<compile_context>
chip_gen: v7x
topology: tpu7x:2x2x1
jax: 0.10.0
libtpu: 0.0.40
codegen_flags: <defaults>
</compile_context>

<pallas_src>
import math

import jax
import jax.numpy as jnp
from jax import lax
from jax.experimental import pallas as pl
from jax.experimental.pallas import tpu as pltpu


def _round_up(x, m):
    return ((x + m - 1) // m) * m


def _vmem_limit(block_bytes, scratch_bytes=0):
    """Per-call scoped-VMEM limit from actual block sizes (2x for double buffers)."""
    est = 2 * block_bytes + scratch_bytes
    return int(max(32 * 1024 * 1024, min(2 * est + (8 << 20), 56 * 1024 * 1024)))


# ----------------------------------------------------------------------------
# Mish.  mish(x) = x * tanh(softplus(x)) = x * u / (u + 2),
#   u = t * (t + 2), t = exp(min(x, 20))   (clamp matches softplus threshold=20)
# ----------------------------------------------------------------------------

def _mish(x):                       # in-kernel version (uses EUP approx recip)
    t = jnp.exp(jnp.minimum(x, 20.0))
    u = t * (t + 2.0)
    return x * u * pl.reciprocal(u + 2.0, approx=True)


def _mish_ref(x):                   # pure-JAX version for the reference
    t = jnp.exp(jnp.minimum(x, 20.0))
    u = t * (t + 2.0)
    return x * u / (u + 2.0)


# ----------------------------------------------------------------------------
# Kernel 1: conv1 -- 3x3 stride-2 conv + bias + Mish.
#   grid = (batch,); the full BN-folded weight stays VMEM-resident (constant
#   index_map -> fetched once).  The padded input is parity (space-to-depth)
#   split in the wrapper so every tap is a unit-stride slice; the 9 taps are
#   accumulated into an fp32 VMEM scratch.
# ----------------------------------------------------------------------------

def _make_conv1_kernel(Ho, Wo):
    def kernel(x_ref, w_ref, b_ref, o_ref, acc_ref):
        # x_ref: (1, 2, 2, Hq, Wq, Cin)  parity quadrants of the padded image
        # w_ref: (3, 3, Cin, Cout)       BN-folded bf16
        # b_ref: (1, Cout) f32;  o_ref: (1, Ho, Wo, Cout) bf16
        # acc_ref: (Ho*Wo, Cout) f32 scratch
        cin = x_ref.shape[-1]
        t = 0
        for dh in range(3):
            for dw in range(3):
                # padded row 2*ho+dh lives in quadrant (dh % 2) at ho + dh//2
                ph, hoff = dh % 2, dh // 2
                pw, woff = dw % 2, dw // 2
                patch = x_ref[0, ph, pw, hoff:hoff + Ho, woff:woff + Wo, :]
                c = jnp.dot(patch.reshape(Ho * Wo, cin), w_ref[dh, dw],
                            preferred_element_type=jnp.float32)
                if t == 0:
                    acc_ref[...] = c
                else:
                    acc_ref[...] += c
                t += 1
        y = _mish(acc_ref[...] + b_ref[...])
        o_ref[0] = y.reshape(Ho, Wo, -1).astype(o_ref.dtype)
    return kernel


def conv1_3x3_s2(x, w, b):
    """x: (N,H,W,Cin) bf16, w: (3,3,Cin,Cout) bf16 (BN-folded), b: (1,Cout) f32."""
    N, H, W, Cin = x.shape
    Cout = w.shape[-1]
    assert H % 2 == 0 and W % 2 == 0
    Ho, Wo = H // 2, W // 2
    Hq, Wq = Ho + 1, Wo + 1

    xp = jnp.pad(x, ((0, 0), (1, 1), (1, 1), (0, 0)))
    # parity (space-to-depth) split; pad+reshape+transpose fuse into one XLA pass
    xin = xp.reshape(N, Hq, 2, Wq, 2, Cin).transpose(0, 2, 4, 1, 3, 5)

    block_bytes = (4 * Hq * Wq * Cin * 2 + 9 * Cin * Cout * 2 + Cout * 4
                   + Ho * Wo * Cout * 2)
    scratch_bytes = Ho * Wo * Cout * 4

    return pl.pallas_call(
        _make_conv1_kernel(Ho, Wo),
        out_shape=jax.ShapeDtypeStruct((N, Ho, Wo, Cout), jnp.bfloat16),
        grid_spec=pltpu.PrefetchScalarGridSpec(
            num_scalar_prefetch=0,
            grid=(N,),
            in_specs=[
                pl.BlockSpec((1, 2, 2, Hq, Wq, Cin), lambda n: (n, 0, 0, 0, 0, 0)),
                pl.BlockSpec((3, 3, Cin, Cout), lambda n: (0, 0, 0, 0)),
                pl.BlockSpec((1, Cout), lambda n: (0, 0)),
            ],
            out_specs=pl.BlockSpec((1, Ho, Wo, Cout), lambda n: (n, 0, 0, 0)),
            scratch_shapes=[pltpu.VMEM((Ho * Wo, Cout), jnp.float32)],
        ),
        compiler_params=pltpu.CompilerParams(
            dimension_semantics=("parallel",),
            vmem_limit_bytes=_vmem_limit(block_bytes, scratch_bytes),
        ),
    )(xin, w, b)


# ----------------------------------------------------------------------------
# Kernel 2: conv2 + conv3 fused -- both 1x1 convs read the same x1 tile once
# and emit two outputs.  Weights VMEM-resident; grid only over M tiles.
# ----------------------------------------------------------------------------

def _dual1x1_kernel(x_ref, w2_ref, b2_ref, w3_ref, b3_ref, o2_ref, o3_ref):
    x = x_ref[...]
    y2 = jnp.dot(x, w2_ref[...], preferred_element_type=jnp.float32) + b2_ref[...]
    o2_ref[...] = _mish(y2).astype(o2_ref.dtype)
    y3 = jnp.dot(x, w3_ref[...], preferred_element_type=jnp.float32) + b3_ref[...]
    o3_ref[...] = _mish(y3).astype(o3_ref.dtype)


def dual_conv1x1(x2d, p2, p3):
    """x2d: (M, Cin) bf16 -> (x2, x3), each (M, Cmid) bf16."""
    w2, b2 = p2
    w3, b3 = p3
    M, Cin = x2d.shape
    Cm = w2.shape[-1]

    tm = min(512, _round_up(M, 8))
    Mp = _round_up(M, tm)
    if Mp != M:
        x2d = jnp.pad(x2d, ((0, Mp - M), (0, 0)))

    block_bytes = tm * Cin * 2 + 2 * Cin * Cm * 2 + 2 * Cm * 4 + 2 * tm * Cm * 2

    o2, o3 = pl.pallas_call(
        _dual1x1_kernel,
        out_shape=(jax.ShapeDtypeStruct((Mp, Cm), jnp.bfloat16),
                   jax.ShapeDtypeStruct((Mp, Cm), jnp.bfloat16)),
        grid_spec=pltpu.PrefetchScalarGridSpec(
            num_scalar_prefetch=0,
            grid=(Mp // tm,),
            in_specs=[
                pl.BlockSpec((tm, Cin), lambda i: (i, 0)),
                pl.BlockSpec((Cin, Cm), lambda i: (0, 0)),
                pl.BlockSpec((1, Cm), lambda i: (0, 0)),
                pl.BlockSpec((Cin, Cm), lambda i: (0, 0)),
                pl.BlockSpec((1, Cm), lambda i: (0, 0)),
            ],
            out_specs=[pl.BlockSpec((tm, Cm), lambda i: (i, 0)),
                       pl.BlockSpec((tm, Cm), lambda i: (i, 0))],
        ),
        compiler_params=pltpu.CompilerParams(
            dimension_semantics=("parallel",),
            vmem_limit_bytes=_vmem_limit(block_bytes),
        ),
    )(x2d, w2, b2, w3, b3)
    if Mp != M:
        o2, o3 = o2[:M], o3[:M]
    return o2, o3


# ----------------------------------------------------------------------------
# Kernel 3: fused ResBlock step -- 1x1 conv + Mish, 3x3 conv + Mish, residual.
#   The intermediate 'h' stays in a zero-bordered VMEM scratch (never hits HBM).
#   grid = (batch,), both weights VMEM-resident, fp32 tap accumulator scratch.
# ----------------------------------------------------------------------------

def _make_resblock_kernel(Ho, Wo):
    def kernel(r_ref, wa_ref, ba_ref, wb_ref, bb_ref, o_ref, hpad_ref, acc_ref):
        C = r_ref.shape[-1]
        r2d = r_ref[0].reshape(Ho * Wo, C)

        # 1x1 conv + Mish -> h (bf16), kept in VMEM
        h = _mish(jnp.dot(r2d, wa_ref[...], preferred_element_type=jnp.float32)
                  + ba_ref[...]).astype(hpad_ref.dtype)

        # zero the padded buffer every step (megacore-safe), then write interior
        hpad_ref[...] = jnp.zeros_like(hpad_ref)
        hpad_ref[1:1 + Ho, 1:1 + Wo, :] = h.reshape(Ho, Wo, C)

        # 3x3 conv: 9 taps accumulated into the fp32 VMEM scratch
        t = 0
        for dh in range(3):
            for dw in range(3):
                patch = hpad_ref[dh:dh + Ho, dw:dw + Wo, :]
                c = jnp.dot(patch.reshape(Ho * Wo, C), wb_ref[dh, dw],
                            preferred_element_type=jnp.float32)
                if t == 0:
                    acc_ref[...] = c
                else:
                    acc_ref[...] += c
                t += 1

        y = _mish(acc_ref[...] + bb_ref[...]) + r2d.astype(jnp.float32)
        o_ref[0] = y.reshape(Ho, Wo, C).astype(o_ref.dtype)
    return kernel


def resblock_fused(r, pa, pb):
    """r: (N, Ho, Wo, C) bf16 -> r + mish(conv3x3(mish(conv1x1(r)))) (bf16)."""
    wa, ba = pa
    wb, bb = pb
    N, Ho, Wo, C = r.shape
    Hp = Ho + 2
    Wp = _round_up(Wo + 2, 8)          # lane/sublane-friendly scratch width

    block_bytes = 2 * Ho * Wo * C * 2 + C * C * 2 + 9 * C * C * 2 + 2 * C * 4
    scratch_bytes = Hp * Wp * C * 2 + Ho * Wo * C * 4

    return pl.pallas_call(
        _make_resblock_kernel(Ho, Wo),
        out_shape=jax.ShapeDtypeStruct((N, Ho, Wo, C), jnp.bfloat16),
        grid_spec=pltpu.PrefetchScalarGridSpec(
            num_scalar_prefetch=0,
            grid=(N,),
            in_specs=[
                pl.BlockSpec((1, Ho, Wo, C), lambda n: (n, 0, 0, 0)),
                pl.BlockSpec((C, C), lambda n: (0, 0)),
                pl.BlockSpec((1, C), lambda n: (0, 0)),
                pl.BlockSpec((3, 3, C, C), lambda n: (0, 0, 0, 0)),
                pl.BlockSpec((1, C), lambda n: (0, 0)),
            ],
            out_specs=pl.BlockSpec((1, Ho, Wo, C), lambda n: (n, 0, 0, 0)),
            scratch_shapes=[pltpu.VMEM((Hp, Wp, C), jnp.bfloat16),
                            pltpu.VMEM((Ho * Wo, C), jnp.float32)],
        ),
        compiler_params=pltpu.CompilerParams(
            dimension_semantics=("parallel",),
            vmem_limit_bytes=_vmem_limit(block_bytes, scratch_bytes),
        ),
    )(r, wa, ba, wb, bb)


# ----------------------------------------------------------------------------
# Kernel 4: conv4 + conv5 fused.  x4 = mish(r@W4 + b4) stays in VMEM; the
# concat [x4, x2] is folded into x4@W5a + x2@W5b.  Weights VMEM-resident.
# ----------------------------------------------------------------------------

def _conv45_kernel(r_ref, x2_ref, w4_ref, b4_ref, w5a_ref, w5b_ref, b5_ref, o_ref):
    x4 = _mish(jnp.dot(r_ref[...], w4_ref[...], preferred_element_type=jnp.float32)
               + b4_ref[...]).astype(jnp.bfloat16)
    y = (jnp.dot(x4, w5a_ref[...], preferred_element_type=jnp.float32)
         + jnp.dot(x2_ref[...], w5b_ref[...], preferred_element_type=jnp.float32)
         + b5_ref[...])
    o_ref[...] = _mish(y).astype(o_ref.dtype)


def conv45_fused(r2d, x22d, p4, p5):
    """r2d, x22d: (M, C) bf16 -> x5: (M, 2C) bf16."""
    w4, b4 = p4
    w5a, w5b, b5 = p5
    M, C = r2d.shape
    Cout = w5a.shape[-1]

    tm = min(512, _round_up(M, 8))
    Mp = _round_up(M, tm)
    if Mp != M:
        r2d = jnp.pad(r2d, ((0, Mp - M), (0, 0)))
        x22d = jnp.pad(x22d, ((0, Mp - M), (0, 0)))

    block_bytes = (2 * tm * C * 2 + C * C * 2 + 2 * C * Cout * 2
                   + (C + Cout) * 4 + tm * Cout * 2)

    out = pl.pallas_call(
        _conv45_kernel,
        out_shape=jax.ShapeDtypeStruct((Mp, Cout), jnp.bfloat16),
        grid_spec=pltpu.PrefetchScalarGridSpec(
            num_scalar_prefetch=0,
            grid=(Mp // tm,),
            in_specs=[
                pl.BlockSpec((tm, C), lambda i: (i, 0)),
                pl.BlockSpec((tm, C), lambda i: (i, 0)),
                pl.BlockSpec((C, C), lambda i: (0, 0)),
                pl.BlockSpec((1, C), lambda i: (0, 0)),
                pl.BlockSpec((C, Cout), lambda i: (0, 0)),
                pl.BlockSpec((C, Cout), lambda i: (0, 0)),
                pl.BlockSpec((1, Cout), lambda i: (0, 0)),
            ],
            out_specs=pl.BlockSpec((tm, Cout), lambda i: (i, 0)),
        ),
        compiler_params=pltpu.CompilerParams(
            dimension_semantics=("parallel",),
            vmem_limit_bytes=_vmem_limit(block_bytes),
        ),
    )(r2d, x22d, w4, b4, w5a, w5b, b5)
    return out[:M] if Mp != M else out


# ----------------------------------------------------------------------------
# Parameter init (deterministic), BN folded into the weights once.
# ----------------------------------------------------------------------------

def _init_cba(key, cin, cout, k):
    kw, kg, kb, km, kv = jax.random.split(key, 5)
    fan_in = k * k * cin
    return dict(
        w=jax.random.normal(kw, (k, k, cin, cout), jnp.float32) / math.sqrt(fan_in),
        gamma=1.0 + 0.1 * jax.random.normal(kg, (cout,), jnp.float32),
        beta=0.1 * jax.random.normal(kb, (cout,), jnp.float32),
        rmean=0.1 * jax.random.normal(km, (cout,), jnp.float32),
        rvar=1.0 + 0.1 * jax.random.uniform(kv, (cout,), jnp.float32),
    )


def _fold(cba, eps=1e-5):
    """Fold eval-mode BatchNorm into the conv weight; cast weight to bf16 once."""
    scale = cba["gamma"] / jnp.sqrt(cba["rvar"] + eps)
    bias = cba["beta"] - cba["rmean"] * scale
    w = (cba["w"] * scale).astype(jnp.bfloat16)
    return w, bias.reshape(1, -1).astype(jnp.float32)


def init_downsample5_params(key, c_in, c_out):
    """c_in/c_out correspond to the module's 512/1024 (scaled down for the test)."""
    keys = jax.random.split(key, 13)
    raw = {}
    raw["conv1"] = _init_cba(keys[0], c_in, c_out, 3)      # 512 -> 1024, 3x3 s2
    raw["conv2"] = _init_cba(keys[1], c_out, c_in, 1)      # 1024 -> 512
    raw["conv3"] = _init_cba(keys[2], c_out, c_in, 1)      # 1024 -> 512
    for i in range(4):                                     # ResBlock(ch=512, nblocks=4)
        raw[f"res{i}_a"] = _init_cba(keys[5 + 2 * i], c_in, c_in, 1)
        raw[f"res{i}_b"] = _init_cba(keys[6 + 2 * i], c_in, c_in, 3)
    raw["conv4"] = _init_cba(keys[3], c_in, c_in, 1)       # 512 -> 512
    raw["conv5"] = _init_cba(keys[4], c_out, c_out, 1)     # 1024 -> 1024
    return raw


def prepare_params(raw, c_in):
    """Fold BN, cast to bf16, reshape 1x1 weights to 2D, split conv5 (done once)."""
    prep = {}
    for name, cba in raw.items():
        w, b = _fold(cba)
        if name == "conv5":
            w2d = w.reshape(w.shape[2], w.shape[3])
            prep["conv5"] = (w2d[:c_in], w2d[c_in:], b)    # x4-part, x2-part
        elif w.shape[0] == 1:                              # 1x1 conv
            prep[name] = (w.reshape(w.shape[2], w.shape[3]), b)
        else:                                              # 3x3 conv
            prep[name] = (w, b)
    return prep


# ----------------------------------------------------------------------------
# DownSample5 forward (Pallas, 7 fused launches)
# ----------------------------------------------------------------------------

def downsample5_forward(x_nchw, p):
    x = jnp.transpose(x_nchw, (0, 2, 3, 1)).astype(jnp.bfloat16)   # NCHW -> NHWC
    N, H, W, _ = x.shape
    Ho, Wo = H // 2, W // 2
    M = N * Ho * Wo

    x1 = conv1_3x3_s2(x, *p["conv1"])                       # (N, Ho, Wo, C_big)
    x2f, x3f = dual_conv1x1(x1.reshape(M, -1), p["conv2"], p["conv3"])

    r = x3f.reshape(N, Ho, Wo, -1)
    for i in range(4):
        r = resblock_fused(r, p[f"res{i}_a"], p[f"res{i}_b"])

    x5f = conv45_fused(r.reshape(M, -1), x2f, p["conv4"], p["conv5"])
    x5 = x5f.reshape(N, Ho, Wo, -1)
    return jnp.transpose(x5.astype(jnp.float32), (0, 3, 1, 2))     # NHWC -> NCHW


# ----------------------------------------------------------------------------
# Pure-JAX reference (lax.conv) mirroring the bf16 data flow, for correctness
# ----------------------------------------------------------------------------

def _ref_cba(x, w, b, stride, ksize, residual=None):
    if ksize == 1:
        w4 = w.reshape(1, 1, w.shape[0], w.shape[1])
    else:
        w4 = w
    pad = (ksize - 1) // 2
    y = lax.conv_general_dilated(
        x.astype(jnp.bfloat16), w4,
        window_strides=(stride, stride),
        padding=((pad, pad), (pad, pad)),
        dimension_numbers=("NHWC", "HWIO", "NHWC"),
        preferred_element_type=jnp.float32)
    y = _mish_ref(y + b.reshape(1, 1, 1, -1))
    if residual is not None:
        y = y + residual.astype(jnp.float32)
    return y.astype(jnp.bfloat16)


def downsample5_reference(x_nchw, p):
    x = jnp.transpose(x_nchw, (0, 2, 3, 1)).astype(jnp.bfloat16)
    x1 = _ref_cba(x, *p["conv1"], 2, 3)
    x2 = _ref_cba(x1, *p["conv2"], 1, 1)
    x3 = _ref_cba(x1, *p["conv3"], 1, 1)
    r = x3
    for i in range(4):
        h = _ref_cba(r, *p[f"res{i}_a"], 1, 1)
        r = _ref_cba(h, *p[f"res{i}_b"], 1, 3, residual=r)
    x4 = _ref_cba(r, *p["conv4"], 1, 1)
    w5a, w5b, b5 = p["conv5"]
    w5 = jnp.concatenate([w5a, w5b], axis=0)
    x4c = jnp.concatenate([x4, x2], axis=-1)
    x5 = _ref_cba(x4c, w5, b5, 1, 1)
    return jnp.transpose(x5.astype(jnp.float32), (0, 3, 1, 2))


# ----------------------------------------------------------------------------
# Main
# ----------------------------------------------------------------------------

if __name__ == "__main__":
    # Module channels 512/1024 scaled by 1/4 -> 128/256 for a small test.
    C_IN, C_OUT = 128, 256
    B, H, W = 2, 16, 16

    key = jax.random.PRNGKey(0)
    k_x, k_p = jax.random.split(key)
    x = jax.random.normal(k_x, (B, C_IN, H, W), jnp.float32)   # NCHW, like PyTorch
    raw = init_downsample5_params(k_p, C_IN, C_OUT)
    params = prepare_params(raw, C_IN)                          # BN folded, bf16, once

    fwd = jax.jit(downsample5_forward)
    out = jax.block_until_ready(fwd(x, params))
    assert out.shape == (B, C_OUT, H // 2, W // 2), out.shape

    ref = jax.block_until_ready(jax.jit(downsample5_reference)(x, params))
    err = float(jnp.max(jnp.abs(out - ref) / (1.0 + jnp.abs(ref))))
    assert err < 3e-2, f"relative err {err}"

    print("KERNEL_OK")
</pallas_src>

<mosaic_0001>
module attributes {stable_mosaic.version = 11 : i64} {
  func.func @kernel(%arg0: i32, %arg1: memref<1x2x2x9x9x128xbf16, #tpu.memory_space<vmem>>, %arg2: memref<3x3x128x256xbf16, #tpu.memory_space<vmem>>, %arg3: memref<1x256xf32, #tpu.memory_space<vmem>>, %arg4: memref<1x8x8x256xbf16, #tpu.memory_space<vmem>>, %arg5: memref<64x256xf32, #tpu.memory_space<vmem>>) attributes {dimension_semantics = [#tpu.dimension_semantics<parallel>], iteration_bounds = array<i64: 2>, scalar_prefetch = 0 : i64, scratch_operands = 1 : i64, tpu.core_type = #tpu.core_type<tc>, window_params = [{transform_indices = @transform_0, window_bounds = array<i64: 1, 2, 2, 9, 9, 128>}, {pipeline_mode = #tpu.pipeline_mode<synchronous>, transform_indices = @transform_1, window_bounds = array<i64: 3, 3, 128, 256>}, {pipeline_mode = #tpu.pipeline_mode<synchronous>, transform_indices = @transform_2, window_bounds = array<i64: 1, 256>}, {transform_indices = @transform_3, window_bounds = array<i64: 1, 8, 8, 256>}]} {
    %c0 = arith.constant 0 : index
    %c0_0 = arith.constant 0 : index
    %c0_1 = arith.constant 0 : index
    %c0_2 = arith.constant 0 : index
    %c0_3 = arith.constant 0 : index
    %c0_4 = arith.constant 0 : index
    %0 = vector.load %arg1[%c0, %c0_0, %c0_1, %c0_2, %c0_3, %c0_4] : memref<1x2x2x9x9x128xbf16, #tpu.memory_space<vmem>>, vector<1x1x1x8x8x128xbf16>
    %1 = vector.shape_cast %0 : vector<1x1x1x8x8x128xbf16> to vector<8x8x128xbf16>
    %2 = vector.shape_cast %1 : vector<8x8x128xbf16> to vector<64x128xbf16>
    %c0_5 = arith.constant 0 : index
    %c0_6 = arith.constant 0 : index
    %c0_7 = arith.constant 0 : index
    %c0_8 = arith.constant 0 : index
    %3 = vector.load %arg2[%c0_5, %c0_6, %c0_7, %c0_8] : memref<3x3x128x256xbf16, #tpu.memory_space<vmem>>, vector<1x1x128x256xbf16>
    %4 = vector.shape_cast %3 : vector<1x1x128x256xbf16> to vector<128x256xbf16>
    %cst = arith.constant dense<0.000000e+00> : vector<64x256xf32>
    %5 = tpu.matmul %2, %4, %cst {dimension_numbers = #tpu.dot_dimension_numbers<[1], [0], [0], [1], [0, 0, 1, 1], [], []>} : vector<64x128xbf16>, vector<128x256xbf16>, vector<64x256xf32> -> vector<64x256xf32>
    %c0_9 = arith.constant 0 : index
    %c0_10 = arith.constant 0 : index
    %6 = vector.load %arg5[%c0_9, %c0_10] : memref<64x256xf32, #tpu.memory_space<vmem>>, vector<64x256xf32>
    tpu.vector_store %arg5[%c0_9, %c0_10], %5 {strides = array<i32>} : memref<64x256xf32, #tpu.memory_space<vmem>>, vector<64x256xf32>,
    %c0_11 = arith.constant 0 : index
    %c0_12 = arith.constant 0 : index
    %c1 = arith.constant 1 : index
    %c0_13 = arith.constant 0 : index
    %c0_14 = arith.constant 0 : index
    %c0_15 = arith.constant 0 : index
    %7 = vector.load %arg1[%c0_11, %c0_12, %c1, %c0_13, %c0_14, %c0_15] : memref<1x2x2x9x9x128xbf16, #tpu.memory_space<vmem>>, vector<1x1x1x8x8x128xbf16>
    %8 = vector.shape_cast %7 : vector<1x1x1x8x8x128xbf16> to vector<8x8x128xbf16>
    %9 = vector.shape_cast %8 : vector<8x8x128xbf16> to vector<64x128xbf16>
    %c0_16 = arith.constant 0 : index
    %c1_17 = arith.constant 1 : index
    %c0_18 = arith.constant 0 : index
    %c0_19 = arith.constant 0 : index
    %10 = vector.load %arg2[%c0_16, %c1_17, %c0_18, %c0_19] : memref<3x3x128x256xbf16, #tpu.memory_space<vmem>>, vector<1x1x128x256xbf16>
    %11 = vector.shape_cast %10 : vector<1x1x128x256xbf16> to vector<128x256xbf16>
    %cst_20 = arith.constant dense<0.000000e+00> : vector<64x256xf32>
    %12 = tpu.matmul %9, %11, %cst_20 {dimension_numbers = #tpu.dot_dimension_numbers<[1], [0], [0], [1], [0, 0, 1, 1], [], []>} : vector<64x128xbf16>, vector<128x256xbf16>, vector<64x256xf32> -> vector<64x256xf32>
    %c0_21 = arith.constant 0 : index
    %c0_22 = arith.constant 0 : index
    %13 = vector.load %arg5[%c0_21, %c0_22] : memref<64x256xf32, #tpu.memory_space<vmem>>, vector<64x256xf32>
    %14 = arith.addf %13, %12 : vector<64x256xf32>
    %c0_23 = arith.constant 0 : index
    %c0_24 = arith.constant 0 : index
    %15 = vector.load %arg5[%c0_23, %c0_24] : memref<64x256xf32, #tpu.memory_space<vmem>>, vector<64x256xf32>
    tpu.vector_store %arg5[%c0_23, %c0_24], %14 {strides = array<i32>} : memref<64x256xf32, #tpu.memory_space<vmem>>, vector<64x256xf32>,
    %c0_25 = arith.constant 0 : index
    %c0_26 = arith.constant 0 : index
    %c0_27 = arith.constant 0 : index
    %c0_28 = arith.constant 0 : index
    %c1_29 = arith.constant 1 : index
    %c0_30 = arith.constant 0 : index
    %16 = vector.load %arg1[%c0_25, %c0_26, %c0_27, %c0_28, %c1_29, %c0_30] : memref<1x2x2x9x9x128xbf16, #tpu.memory_space<vmem>>, vector<1x1x1x8x8x128xbf16>
    %17 = vector.shape_cast %16 : vector<1x1x1x8x8x128xbf16> to vector<8x8x128xbf16>
    %18 = vector.shape_cast %17 : vector<8x8x128xbf16> to vector<64x128xbf16>
    %c0_31 = arith.constant 0 : index
    %c2 = arith.constant 2 : index
    %c0_32 = arith.constant 0 : index
    %c0_33 = arith.constant 0 : index
    %19 = vector.load %arg2[%c0_31, %c2, %c0_32, %c0_33] : memref<3x3x128x256xbf16, #tpu.memory_space<vmem>>, vector<1x1x128x256xbf16>
    %20 = vector.shape_cast %19 : vector<1x1x128x256xbf16> to vector<128x256xbf16>
    %cst_34 = arith.constant dense<0.000000e+00> : vector<64x256xf32>
    %21 = tpu.matmul %18, %20, %cst_34 {dimension_numbers = #tpu.dot_dimension_numbers<[1], [0], [0], [1], [0, 0, 1, 1], [], []>} : vector<64x128xbf16>, vector<128x256xbf16>, vector<64x256xf32> -> vector<64x256xf32>
    %c0_35 = arith.constant 0 : index
    %c0_36 = arith.constant 0 : index
    %22 = vector.load %arg5[%c0_35, %c0_36] : memref<64x256xf32, #tpu.memory_space<vmem>>, vector<64x256xf32>
    %23 = arith.addf %22, %21 : vector<64x256xf32>
    %c0_37 = arith.constant 0 : index
    %c0_38 = arith.constant 0 : index
    %24 = vector.load %arg5[%c0_37, %c0_38] : memref<64x256xf32, #tpu.memory_space<vmem>>, vector<64x256xf32>
    tpu.vector_store %arg5[%c0_37, %c0_38], %23 {strides = array<i32>} : memref<64x256xf32, #tpu.memory_space<vmem>>, vector<64x256xf32>,
    %c0_39 = arith.constant 0 : index
    %c1_40 = arith.constant 1 : index
    %c0_41 = arith.constant 0 : index
    %c0_42 = arith.constant 0 : index
    %c0_43 = arith.constant 0 : index
    %c0_44 = arith.constant 0 : index
    %25 = vector.load %arg1[%c0_39, %c1_40, %c0_41, %c0_42, %c0_43, %c0_44] : memref<1x2x2x9x9x128xbf16, #tpu.memory_space<vmem>>, vector<1x1x1x8x8x128xbf16>
    %26 = vector.shape_cast %25 : vector<1x1x1x8x8x128xbf16> to vector<8x8x128xbf16>
    %27 = vector.shape_cast %26 : vector<8x8x128xbf16> to vector<64x128xbf16>
    %c1_45 = arith.constant 1 : index
    %c0_46 = arith.constant 0 : index
    %c0_47 = arith.constant 0 : index
    %c0_48 = arith.constant 0 : index
    %28 = vector.load %arg2[%c1_45, %c0_46, %c0_47, %c0_48] : memref<3x3x128x256xbf16, #tpu.memory_space<vmem>>, vector<1x1x128x256xbf16>
    %29 = vector.shape_cast %28 : vector<1x1x128x256xbf16> to vector<128x256xbf16>
    %cst_49 = arith.constant dense<0.000000e+00> : vector<64x256xf32>
    %30 = tpu.matmul %27, %29, %cst_49 {dimension_numbers = #tpu.dot_dimension_numbers<[1], [0], [0], [1], [0, 0, 1, 1], [], []>} : vector<64x128xbf16>, vector<128x256xbf16>, vector<64x256xf32> -> vector<64x256xf32>
    %c0_50 = arith.constant 0 : index
    %c0_51 = arith.constant 0 : index
    %31 = vector.load %arg5[%c0_50, %c0_51] : memref<64x256xf32, #tpu.memory_space<vmem>>, vector<64x256xf32>
    %32 = arith.addf %31, %30 : vector<64x256xf32>
    %c0_52 = arith.constant 0 : index
    %c0_53 = arith.constant 0 : index
    %33 = vector.load %arg5[%c0_52, %c0_53] : memref<64x256xf32, #tpu.memory_space<vmem>>, vector<64x256xf32>
    tpu.vector_store %arg5[%c0_52, %c0_53], %32 {strides = array<i32>} : memref<64x256xf32, #tpu.memory_space<vmem>>, vector<64x256xf32>,
    %c0_54 = arith.constant 0 : index
    %c1_55 = arith.constant 1 : index
    %c1_56 = arith.constant 1 : index
    %c0_57 = arith.constant 0 : index
    %c0_58 = arith.constant 0 : index
    %c0_59 = arith.constant 0 : index
    %34 = vector.load %arg1[%c0_54, %c1_55, %c1_56, %c0_57, %c0_58, %c0_59] : memref<1x2x2x9x9x128xbf16, #tpu.memory_space<vmem>>, vector<1x1x1x8x8x128xbf16>
    %35 = vector.shape_cast %34 : vector<1x1x1x8x8x128xbf16> to vector<8x8x128xbf16>
    %36 = vector.shape_cast %35 : vector<8x8x128xbf16> to vector<64x128xbf16>
    %c1_60 = arith.constant 1 : index
    %c1_61 = arith.constant 1 : index
    %c0_62 = arith.constant 0 : index
    %c0_63 = arith.constant 0 : index
    %37 = vector.load %arg2[%c1_60, %c1_61, %c0_62, %c0_63] : memref<3x3x128x256xbf16, #tpu.memory_space<vmem>>, vector<1x1x128x256xbf16>
    %38 = vector.shape_cast %37 : vector<1x1x128x256xbf16> to vector<128x256xbf16>
    %cst_64 = arith.constant dense<0.000000e+00> : vector<64x256xf32>
    %39 = tpu.matmul %36, %38, %cst_64 {dimension_numbers = #tpu.dot_dimension_numbers<[1], [0], [0], [1], [0, 0, 1, 1], [], []>} : vector<64x128xbf16>, vector<128x256xbf16>, vector<64x256xf32> -> vector<64x256xf32>
    %c0_65 = arith.constant 0 : index
    %c0_66 = arith.constant 0 : index
    %40 = vector.load %arg5[%c0_65, %c0_66] : memref<64x256xf32, #tpu.memory_space<vmem>>, vector<64x256xf32>
    %41 = arith.addf %40, %39 : vector<64x256xf32>
    %c0_67 = arith.constant 0 : index
    %c0_68 = arith.constant 0 : index
    %42 = vector.load %arg5[%c0_67, %c0_68] : memref<64x256xf32, #tpu.memory_space<vmem>>, vector<64x256xf32>
    tpu.vector_store %arg5[%c0_67, %c0_68], %41 {strides = array<i32>} : memref<64x256xf32, #tpu.memory_space<vmem>>, vector<64x256xf32>,
    %c0_69 = arith.constant 0 : index
    %c1_70 = arith.constant 1 : index
    %c0_71 = arith.constant 0 : index
    %c0_72 = arith.constant 0 : index
    %c1_73 = arith.constant 1 : index
    %c0_74 = arith.constant 0 : index
    %43 = vector.load %arg1[%c0_69, %c1_70, %c0_71, %c0_72, %c1_73, %c0_74] : memref<1x2x2x9x9x128xbf16, #tpu.memory_space<vmem>>, vector<1x1x1x8x8x128xbf16>
    %44 = vector.shape_cast %43 : vector<1x1x1x8x8x128xbf16> to vector<8x8x128xbf16>
    %45 = vector.shape_cast %44 : vector<8x8x128xbf16> to vector<64x128xbf16>
    %c1_75 = arith.constant 1 : index
    %c2_76 = arith.constant 2 : index
    %c0_77 = arith.constant 0 : index
    %c0_78 = arith.constant 0 : index
    %46 = vector.load %arg2[%c1_75, %c2_76, %c0_77, %c0_78] : memref<3x3x128x256xbf16, #tpu.memory_space<vmem>>, vector<1x1x128x256xbf16>
    %47 = vector.shape_cast %46 : vector<1x1x128x256xbf16> to vector<128x256xbf16>
    %cst_79 = arith.constant dense<0.000000e+00> : vector<64x256xf32>
    %48 = tpu.matmul %45, %47, %cst_79 {dimension_numbers = #tpu.dot_dimension_numbers<[1], [0], [0], [1], [0, 0, 1, 1], [], []>} : vector<64x128xbf16>, vector<128x256xbf16>, vector<64x256xf32> -> vector<64x256xf32>
    %c0_80 = arith.constant 0 : index
    %c0_81 = arith.constant 0 : index
    %49 = vector.load %arg5[%c0_80, %c0_81] : memref<64x256xf32, #tpu.memory_space<vmem>>, vector<64x256xf32>
    %50 = arith.addf %49, %48 : vector<64x256xf32>
    %c0_82 = arith.constant 0 : index
    %c0_83 = arith.constant 0 : index
    %51 = vector.load %arg5[%c0_82, %c0_83] : memref<64x256xf32, #tpu.memory_space<vmem>>, vector<64x256xf32>
    tpu.vector_store %arg5[%c0_82, %c0_83], %50 {strides = array<i32>} : memref<64x256xf32, #tpu.memory_space<vmem>>, vector<64x256xf32>,
    %c0_84 = arith.constant 0 : index
    %c0_85 = arith.constant 0 : index
    %c0_86 = arith.constant 0 : index
    %c1_87 = arith.constant 1 : index
    %c0_88 = arith.constant 0 : index
    %c0_89 = arith.constant 0 : index
    %52 = vector.load %arg1[%c0_84, %c0_85, %c0_86, %c1_87, %c0_88, %c0_89] : memref<1x2x2x9x9x128xbf16, #tpu.memory_space<vmem>>, vector<1x1x1x8x8x128xbf16>
    %53 = vector.shape_cast %52 : vector<1x1x1x8x8x128xbf16> to vector<8x8x128xbf16>
    %54 = vector.shape_cast %53 : vector<8x8x128xbf16> to vector<64x128xbf16>
    %c2_90 = arith.constant 2 : index
    %c0_91 = arith.constant 0 : index
    %c0_92 = arith.constant 0 : index
    %c0_93 = arith.constant 0 : index
    %55 = vector.load %arg2[%c2_90, %c0_91, %c0_92, %c0_93] : memref<3x3x128x256xbf16, #tpu.memory_space<vmem>>, vector<1x1x128x256xbf16>
    %56 = vector.shape_cast %55 : vector<1x1x128x256xbf16> to vector<128x256xbf16>
    %cst_94 = arith.constant dense<0.000000e+00> : vector<64x256xf32>
    %57 = tpu.matmul %54, %56, %cst_94 {dimension_numbers = #tpu.dot_dimension_numbers<[1], [0], [0], [1], [0, 0, 1, 1], [], []>} : vector<64x128xbf16>, vector<128x256xbf16>, vector<64x256xf32> -> vector<64x256xf32>
    %c0_95 = arith.constant 0 : index
    %c0_96 = arith.constant 0 : index
    %58 = vector.load %arg5[%c0_95, %c0_96] : memref<64x256xf32, #tpu.memory_space<vmem>>, vector<64x256xf32>
    %59 = arith.addf %58, %57 : vector<64x256xf32>
    %c0_97 = arith.constant 0 : index
    %c0_98 = arith.constant 0 : index
    %60 = vector.load %arg5[%c0_97, %c0_98] : memref<64x256xf32, #tpu.memory_space<vmem>>, vector<64x256xf32>
    tpu.vector_store %arg5[%c0_97, %c0_98], %59 {strides = array<i32>} : memref<64x256xf32, #tpu.memory_space<vmem>>, vector<64x256xf32>,
    %c0_99 = arith.constant 0 : index
    %c0_100 = arith.constant 0 : index
    %c1_101 = arith.constant 1 : index
    %c1_102 = arith.constant 1 : index
    %c0_103 = arith.constant 0 : index
    %c0_104 = arith.constant 0 : index
    %61 = vector.load %arg1[%c0_99, %c0_100, %c1_101, %c1_102, %c0_103, %c0_104] : memref<1x2x2x9x9x128xbf16, #tpu.memory_space<vmem>>, vector<1x1x1x8x8x128xbf16>
    %62 = vector.shape_cast %61 : vector<1x1x1x8x8x128xbf16> to vector<8x8x128xbf16>
    %63 = vector.shape_cast %62 : vector<8x8x128xbf16> to vector<64x128xbf16>
    %c2_105 = arith.constant 2 : index
    %c1_106 = arith.constant 1 : index
    %c0_107 = arith.constant 0 : index
    %c0_108 = arith.constant 0 : index
    %64 = vector.load %arg2[%c2_105, %c1_106, %c0_107, %c0_108] : memref<3x3x128x256xbf16, #tpu.memory_space<vmem>>, vector<1x1x128x256xbf16>
    %65 = vector.shape_cast %64 : vector<1x1x128x256xbf16> to vector<128x256xbf16>
    %cst_109 = arith.constant dense<0.000000e+00> : vector<64x256xf32>
    %66 = tpu.matmul %63, %65, %cst_109 {dimension_numbers = #tpu.dot_dimension_numbers<[1], [0], [0], [1], [0, 0, 1, 1], [], []>} : vector<64x128xbf16>, vector<128x256xbf16>, vector<64x256xf32> -> vector<64x256xf32>
    %c0_110 = arith.constant 0 : index
    %c0_111 = arith.constant 0 : index
    %67 = vector.load %arg5[%c0_110, %c0_111] : memref<64x256xf32, #tpu.memory_space<vmem>>, vector<64x256xf32>
    %68 = arith.addf %67, %66 : vector<64x256xf32>
    %c0_112 = arith.constant 0 : index
    %c0_113 = arith.constant 0 : index
    %69 = vector.load %arg5[%c0_112, %c0_113] : memref<64x256xf32, #tpu.memory_space<vmem>>, vector<64x256xf32>
    tpu.vector_store %arg5[%c0_112, %c0_113], %68 {strides = array<i32>} : memref<64x256xf32, #tpu.memory_space<vmem>>, vector<64x256xf32>,
    %c0_114 = arith.constant 0 : index
    %c0_115 = arith.constant 0 : index
    %c0_116 = arith.constant 0 : index
    %c1_117 = arith.constant 1 : index
    %c1_118 = arith.constant 1 : index
    %c0_119 = arith.constant 0 : index
    %70 = vector.load %arg1[%c0_114, %c0_115, %c0_116, %c1_117, %c1_118, %c0_119] : memref<1x2x2x9x9x128xbf16, #tpu.memory_space<vmem>>, vector<1x1x1x8x8x128xbf16>
    %71 = vector.shape_cast %70 : vector<1x1x1x8x8x128xbf16> to vector<8x8x128xbf16>
    %72 = vector.shape_cast %71 : vector<8x8x128xbf16> to vector<64x128xbf16>
    %c2_120 = arith.constant 2 : index
    %c2_121 = arith.constant 2 : index
    %c0_122 = arith.constant 0 : index
    %c0_123 = arith.constant 0 : index
    %73 = vector.load %arg2[%c2_120, %c2_121, %c0_122, %c0_123] : memref<3x3x128x256xbf16, #tpu.memory_space<vmem>>, vector<1x1x128x256xbf16>
    %74 = vector.shape_cast %73 : vector<1x1x128x256xbf16> to vector<128x256xbf16>
    %cst_124 = arith.constant dense<0.000000e+00> : vector<64x256xf32>
    %75 = tpu.matmul %72, %74, %cst_124 {dimension_numbers = #tpu.dot_dimension_numbers<[1], [0], [0], [1], [0, 0, 1, 1], [], []>} : vector<64x128xbf16>, vector<128x256xbf16>, vector<64x256xf32> -> vector<64x256xf32>
    %c0_125 = arith.constant 0 : index
    %c0_126 = arith.constant 0 : index
    %76 = vector.load %arg5[%c0_125, %c0_126] : memref<64x256xf32, #tpu.memory_space<vmem>>, vector<64x256xf32>
    %77 = arith.addf %76, %75 : vector<64x256xf32>
    %c0_127 = arith.constant 0 : index
    %c0_128 = arith.constant 0 : index
    %78 = vector.load %arg5[%c0_127, %c0_128] : memref<64x256xf32, #tpu.memory_space<vmem>>, vector<64x256xf32>
    tpu.vector_store %arg5[%c0_127, %c0_128], %77 {strides = array<i32>} : memref<64x256xf32, #tpu.memory_space<vmem>>, vector<64x256xf32>,
    %c0_129 = arith.constant 0 : index
    %c0_130 = arith.constant 0 : index
    %79 = vector.load %arg5[%c0_129, %c0_130] : memref<64x256xf32, #tpu.memory_space<vmem>>, vector<64x256xf32>
    %c0_131 = arith.constant 0 : index
    %c0_132 = arith.constant 0 : index
    %80 = vector.load %arg3[%c0_131, %c0_132] : memref<1x256xf32, #tpu.memory_space<vmem>>, vector<1x256xf32>
    %81 = vector.broadcast %80 : vector<1x256xf32> to vector<64x256xf32>
    %82 = arith.addf %79, %81 : vector<64x256xf32>
    %cst_133 = arith.constant 2.000000e+01 : f32
    %83 = vector.broadcast %cst_133 : f32 to vector<64x256xf32>
    %84 = arith.minimumf %82, %83 : vector<64x256xf32>
    %85 = math.exp %84 : vector<64x256xf32>
    %cst_134 = arith.constant 2.000000e+00 : f32
    %86 = vector.broadcast %cst_134 : f32 to vector<64x256xf32>
    %87 = arith.addf %85, %86 : vector<64x256xf32>
    %88 = arith.mulf %85, %87 : vector<64x256xf32>
    %89 = arith.mulf %82, %88 : vector<64x256xf32>
    %cst_135 = arith.constant 2.000000e+00 : f32
    %90 = vector.broadcast %cst_135 : f32 to vector<64x256xf32>
    %91 = arith.addf %88, %90 : vector<64x256xf32>
    %92 = tpu.reciprocal %91 {approx = true} : vector<64x256xf32> -> vector<64x256xf32>
    %93 = arith.mulf %89, %92 : vector<64x256xf32>
    %94 = vector.shape_cast %93 : vector<64x256xf32> to vector<8x8x256xf32>
    %95 = arith.truncf %94 : vector<8x8x256xf32> to vector<8x8x256xbf16>
    %c0_136 = arith.constant 0 : index
    %c0_137 = arith.constant 0 : index
    %c0_138 = arith.constant 0 : index
    %c0_139 = arith.constant 0 : index
    %96 = vector.load %arg4[%c0_136, %c0_137, %c0_138, %c0_139] : memref<1x8x8x256xbf16, #tpu.memory_space<vmem>>, vector<1x8x8x256xbf16>
    %97 = vector.shape_cast %96 : vector<1x8x8x256xbf16> to vector<8x8x256xbf16>
    %98 = vector.shape_cast %95 : vector<8x8x256xbf16> to vector<1x8x8x256xbf16>
    tpu.vector_store %arg4[%c0_136, %c0_137, %c0_138, %c0_139], %98 {strides = array<i32>} : memref<1x8x8x256xbf16, #tpu.memory_space<vmem>>, vector<1x8x8x256xbf16>,
    return
  }
  func.func @transform_0(%arg0: i32) -> (i32, i32, i32, i32, i32, i32) {
    %c0_i32 = arith.constant 0 : i32
    %c0_i32_0 = arith.constant 0 : i32
    %c0_i32_1 = arith.constant 0 : i32
    %c0_i32_2 = arith.constant 0 : i32
    %c0_i32_3 = arith.constant 0 : i32
    %c0_i32_4 = arith.constant 0 : i32
    return %arg0, %c0_i32, %c0_i32_0, %c0_i32_1, %c0_i32_2, %c0_i32_3 : i32, i32, i32, i32, i32, i32
  }
  func.func @transform_1(%arg0: i32) -> (i32, i32, i32, i32) {
    %c0_i32 = arith.constant 0 : i32
    %c0_i32_0 = arith.constant 0 : i32
    %c0_i32_1 = arith.constant 0 : i32
    %c0_i32_2 = arith.constant 0 : i32
    %c0_i32_3 = arith.constant 0 : i32
    return %c0_i32, %c0_i32_0, %c0_i32_1, %c0_i32_2 : i32, i32, i32, i32
  }
  func.func @transform_2(%arg0: i32) -> (i32, i32) {
    %c0_i32 = arith.constant 0 : i32
    %c0_i32_0 = arith.constant 0 : i32
    %c0_i32_1 = arith.constant 0 : i32
    return %c0_i32, %c0_i32_0 : i32, i32
  }
  func.func @transform_3(%arg0: i32) -> (i32, i32, i32, i32) {
    %c0_i32 = arith.constant 0 : i32
    %c0_i32_0 = arith.constant 0 : i32
    %c0_i32_1 = arith.constant 0 : i32
    %c0_i32_2 = arith.constant 0 : i32
    return %arg0, %c0_i32, %c0_i32_0, %c0_i32_1 : i32, i32, i32, i32
  }
}

module attributes {stable_mosaic.version = 11 : i64} {
  func.func @_dual1x1_kernel(%arg0: i32, %arg1: memref<128x256xbf16, #tpu.memory_space<vmem>>, %arg2: memref<256x128xbf16, #tpu.memory_space<vmem>>, %arg3: memref<1x128xf32, #tpu.memory_space<vmem>>, %arg4: memref<256x128xbf16, #tpu.memory_space<vmem>>, %arg5: memref<1x128xf32, #tpu.memory_space<vmem>>, %arg6: memref<128x128xbf16, #tpu.memory_space<vmem>>, %arg7: memref<128x128xbf16, #tpu.memory_space<vmem>>) attributes {dimension_semantics = [#tpu.dimension_semantics<parallel>], iteration_bounds = array<i64: 1>, scalar_prefetch = 0 : i64, scratch_operands = 0 : i64, tpu.core_type = #tpu.core_type<tc>, window_params = [{transform_indices = @transform_0, window_bounds = array<i64: 128, 256>}, {pipeline_mode = #tpu.pipeline_mode<synchronous>, transform_indices = @transform_1, window_bounds = array<i64: 256, 128>}, {pipeline_mode = #tpu.pipeline_mode<synchronous>, transform_indices = @transform_2, window_bounds = array<i64: 1, 128>}, {pipeline_mode = #tpu.pipeline_mode<synchronous>, transform_indices = @transform_3, window_bounds = array<i64: 256, 128>}, {pipeline_mode = #tpu.pipeline_mode<synchronous>, transform_indices = @transform_4, window_bounds = array<i64: 1, 128>}, {transform_indices = @transform_5, window_bounds = array<i64: 128, 128>}, {transform_indices = @transform_6, window_bounds = array<i64: 128, 128>}]} {
    %c0 = arith.constant 0 : index
    %c0_0 = arith.constant 0 : index
    %0 = vector.load %arg1[%c0, %c0_0] : memref<128x256xbf16, #tpu.memory_space<vmem>>, vector<128x256xbf16>
    %c0_1 = arith.constant 0 : index
    %c0_2 = arith.constant 0 : index
    %1 = vector.load %arg2[%c0_1, %c0_2] : memref<256x128xbf16, #tpu.memory_space<vmem>>, vector<256x128xbf16>
    %cst = arith.constant dense<0.000000e+00> : vector<128x128xf32>
    %2 = tpu.matmul %0, %1, %cst {dimension_numbers = #tpu.dot_dimension_numbers<[1], [0], [0], [1], [0, 0, 1, 1], [], []>} : vector<128x256xbf16>, vector<256x128xbf16>, vector<128x128xf32> -> vector<128x128xf32>
    %c0_3 = arith.constant 0 : index
    %c0_4 = arith.constant 0 : index
    %3 = vector.load %arg3[%c0_3, %c0_4] : memref<1x128xf32, #tpu.memory_space<vmem>>, vector<1x128xf32>
    %4 = vector.broadcast %3 : vector<1x128xf32> to vector<128x128xf32>
    %5 = arith.addf %2, %4 : vector<128x128xf32>
    %cst_5 = arith.constant 2.000000e+01 : f32
    %6 = vector.broadcast %cst_5 : f32 to vector<128x128xf32>
    %7 = arith.minimumf %5, %6 : vector<128x128xf32>
    %8 = math.exp %7 : vector<128x128xf32>
    %cst_6 = arith.constant 2.000000e+00 : f32
    %9 = vector.broadcast %cst_6 : f32 to vector<128x128xf32>
    %10 = arith.addf %8, %9 : vector<128x128xf32>
    %11 = arith.mulf %8, %10 : vector<128x128xf32>
    %12 = arith.mulf %5, %11 : vector<128x128xf32>
    %cst_7 = arith.constant 2.000000e+00 : f32
    %13 = vector.broadcast %cst_7 : f32 to vector<128x128xf32>
    %14 = arith.addf %11, %13 : vector<128x128xf32>
    %15 = tpu.reciprocal %14 {approx = true} : vector<128x128xf32> -> vector<128x128xf32>
    %16 = arith.mulf %12, %15 : vector<128x128xf32>
    %17 = arith.truncf %16 : vector<128x128xf32> to vector<128x128xbf16>
    %c0_8 = arith.constant 0 : index
    %c0_9 = arith.constant 0 : index
    %18 = vector.load %arg6[%c0_8, %c0_9] : memref<128x128xbf16, #tpu.memory_space<vmem>>, vector<128x128xbf16>
    tpu.vector_store %arg6[%c0_8, %c0_9], %17 {strides = array<i32>} : memref<128x128xbf16, #tpu.memory_space<vmem>>, vector<128x128xbf16>,
    %c0_10 = arith.constant 0 : index
    %c0_11 = arith.constant 0 : index
    %19 = vector.load %arg4[%c0_10, %c0_11] : memref<256x128xbf16, #tpu.memory_space<vmem>>, vector<256x128xbf16>
    %cst_12 = arith.constant dense<0.000000e+00> : vector<128x128xf32>
    %20 = tpu.matmul %0, %19, %cst_12 {dimension_numbers = #tpu.dot_dimension_numbers<[1], [0], [0], [1], [0, 0, 1, 1], [], []>} : vector<128x256xbf16>, vector<256x128xbf16>, vector<128x128xf32> -> vector<128x128xf32>
    %c0_13 = arith.constant 0 : index
    %c0_14 = arith.constant 0 : index
    %21 = vector.load %arg5[%c0_13, %c0_14] : memref<1x128xf32, #tpu.memory_space<vmem>>, vector<1x128xf32>
    %22 = vector.broadcast %21 : vector<1x128xf32> to vector<128x128xf32>
    %23 = arith.addf %20, %22 : vector<128x128xf32>
    %cst_15 = arith.constant 2.000000e+01 : f32
    %24 = vector.broadcast %cst_15 : f32 to vector<128x128xf32>
    %25 = arith.minimumf %23, %24 : vector<128x128xf32>
    %26 = math.exp %25 : vector<128x128xf32>
    %cst_16 = arith.constant 2.000000e+00 : f32
    %27 = vector.broadcast %cst_16 : f32 to vector<128x128xf32>
    %28 = arith.addf %26, %27 : vector<128x128xf32>
    %29 = arith.mulf %26, %28 : vector<128x128xf32>
    %30 = arith.mulf %23, %29 : vector<128x128xf32>
    %cst_17 = arith.constant 2.000000e+00 : f32
    %31 = vector.broadcast %cst_17 : f32 to vector<128x128xf32>
    %32 = arith.addf %29, %31 : vector<128x128xf32>
    %33 = tpu.reciprocal %32 {approx = true} : vector<128x128xf32> -> vector<128x128xf32>
    %34 = arith.mulf %30, %33 : vector<128x128xf32>
    %35 = arith.truncf %34 : vector<128x128xf32> to vector<128x128xbf16>
    %c0_18 = arith.constant 0 : index
    %c0_19 = arith.constant 0 : index
    %36 = vector.load %arg7[%c0_18, %c0_19] : memref<128x128xbf16, #tpu.memory_space<vmem>>, vector<128x128xbf16>
    tpu.vector_store %arg7[%c0_18, %c0_19], %35 {strides = array<i32>} : memref<128x128xbf16, #tpu.memory_space<vmem>>, vector<128x128xbf16>,
    return
  }
  func.func @transform_0(%arg0: i32) -> (i32, i32) {
    %c0_i32 = arith.constant 0 : i32
    %c0_i32_0 = arith.constant 0 : i32
    return %arg0, %c0_i32 : i32, i32
  }
  func.func @transform_1(%arg0: i32) -> (i32, i32) {
    %c0_i32 = arith.constant 0 : i32
    %c0_i32_0 = arith.constant 0 : i32
    %c0_i32_1 = arith.constant 0 : i32
    return %c0_i32, %c0_i32_0 : i32, i32
  }
  func.func @transform_2(%arg0: i32) -> (i32, i32) {
    %c0_i32 = arith.constant 0 : i32
    %c0_i32_0 = arith.constant 0 : i32
    %c0_i32_1 = arith.constant 0 : i32
    return %c0_i32, %c0_i32_0 : i32, i32
  }
  func.func @transform_3(%arg0: i32) -> (i32, i32) {
    %c0_i32 = arith.constant 0 : i32
    %c0_i32_0 = arith.constant 0 : i32
    %c0_i32_1 = arith.constant 0 : i32
    return %c0_i32, %c0_i32_0 : i32, i32
  }
  func.func @transform_4(%arg0: i32) -> (i32, i32) {
    %c0_i32 = arith.constant 0 : i32
    %c0_i32_0 = arith.constant 0 : i32
    %c0_i32_1 = arith.constant 0 : i32
    return %c0_i32, %c0_i32_0 : i32, i32
  }
  func.func @transform_5(%arg0: i32) -> (i32, i32) {
    %c0_i32 = arith.constant 0 : i32
    %c0_i32_0 = arith.constant 0 : i32
    return %arg0, %c0_i32 : i32, i32
  }
  func.func @transform_6(%arg0: i32) -> (i32, i32) {
    %c0_i32 = arith.constant 0 : i32
    %c0_i32_0 = arith.constant 0 : i32
    return %arg0, %c0_i32 : i32, i32
  }
}

module attributes {stable_mosaic.version = 11 : i64} {
  func.func @kernel(%arg0: i32, %arg1: memref<1x8x8x128xbf16, #tpu.memory_space<vmem>>, %arg2: memref<128x128xbf16, #tpu.memory_space<vmem>>, %arg3: memref<1x128xf32, #tpu.memory_space<vmem>>, %arg4: memref<3x3x128x128xbf16, #tpu.memory_space<vmem>>, %arg5: memref<1x128xf32, #tpu.memory_space<vmem>>, %arg6: memref<1x8x8x128xbf16, #tpu.memory_space<vmem>>, %arg7: memref<10x16x128xbf16, #tpu.memory_space<vmem>>, %arg8: memref<64x128xf32, #tpu.memory_space<vmem>>) attributes {dimension_semantics = [#tpu.dimension_semantics<parallel>], iteration_bounds = array<i64: 2>, scalar_prefetch = 0 : i64, scratch_operands = 2 : i64, tpu.core_type = #tpu.core_type<tc>, window_params = [{transform_indices = @transform_0, window_bounds = array<i64: 1, 8, 8, 128>}, {pipeline_mode = #tpu.pipeline_mode<synchronous>, transform_indices = @transform_1, window_bounds = array<i64: 128, 128>}, {pipeline_mode = #tpu.pipeline_mode<synchronous>, transform_indices = @transform_2, window_bounds = array<i64: 1, 128>}, {pipeline_mode = #tpu.pipeline_mode<synchronous>, transform_indices = @transform_3, window_bounds = array<i64: 3, 3, 128, 128>}, {pipeline_mode = #tpu.pipeline_mode<synchronous>, transform_indices = @transform_4, window_bounds = array<i64: 1, 128>}, {transform_indices = @transform_5, window_bounds = array<i64: 1, 8, 8, 128>}]} {
    %c0 = arith.constant 0 : index
    %c0_0 = arith.constant 0 : index
    %c0_1 = arith.constant 0 : index
    %c0_2 = arith.constant 0 : index
    %0 = vector.load %arg1[%c0, %c0_0, %c0_1, %c0_2] : memref<1x8x8x128xbf16, #tpu.memory_space<vmem>>, vector<1x8x8x128xbf16>
    %1 = vector.shape_cast %0 : vector<1x8x8x128xbf16> to vector<8x8x128xbf16>
    %2 = vector.shape_cast %1 : vector<8x8x128xbf16> to vector<64x128xbf16>
    %c0_3 = arith.constant 0 : index
    %c0_4 = arith.constant 0 : index
    %3 = vector.load %arg2[%c0_3, %c0_4] : memref<128x128xbf16, #tpu.memory_space<vmem>>, vector<128x128xbf16>
    %cst = arith.constant dense<0.000000e+00> : vector<64x128xf32>
    %4 = tpu.matmul %2, %3, %cst {dimension_numbers = #tpu.dot_dimension_numbers<[1], [0], [0], [1], [0, 0, 1, 1], [], []>} : vector<64x128xbf16>, vector<128x128xbf16>, vector<64x128xf32> -> vector<64x128xf32>
    %c0_5 = arith.constant 0 : index
    %c0_6 = arith.constant 0 : index
    %5 = vector.load %arg3[%c0_5, %c0_6] : memref<1x128xf32, #tpu.memory_space<vmem>>, vector<1x128xf32>
    %6 = vector.broadcast %5 : vector<1x128xf32> to vector<64x128xf32>
    %7 = arith.addf %4, %6 : vector<64x128xf32>
    %cst_7 = arith.constant 2.000000e+01 : f32
    %8 = vector.broadcast %cst_7 : f32 to vector<64x128xf32>
    %9 = arith.minimumf %7, %8 : vector<64x128xf32>
    %10 = math.exp %9 : vector<64x128xf32>
    %cst_8 = arith.constant 2.000000e+00 : f32
    %11 = vector.broadcast %cst_8 : f32 to vector<64x128xf32>
    %12 = arith.addf %10, %11 : vector<64x128xf32>
    %13 = arith.mulf %10, %12 : vector<64x128xf32>
    %14 = arith.mulf %7, %13 : vector<64x128xf32>
    %cst_9 = arith.constant 2.000000e+00 : f32
    %15 = vector.broadcast %cst_9 : f32 to vector<64x128xf32>
    %16 = arith.addf %13, %15 : vector<64x128xf32>
    %17 = tpu.reciprocal %16 {approx = true} : vector<64x128xf32> -> vector<64x128xf32>
    %18 = arith.mulf %14, %17 : vector<64x128xf32>
    %19 = arith.truncf %18 : vector<64x128xf32> to vector<64x128xbf16>
    %cst_10 = arith.constant 0.000000e+00 : bf16
    %20 = vector.broadcast %cst_10 : bf16 to vector<10x16x128xbf16>
    %c0_11 = arith.constant 0 : index
    %c0_12 = arith.constant 0 : index
    %c0_13 = arith.constant 0 : index
    %21 = vector.load %arg7[%c0_11, %c0_12, %c0_13] : memref<10x16x128xbf16, #tpu.memory_space<vmem>>, vector<10x16x128xbf16>
    tpu.vector_store %arg7[%c0_11, %c0_12, %c0_13], %20 {strides = array<i32>} : memref<10x16x128xbf16, #tpu.memory_space<vmem>>, vector<10x16x128xbf16>,
    %22 = vector.shape_cast %19 : vector<64x128xbf16> to vector<8x8x128xbf16>
    %c1 = arith.constant 1 : index
    %c1_14 = arith.constant 1 : index
    %c0_15 = arith.constant 0 : index
    %23 = vector.load %arg7[%c1, %c1_14, %c0_15] : memref<10x16x128xbf16, #tpu.memory_space<vmem>>, vector<8x8x128xbf16>
    tpu.vector_store %arg7[%c1, %c1_14, %c0_15], %22 {strides = array<i32>} : memref<10x16x128xbf16, #tpu.memory_space<vmem>>, vector<8x8x128xbf16>,
    %c0_16 = arith.constant 0 : index
    %c0_17 = arith.constant 0 : index
    %c0_18 = arith.constant 0 : index
    %24 = vector.load %arg7[%c0_16, %c0_17, %c0_18] : memref<10x16x128xbf16, #tpu.memory_space<vmem>>, vector<8x8x128xbf16>
    %25 = vector.shape_cast %24 : vector<8x8x128xbf16> to vector<64x128xbf16>
    %c0_19 = arith.constant 0 : index
    %c0_20 = arith.constant 0 : index
    %c0_21 = arith.constant 0 : index
    %c0_22 = arith.constant 0 : index
    %26 = vector.load %arg4[%c0_19, %c0_20, %c0_21, %c0_22] : memref<3x3x128x128xbf16, #tpu.memory_space<vmem>>, vector<1x1x128x128xbf16>
    %27 = vector.shape_cast %26 : vector<1x1x128x128xbf16> to vector<128x128xbf16>
    %cst_23 = arith.constant dense<0.000000e+00> : vector<64x128xf32>
    %28 = tpu.matmul %25, %27, %cst_23 {dimension_numbers = #tpu.dot_dimension_numbers<[1], [0], [0], [1], [0, 0, 1, 1], [], []>} : vector<64x128xbf16>, vector<128x128xbf16>, vector<64x128xf32> -> vector<64x128xf32>
    %c0_24 = arith.constant 0 : index
    %c0_25 = arith.constant 0 : index
    %29 = vector.load %arg8[%c0_24, %c0_25] : memref<64x128xf32, #tpu.memory_space<vmem>>, vector<64x128xf32>
    tpu.vector_store %arg8[%c0_24, %c0_25], %28 {strides = array<i32>} : memref<64x128xf32, #tpu.memory_space<vmem>>, vector<64x128xf32>,
    %c0_26 = arith.constant 0 : index
    %c1_27 = arith.constant 1 : index
    %c0_28 = arith.constant 0 : index
    %30 = vector.load %arg7[%c0_26, %c1_27, %c0_28] : memref<10x16x128xbf16, #tpu.memory_space<vmem>>, vector<8x8x128xbf16>
    %31 = vector.shape_cast %30 : vector<8x8x128xbf16> to vector<64x128xbf16>
    %c0_29 = arith.constant 0 : index
    %c1_30 = arith.constant 1 : index
    %c0_31 = arith.constant 0 : index
    %c0_32 = arith.constant 0 : index
    %32 = vector.load %arg4[%c0_29, %c1_30, %c0_31, %c0_32] : memref<3x3x128x128xbf16, #tpu.memory_space<vmem>>, vector<1x1x128x128xbf16>
    %33 = vector.shape_cast %32 : vector<1x1x128x128xbf16> to vector<128x128xbf16>
    %cst_33 = arith.constant dense<0.000000e+00> : vector<64x128xf32>
    %34 = tpu.matmul %31, %33, %cst_33 {dimension_numbers = #tpu.dot_dimension_numbers<[1], [0], [0], [1], [0, 0, 1, 1], [], []>} : vector<64x128xbf16>, vector<128x128xbf16>, vector<64x128xf32> -> vector<64x128xf32>
    %c0_34 = arith.constant 0 : index
    %c0_35 = arith.constant 0 : index
    %35 = vector.load %arg8[%c0_34, %c0_35] : memref<64x128xf32, #tpu.memory_space<vmem>>, vector<64x128xf32>
    %36 = arith.addf %35, %34 : vector<64x128xf32>
    %c0_36 = arith.constant 0 : index
    %c0_37 = arith.constant 0 : index
    %37 = vector.load %arg8[%c0_36, %c0_37] : memref<64x128xf32, #tpu.memory_space<vmem>>, vector<64x128xf32>
    tpu.vector_store %arg8[%c0_36, %c0_37], %36 {strides = array<i32>} : memref<64x128xf32, #tpu.memory_space<vmem>>, vector<64x128xf32>,
    %c0_38 = arith.constant 0 : index
    %c2 = arith.constant 2 : index
    %c0_39 = arith.constant 0 : index
    %38 = vector.load %arg7[%c0_38, %c2, %c0_39] : memref<10x16x128xbf16, #tpu.memory_space<vmem>>, vector<8x8x128xbf16>
    %39 = vector.shape_cast %38 : vector<8x8x128xbf16> to vector<64x128xbf16>
    %c0_40 = arith.constant 0 : index
    %c2_41 = arith.constant 2 : index
    %c0_42 = arith.constant 0 : index
    %c0_43 = arith.constant 0 : index
    %40 = vector.load %arg4[%c0_40, %c2_41, %c0_42, %c0_43] : memref<3x3x128x128xbf16, #tpu.memory_space<vmem>>, vector<1x1x128x128xbf16>
    %41 = vector.shape_cast %40 : vector<1x1x128x128xbf16> to vector<128x128xbf16>
    %cst_44 = arith.constant dense<0.000000e+00> : vector<64x128xf32>
    %42 = tpu.matmul %39, %41, %cst_44 {dimension_numbers = #tpu.dot_dimension_numbers<[1], [0], [0], [1], [0, 0, 1, 1], [], []>} : vector<64x128xbf16>, vector<128x128xbf16>, vector<64x128xf32> -> vector<64x128xf32>
    %c0_45 = arith.constant 0 : index
    %c0_46 = arith.constant 0 : index
    %43 = vector.load %arg8[%c0_45, %c0_46] : memref<64x128xf32, #tpu.memory_space<vmem>>, vector<64x128xf32>
    %44 = arith.addf %43, %42 : vector<64x128xf32>
    %c0_47 = arith.constant 0 : index
    %c0_48 = arith.constant 0 : index
    %45 = vector.load %arg8[%c0_47, %c0_48] : memref<64x128xf32, #tpu.memory_space<vmem>>, vector<64x128xf32>
    tpu.vector_store %arg8[%c0_47, %c0_48], %44 {strides = array<i32>} : memref<64x128xf32, #tpu.memory_space<vmem>>, vector<64x128xf32>,
    %c1_49 = arith.constant 1 : index
    %c0_50 = arith.constant 0 : index
    %c0_51 = arith.constant 0 : index
    %46 = vector.load %arg7[%c1_49, %c0_50, %c0_51] : memref<10x16x128xbf16, #tpu.memory_space<vmem>>, vector<8x8x128xbf16>
    %47 = vector.shape_cast %46 : vector<8x8x128xbf16> to vector<64x128xbf16>
    %c1_52 = arith.constant 1 : index
    %c0_53 = arith.constant 0 : index
    %c0_54 = arith.constant 0 : index
    %c0_55 = arith.constant 0 : index
    %48 = vector.load %arg4[%c1_52, %c0_53, %c0_54, %c0_55] : memref<3x3x128x128xbf16, #tpu.memory_space<vmem>>, vector<1x1x128x128xbf16>
    %49 = vector.shape_cast %48 : vector<1x1x128x128xbf16> to vector<128x128xbf16>
    %cst_56 = arith.constant dense<0.000000e+00> : vector<64x128xf32>
    %50 = tpu.matmul %47, %49, %cst_56 {dimension_numbers = #tpu.dot_dimension_numbers<[1], [0], [0], [1], [0, 0, 1, 1], [], []>} : vector<64x128xbf16>, vector<128x128xbf16>, vector<64x128xf32> -> vector<64x128xf32>
    %c0_57 = arith.constant 0 : index
    %c0_58 = arith.constant 0 : index
    %51 = vector.load %arg8[%c0_57, %c0_58] : memref<64x128xf32, #tpu.memory_space<vmem>>, vector<64x128xf32>
    %52 = arith.addf %51, %50 : vector<64x128xf32>
    %c0_59 = arith.constant 0 : index
    %c0_60 = arith.constant 0 : index
    %53 = vector.load %arg8[%c0_59, %c0_60] : memref<64x128xf32, #tpu.memory_space<vmem>>, vector<64x128xf32>
    tpu.vector_store %arg8[%c0_59, %c0_60], %52 {strides = array<i32>} : memref<64x128xf32, #tpu.memory_space<vmem>>, vector<64x128xf32>,
    %c1_61 = arith.constant 1 : index
    %c1_62 = arith.constant 1 : index
    %c0_63 = arith.constant 0 : index
    %54 = vector.load %arg7[%c1_61, %c1_62, %c0_63] : memref<10x16x128xbf16, #tpu.memory_space<vmem>>, vector<8x8x128xbf16>
    %55 = vector.shape_cast %54 : vector<8x8x128xbf16> to vector<64x128xbf16>
    %c1_64 = arith.constant 1 : index
    %c1_65 = arith.constant 1 : index
    %c0_66 = arith.constant 0 : index
    %c0_67 = arith.constant 0 : index
    %56 = vector.load %arg4[%c1_64, %c1_65, %c0_66, %c0_67] : memref<3x3x128x128xbf16, #tpu.memory_space<vmem>>, vector<1x1x128x128xbf16>
    %57 = vector.shape_cast %56 : vector<1x1x128x128xbf16> to vector<128x128xbf16>
    %cst_68 = arith.constant dense<0.000000e+00> : vector<64x128xf32>
    %58 = tpu.matmul %55, %57, %cst_68 {dimension_numbers = #tpu.dot_dimension_numbers<[1], [0], [0], [1], [0, 0, 1, 1], [], []>} : vector<64x128xbf16>, vector<128x128xbf16>, vector<64x128xf32> -> vector<64x128xf32>
    %c0_69 = arith.constant 0 : index
    %c0_70 = arith.constant 0 : index
    %59 = vector.load %arg8[%c0_69, %c0_70] : memref<64x128xf32, #tpu.memory_space<vmem>>, vector<64x128xf32>
    %60 = arith.addf %59, %58 : vector<64x128xf32>
    %c0_71 = arith.constant 0 : index
    %c0_72 = arith.constant 0 : index
    %61 = vector.load %arg8[%c0_71, %c0_72] : memref<64x128xf32, #tpu.memory_space<vmem>>, vector<64x128xf32>
    tpu.vector_store %arg8[%c0_71, %c0_72], %60 {strides = array<i32>} : memref<64x128xf32, #tpu.memory_space<vmem>>, vector<64x128xf32>,
    %c1_73 = arith.constant 1 : index
    %c2_74 = arith.constant 2 : index
    %c0_75 = arith.constant 0 : index
    %62 = vector.load %arg7[%c1_73, %c2_74, %c0_75] : memref<10x16x128xbf16, #tpu.memory_space<vmem>>, vector<8x8x128xbf16>
    %63 = vector.shape_cast %62 : vector<8x8x128xbf16> to vector<64x128xbf16>
    %c1_76 = arith.constant 1 : index
    %c2_77 = arith.constant 2 : index
    %c0_78 = arith.constant 0 : index
    %c0_79 = arith.constant 0 : index
    %64 = vector.load %arg4[%c1_76, %c2_77, %c0_78, %c0_79] : memref<3x3x128x128xbf16, #tpu.memory_space<vmem>>, vector<1x1x128x128xbf16>
    %65 = vector.shape_cast %64 : vector<1x1x128x128xbf16> to vector<128x128xbf16>
    %cst_80 = arith.constant dense<0.000000e+00> : vector<64x128xf32>
    %66 = tpu.matmul %63, %65, %cst_80 {dimension_numbers = #tpu.dot_dimension_numbers<[1], [0], [0], [1], [0, 0, 1, 1], [], []>} : vector<64x128xbf16>, vector<128x128xbf16>, vector<64x128xf32> -> vector<64x128xf32>
    %c0_81 = arith.constant 0 : index
    %c0_82 = arith.constant 0 : index
    %67 = vector.load %arg8[%c0_81, %c0_82] : memref<64x128xf32, #tpu.memory_space<vmem>>, vector<64x128xf32>
    %68 = arith.addf %67, %66 : vector<64x128xf32>
    %c0_83 = arith.constant 0 : index
    %c0_84 = arith.constant 0 : index
    %69 = vector.load %arg8[%c0_83, %c0_84] : memref<64x128xf32, #tpu.memory_space<vmem>>, vector<64x128xf32>
    tpu.vector_store %arg8[%c0_83, %c0_84], %68 {strides = array<i32>} : memref<64x128xf32, #tpu.memory_space<vmem>>, vector<64x128xf32>,
    %c2_85 = arith.constant 2 : index
    %c0_86 = arith.constant 0 : index
    %c0_87 = arith.constant 0 : index
    %70 = vector.load %arg7[%c2_85, %c0_86, %c0_87] : memref<10x16x128xbf16, #tpu.memory_space<vmem>>, vector<8x8x128xbf16>
    %71 = vector.shape_cast %70 : vector<8x8x128xbf16> to vector<64x128xbf16>
    %c2_88 = arith.constant 2 : index
    %c0_89 = arith.constant 0 : index
    %c0_90 = arith.constant 0 : index
    %c0_91 = arith.constant 0 : index
    %72 = vector.load %arg4[%c2_88, %c0_89, %c0_90, %c0_91] : memref<3x3x128x128xbf16, #tpu.memory_space<vmem>>, vector<1x1x128x128xbf16>
    %73 = vector.shape_cast %72 : vector<1x1x128x128xbf16> to vector<128x128xbf16>
    %cst_92 = arith.constant dense<0.000000e+00> : vector<64x128xf32>
    %74 = tpu.matmul %71, %73, %cst_92 {dimension_numbers = #tpu.dot_dimension_numbers<[1], [0], [0], [1], [0, 0, 1, 1], [], []>} : vector<64x128xbf16>, vector<128x128xbf16>, vector<64x128xf32> -> vector<64x128xf32>
    %c0_93 = arith.constant 0 : index
    %c0_94 = arith.constant 0 : index
    %75 = vector.load %arg8[%c0_93, %c0_94] : memref<64x128xf32, #tpu.memory_space<vmem>>, vector<64x128xf32>
    %76 = arith.addf %75, %74 : vector<64x128xf32>
    %c0_95 = arith.constant 0 : index
    %c0_96 = arith.constant 0 : index
    %77 = vector.load %arg8[%c0_95, %c0_96] : memref<64x128xf32, #tpu.memory_space<vmem>>, vector<64x128xf32>
    tpu.vector_store %arg8[%c0_95, %c0_96], %76 {strides = array<i32>} : memref<64x128xf32, #tpu.memory_space<vmem>>, vector<64x128xf32>,
    %c2_97 = arith.constant 2 : index
    %c1_98 = arith.constant 1 : index
    %c0_99 = arith.constant 0 : index
    %78 = vector.load %arg7[%c2_97, %c1_98, %c0_99] : memref<10x16x128xbf16, #tpu.memory_space<vmem>>, vector<8x8x128xbf16>
    %79 = vector.shape_cast %78 : vector<8x8x128xbf16> to vector<64x128xbf16>
    %c2_100 = arith.constant 2 : index
    %c1_101 = arith.constant 1 : index
    %c0_102 = arith.constant 0 : index
    %c0_103 = arith.constant 0 : index
    %80 = vector.load %arg4[%c2_100, %c1_101, %c0_102, %c0_103] : memref<3x3x128x128xbf16, #tpu.memory_space<vmem>>, vector<1x1x128x128xbf16>
    %81 = vector.shape_cast %80 : vector<1x1x128x128xbf16> to vector<128x128xbf16>
    %cst_104 = arith.constant dense<0.000000e+00> : vector<64x128xf32>
    %82 = tpu.matmul %79, %81, %cst_104 {dimension_numbers = #tpu.dot_dimension_numbers<[1], [0], [0], [1], [0, 0, 1, 1], [], []>} : vector<64x128xbf16>, vector<128x128xbf16>, vector<64x128xf32> -> vector<64x128xf32>
    %c0_105 = arith.constant 0 : index
    %c0_106 = arith.constant 0 : index
    %83 = vector.load %arg8[%c0_105, %c0_106] : memref<64x128xf32, #tpu.memory_space<vmem>>, vector<64x128xf32>
    %84 = arith.addf %83, %82 : vector<64x128xf32>
    %c0_107 = arith.constant 0 : index
    %c0_108 = arith.constant 0 : index
    %85 = vector.load %arg8[%c0_107, %c0_108] : memref<64x128xf32, #tpu.memory_space<vmem>>, vector<64x128xf32>
    tpu.vector_store %arg8[%c0_107, %c0_108], %84 {strides = array<i32>} : memref<64x128xf32, #tpu.memory_space<vmem>>, vector<64x128xf32>,
    %c2_109 = arith.constant 2 : index
    %c2_110 = arith.constant 2 : index
    %c0_111 = arith.constant 0 : index
    %86 = vector.load %arg7[%c2_109, %c2_110, %c0_111] : memref<10x16x128xbf16, #tpu.memory_space<vmem>>, vector<8x8x128xbf16>
    %87 = vector.shape_cast %86 : vector<8x8x128xbf16> to vector<64x128xbf16>
    %c2_112 = arith.constant 2 : index
    %c2_113 = arith.constant 2 : index
    %c0_114 = arith.constant 0 : index
    %c0_115 = arith.constant 0 : index
    %88 = vector.load %arg4[%c2_112, %c2_113, %c0_114, %c0_115] : memref<3x3x128x128xbf16, #tpu.memory_space<vmem>>, vector<1x1x128x128xbf16>
    %89 = vector.shape_cast %88 : vector<1x1x128x128xbf16> to vector<128x128xbf16>
    %cst_116 = arith.constant dense<0.000000e+00> : vector<64x128xf32>
    %90 = tpu.matmul %87, %89, %cst_116 {dimension_numbers = #tpu.dot_dimension_numbers<[1], [0], [0], [1], [0, 0, 1, 1], [], []>} : vector<64x128xbf16>, vector<128x128xbf16>, vector<64x128xf32> -> vector<64x128xf32>
    %c0_117 = arith.constant 0 : index
    %c0_118 = arith.constant 0 : index
    %91 = vector.load %arg8[%c0_117, %c0_118] : memref<64x128xf32, #tpu.memory_space<vmem>>, vector<64x128xf32>
    %92 = arith.addf %91, %90 : vector<64x128xf32>
    %c0_119 = arith.constant 0 : index
    %c0_120 = arith.constant 0 : index
    %93 = vector.load %arg8[%c0_119, %c0_120] : memref<64x128xf32, #tpu.memory_space<vmem>>, vector<64x128xf32>
    tpu.vector_store %arg8[%c0_119, %c0_120], %92 {strides = array<i32>} : memref<64x128xf32, #tpu.memory_space<vmem>>, vector<64x128xf32>,
    %c0_121 = arith.constant 0 : index
    %c0_122 = arith.constant 0 : index
    %94 = vector.load %arg8[%c0_121, %c0_122] : memref<64x128xf32, #tpu.memory_space<vmem>>, vector<64x128xf32>
    %c0_123 = arith.constant 0 : index
    %c0_124 = arith.constant 0 : index
    %95 = vector.load %arg5[%c0_123, %c0_124] : memref<1x128xf32, #tpu.memory_space<vmem>>, vector<1x128xf32>
    %96 = vector.broadcast %95 : vector<1x128xf32> to vector<64x128xf32>
    %97 = arith.addf %94, %96 : vector<64x128xf32>
    %cst_125 = arith.constant 2.000000e+01 : f32
    %98 = vector.broadcast %cst_125 : f32 to vector<64x128xf32>
    %99 = arith.minimumf %97, %98 : vector<64x128xf32>
    %100 = math.exp %99 : vector<64x128xf32>
    %cst_126 = arith.constant 2.000000e+00 : f32
    %101 = vector.broadcast %cst_126 : f32 to vector<64x128xf32>
    %102 = arith.addf %100, %101 : vector<64x128xf32>
    %103 = arith.mulf %100, %102 : vector<64x128xf32>
    %104 = arith.mulf %97, %103 : vector<64x128xf32>
    %cst_127 = arith.constant 2.000000e+00 : f32
    %105 = vector.broadcast %cst_127 : f32 to vector<64x128xf32>
    %106 = arith.addf %103, %105 : vector<64x128xf32>
    %107 = tpu.reciprocal %106 {approx = true} : vector<64x128xf32> -> vector<64x128xf32>
    %108 = arith.mulf %104, %107 : vector<64x128xf32>
    %109 = arith.extf %2 : vector<64x128xbf16> to vector<64x128xf32>
    %110 = arith.addf %108, %109 : vector<64x128xf32>
    %111 = vector.shape_cast %110 : vector<64x128xf32> to vector<8x8x128xf32>
    %112 = arith.truncf %111 : vector<8x8x128xf32> to vector<8x8x128xbf16>
    %c0_128 = arith.constant 0 : index
    %c0_129 = arith.constant 0 : index
    %c0_130 = arith.constant 0 : index
    %c0_131 = arith.constant 0 : index
    %113 = vector.load %arg6[%c0_128, %c0_129, %c0_130, %c0_131] : memref<1x8x8x128xbf16, #tpu.memory_space<vmem>>, vector<1x8x8x128xbf16>
    %114 = vector.shape_cast %113 : vector<1x8x8x128xbf16> to vector<8x8x128xbf16>
    %115 = vector.shape_cast %112 : vector<8x8x128xbf16> to vector<1x8x8x128xbf16>
    tpu.vector_store %arg6[%c0_128, %c0_129, %c0_130, %c0_131], %115 {strides = array<i32>} : memref<1x8x8x128xbf16, #tpu.memory_space<vmem>>, vector<1x8x8x128xbf16>,
    return
  }
  func.func @transform_0(%arg0: i32) -> (i32, i32, i32, i32) {
    %c0_i32 = arith.constant 0 : i32
    %c0_i32_0 = arith.constant 0 : i32
    %c0_i32_1 = arith.constant 0 : i32
    %c0_i32_2 = arith.constant 0 : i32
    return %arg0, %c0_i32, %c0_i32_0, %c0_i32_1 : i32, i32, i32, i32
  }
  func.func @transform_1(%arg0: i32) -> (i32, i32) {
    %c0_i32 = arith.constant 0 : i32
    %c0_i32_0 = arith.constant 0 : i32
    %c0_i32_1 = arith.constant 0 : i32
    return %c0_i32, %c0_i32_0 : i32, i32
  }
  func.func @transform_2(%arg0: i32) -> (i32, i32) {
    %c0_i32 = arith.constant 0 : i32
    %c0_i32_0 = arith.constant 0 : i32
    %c0_i32_1 = arith.constant 0 : i32
    return %c0_i32, %c0_i32_0 : i32, i32
  }
  func.func @transform_3(%arg0: i32) -> (i32, i32, i32, i32) {
    %c0_i32 = arith.constant 0 : i32
    %c0_i32_0 = arith.constant 0 : i32
    %c0_i32_1 = arith.constant 0 : i32
    %c0_i32_2 = arith.constant 0 : i32
    %c0_i32_3 = arith.constant 0 : i32
    return %c0_i32, %c0_i32_0, %c0_i32_1, %c0_i32_2 : i32, i32, i32, i32
  }
  func.func @transform_4(%arg0: i32) -> (i32, i32) {
    %c0_i32 = arith.constant 0 : i32
    %c0_i32_0 = arith.constant 0 : i32
    %c0_i32_1 = arith.constant 0 : i32
    return %c0_i32, %c0_i32_0 : i32, i32
  }
  func.func @transform_5(%arg0: i32) -> (i32, i32, i32, i32) {
    %c0_i32 = arith.constant 0 : i32
    %c0_i32_0 = arith.constant 0 : i32
    %c0_i32_1 = arith.constant 0 : i32
    %c0_i32_2 = arith.constant 0 : i32
    return %arg0, %c0_i32, %c0_i32_0, %c0_i32_1 : i32, i32, i32, i32
  }
}

module attributes {stable_mosaic.version = 11 : i64} {
  func.func @_conv45_kernel(%arg0: i32, %arg1: memref<128x128xbf16, #tpu.memory_space<vmem>>, %arg2: memref<128x128xbf16, #tpu.memory_space<vmem>>, %arg3: memref<128x128xbf16, #tpu.memory_space<vmem>>, %arg4: memref<1x128xf32, #tpu.memory_space<vmem>>, %arg5: memref<128x256xbf16, #tpu.memory_space<vmem>>, %arg6: memref<128x256xbf16, #tpu.memory_space<vmem>>, %arg7: memref<1x256xf32, #tpu.memory_space<vmem>>, %arg8: memref<128x256xbf16, #tpu.memory_space<vmem>>) attributes {dimension_semantics = [#tpu.dimension_semantics<parallel>], iteration_bounds = array<i64: 1>, scalar_prefetch = 0 : i64, scratch_operands = 0 : i64, tpu.core_type = #tpu.core_type<tc>, window_params = [{transform_indices = @transform_0, window_bounds = array<i64: 128, 128>}, {transform_indices = @transform_1, window_bounds = array<i64: 128, 128>}, {pipeline_mode = #tpu.pipeline_mode<synchronous>, transform_indices = @transform_2, window_bounds = array<i64: 128, 128>}, {pipeline_mode = #tpu.pipeline_mode<synchronous>, transform_indices = @transform_3, window_bounds = array<i64: 1, 128>}, {pipeline_mode = #tpu.pipeline_mode<synchronous>, transform_indices = @transform_4, window_bounds = array<i64: 128, 256>}, {pipeline_mode = #tpu.pipeline_mode<synchronous>, transform_indices = @transform_5, window_bounds = array<i64: 128, 256>}, {pipeline_mode = #tpu.pipeline_mode<synchronous>, transform_indices = @transform_6, window_bounds = array<i64: 1, 256>}, {transform_indices = @transform_7, window_bounds = array<i64: 128, 256>}]} {
    %c0 = arith.constant 0 : index
    %c0_0 = arith.constant 0 : index
    %0 = vector.load %arg1[%c0, %c0_0] : memref<128x128xbf16, #tpu.memory_space<vmem>>, vector<128x128xbf16>
    %c0_1 = arith.constant 0 : index
    %c0_2 = arith.constant 0 : index
    %1 = vector.load %arg3[%c0_1, %c0_2] : memref<128x128xbf16, #tpu.memory_space<vmem>>, vector<128x128xbf16>
    %cst = arith.constant dense<0.000000e+00> : vector<128x128xf32>
    %2 = tpu.matmul %0, %1, %cst {dimension_numbers = #tpu.dot_dimension_numbers<[1], [0], [0], [1], [0, 0, 1, 1], [], []>} : vector<128x128xbf16>, vector<128x128xbf16>, vector<128x128xf32> -> vector<128x128xf32>
    %c0_3 = arith.constant 0 : index
    %c0_4 = arith.constant 0 : index
    %3 = vector.load %arg4[%c0_3, %c0_4] : memref<1x128xf32, #tpu.memory_space<vmem>>, vector<1x128xf32>
    %4 = vector.broadcast %3 : vector<1x128xf32> to vector<128x128xf32>
    %5 = arith.addf %2, %4 : vector<128x128xf32>
    %cst_5 = arith.constant 2.000000e+01 : f32
    %6 = vector.broadcast %cst_5 : f32 to vector<128x128xf32>
    %7 = arith.minimumf %5, %6 : vector<128x128xf32>
    %8 = math.exp %7 : vector<128x128xf32>
    %cst_6 = arith.constant 2.000000e+00 : f32
    %9 = vector.broadcast %cst_6 : f32 to vector<128x128xf32>
    %10 = arith.addf %8, %9 : vector<128x128xf32>
    %11 = arith.mulf %8, %10 : vector<128x128xf32>
    %12 = arith.mulf %5, %11 : vector<128x128xf32>
    %cst_7 = arith.constant 2.000000e+00 : f32
    %13 = vector.broadcast %cst_7 : f32 to vector<128x128xf32>
    %14 = arith.addf %11, %13 : vector<128x128xf32>
    %15 = tpu.reciprocal %14 {approx = true} : vector<128x128xf32> -> vector<128x128xf32>
    %16 = arith.mulf %12, %15 : vector<128x128xf32>
    %17 = arith.truncf %16 : vector<128x128xf32> to vector<128x128xbf16>
    %c0_8 = arith.constant 0 : index
    %c0_9 = arith.constant 0 : index
    %18 = vector.load %arg5[%c0_8, %c0_9] : memref<128x256xbf16, #tpu.memory_space<vmem>>, vector<128x256xbf16>
    %cst_10 = arith.constant dense<0.000000e+00> : vector<128x256xf32>
    %19 = tpu.matmul %17, %18, %cst_10 {dimension_numbers = #tpu.dot_dimension_numbers<[1], [0], [0], [1], [0, 0, 1, 1], [], []>} : vector<128x128xbf16>, vector<128x256xbf16>, vector<128x256xf32> -> vector<128x256xf32>
    %c0_11 = arith.constant 0 : index
    %c0_12 = arith.constant 0 : index
    %20 = vector.load %arg2[%c0_11, %c0_12] : memref<128x128xbf16, #tpu.memory_space<vmem>>, vector<128x128xbf16>
    %c0_13 = arith.constant 0 : index
    %c0_14 = arith.constant 0 : index
    %21 = vector.load %arg6[%c0_13, %c0_14] : memref<128x256xbf16, #tpu.memory_space<vmem>>, vector<128x256xbf16>
    %cst_15 = arith.constant dense<0.000000e+00> : vector<128x256xf32>
    %22 = tpu.matmul %20, %21, %cst_15 {dimension_numbers = #tpu.dot_dimension_numbers<[1], [0], [0], [1], [0, 0, 1, 1], [], []>} : vector<128x128xbf16>, vector<128x256xbf16>, vector<128x256xf32> -> vector<128x256xf32>
    %23 = arith.addf %19, %22 : vector<128x256xf32>
    %c0_16 = arith.constant 0 : index
    %c0_17 = arith.constant 0 : index
    %24 = vector.load %arg7[%c0_16, %c0_17] : memref<1x256xf32, #tpu.memory_space<vmem>>, vector<1x256xf32>
    %25 = vector.broadcast %24 : vector<1x256xf32> to vector<128x256xf32>
    %26 = arith.addf %23, %25 : vector<128x256xf32>
    %cst_18 = arith.constant 2.000000e+01 : f32
    %27 = vector.broadcast %cst_18 : f32 to vector<128x256xf32>
    %28 = arith.minimumf %26, %27 : vector<128x256xf32>
    %29 = math.exp %28 : vector<128x256xf32>
    %cst_19 = arith.constant 2.000000e+00 : f32
    %30 = vector.broadcast %cst_19 : f32 to vector<128x256xf32>
    %31 = arith.addf %29, %30 : vector<128x256xf32>
    %32 = arith.mulf %29, %31 : vector<128x256xf32>
    %33 = arith.mulf %26, %32 : vector<128x256xf32>
    %cst_20 = arith.constant 2.000000e+00 : f32
    %34 = vector.broadcast %cst_20 : f32 to vector<128x256xf32>
    %35 = arith.addf %32, %34 : vector<128x256xf32>
    %36 = tpu.reciprocal %35 {approx = true} : vector<128x256xf32> -> vector<128x256xf32>
    %37 = arith.mulf %33, %36 : vector<128x256xf32>
    %38 = arith.truncf %37 : vector<128x256xf32> to vector<128x256xbf16>
    %c0_21 = arith.constant 0 : index
    %c0_22 = arith.constant 0 : index
    %39 = vector.load %arg8[%c0_21, %c0_22] : memref<128x256xbf16, #tpu.memory_space<vmem>>, vector<128x256xbf16>
    tpu.vector_store %arg8[%c0_21, %c0_22], %38 {strides = array<i32>} : memref<128x256xbf16, #tpu.memory_space<vmem>>, vector<128x256xbf16>,
    return
  }
  func.func @transform_0(%arg0: i32) -> (i32, i32) {
    %c0_i32 = arith.constant 0 : i32
    %c0_i32_0 = arith.constant 0 : i32
    return %arg0, %c0_i32 : i32, i32
  }
  func.func @transform_1(%arg0: i32) -> (i32, i32) {
    %c0_i32 = arith.constant 0 : i32
    %c0_i32_0 = arith.constant 0 : i32
    return %arg0, %c0_i32 : i32, i32
  }
  func.func @transform_2(%arg0: i32) -> (i32, i32) {
    %c0_i32 = arith.constant 0 : i32
    %c0_i32_0 = arith.constant 0 : i32
    %c0_i32_1 = arith.constant 0 : i32
    return %c0_i32, %c0_i32_0 : i32, i32
  }
  func.func @transform_3(%arg0: i32) -> (i32, i32) {
    %c0_i32 = arith.constant 0 : i32
    %c0_i32_0 = arith.constant 0 : i32
    %c0_i32_1 = arith.constant 0 : i32
    return %c0_i32, %c0_i32_0 : i32, i32
  }
  func.func @transform_4(%arg0: i32) -> (i32, i32) {
    %c0_i32 = arith.constant 0 : i32
    %c0_i32_0 = arith.constant 0 : i32
    %c0_i32_1 = arith.constant 0 : i32
    return %c0_i32, %c0_i32_0 : i32, i32
  }
  func.func @transform_5(%arg0: i32) -> (i32, i32) {
    %c0_i32 = arith.constant 0 : i32
    %c0_i32_0 = arith.constant 0 : i32
    %c0_i32_1 = arith.constant 0 : i32
    return %c0_i32, %c0_i32_0 : i32, i32
  }
  func.func @transform_6(%arg0: i32) -> (i32, i32) {
    %c0_i32 = arith.constant 0 : i32
    %c0_i32_0 = arith.constant 0 : i32
    %c0_i32_1 = arith.constant 0 : i32
    return %c0_i32, %c0_i32_0 : i32, i32
  }
  func.func @transform_7(%arg0: i32) -> (i32, i32) {
    %c0_i32 = arith.constant 0 : i32
    %c0_i32_0 = arith.constant 0 : i32
    return %arg0, %c0_i32 : i32, i32
  }
}

</mosaic_0001>

<llo_original>
// kernel: downsample5_forward.8
$region0: #{downsample5_forward.8}
  #allocation0 [shape = 'u32[]', space=smem, size = 0x4, offset = 0x4, fixed_abs, tag = 'smem constant byte address 0x4 - core index']
  #allocation1 [shape = 'u32[144,128]{1,0:T(1,128)}', space=vmem, size = 0x12000, scoped, tag = 'internal scratch']
  %s0 = inlined_call_operand.vmem [shape: bf16[128,256], index: 0, kind: input, shape index: {}]
  %s1 = inlined_call_operand.vmem [shape: bf16[256,128], index: 1, kind: input, shape index: {}]
  %s2 = inlined_call_operand.vmem [shape: f32[1,128], index: 2, kind: input, shape index: {}]
  %s3 = inlined_call_operand.vmem [shape: bf16[256,128], index: 3, kind: input, shape index: {}]
  %s4 = inlined_call_operand.vmem [shape: f32[1,128], index: 4, kind: input, shape index: {}]
  %s5 = inlined_call_operand.vmem [shape: bf16[128,128], index: 5, kind: output, shape index: {0}]
  %s6 = inlined_call_operand.vmem [shape: bf16[128,128], index: 6, kind: output, shape index: {1}]
  %7 = xla_tuple %s5, %s6
  %s8 = sld [smem:[#allocation0]]
  $region38: #{downsample5_forward.8} parent=0
    _
  %s10 = ssub.s32 1, %s8
  %s11 = scalar_select 0, %s10, %s8
  // Predicated region
  $region2: #{downsample5_forward.8} parent=0 // pred_check
    _
  $region3: #{downsample5_forward.8} parent=0 // pred_check_branch
    %13 = sbr.rel (0) target = $region5
  $region4: #{downsample5_forward.8} parent=0 // pred_region
    _
  $region5: #{downsample5_forward.8} parent=0 // pred_fallthru
    _
  // Predicated region
  $region6: #{downsample5_forward.8} parent=0 // pred_check
    _
  $region7: #{downsample5_forward.8} parent=0 // pred_check_branch
    %15 = sbr.rel (0) target = $region9
  $region8: #{downsample5_forward.8} parent=0 // pred_region
    _
  $region9: #{downsample5_forward.8} parent=0 // pred_fallthru
    _
  // Predicated region
  $region10: #{downsample5_forward.8} parent=0 // pred_check
    _
  $region11: #{downsample5_forward.8} parent=0 // pred_check_branch
    %17 = sbr.rel (0) target = $region13
  $region12: #{downsample5_forward.8} parent=0 // pred_region
    _
  $region13: #{downsample5_forward.8} parent=0 // pred_fallthru
    _
  // Predicated region
  $region14: #{downsample5_forward.8} parent=0 // pred_check
    _
  $region15: #{downsample5_forward.8} parent=0 // pred_check_branch
    %19 = sbr.rel (0) target = $region17
  $region16: #{downsample5_forward.8} parent=0 // pred_region
    _
  $region17: #{downsample5_forward.8} parent=0 // pred_fallthru
    _
  // Predicated region
  $region18: #{downsample5_forward.8} parent=0 // pred_check
    _
  $region19: #{downsample5_forward.8} parent=0 // pred_check_branch
    %21 = sbr.rel (0) target = $region21
  $region20: #{downsample5_forward.8} parent=0 // pred_region
    _
  $region21: #{downsample5_forward.8} parent=0 // pred_fallthru
    _
  %v23 = vld [vmem:[%s0] sm:$0xff]
  %v24 = vld [vmem:[%s0 + $0x8] sm:$0xff]
  %v25 = vld [vmem:[%s0 + $0x10] sm:$0xff]
  %v26 = vld [vmem:[%s0 + $0x18] sm:$0xff]
  %v27 = vld [vmem:[%s0 + $0x20] sm:$0xff]
  %v28 = vld [vmem:[%s0 + $0x28] sm:$0xff]
  %v29 = vld [vmem:[%s0 + $0x30] sm:$0xff]
  %v30 = vld [vmem:[%s0 + $0x38] sm:$0xff]
  %v31 = vld [vmem:[%s0 + $0x40] sm:$0xff]
  %v32 = vld [vmem:[%s0 + $0x48] sm:$0xff]
  %v33 = vld [vmem:[%s0 + $0x50] sm:$0xff]
  %v34 = vld [vmem:[%s0 + $0x58] sm:$0xff]
  %v35 = vld [vmem:[%s0 + $0x60] sm:$0xff]
  %v36 = vld [vmem:[%s0 + $0x68] sm:$0xff]
  %v37 = vld [vmem:[%s0 + $0x70] sm:$0xff]
  %v38 = vld [vmem:[%s0 + $0x78] sm:$0xff]
  %v39 = vld [vmem:[%s1] sm:$0xf]
  %v40 = vld [vmem:[%s1 + $0x4] sm:$0xf]
  %v41 = vld [vmem:[%s1 + $0x8] sm:$0xf]
  %v42 = vld [vmem:[%s1 + $0xc] sm:$0xf]
  %v43 = vld [vmem:[%s1 + $0x10] sm:$0xf]
  %v44 = vld [vmem:[%s1 + $0x14] sm:$0xf]
  %v45 = vld [vmem:[%s1 + $0x18] sm:$0xf]
  %v46 = vld [vmem:[%s1 + $0x1c] sm:$0xf]
  %v47 = vld [vmem:[%s1 + $0x20] sm:$0xf]
  %v48 = vld [vmem:[%s1 + $0x24] sm:$0xf]
  %v49 = vld [vmem:[%s1 + $0x28] sm:$0xf]
  %v50 = vld [vmem:[%s1 + $0x2c] sm:$0xf]
  %v51 = vld [vmem:[%s1 + $0x30] sm:$0xf]
  %v52 = vld [vmem:[%s1 + $0x34] sm:$0xf]
  %v53 = vld [vmem:[%s1 + $0x38] sm:$0xf]
  %v54 = vld [vmem:[%s1 + $0x3c] sm:$0xf]
  %v55 = vld [vmem:[%s1 + $0x40] sm:$0xf]
  %v56 = vld [vmem:[%s1 + $0x44] sm:$0xf]
  %v57 = vld [vmem:[%s1 + $0x48] sm:$0xf]
  %v58 = vld [vmem:[%s1 + $0x4c] sm:$0xf]
  %v59 = vld [vmem:[%s1 + $0x50] sm:$0xf]
  %v60 = vld [vmem:[%s1 + $0x54] sm:$0xf]
  %v61 = vld [vmem:[%s1 + $0x58] sm:$0xf]
  %v62 = vld [vmem:[%s1 + $0x5c] sm:$0xf]
  %v63 = vld [vmem:[%s1 + $0x60] sm:$0xf]
  %v64 = vld [vmem:[%s1 + $0x64] sm:$0xf]
  %v65 = vld [vmem:[%s1 + $0x68] sm:$0xf]
  %v66 = vld [vmem:[%s1 + $0x6c] sm:$0xf]
  %v67 = vld [vmem:[%s1 + $0x70] sm:$0xf]
  %v68 = vld [vmem:[%s1 + $0x74] sm:$0xf]
  %v69 = vld [vmem:[%s1 + $0x78] sm:$0xf]
  %v70 = vld [vmem:[%s1 + $0x7c] sm:$0xf]
  %v71 = vld [vmem:[%s2] sm:$0x1]
  %v73 = vlaneseq
  %v74 = vshrl.u32 %v73, 7
  %v75 = vsub.s32 0, %v74
  %v76 = vrot.slane %v71, %v75
  %v94 = vunpack.c.l.b16 %v23
  %v95 = vunpack.c.h.b16 %v23
  %v96 = vunpack.c.l.b16 %v24
  %v97 = vunpack.c.h.b16 %v24
  %v98 = vunpack.c.l.b16 %v25
  %v99 = vunpack.c.h.b16 %v25
  %v100 = vunpack.c.l.b16 %v26
  %v101 = vunpack.c.h.b16 %v26
  %v102 = vunpack.c.l.b16 %v27
  %v103 = vunpack.c.h.b16 %v27
  %v104 = vunpack.c.l.b16 %v28
  %v105 = vunpack.c.h.b16 %v28
  %v106 = vunpack.c.l.b16 %v29
  %v107 = vunpack.c.h.b16 %v29
  %v108 = vunpack.c.l.b16 %v30
  %v109 = vunpack.c.h.b16 %v30
  %v110 = vunpack.c.l.b16 %v31
  %v111 = vunpack.c.h.b16 %v31
  %v112 = vunpack.c.l.b16 %v32
  %v113 = vunpack.c.h.b16 %v32
  %v114 = vunpack.c.l.b16 %v33
  %v115 = vunpack.c.h.b16 %v33
  %v116 = vunpack.c.l.b16 %v34
  %v117 = vunpack.c.h.b16 %v34
  %v118 = vunpack.c.l.b16 %v35
  %v119 = vunpack.c.h.b16 %v35
  %v120 = vunpack.c.l.b16 %v36
  %v121 = vunpack.c.h.b16 %v36
  %v122 = vunpack.c.l.b16 %v37
  %v123 = vunpack.c.h.b16 %v37
  %v124 = vunpack.c.l.b16 %v38
  %v125 = vunpack.c.h.b16 %v38
  %v126 = vpack.c.b16 %v96, %v94
  %v127 = vpack.c.b16 %v97, %v95
  %v128 = vpack.c.b16 %v100, %v98
  %v129 = vpack.c.b16 %v101, %v99
  %v130 = vpack.c.b16 %v104, %v102
  %v131 = vpack.c.b16 %v105, %v103
  %v132 = vpack.c.b16 %v108, %v106
  %v133 = vpack.c.b16 %v109, %v107
  %v134 = vpack.c.b16 %v112, %v110
  %v135 = vpack.c.b16 %v113, %v111
  %v136 = vpack.c.b16 %v116, %v114
  %v137 = vpack.c.b16 %v117, %v115
  %v138 = vpack.c.b16 %v120, %v118
  %v139 = vpack.c.b16 %v121, %v119
  %v140 = vpack.c.b16 %v124, %v122
  %v141 = vpack.c.b16 %v125, %v123
  %v190 = vunpack.c.l.b16 %v39
  %v191 = vunpack.c.l.b16 %v40
  %v192 = vunpack.c.l.b16 %v41
  %v193 = vunpack.c.l.b16 %v42
  %v194 = vunpack.c.l.b16 %v43
  %v195 = vunpack.c.l.b16 %v44
  %v196 = vunpack.c.l.b16 %v45
  %v197 = vunpack.c.l.b16 %v46
  %v198 = vunpack.c.l.b16 %v47
  %v199 = vunpack.c.l.b16 %v48
  %v200 = vunpack.c.l.b16 %v49
  %v201 = vunpack.c.l.b16 %v50
  %v202 = vunpack.c.l.b16 %v51
  %v203 = vunpack.c.l.b16 %v52
  %v204 = vunpack.c.l.b16 %v53
  %v205 = vunpack.c.l.b16 %v54
  %v206 = vunpack.c.l.b16 %v55
  %v207 = vunpack.c.l.b16 %v56
  %v208 = vunpack.c.l.b16 %v57
  %v209 = vunpack.c.l.b16 %v58
  %v210 = vunpack.c.l.b16 %v59
  %v211 = vunpack.c.l.b16 %v60
  %v212 = vunpack.c.l.b16 %v61
  %v213 = vunpack.c.l.b16 %v62
  %v214 = vunpack.c.l.b16 %v63
  %v215 = vunpack.c.l.b16 %v64
  %v216 = vunpack.c.l.b16 %v65
  %v217 = vunpack.c.l.b16 %v66
  %v218 = vunpack.c.l.b16 %v67
  %v219 = vunpack.c.l.b16 %v68
  %v220 = vunpack.c.l.b16 %v69
  %v221 = vunpack.c.l.b16 %v70
  %v222 = vpack.c.b16 %v191, %v190
  %v223 = vpack.c.b16 %v193, %v192
  %v224 = vpack.c.b16 %v195, %v194
  %v225 = vpack.c.b16 %v197, %v196
  %v226 = vpack.c.b16 %v199, %v198
  %v227 = vpack.c.b16 %v201, %v200
  %v228 = vpack.c.b16 %v203, %v202
  %v229 = vpack.c.b16 %v205, %v204
  %v230 = vpack.c.b16 %v207, %v206
  %v231 = vpack.c.b16 %v209, %v208
  %v232 = vpack.c.b16 %v211, %v210
  %v233 = vpack.c.b16 %v213, %v212
  %v234 = vpack.c.b16 %v215, %v214
  %v235 = vpack.c.b16 %v217, %v216
  %v236 = vpack.c.b16 %v219, %v218
  %v237 = vpack.c.b16 %v221, %v220
  %254 = vmatprep.subr.bf16.mxu0 0
  %255 = vmatpush1.bf16.msra.mxu0 %v222
  %256 = vmatprep.subr.bf16.mxu0 0
  %257 = vmatpush1.bf16.msra.mxu0 %v223
  %258 = vmatprep.subr.bf16.mxu0 0
  %259 = vmatpush1.bf16.msra.mxu0 %v224
  %260 = vmatprep.subr.bf16.mxu0 0
  %261 = vmatpush1.bf16.msra.mxu0 %v225
  %262 = vmatprep.subr.bf16.mxu0 0
  %263 = vmatpush1.bf16.msra.mxu0 %v226
  %264 = vmatprep.subr.bf16.mxu0 0
  %265 = vmatpush1.bf16.msra.mxu0 %v227
  %266 = vmatprep.subr.bf16.mxu0 0
  %267 = vmatpush1.bf16.msra.mxu0 %v228
  %268 = vmatprep.subr.bf16.mxu0 0
  %269 = vmatpush1.bf16.msra.mxu0 %v229
  %270 = vmatprep.subr.bf16.mxu0 0
  %271 = vmatpush1.bf16.msra.mxu0 %v230
  %272 = vmatprep.subr.bf16.mxu0 0
  %273 = vmatpush1.bf16.msra.mxu0 %v231
  %274 = vmatprep.subr.bf16.mxu0 0
  %275 = vmatpush1.bf16.msra.mxu0 %v232
  %276 = vmatprep.subr.bf16.mxu0 0
  %277 = vmatpush1.bf16.msra.mxu0 %v233
  %278 = vmatprep.subr.bf16.mxu0 0
  %279 = vmatpush1.bf16.msra.mxu0 %v234
  %280 = vmatprep.subr.bf16.mxu0 0
  %281 = vmatpush1.bf16.msra.mxu0 %v235
  %282 = vmatprep.subr.bf16.mxu0 0
  %283 = vmatpush1.bf16.msra.mxu0 %v236
  %284 = vmatprep.subr.bf16.mxu0 0
  %285 = vmatpush1.bf16.msra.mxu0 %v237
  %286 = vmatprep.mubr.bf16.mxu0 %v127
  %287 = vmatmul.mubr.bf16.gmra.mrb[0].mxu0 %v126
  %v288 = vpop.f32.mrb[0].mxu0
  %v289 = vadd.f32 %v76, %v288
  %v290 = vpop.f32.mrb[0].mxu0
  %v291 = vpop.f32.mrb[0].mxu0
  %v292 = vadd.f32 %v76, %v291
  %v293 = vpop.f32.mrb[0].mxu0
  %294 = vmatprep.mubr.bf16.mxu0 %v129
  %295 = vmatmul.mubr.bf16.gmra.mrb[0].mxu0 %v128
  %v296 = vpop.f32.mrb[0].mxu0
  %v297 = vadd.f32 %v76, %v296
  %v298 = vpop.f32.mrb[0].mxu0
  %v299 = vpop.f32.mrb[0].mxu0
  %v300 = vadd.f32 %v76, %v299
  %v301 = vpop.f32.mrb[0].mxu0
  %302 = vmatprep.mubr.bf16.mxu0 %v131
  %303 = vmatmul.mubr.bf16.gmra.mrb[0].mxu0 %v130
  %v304 = vpop.f32.mrb[0].mxu0
  %v305 = vadd.f32 %v76, %v304
  %v306 = vpop.f32.mrb[0].mxu0
  %v307 = vpop.f32.mrb[0].mxu0
  %v308 = vadd.f32 %v76, %v307
  %v309 = vpop.f32.mrb[0].mxu0
  %310 = vmatprep.mubr.bf16.mxu0 %v133
  %311 = vmatmul.mubr.bf16.gmra.mrb[0].mxu0 %v132
  %v312 = vpop.f32.mrb[0].mxu0
  %v313 = vadd.f32 %v76, %v312
  %v314 = vpop.f32.mrb[0].mxu0
  %v315 = vpop.f32.mrb[0].mxu0
  %v316 = vadd.f32 %v76, %v315
  %v317 = vpop.f32.mrb[0].mxu0
  %318 = vmatprep.mubr.bf16.mxu0 %v135
  %319 = vmatmul.mubr.bf16.gmra.mrb[0].mxu0 %v134
  %v320 = vpop.f32.mrb[0].mxu0
  %v321 = vadd.f32 %v76, %v320
  %v322 = vpop.f32.mrb[0].mxu0
  %v323 = vpop.f32.mrb[0].mxu0
  %v324 = vadd.f32 %v76, %v323
  %v325 = vpop.f32.mrb[0].mxu0
  %326 = vmatprep.mubr.bf16.mxu0 %v137
  %327 = vmatmul.mubr.bf16.gmra.mrb[0].mxu0 %v136
  %v328 = vpop.f32.mrb[0].mxu0
  %v329 = vadd.f32 %v76, %v328
  %v330 = vpop.f32.mrb[0].mxu0
  %v331 = vpop.f32.mrb[0].mxu0
  %v332 = vadd.f32 %v76, %v331
  %v333 = vpop.f32.mrb[0].mxu0
  %334 = vmatprep.mubr.bf16.mxu0 %v139
  %335 = vmatmul.mubr.bf16.gmra.mrb[0].mxu0 %v138
  %v336 = vpop.f32.mrb[0].mxu0
  %v337 = vadd.f32 %v76, %v336
  %v338 = vpop.f32.mrb[0].mxu0
  %v339 = vpop.f32.mrb[0].mxu0
  %v340 = vadd.f32 %v76, %v339
  %v341 = vpop.f32.mrb[0].mxu0
  %342 = vmatprep.mubr.bf16.mxu0 %v141
  %343 = vmatmul.mubr.bf16.gmra.mrb[0].mxu0 %v140
  %v344 = vpop.f32.mrb[0].mxu0
  %v345 = vadd.f32 %v76, %v344
  %v346 = vpop.f32.mrb[0].mxu0
  %v347 = vpop.f32.mrb[0].mxu0
  %v348 = vadd.f32 %v76, %v347
  %v349 = vpop.f32.mrb[0].mxu0
  %350 = vdwg.mxu0
  %v351 = vmin.f32 %v289, 20.0
  %v352 = vmin.f32 %v292, 20.0
  %v353 = vmin.f32 %v297, 20.0
  %v354 = vmin.f32 %v300, 20.0
  %v355 = vmin.f32 %v305, 20.0
  %v356 = vmin.f32 %v308, 20.0
  %v357 = vmin.f32 %v313, 20.0
  %v358 = vmin.f32 %v316, 20.0
  %v359 = vmin.f32 %v321, 20.0
  %v360 = vmin.f32 %v324, 20.0
  %v361 = vmin.f32 %v329, 20.0
  %v362 = vmin.f32 %v332, 20.0
  %v363 = vmin.f32 %v337, 20.0
  %v364 = vmin.f32 %v340, 20.0
  %v365 = vmin.f32 %v345, 20.0
  %v366 = vmin.f32 %v348, 20.0
  %v367 = vmul.f32 %v351, 1.442695
  %v368 = vpow.pop %v367
  %v369 = vmul.f32 %v352, 1.442695
  %v370 = vpow.pop %v369
  %v371 = vmul.f32 %v353, 1.442695
  %v372 = vpow.pop %v371
  %v373 = vmul.f32 %v354, 1.442695
  %v374 = vpow.pop %v373
  %v375 = vmul.f32 %v355, 1.442695
  %v376 = vpow.pop %v375
  %v377 = vmul.f32 %v356, 1.442695
  %v378 = vpow.pop %v377
  %v379 = vmul.f32 %v357, 1.442695
  %v380 = vpow.pop %v379
  %v381 = vmul.f32 %v358, 1.442695
  %v382 = vpow.pop %v381
  %v383 = vmul.f32 %v359, 1.442695
  %v384 = vpow.pop %v383
  %v385 = vmul.f32 %v360, 1.442695
  %v386 = vpow.pop %v385
  %v387 = vmul.f32 %v361, 1.442695
  %v388 = vpow.pop %v387
  %v389 = vmul.f32 %v362, 1.442695
  %v390 = vpow.pop %v389
  %v391 = vmul.f32 %v363, 1.442695
  %v392 = vpow.pop %v391
  %v393 = vmul.f32 %v364, 1.442695
  %v394 = vpow.pop %v393
  %v395 = vmul.f32 %v365, 1.442695
  %v396 = vpow.pop %v395
  %v397 = vmul.f32 %v366, 1.442695
  %v398 = vpow.pop %v397
  %v399 = vadd.f32 %v368, 2.0
  %v400 = vadd.f32 %v370, 2.0
  %v401 = vadd.f32 %v372, 2.0
  %v402 = vadd.f32 %v374, 2.0
  %v403 = vadd.f32 %v376, 2.0
  %v404 = vadd.f32 %v378, 2.0
  %v405 = vadd.f32 %v380, 2.0
  %v406 = vadd.f32 %v382, 2.0
  %v407 = vadd.f32 %v384, 2.0
  %v408 = vadd.f32 %v386, 2.0
  %v409 = vadd.f32 %v388, 2.0
  %v410 = vadd.f32 %v390, 2.0
  %v411 = vadd.f32 %v392, 2.0
  %v412 = vadd.f32 %v394, 2.0
  %v413 = vadd.f32 %v396, 2.0
  %v414 = vadd.f32 %v398, 2.0
  %v415 = vmul.f32 %v368, %v399
  %v416 = vmul.f32 %v370, %v400
  %v417 = vmul.f32 %v372, %v401
  %v418 = vmul.f32 %v374, %v402
  %v419 = vmul.f32 %v376, %v403
  %v420 = vmul.f32 %v378, %v404
  %v421 = vmul.f32 %v380, %v405
  %v422 = vmul.f32 %v382, %v406
  %v423 = vmul.f32 %v384, %v407
  %v424 = vmul.f32 %v386, %v408
  %v425 = vmul.f32 %v388, %v409
  %v426 = vmul.f32 %v390, %v410
  %v427 = vmul.f32 %v392, %v411
  %v428 = vmul.f32 %v394, %v412
  %v429 = vmul.f32 %v396, %v413
  %v430 = vmul.f32 %v398, %v414
  %v431 = vmul.f32 %v289, %v415
  %v432 = vmul.f32 %v292, %v416
  %v433 = vmul.f32 %v297, %v417
  %v434 = vmul.f32 %v300, %v418
  %v435 = vmul.f32 %v305, %v419
  %v436 = vmul.f32 %v308, %v420
  %v437 = vmul.f32 %v313, %v421
  %v438 = vmul.f32 %v316, %v422
  %v439 = vmul.f32 %v321, %v423
  %v440 = vmul.f32 %v324, %v424
  %v441 = vmul.f32 %v329, %v425
  %v442 = vmul.f32 %v332, %v426
  %v443 = vmul.f32 %v337, %v427
  %v444 = vmul.f32 %v340, %v428
  %v445 = vmul.f32 %v345, %v429
  %v446 = vmul.f32 %v348, %v430
  %v447 = vadd.f32 %v415, 2.0
  %v448 = vadd.f32 %v416, 2.0
  %v449 = vadd.f32 %v417, 2.0
  %v450 = vadd.f32 %v418, 2.0
  %v451 = vadd.f32 %v419, 2.0
  %v452 = vadd.f32 %v420, 2.0
  %v453 = vadd.f32 %v421, 2.0
  %v454 = vadd.f32 %v422, 2.0
  %v455 = vadd.f32 %v423, 2.0
  %v456 = vadd.f32 %v424, 2.0
  %v457 = vadd.f32 %v425, 2.0
  %v458 = vadd.f32 %v426, 2.0
  %v459 = vadd.f32 %v427, 2.0
  %v460 = vadd.f32 %v428, 2.0
  %v461 = vadd.f32 %v429, 2.0
  %v462 = vadd.f32 %v430, 2.0
  %v463 = vrcp.pop %v447
  %v464 = vrcp.pop %v448
  %v465 = vrcp.pop %v449
  %v466 = vrcp.pop %v450
  %v467 = vrcp.pop %v451
  %v468 = vrcp.pop %v452
  %v469 = vrcp.pop %v453
  %v470 = vrcp.pop %v454
  %v471 = vrcp.pop %v455
  %v472 = vrcp.pop %v456
  %v473 = vrcp.pop %v457
  %v474 = vrcp.pop %v458
  %v475 = vrcp.pop %v459
  %v476 = vrcp.pop %v460
  %v477 = vrcp.pop %v461
  %v478 = vrcp.pop %v462
  %v479 = vmul.f32 %v431, %v463
  %v480 = vmul.f32 %v432, %v464
  %v481 = vmul.f32 %v433, %v465
  %v482 = vmul.f32 %v434, %v466
  %v483 = vmul.f32 %v435, %v467
  %v484 = vmul.f32 %v436, %v468
  %v485 = vmul.f32 %v437, %v469
  %v486 = vmul.f32 %v438, %v470
  %v487 = vmul.f32 %v439, %v471
  %v488 = vmul.f32 %v440, %v472
  %v489 = vmul.f32 %v441, %v473
  %v490 = vmul.f32 %v442, %v474
  %v491 = vmul.f32 %v443, %v475
  %v492 = vmul.f32 %v444, %v476
  %v493 = vmul.f32 %v445, %v477
  %v494 = vmul.f32 %v446, %v478
  %v495 = vpack.c.bf16 %v480, %v479
  %v496 = vpack.c.bf16 %v482, %v481
  %v497 = vpack.c.bf16 %v484, %v483
  %v498 = vpack.c.bf16 %v486, %v485
  %v499 = vpack.c.bf16 %v488, %v487
  %v500 = vpack.c.bf16 %v490, %v489
  %v501 = vpack.c.bf16 %v492, %v491
  %v502 = vpack.c.bf16 %v494, %v493
  %v511 = vunpack.c.l.b16 %v495
  %v512 = vunpack.c.h.b16 %v495
  %v513 = vunpack.c.l.b16 %v496
  %v514 = vunpack.c.h.b16 %v496
  %v515 = vunpack.c.l.b16 %v497
  %v516 = vunpack.c.h.b16 %v497
  %v517 = vunpack.c.l.b16 %v498
  %v518 = vunpack.c.h.b16 %v498
  %v519 = vunpack.c.l.b16 %v499
  %v520 = vunpack.c.h.b16 %v499
  %v521 = vunpack.c.l.b16 %v500
  %v522 = vunpack.c.h.b16 %v500
  %v523 = vunpack.c.l.b16 %v501
  %v524 = vunpack.c.h.b16 %v501
  %v525 = vunpack.c.l.b16 %v502
  %v526 = vunpack.c.h.b16 %v502
  %v527 = vpack.c.b16 %v511, %v511
  %v528 = vpack.c.b16 %v512, %v512
  %v529 = vpack.c.b16 %v513, %v513
  %v530 = vpack.c.b16 %v514, %v514
  %v531 = vpack.c.b16 %v515, %v515
  %v532 = vpack.c.b16 %v516, %v516
  %v533 = vpack.c.b16 %v517, %v517
  %v534 = vpack.c.b16 %v518, %v518
  %v535 = vpack.c.b16 %v519, %v519
  %v536 = vpack.c.b16 %v520, %v520
  %v537 = vpack.c.b16 %v521, %v521
  %v538 = vpack.c.b16 %v522, %v522
  %v539 = vpack.c.b16 %v523, %v523
  %v540 = vpack.c.b16 %v524, %v524
  %v541 = vpack.c.b16 %v525, %v525
  %v542 = vpack.c.b16 %v526, %v526
  %559 = vst [vmem:[%s5] sm:$0xf] %v527
  %560 = vst [vmem:[%s5 + $0x4] sm:$0xf] %v528
  %561 = vst [vmem:[%s5 + $0x8] sm:$0xf] %v529
  %562 = vst [vmem:[%s5 + $0xc] sm:$0xf] %v530
  %563 = vst [vmem:[%s5 + $0x10] sm:$0xf] %v531
  %564 = vst [vmem:[%s5 + $0x14] sm:$0xf] %v532
  %565 = vst [vmem:[%s5 + $0x18] sm:$0xf] %v533
  %566 = vst [vmem:[%s5 + $0x1c] sm:$0xf] %v534
  %567 = vst [vmem:[%s5 + $0x20] sm:$0xf] %v535
  %568 = vst [vmem:[%s5 + $0x24] sm:$0xf] %v536
  %569 = vst [vmem:[%s5 + $0x28] sm:$0xf] %v537
  %570 = vst [vmem:[%s5 + $0x2c] sm:$0xf] %v538
  %571 = vst [vmem:[%s5 + $0x30] sm:$0xf] %v539
  %572 = vst [vmem:[%s5 + $0x34] sm:$0xf] %v540
  %573 = vst [vmem:[%s5 + $0x38] sm:$0xf] %v541
  %574 = vst [vmem:[%s5 + $0x3c] sm:$0xf] %v542
  %v575 = vld [vmem:[%s3] sm:$0xf]
  %v576 = vld [vmem:[%s3 + $0x4] sm:$0xf]
  %v577 = vld [vmem:[%s3 + $0x8] sm:$0xf]
  %v578 = vld [vmem:[%s3 + $0xc] sm:$0xf]
  %v579 = vld [vmem:[%s3 + $0x10] sm:$0xf]
  %v580 = vld [vmem:[%s3 + $0x14] sm:$0xf]
  %v581 = vld [vmem:[%s3 + $0x18] sm:$0xf]
  %v582 = vld [vmem:[%s3 + $0x1c] sm:$0xf]
  %v583 = vld [vmem:[%s3 + $0x20] sm:$0xf]
  %v584 = vld [vmem:[%s3 + $0x24] sm:$0xf]
  %v585 = vld [vmem:[%s3 + $0x28] sm:$0xf]
  %v586 = vld [vmem:[%s3 + $0x2c] sm:$0xf]
  %v587 = vld [vmem:[%s3 + $0x30] sm:$0xf]
  %v588 = vld [vmem:[%s3 + $0x34] sm:$0xf]
  %v589 = vld [vmem:[%s3 + $0x38] sm:$0xf]
  %v590 = vld [vmem:[%s3 + $0x3c] sm:$0xf]
  %v591 = vld [vmem:[%s3 + $0x40] sm:$0xf]
  %v592 = vld [vmem:[%s3 + $0x44] sm:$0xf]
  %v593 = vld [vmem:[%s3 + $0x48] sm:$0xf]
  %v594 = vld [vmem:[%s3 + $0x4c] sm:$0xf]
  %v595 = vld [vmem:[%s3 + $0x50] sm:$0xf]
  %v596 = vld [vmem:[%s3 + $0x54] sm:$0xf]
  %v597 = vld [vmem:[%s3 + $0x58] sm:$0xf]
  %v598 = vld [vmem:[%s3 + $0x5c] sm:$0xf]
  %v599 = vld [vmem:[%s3 + $0x60] sm:$0xf]
  %v600 = vld [vmem:[%s3 + $0x64] sm:$0xf]
  %v601 = vld [vmem:[%s3 + $0x68] sm:$0xf]
  %v602 = vld [vmem:[%s3 + $0x6c] sm:$0xf]
  %v603 = vld [vmem:[%s3 + $0x70] sm:$0xf]
  %v604 = vld [vmem:[%s3 + $0x74] sm:$0xf]
  %v605 = vld [vmem:[%s3 + $0x78] sm:$0xf]
  %v606 = vld [vmem:[%s3 + $0x7c] sm:$0xf]
  %v607 = vld [vmem:[%s4] sm:$0x1]
  %v609 = vlaneseq
  %v610 = vshrl.u32 %v609, 7
  %v611 = vsub.s32 0, %v610
  %v612 = vrot.slane %v607, %v611
  %v646 = vunpack.c.l.b16 %v575
  %v647 = vunpack.c.l.b16 %v576
  %v648 = vunpack.c.l.b16 %v577
  %v649 = vunpack.c.l.b16 %v578
  %v650 = vunpack.c.l.b16 %v579
  %v651 = vunpack.c.l.b16 %v580
  %v652 = vunpack.c.l.b16 %v581
  %v653 = vunpack.c.l.b16 %v582
  %v654 = vunpack.c.l.b16 %v583
  %v655 = vunpack.c.l.b16 %v584
  %v656 = vunpack.c.l.b16 %v585
  %v657 = vunpack.c.l.b16 %v586
  %v658 = vunpack.c.l.b16 %v587
  %v659 = vunpack.c.l.b16 %v588
  %v660 = vunpack.c.l.b16 %v589
  %v661 = vunpack.c.l.b16 %v590
  %v662 = vunpack.c.l.b16 %v591
  %v663 = vunpack.c.l.b16 %v592
  %v664 = vunpack.c.l.b16 %v593
  %v665 = vunpack.c.l.b16 %v594
  %v666 = vunpack.c.l.b16 %v595
  %v667 = vunpack.c.l.b16 %v596
  %v668 = vunpack.c.l.b16 %v597
  %v669 = vunpack.c.l.b16 %v598
  %v670 = vunpack.c.l.b16 %v599
  %v671 = vunpack.c.l.b16 %v600
  %v672 = vunpack.c.l.b16 %v601
  %v673 = vunpack.c.l.b16 %v602
  %v674 = vunpack.c.l.b16 %v603
  %v675 = vunpack.c.l.b16 %v604
  %v676 = vunpack.c.l.b16 %v605
  %v677 = vunpack.c.l.b16 %v606
  %v678 = vpack.c.b16 %v647, %v646
  %v679 = vpack.c.b16 %v649, %v648
  %v680 = vpack.c.b16 %v651, %v650
  %v681 = vpack.c.b16 %v653, %v652
  %v682 = vpack.c.b16 %v655, %v654
  %v683 = vpack.c.b16 %v657, %v656
  %v684 = vpack.c.b16 %v659, %v658
  %v685 = vpack.c.b16 %v661, %v660
  %v686 = vpack.c.b16 %v663, %v662
  %v687 = vpack.c.b16 %v665, %v664
  %v688 = vpack.c.b16 %v667, %v666
  %v689 = vpack.c.b16 %v669, %v668
  %v690 = vpack.c.b16 %v671, %v670
  %v691 = vpack.c.b16 %v673, %v672
  %v692 = vpack.c.b16 %v675, %v674
  %v693 = vpack.c.b16 %v677, %v676
  %710 = vmatprep.subr.bf16.mxu0 0
  %711 = vmatpush1.bf16.msra.mxu0 %v678
  %712 = vmatprep.subr.bf16.mxu0 0
  %713 = vmatpush1.bf16.msra.mxu0 %v679
  %714 = vmatprep.subr.bf16.mxu0 0
  %715 = vmatpush1.bf16.msra.mxu0 %v680
  %716 = vmatprep.subr.bf16.mxu0 0
  %717 = vmatpush1.bf16.msra.mxu0 %v681
  %718 = vmatprep.subr.bf16.mxu0 0
  %719 = vmatpush1.bf16.msra.mxu0 %v682
  %720 = vmatprep.subr.bf16.mxu0 0
  %721 = vmatpush1.bf16.msra.mxu0 %v683
  %722 = vmatprep.subr.bf16.mxu0 0
  %723 = vmatpush1.bf16.msra.mxu0 %v684
  %724 = vmatprep.subr.bf16.mxu0 0
  %725 = vmatpush1.bf16.msra.mxu0 %v685
  %726 = vmatprep.subr.bf16.mxu0 0
  %727 = vmatpush1.bf16.msra.mxu0 %v686
  %728 = vmatprep.subr.bf16.mxu0 0
  %729 = vmatpush1.bf16.msra.mxu0 %v687
  %730 = vmatprep.subr.bf16.mxu0 0
  %731 = vmatpush1.bf16.msra.mxu0 %v688
  %732 = vmatprep.subr.bf16.mxu0 0
  %733 = vmatpush1.bf16.msra.mxu0 %v689
  %734 = vmatprep.subr.bf16.mxu0 0
  %735 = vmatpush1.bf16.msra.mxu0 %v690
  %736 = vmatprep.subr.bf16.mxu0 0
  %737 = vmatpush1.bf16.msra.mxu0 %v691
  %738 = vmatprep.subr.bf16.mxu0 0
  %739 = vmatpush1.bf16.msra.mxu0 %v692
  %740 = vmatprep.subr.bf16.mxu0 0
  %741 = vmatpush1.bf16.msra.mxu0 %v693
  %742 = vmatprep.mubr.bf16.mxu0 %v127
  %743 = vmatmul.mubr.bf16.gmra.mrb[0].mxu0 %v126
  %v744 = vpop.f32.mrb[0].mxu0
  %v745 = vadd.f32 %v612, %v744
  %v746 = vpop.f32.mrb[0].mxu0
  %v747 = vpop.f32.mrb[0].mxu0
  %v748 = vadd.f32 %v612, %v747
  %v749 = vpop.f32.mrb[0].mxu0
  %750 = vmatprep.mubr.bf16.mxu0 %v129
  %751 = vmatmul.mubr.bf16.gmra.mrb[0].mxu0 %v128
  %v752 = vpop.f32.mrb[0].mxu0
  %v753 = vadd.f32 %v612, %v752
  %v754 = vpop.f32.mrb[0].mxu0
  %v755 = vpop.f32.mrb[0].mxu0
  %v756 = vadd.f32 %v612, %v755
  %v757 = vpop.f32.mrb[0].mxu0
  %758 = vmatprep.mubr.bf16.mxu0 %v131
  %759 = vmatmul.mubr.bf16.gmra.mrb[0].mxu0 %v130
  %v760 = vpop.f32.mrb[0].mxu0
  %v761 = vadd.f32 %v612, %v760
  %v762 = vpop.f32.mrb[0].mxu0
  %v763 = vpop.f32.mrb[0].mxu0
  %v764 = vadd.f32 %v612, %v763
  %v765 = vpop.f32.mrb[0].mxu0
  %766 = vmatprep.mubr.bf16.mxu0 %v133
  %767 = vmatmul.mubr.bf16.gmra.mrb[0].mxu0 %v132
  %v768 = vpop.f32.mrb[0].mxu0
  %v769 = vadd.f32 %v612, %v768
  %v770 = vpop.f32.mrb[0].mxu0
  %v771 = vpop.f32.mrb[0].mxu0
  %v772 = vadd.f32 %v612, %v771
  %v773 = vpop.f32.mrb[0].mxu0
  %774 = vmatprep.mubr.bf16.mxu0 %v135
  %775 = vmatmul.mubr.bf16.gmra.mrb[0].mxu0 %v134
  %v776 = vpop.f32.mrb[0].mxu0
  %v777 = vadd.f32 %v612, %v776
  %v778 = vpop.f32.mrb[0].mxu0
  %v779 = vpop.f32.mrb[0].mxu0
  %v780 = vadd.f32 %v612, %v779
  %v781 = vpop.f32.mrb[0].mxu0
  %782 = vmatprep.mubr.bf16.mxu0 %v137
  %783 = vmatmul.mubr.bf16.gmra.mrb[0].mxu0 %v136
  %v784 = vpop.f32.mrb[0].mxu0
  %v785 = vadd.f32 %v612, %v784
  %v786 = vpop.f32.mrb[0].mxu0
  %v787 = vpop.f32.mrb[0].mxu0
  %v788 = vadd.f32 %v612, %v787
  %v789 = vpop.f32.mrb[0].mxu0
  %790 = vmatprep.mubr.bf16.mxu0 %v139
  %791 = vmatmul.mubr.bf16.gmra.mrb[0].mxu0 %v138
  %v792 = vpop.f32.mrb[0].mxu0
  %v793 = vadd.f32 %v612, %v792
  %v794 = vpop.f32.mrb[0].mxu0
  %v795 = vpop.f32.mrb[0].mxu0
  %v796 = vadd.f32 %v612, %v795
  %v797 = vpop.f32.mrb[0].mxu0
  %798 = vmatprep.mubr.bf16.mxu0 %v141
  %799 = vmatmul.mubr.bf16.gmra.mrb[0].mxu0 %v140
  %v800 = vpop.f32.mrb[0].mxu0
  %v801 = vadd.f32 %v612, %v800
  %v802 = vpop.f32.mrb[0].mxu0
  %v803 = vpop.f32.mrb[0].mxu0
  %v804 = vadd.f32 %v612, %v803
  %v805 = vpop.f32.mrb[0].mxu0
  %806 = vdwg.mxu0
  %v807 = vmin.f32 %v745, 20.0
  %v808 = vmin.f32 %v748, 20.0
  %v809 = vmin.f32 %v753, 20.0
  %v810 = vmin.f32 %v756, 20.0
  %v811 = vmin.f32 %v761, 20.0
  %v812 = vmin.f32 %v764, 20.0
  %v813 = vmin.f32 %v769, 20.0
  %v814 = vmin.f32 %v772, 20.0
  %v815 = vmin.f32 %v777, 20.0
  %v816 = vmin.f32 %v780, 20.0
  %v817 = vmin.f32 %v785, 20.0
  %v818 = vmin.f32 %v788, 20.0
  %v819 = vmin.f32 %v793, 20.0
  %v820 = vmin.f32 %v796, 20.0
  %v821 = vmin.f32 %v801, 20.0
  %v822 = vmin.f32 %v804, 20.0
  %v823 = vmul.f32 %v807, 1.442695
  %v824 = vpow.pop %v823
  %v825 = vmul.f32 %v808, 1.442695
  %v826 = vpow.pop %v825
  %v827 = vmul.f32 %v809, 1.442695
  %v828 = vpow.pop %v827
  %v829 = vmul.f32 %v810, 1.442695
  %v830 = vpow.pop %v829
  %v831 = vmul.f32 %v811, 1.442695
  %v832 = vpow.pop %v831
  %v833 = vmul.f32 %v812, 1.442695
  %v834 = vpow.pop %v833
  %v835 = vmul.f32 %v813, 1.442695
  %v836 = vpow.pop %v835
  %v837 = vmul.f32 %v814, 1.442695
  %v838 = vpow.pop %v837
  %v839 = vmul.f32 %v815, 1.442695
  %v840 = vpow.pop %v839
  %v841 = vmul.f32 %v816, 1.442695
  %v842 = vpow.pop %v841
  %v843 = vmul.f32 %v817, 1.442695
  %v844 = vpow.pop %v843
  %v845 = vmul.f32 %v818, 1.442695
  %v846 = vpow.pop %v845
  %v847 = vmul.f32 %v819, 1.442695
  %v848 = vpow.pop %v847
  %v849 = vmul.f32 %v820, 1.442695
  %v850 = vpow.pop %v849
  %v851 = vmul.f32 %v821, 1.442695
  %v852 = vpow.pop %v851
  %v853 = vmul.f32 %v822, 1.442695
  %v854 = vpow.pop %v853
  %v855 = vadd.f32 %v824, 2.0
  %v856 = vadd.f32 %v826, 2.0
  %v857 = vadd.f32 %v828, 2.0
  %v858 = vadd.f32 %v830, 2.0
  %v859 = vadd.f32 %v832, 2.0
  %v860 = vadd.f32 %v834, 2.0
  %v861 = vadd.f32 %v836, 2.0
  %v862 = vadd.f32 %v838, 2.0
  %v863 = vadd.f32 %v840, 2.0
  %v864 = vadd.f32 %v842, 2.0
  %v865 = vadd.f32 %v844, 2.0
  %v866 = vadd.f32 %v846, 2.0
  %v867 = vadd.f32 %v848, 2.0
  %v868 = vadd.f32 %v850, 2.0
  %v869 = vadd.f32 %v852, 2.0
  %v870 = vadd.f32 %v854, 2.0
  %v871 = vmul.f32 %v824, %v855
  %v872 = vmul.f32 %v826, %v856
  %v873 = vmul.f32 %v828, %v857
  %v874 = vmul.f32 %v830, %v858
  %v875 = vmul.f32 %v832, %v859
  %v876 = vmul.f32 %v834, %v860
  %v877 = vmul.f32 %v836, %v861
  %v878 = vmul.f32 %v838, %v862
  %v879 = vmul.f32 %v840, %v863
  %v880 = vmul.f32 %v842, %v864
  %v881 = vmul.f32 %v844, %v865
  %v882 = vmul.f32 %v846, %v866
  %v883 = vmul.f32 %v848, %v867
  %v884 = vmul.f32 %v850, %v868
  %v885 = vmul.f32 %v852, %v869
  %v886 = vmul.f32 %v854, %v870
  %v887 = vmul.f32 %v745, %v871
  %v888 = vmul.f32 %v748, %v872
  %v889 = vmul.f32 %v753, %v873
  %v890 = vmul.f32 %v756, %v874
  %v891 = vmul.f32 %v761, %v875
  %v892 = vmul.f32 %v764, %v876
  %v893 = vmul.f32 %v769, %v877
  %v894 = vmul.f32 %v772, %v878
  %v895 = vmul.f32 %v777, %v879
  %v896 = vmul.f32 %v780, %v880
  %v897 = vmul.f32 %v785, %v881
  %v898 = vmul.f32 %v788, %v882
  %v899 = vmul.f32 %v793, %v883
  %v900 = vmul.f32 %v796, %v884
  %v901 = vmul.f32 %v801, %v885
  %v902 = vmul.f32 %v804, %v886
  %v903 = vadd.f32 %v871, 2.0
  %v904 = vadd.f32 %v872, 2.0
  %v905 = vadd.f32 %v873, 2.0
  %v906 = vadd.f32 %v874, 2.0
  %v907 = vadd.f32 %v875, 2.0
  %v908 = vadd.f32 %v876, 2.0
  %v909 = vadd.f32 %v877, 2.0
  %v910 = vadd.f32 %v878, 2.0
  %v911 = vadd.f32 %v879, 2.0
  %v912 = vadd.f32 %v880, 2.0
  %v913 = vadd.f32 %v881, 2.0
  %v914 = vadd.f32 %v882, 2.0
  %v915 = vadd.f32 %v883, 2.0
  %v916 = vadd.f32 %v884, 2.0
  %v917 = vadd.f32 %v885, 2.0
  %v918 = vadd.f32 %v886, 2.0
  %v919 = vrcp.pop %v903
  %v920 = vrcp.pop %v904
  %v921 = vrcp.pop %v905
  %v922 = vrcp.pop %v906
  %v923 = vrcp.pop %v907
  %v924 = vrcp.pop %v908
  %v925 = vrcp.pop %v909
  %v926 = vrcp.pop %v910
  %v927 = vrcp.pop %v911
  %v928 = vrcp.pop %v912
  %v929 = vrcp.pop %v913
  %v930 = vrcp.pop %v914
  %v931 = vrcp.pop %v915
  %v932 = vrcp.pop %v916
  %v933 = vrcp.pop %v917
  %v934 = vrcp.pop %v918
  %v935 = vmul.f32 %v887, %v919
  %v936 = vmul.f32 %v888, %v920
  %v937 = vmul.f32 %v889, %v921
  %v938 = vmul.f32 %v890, %v922
  %v939 = vmul.f32 %v891, %v923
  %v940 = vmul.f32 %v892, %v924
  %v941 = vmul.f32 %v893, %v925
  %v942 = vmul.f32 %v894, %v926
  %v943 = vmul.f32 %v895, %v927
  %v944 = vmul.f32 %v896, %v928
  %v945 = vmul.f32 %v897, %v929
  %v946 = vmul.f32 %v898, %v930
  %v947 = vmul.f32 %v899, %v931
  %v948 = vmul.f32 %v900, %v932
  %v949 = vmul.f32 %v901, %v933
  %v950 = vmul.f32 %v902, %v934
  %v951 = vpack.c.bf16 %v936, %v935
  %v952 = vpack.c.bf16 %v938, %v937
  %v953 = vpack.c.bf16 %v940, %v939
  %v954 = vpack.c.bf16 %v942, %v941
  %v955 = vpack.c.bf16 %v944, %v943
  %v956 = vpack.c.bf16 %v946, %v945
  %v957 = vpack.c.bf16 %v948, %v947
  %v958 = vpack.c.bf16 %v950, %v949
  %v967 = vunpack.c.l.b16 %v951
  %v968 = vunpack.c.h.b16 %v951
  %v969 = vunpack.c.l.b16 %v952
  %v970 = vunpack.c.h.b16 %v952
  %v971 = vunpack.c.l.b16 %v953
  %v972 = vunpack.c.h.b16 %v953
  %v973 = vunpack.c.l.b16 %v954
  %v974 = vunpack.c.h.b16 %v954
  %v975 = vunpack.c.l.b16 %v955
  %v976 = vunpack.c.h.b16 %v955
  %v977 = vunpack.c.l.b16 %v956
  %v978 = vunpack.c.h.b16 %v956
  %v979 = vunpack.c.l.b16 %v957
  %v980 = vunpack.c.h.b16 %v957
  %v981 = vunpack.c.l.b16 %v958
  %v982 = vunpack.c.h.b16 %v958
  %v983 = vpack.c.b16 %v967, %v967
  %v984 = vpack.c.b16 %v968, %v968
  %v985 = vpack.c.b16 %v969, %v969
  %v986 = vpack.c.b16 %v970, %v970
  %v987 = vpack.c.b16 %v971, %v971
  %v988 = vpack.c.b16 %v972, %v972
  %v989 = vpack.c.b16 %v973, %v973
  %v990 = vpack.c.b16 %v974, %v974
  %v991 = vpack.c.b16 %v975, %v975
  %v992 = vpack.c.b16 %v976, %v976
  %v993 = vpack.c.b16 %v977, %v977
  %v994 = vpack.c.b16 %v978, %v978
  %v995 = vpack.c.b16 %v979, %v979
  %v996 = vpack.c.b16 %v980, %v980
  %v997 = vpack.c.b16 %v981, %v981
  %v998 = vpack.c.b16 %v982, %v982
  %1015 = vst [vmem:[%s6] sm:$0xf] %v983
  %1016 = vst [vmem:[%s6 + $0x4] sm:$0xf] %v984
  %1017 = vst [vmem:[%s6 + $0x8] sm:$0xf] %v985
  %1018 = vst [vmem:[%s6 + $0xc] sm:$0xf] %v986
  %1019 = vst [vmem:[%s6 + $0x10] sm:$0xf] %v987
  %1020 = vst [vmem:[%s6 + $0x14] sm:$0xf] %v988
  %1021 = vst [vmem:[%s6 + $0x18] sm:$0xf] %v989
  %1022 = vst [vmem:[%s6 + $0x1c] sm:$0xf] %v990
  %1023 = vst [vmem:[%s6 + $0x20] sm:$0xf] %v991
  %1024 = vst [vmem:[%s6 + $0x24] sm:$0xf] %v992
  %1025 = vst [vmem:[%s6 + $0x28] sm:$0xf] %v993
  %1026 = vst [vmem:[%s6 + $0x2c] sm:$0xf] %v994
  %1027 = vst [vmem:[%s6 + $0x30] sm:$0xf] %v995
  %1028 = vst [vmem:[%s6 + $0x34] sm:$0xf] %v996
  %1029 = vst [vmem:[%s6 + $0x38] sm:$0xf] %v997
  %1030 = vst [vmem:[%s6 + $0x3c] sm:$0xf] %v998
  // Predicated region
  $region22: #{downsample5_forward.8} parent=0 // pred_check
    _
  $region23: #{downsample5_forward.8} parent=0 // pred_check_branch
    %1032 = sbr.rel (0) target = $region25
  $region24: #{downsample5_forward.8} parent=0 // pred_region
    _
  $region25: #{downsample5_forward.8} parent=0 // pred_fallthru
    _
  // Predicated region
  $region26: #{downsample5_forward.8} parent=0 // pred_check
    _
  $region27: #{downsample5_forward.8} parent=0 // pred_check_branch
    %1034 = sbr.rel (0) target = $region29
  $region28: #{downsample5_forward.8} parent=0 // pred_region
    _
  $region29: #{downsample5_forward.8} parent=0 // pred_fallthru
    _
  // Predicated region
  $region30: #{downsample5_forward.8} parent=0 // pred_check
    _
  $region31: #{downsample5_forward.8} parent=0 // pred_check_branch
    %1036 = sbr.rel (0) target = $region33
  $region32: #{downsample5_forward.8} parent=0 // pred_region
    _
  $region33: #{downsample5_forward.8} parent=0 // pred_fallthru
    _
  // Predicated region
  $region34: #{downsample5_forward.8} parent=0 // pred_check
    _
  $region35: #{downsample5_forward.8} parent=0 // pred_check_branch
    %1038 = sbr.rel (0) target = $region37
  $region36: #{downsample5_forward.8} parent=0 // pred_region
    _
  $region37: #{downsample5_forward.8} parent=0 // pred_fallthru
    _

// kernel: downsample5_forward.13
$region0: #{downsample5_forward.13}
  #allocation0 [shape = 'u32[]', space=smem, size = 0x4, offset = 0x4, fixed_abs, tag = 'smem constant byte address 0x4 - core index']
  #allocation1 [shape = 'u32[144,128]{1,0:T(1,128)}', space=vmem, size = 0x12000, scoped, tag = 'internal scratch']
  %s0 = inlined_call_operand.vmem [shape: bf16[128,128], index: 0, kind: input, shape index: {}]
  %s1 = inlined_call_operand.vmem [shape: bf16[128,128], index: 1, kind: input, shape index: {}]
  %s2 = inlined_call_operand.vmem [shape: bf16[128,128], index: 2, kind: input, shape index: {}]
  %s3 = inlined_call_operand.vmem [shape: f32[1,128], index: 3, kind: input, shape index: {}]
  %s4 = inlined_call_operand.vmem [shape: bf16[128,256], index: 4, kind: input, shape index: {}]
  %s5 = inlined_call_operand.vmem [shape: bf16[128,256], index: 5, kind: input, shape index: {}]
  %s6 = inlined_call_operand.vmem [shape: f32[1,256], index: 6, kind: input, shape index: {}]
  %s7 = inlined_call_operand.vmem [shape: bf16[128,256], index: 7, kind: output, shape index: {}]
  %s8 = sld [smem:[#allocation0]]
  $region38: #{downsample5_forward.13} parent=0
    _
  %s10 = ssub.s32 1, %s8
  %s11 = scalar_select 0, %s10, %s8
  // Predicated region
  $region2: #{downsample5_forward.13} parent=0 // pred_check
    _
  $region3: #{downsample5_forward.13} parent=0 // pred_check_branch
    %13 = sbr.rel (0) target = $region5
  $region4: #{downsample5_forward.13} parent=0 // pred_region
    _
  $region5: #{downsample5_forward.13} parent=0 // pred_fallthru
    _
  // Predicated region
  $region6: #{downsample5_forward.13} parent=0 // pred_check
    _
  $region7: #{downsample5_forward.13} parent=0 // pred_check_branch
    %15 = sbr.rel (0) target = $region9
  $region8: #{downsample5_forward.13} parent=0 // pred_region
    _
  $region9: #{downsample5_forward.13} parent=0 // pred_fallthru
    _
  // Predicated region
  $region10: #{downsample5_forward.13} parent=0 // pred_check
    _
  $region11: #{downsample5_forward.13} parent=0 // pred_check_branch
    %17 = sbr.rel (0) target = $region13
  $region12: #{downsample5_forward.13} parent=0 // pred_region
    _
  $region13: #{downsample5_forward.13} parent=0 // pred_fallthru
    _
  // Predicated region
  $region14: #{downsample5_forward.13} parent=0 // pred_check
    _
  $region15: #{downsample5_forward.13} parent=0 // pred_check_branch
    %19 = sbr.rel (0) target = $region17
  $region16: #{downsample5_forward.13} parent=0 // pred_region
    _
  $region17: #{downsample5_forward.13} parent=0 // pred_fallthru
    _
  // Predicated region
  $region18: #{downsample5_forward.13} parent=0 // pred_check
    _
  $region19: #{downsample5_forward.13} parent=0 // pred_check_branch
    %21 = sbr.rel (0) target = $region21
  $region20: #{downsample5_forward.13} parent=0 // pred_region
    _
  $region21: #{downsample5_forward.13} parent=0 // pred_fallthru
    _
  // Predicated region
  $region22: #{downsample5_forward.13} parent=0 // pred_check
    _
  $region23: #{downsample5_forward.13} parent=0 // pred_check_branch
    %23 = sbr.rel (0) target = $region25
  $region24: #{downsample5_forward.13} parent=0 // pred_region
    _
  $region25: #{downsample5_forward.13} parent=0 // pred_fallthru
    _
  // Predicated region
  $region26: #{downsample5_forward.13} parent=0 // pred_check
    _
  $region27: #{downsample5_forward.13} parent=0 // pred_check_branch
    %25 = sbr.rel (0) target = $region29
  $region28: #{downsample5_forward.13} parent=0 // pred_region
    _
  $region29: #{downsample5_forward.13} parent=0 // pred_fallthru
    _
  %v27 = vld [vmem:[%s0] sm:$0xf]
  %v28 = vld [vmem:[%s0 + $0x4] sm:$0xf]
  %v29 = vld [vmem:[%s0 + $0x8] sm:$0xf]
  %v30 = vld [vmem:[%s0 + $0xc] sm:$0xf]
  %v31 = vld [vmem:[%s0 + $0x10] sm:$0xf]
  %v32 = vld [vmem:[%s0 + $0x14] sm:$0xf]
  %v33 = vld [vmem:[%s0 + $0x18] sm:$0xf]
  %v34 = vld [vmem:[%s0 + $0x1c] sm:$0xf]
  %v35 = vld [vmem:[%s0 + $0x20] sm:$0xf]
  %v36 = vld [vmem:[%s0 + $0x24] sm:$0xf]
  %v37 = vld [vmem:[%s0 + $0x28] sm:$0xf]
  %v38 = vld [vmem:[%s0 + $0x2c] sm:$0xf]
  %v39 = vld [vmem:[%s0 + $0x30] sm:$0xf]
  %v40 = vld [vmem:[%s0 + $0x34] sm:$0xf]
  %v41 = vld [vmem:[%s0 + $0x38] sm:$0xf]
  %v42 = vld [vmem:[%s0 + $0x3c] sm:$0xf]
  %v43 = vld [vmem:[%s2] sm:$0xf]
  %v44 = vld [vmem:[%s2 + $0x4] sm:$0xf]
  %v45 = vld [vmem:[%s2 + $0x8] sm:$0xf]
  %v46 = vld [vmem:[%s2 + $0xc] sm:$0xf]
  %v47 = vld [vmem:[%s2 + $0x10] sm:$0xf]
  %v48 = vld [vmem:[%s2 + $0x14] sm:$0xf]
  %v49 = vld [vmem:[%s2 + $0x18] sm:$0xf]
  %v50 = vld [vmem:[%s2 + $0x1c] sm:$0xf]
  %v51 = vld [vmem:[%s2 + $0x20] sm:$0xf]
  %v52 = vld [vmem:[%s2 + $0x24] sm:$0xf]
  %v53 = vld [vmem:[%s2 + $0x28] sm:$0xf]
  %v54 = vld [vmem:[%s2 + $0x2c] sm:$0xf]
  %v55 = vld [vmem:[%s2 + $0x30] sm:$0xf]
  %v56 = vld [vmem:[%s2 + $0x34] sm:$0xf]
  %v57 = vld [vmem:[%s2 + $0x38] sm:$0xf]
  %v58 = vld [vmem:[%s2 + $0x3c] sm:$0xf]
  %v59 = vld [vmem:[%s3] sm:$0x1]
  %v61 = vlaneseq
  %v62 = vshrl.u32 %v61, 7
  %v63 = vsub.s32 0, %v62
  %v64 = vrot.slane %v59, %v63
  %v82 = vunpack.c.l.b16 %v27
  %v83 = vunpack.c.l.b16 %v28
  %v84 = vunpack.c.l.b16 %v29
  %v85 = vunpack.c.l.b16 %v30
  %v86 = vunpack.c.l.b16 %v31
  %v87 = vunpack.c.l.b16 %v32
  %v88 = vunpack.c.l.b16 %v33
  %v89 = vunpack.c.l.b16 %v34
  %v90 = vunpack.c.l.b16 %v35
  %v91 = vunpack.c.l.b16 %v36
  %v92 = vunpack.c.l.b16 %v37
  %v93 = vunpack.c.l.b16 %v38
  %v94 = vunpack.c.l.b16 %v39
  %v95 = vunpack.c.l.b16 %v40
  %v96 = vunpack.c.l.b16 %v41
  %v97 = vunpack.c.l.b16 %v42
  %v98 = vpack.c.b16 %v83, %v82
  %v99 = vpack.c.b16 %v85, %v84
  %v100 = vpack.c.b16 %v87, %v86
  %v101 = vpack.c.b16 %v89, %v88
  %v102 = vpack.c.b16 %v91, %v90
  %v103 = vpack.c.b16 %v93, %v92
  %v104 = vpack.c.b16 %v95, %v94
  %v105 = vpack.c.b16 %v97, %v96
  %v130 = vunpack.c.l.b16 %v43
  %v131 = vunpack.c.l.b16 %v44
  %v132 = vunpack.c.l.b16 %v45
  %v133 = vunpack.c.l.b16 %v46
  %v134 = vunpack.c.l.b16 %v47
  %v135 = vunpack.c.l.b16 %v48
  %v136 = vunpack.c.l.b16 %v49
  %v137 = vunpack.c.l.b16 %v50
  %v138 = vunpack.c.l.b16 %v51
  %v139 = vunpack.c.l.b16 %v52
  %v140 = vunpack.c.l.b16 %v53
  %v141 = vunpack.c.l.b16 %v54
  %v142 = vunpack.c.l.b16 %v55
  %v143 = vunpack.c.l.b16 %v56
  %v144 = vunpack.c.l.b16 %v57
  %v145 = vunpack.c.l.b16 %v58
  %v146 = vpack.c.b16 %v131, %v130
  %v147 = vpack.c.b16 %v133, %v132
  %v148 = vpack.c.b16 %v135, %v134
  %v149 = vpack.c.b16 %v137, %v136
  %v150 = vpack.c.b16 %v139, %v138
  %v151 = vpack.c.b16 %v141, %v140
  %v152 = vpack.c.b16 %v143, %v142
  %v153 = vpack.c.b16 %v145, %v144
  %162 = vmatprep.subr.bf16.mxu0 0
  %163 = vmatpush1.bf16.msra.mxu0 %v146
  %164 = vmatprep.subr.bf16.mxu0 0
  %165 = vmatpush1.bf16.msra.mxu0 %v147
  %166 = vmatprep.subr.bf16.mxu0 0
  %167 = vmatpush1.bf16.msra.mxu0 %v148
  %168 = vmatprep.subr.bf16.mxu0 0
  %169 = vmatpush1.bf16.msra.mxu0 %v149
  %170 = vmatprep.subr.bf16.mxu0 0
  %171 = vmatpush1.bf16.msra.mxu0 %v150
  %172 = vmatprep.subr.bf16.mxu0 0
  %173 = vmatpush1.bf16.msra.mxu0 %v151
  %174 = vmatprep.subr.bf16.mxu0 0
  %175 = vmatpush1.bf16.msra.mxu0 %v152
  %176 = vmatprep.subr.bf16.mxu0 0
  %177 = vmatpush1.bf16.msra.mxu0 %v153
  %178 = vmatprep.subr.bf16.mxu0 0
  %179 = vmatpush1.bf16.msra.mxu0 0
  %180 = vmatprep.subr.bf16.mxu0 0
  %181 = vmatpush1.bf16.msra.mxu0 0
  %182 = vmatprep.subr.bf16.mxu0 0
  %183 = vmatpush1.bf16.msra.mxu0 0
  %184 = vmatprep.subr.bf16.mxu0 0
  %185 = vmatpush1.bf16.msra.mxu0 0
  %186 = vmatprep.subr.bf16.mxu0 0
  %187 = vmatpush1.bf16.msra.mxu0 0
  %188 = vmatprep.subr.bf16.mxu0 0
  %189 = vmatpush1.bf16.msra.mxu0 0
  %190 = vmatprep.subr.bf16.mxu0 0
  %191 = vmatpush1.bf16.msra.mxu0 0
  %192 = vmatprep.subr.bf16.mxu0 0
  %193 = vmatpush1.bf16.msra.mxu0 0
  %194 = vmatprep.mubr.bf16.mxu0 0
  %195 = vmatmul.mubr.bf16.gmra.mrb[0].mxu0 %v98
  %v196 = vpop.f32.mrb[0].mxu0
  %v197 = vadd.f32 %v64, %v196
  %v198 = vpop.f32.mrb[0].mxu0
  %v199 = vpop.f32.mrb[0].mxu0
  %v200 = vadd.f32 %v64, %v199
  %v201 = vpop.f32.mrb[0].mxu0
  %202 = vmatprep.mubr.bf16.mxu0 0
  %203 = vmatmul.mubr.bf16.gmra.mrb[0].mxu0 %v99
  %v204 = vpop.f32.mrb[0].mxu0
  %v205 = vadd.f32 %v64, %v204
  %v206 = vpop.f32.mrb[0].mxu0
  %v207 = vpop.f32.mrb[0].mxu0
  %v208 = vadd.f32 %v64, %v207
  %v209 = vpop.f32.mrb[0].mxu0
  %210 = vmatprep.mubr.bf16.mxu0 0
  %211 = vmatmul.mubr.bf16.gmra.mrb[0].mxu0 %v100
  %v212 = vpop.f32.mrb[0].mxu0
  %v213 = vadd.f32 %v64, %v212
  %v214 = vpop.f32.mrb[0].mxu0
  %v215 = vpop.f32.mrb[0].mxu0
  %v216 = vadd.f32 %v64, %v215
  %v217 = vpop.f32.mrb[0].mxu0
  %218 = vmatprep.mubr.bf16.mxu0 0
  %219 = vmatmul.mubr.bf16.gmra.mrb[0].mxu0 %v101
  %v220 = vpop.f32.mrb[0].mxu0
  %v221 = vadd.f32 %v64, %v220
  %v222 = vpop.f32.mrb[0].mxu0
  %v223 = vpop.f32.mrb[0].mxu0
  %v224 = vadd.f32 %v64, %v223
  %v225 = vpop.f32.mrb[0].mxu0
  %226 = vmatprep.mubr.bf16.mxu0 0
  %227 = vmatmul.mubr.bf16.gmra.mrb[0].mxu0 %v102
  %v228 = vpop.f32.mrb[0].mxu0
  %v229 = vadd.f32 %v64, %v228
  %v230 = vpop.f32.mrb[0].mxu0
  %v231 = vpop.f32.mrb[0].mxu0
  %v232 = vadd.f32 %v64, %v231
  %v233 = vpop.f32.mrb[0].mxu0
  %234 = vmatprep.mubr.bf16.mxu0 0
  %235 = vmatmul.mubr.bf16.gmra.mrb[0].mxu0 %v103
  %v236 = vpop.f32.mrb[0].mxu0
  %v237 = vadd.f32 %v64, %v236
  %v238 = vpop.f32.mrb[0].mxu0
  %v239 = vpop.f32.mrb[0].mxu0
  %v240 = vadd.f32 %v64, %v239
  %v241 = vpop.f32.mrb[0].mxu0
  %242 = vmatprep.mubr.bf16.mxu0 0
  %243 = vmatmul.mubr.bf16.gmra.mrb[0].mxu0 %v104
  %v244 = vpop.f32.mrb[0].mxu0
  %v245 = vadd.f32 %v64, %v244
  %v246 = vpop.f32.mrb[0].mxu0
  %v247 = vpop.f32.mrb[0].mxu0
  %v248 = vadd.f32 %v64, %v247
  %v249 = vpop.f32.mrb[0].mxu0
  %250 = vmatprep.mubr.bf16.mxu0 0
  %251 = vmatmul.mubr.bf16.gmra.mrb[0].mxu0 %v105
  %v252 = vpop.f32.mrb[0].mxu0
  %v253 = vadd.f32 %v64, %v252
  %v254 = vpop.f32.mrb[0].mxu0
  %v255 = vpop.f32.mrb[0].mxu0
  %v256 = vadd.f32 %v64, %v255
  %v257 = vpop.f32.mrb[0].mxu0
  %258 = vdwg.mxu0
  %v259 = vmin.f32 %v197, 20.0
  %v260 = vmin.f32 %v200, 20.0
  %v261 = vmin.f32 %v205, 20.0
  %v262 = vmin.f32 %v208, 20.0
  %v263 = vmin.f32 %v213, 20.0
  %v264 = vmin.f32 %v216, 20.0
  %v265 = vmin.f32 %v221, 20.0
  %v266 = vmin.f32 %v224, 20.0
  %v267 = vmin.f32 %v229, 20.0
  %v268 = vmin.f32 %v232, 20.0
  %v269 = vmin.f32 %v237, 20.0
  %v270 = vmin.f32 %v240, 20.0
  %v271 = vmin.f32 %v245, 20.0
  %v272 = vmin.f32 %v248, 20.0
  %v273 = vmin.f32 %v253, 20.0
  %v274 = vmin.f32 %v256, 20.0
  %v275 = vmul.f32 %v259, 1.442695
  %v276 = vpow.pop %v275
  %v277 = vmul.f32 %v260, 1.442695
  %v278 = vpow.pop %v277
  %v279 = vmul.f32 %v261, 1.442695
  %v280 = vpow.pop %v279
  %v281 = vmul.f32 %v262, 1.442695
  %v282 = vpow.pop %v281
  %v283 = vmul.f32 %v263, 1.442695
  %v284 = vpow.pop %v283
  %v285 = vmul.f32 %v264, 1.442695
  %v286 = vpow.pop %v285
  %v287 = vmul.f32 %v265, 1.442695
  %v288 = vpow.pop %v287
  %v289 = vmul.f32 %v266, 1.442695
  %v290 = vpow.pop %v289
  %v291 = vmul.f32 %v267, 1.442695
  %v292 = vpow.pop %v291
  %v293 = vmul.f32 %v268, 1.442695
  %v294 = vpow.pop %v293
  %v295 = vmul.f32 %v269, 1.442695
  %v296 = vpow.pop %v295
  %v297 = vmul.f32 %v270, 1.442695
  %v298 = vpow.pop %v297
  %v299 = vmul.f32 %v271, 1.442695
  %v300 = vpow.pop %v299
  %v301 = vmul.f32 %v272, 1.442695
  %v302 = vpow.pop %v301
  %v303 = vmul.f32 %v273, 1.442695
  %v304 = vpow.pop %v303
  %v305 = vmul.f32 %v274, 1.442695
  %v306 = vpow.pop %v305
  %v307 = vadd.f32 %v276, 2.0
  %v308 = vadd.f32 %v278, 2.0
  %v309 = vadd.f32 %v280, 2.0
  %v310 = vadd.f32 %v282, 2.0
  %v311 = vadd.f32 %v284, 2.0
  %v312 = vadd.f32 %v286, 2.0
  %v313 = vadd.f32 %v288, 2.0
  %v314 = vadd.f32 %v290, 2.0
  %v315 = vadd.f32 %v292, 2.0
  %v316 = vadd.f32 %v294, 2.0
  %v317 = vadd.f32 %v296, 2.0
  %v318 = vadd.f32 %v298, 2.0
  %v319 = vadd.f32 %v300, 2.0
  %v320 = vadd.f32 %v302, 2.0
  %v321 = vadd.f32 %v304, 2.0
  %v322 = vadd.f32 %v306, 2.0
  %v323 = vmul.f32 %v276, %v307
  %v324 = vmul.f32 %v278, %v308
  %v325 = vmul.f32 %v280, %v309
  %v326 = vmul.f32 %v282, %v310
  %v327 = vmul.f32 %v284, %v311
  %v328 = vmul.f32 %v286, %v312
  %v329 = vmul.f32 %v288, %v313
  %v330 = vmul.f32 %v290, %v314
  %v331 = vmul.f32 %v292, %v315
  %v332 = vmul.f32 %v294, %v316
  %v333 = vmul.f32 %v296, %v317
  %v334 = vmul.f32 %v298, %v318
  %v335 = vmul.f32 %v300, %v319
  %v336 = vmul.f32 %v302, %v320
  %v337 = vmul.f32 %v304, %v321
  %v338 = vmul.f32 %v306, %v322
  %v339 = vmul.f32 %v197, %v323
  %v340 = vmul.f32 %v200, %v324
  %v341 = vmul.f32 %v205, %v325
  %v342 = vmul.f32 %v208, %v326
  %v343 = vmul.f32 %v213, %v327
  %v344 = vmul.f32 %v216, %v328
  %v345 = vmul.f32 %v221, %v329
  %v346 = vmul.f32 %v224, %v330
  %v347 = vmul.f32 %v229, %v331
  %v348 = vmul.f32 %v232, %v332
  %v349 = vmul.f32 %v237, %v333
  %v350 = vmul.f32 %v240, %v334
  %v351 = vmul.f32 %v245, %v335
  %v352 = vmul.f32 %v248, %v336
  %v353 = vmul.f32 %v253, %v337
  %v354 = vmul.f32 %v256, %v338
  %v355 = vadd.f32 %v323, 2.0
  %v356 = vadd.f32 %v324, 2.0
  %v357 = vadd.f32 %v325, 2.0
  %v358 = vadd.f32 %v326, 2.0
  %v359 = vadd.f32 %v327, 2.0
  %v360 = vadd.f32 %v328, 2.0
  %v361 = vadd.f32 %v329, 2.0
  %v362 = vadd.f32 %v330, 2.0
  %v363 = vadd.f32 %v331, 2.0
  %v364 = vadd.f32 %v332, 2.0
  %v365 = vadd.f32 %v333, 2.0
  %v366 = vadd.f32 %v334, 2.0
  %v367 = vadd.f32 %v335, 2.0
  %v368 = vadd.f32 %v336, 2.0
  %v369 = vadd.f32 %v337, 2.0
  %v370 = vadd.f32 %v338, 2.0
  %v371 = vrcp.pop %v355
  %v372 = vrcp.pop %v356
  %v373 = vrcp.pop %v357
  %v374 = vrcp.pop %v358
  %v375 = vrcp.pop %v359
  %v376 = vrcp.pop %v360
  %v377 = vrcp.pop %v361
  %v378 = vrcp.pop %v362
  %v379 = vrcp.pop %v363
  %v380 = vrcp.pop %v364
  %v381 = vrcp.pop %v365
  %v382 = vrcp.pop %v366
  %v383 = vrcp.pop %v367
  %v384 = vrcp.pop %v368
  %v385 = vrcp.pop %v369
  %v386 = vrcp.pop %v370
  %v387 = vmul.f32 %v339, %v371
  %v388 = vmul.f32 %v340, %v372
  %v389 = vmul.f32 %v341, %v373
  %v390 = vmul.f32 %v342, %v374
  %v391 = vmul.f32 %v343, %v375
  %v392 = vmul.f32 %v344, %v376
  %v393 = vmul.f32 %v345, %v377
  %v394 = vmul.f32 %v346, %v378
  %v395 = vmul.f32 %v347, %v379
  %v396 = vmul.f32 %v348, %v380
  %v397 = vmul.f32 %v349, %v381
  %v398 = vmul.f32 %v350, %v382
  %v399 = vmul.f32 %v351, %v383
  %v400 = vmul.f32 %v352, %v384
  %v401 = vmul.f32 %v353, %v385
  %v402 = vmul.f32 %v354, %v386
  %v403 = vpack.c.bf16 %v388, %v387
  %v404 = vpack.c.bf16 %v390, %v389
  %v405 = vpack.c.bf16 %v392, %v391
  %v406 = vpack.c.bf16 %v394, %v393
  %v407 = vpack.c.bf16 %v396, %v395
  %v408 = vpack.c.bf16 %v398, %v397
  %v409 = vpack.c.bf16 %v400, %v399
  %v410 = vpack.c.bf16 %v402, %v401
  %v411 = vld [vmem:[%s4] sm:$0xff]
  %v412 = vld [vmem:[%s4 + $0x8] sm:$0xff]
  %v413 = vld [vmem:[%s4 + $0x10] sm:$0xff]
  %v414 = vld [vmem:[%s4 + $0x18] sm:$0xff]
  %v415 = vld [vmem:[%s4 + $0x20] sm:$0xff]
  %v416 = vld [vmem:[%s4 + $0x28] sm:$0xff]
  %v417 = vld [vmem:[%s4 + $0x30] sm:$0xff]
  %v418 = vld [vmem:[%s4 + $0x38] sm:$0xff]
  %v419 = vld [vmem:[%s4 + $0x40] sm:$0xff]
  %v420 = vld [vmem:[%s4 + $0x48] sm:$0xff]
  %v421 = vld [vmem:[%s4 + $0x50] sm:$0xff]
  %v422 = vld [vmem:[%s4 + $0x58] sm:$0xff]
  %v423 = vld [vmem:[%s4 + $0x60] sm:$0xff]
  %v424 = vld [vmem:[%s4 + $0x68] sm:$0xff]
  %v425 = vld [vmem:[%s4 + $0x70] sm:$0xff]
  %v426 = vld [vmem:[%s4 + $0x78] sm:$0xff]
  %v427 = vld [vmem:[%s1] sm:$0xf]
  %v428 = vld [vmem:[%s1 + $0x4] sm:$0xf]
  %v429 = vld [vmem:[%s1 + $0x8] sm:$0xf]
  %v430 = vld [vmem:[%s1 + $0xc] sm:$0xf]
  %v431 = vld [vmem:[%s1 + $0x10] sm:$0xf]
  %v432 = vld [vmem:[%s1 + $0x14] sm:$0xf]
  %v433 = vld [vmem:[%s1 + $0x18] sm:$0xf]
  %v434 = vld [vmem:[%s1 + $0x1c] sm:$0xf]
  %v435 = vld [vmem:[%s1 + $0x20] sm:$0xf]
  %v436 = vld [vmem:[%s1 + $0x24] sm:$0xf]
  %v437 = vld [vmem:[%s1 + $0x28] sm:$0xf]
  %v438 = vld [vmem:[%s1 + $0x2c] sm:$0xf]
  %v439 = vld [vmem:[%s1 + $0x30] sm:$0xf]
  %v440 = vld [vmem:[%s1 + $0x34] sm:$0xf]
  %v441 = vld [vmem:[%s1 + $0x38] sm:$0xf]
  %v442 = vld [vmem:[%s1 + $0x3c] sm:$0xf]
  %v443 = vld [vmem:[%s5] sm:$0xff]
  %v444 = vld [vmem:[%s5 + $0x8] sm:$0xff]
  %v445 = vld [vmem:[%s5 + $0x10] sm:$0xff]
  %v446 = vld [vmem:[%s5 + $0x18] sm:$0xff]
  %v447 = vld [vmem:[%s5 + $0x20] sm:$0xff]
  %v448 = vld [vmem:[%s5 + $0x28] sm:$0xff]
  %v449 = vld [vmem:[%s5 + $0x30] sm:$0xff]
  %v450 = vld [vmem:[%s5 + $0x38] sm:$0xff]
  %v451 = vld [vmem:[%s5 + $0x40] sm:$0xff]
  %v452 = vld [vmem:[%s5 + $0x48] sm:$0xff]
  %v453 = vld [vmem:[%s5 + $0x50] sm:$0xff]
  %v454 = vld [vmem:[%s5 + $0x58] sm:$0xff]
  %v455 = vld [vmem:[%s5 + $0x60] sm:$0xff]
  %v456 = vld [vmem:[%s5 + $0x68] sm:$0xff]
  %v457 = vld [vmem:[%s5 + $0x70] sm:$0xff]
  %v458 = vld [vmem:[%s5 + $0x78] sm:$0xff]
  %v475 = vunpack.c.l.b16 %v427
  %v476 = vunpack.c.l.b16 %v428
  %v477 = vunpack.c.l.b16 %v429
  %v478 = vunpack.c.l.b16 %v430
  %v479 = vunpack.c.l.b16 %v431
  %v480 = vunpack.c.l.b16 %v432
  %v481 = vunpack.c.l.b16 %v433
  %v482 = vunpack.c.l.b16 %v434
  %v483 = vunpack.c.l.b16 %v435
  %v484 = vunpack.c.l.b16 %v436
  %v485 = vunpack.c.l.b16 %v437
  %v486 = vunpack.c.l.b16 %v438
  %v487 = vunpack.c.l.b16 %v439
  %v488 = vunpack.c.l.b16 %v440
  %v489 = vunpack.c.l.b16 %v441
  %v490 = vunpack.c.l.b16 %v442
  %v491 = vpack.c.b16 %v476, %v475
  %v492 = vpack.c.b16 %v478, %v477
  %v493 = vpack.c.b16 %v480, %v479
  %v494 = vpack.c.b16 %v482, %v481
  %v495 = vpack.c.b16 %v484, %v483
  %v496 = vpack.c.b16 %v486, %v485
  %v497 = vpack.c.b16 %v488, %v487
  %v498 = vpack.c.b16 %v490, %v489
  %v523 = vunpack.c.l.b16 %v443
  %v524 = vunpack.c.h.b16 %v443
  %v525 = vunpack.c.l.b16 %v444
  %v526 = vunpack.c.h.b16 %v444
  %v527 = vunpack.c.l.b16 %v445
  %v528 = vunpack.c.h.b16 %v445
  %v529 = vunpack.c.l.b16 %v446
  %v530 = vunpack.c.h.b16 %v446
  %v531 = vunpack.c.l.b16 %v447
  %v532 = vunpack.c.h.b16 %v447
  %v533 = vunpack.c.l.b16 %v448
  %v534 = vunpack.c.h.b16 %v448
  %v535 = vunpack.c.l.b16 %v449
  %v536 = vunpack.c.h.b16 %v449
  %v537 = vunpack.c.l.b16 %v450
  %v538 = vunpack.c.h.b16 %v450
  %v539 = vunpack.c.l.b16 %v451
  %v540 = vunpack.c.h.b16 %v451
  %v541 = vunpack.c.l.b16 %v452
  %v542 = vunpack.c.h.b16 %v452
  %v543 = vunpack.c.l.b16 %v453
  %v544 = vunpack.c.h.b16 %v453
  %v545 = vunpack.c.l.b16 %v454
  %v546 = vunpack.c.h.b16 %v454
  %v547 = vunpack.c.l.b16 %v455
  %v548 = vunpack.c.h.b16 %v455
  %v549 = vunpack.c.l.b16 %v456
  %v550 = vunpack.c.h.b16 %v456
  %v551 = vunpack.c.l.b16 %v457
  %v552 = vunpack.c.h.b16 %v457
  %v553 = vunpack.c.l.b16 %v458
  %v554 = vunpack.c.h.b16 %v458
  %v555 = vpack.c.b16 %v525, %v523
  %v556 = vpack.c.b16 %v526, %v524
  %v557 = vpack.c.b16 %v529, %v527
  %v558 = vpack.c.b16 %v530, %v528
  %v559 = vpack.c.b16 %v533, %v531
  %v560 = vpack.c.b16 %v534, %v532
  %v561 = vpack.c.b16 %v537, %v535
  %v562 = vpack.c.b16 %v538, %v536
  %v563 = vpack.c.b16 %v541, %v539
  %v564 = vpack.c.b16 %v542, %v540
  %v565 = vpack.c.b16 %v545, %v543
  %v566 = vpack.c.b16 %v546, %v544
  %v567 = vpack.c.b16 %v549, %v547
  %v568 = vpack.c.b16 %v550, %v548
  %v569 = vpack.c.b16 %v553, %v551
  %v570 = vpack.c.b16 %v554, %v552
  %587 = vmatprep.subr.bf16.mxu0 %v556
  %588 = vmatpush1.bf16.msra.mxu0 %v555
  %589 = vmatprep.subr.bf16.mxu0 %v558
  %590 = vmatpush1.bf16.msra.mxu0 %v557
  %591 = vmatprep.subr.bf16.mxu0 %v560
  %592 = vmatpush1.bf16.msra.mxu0 %v559
  %593 = vmatprep.subr.bf16.mxu0 %v562
  %594 = vmatpush1.bf16.msra.mxu0 %v561
  %595 = vmatprep.subr.bf16.mxu0 %v564
  %596 = vmatpush1.bf16.msra.mxu0 %v563
  %597 = vmatprep.subr.bf16.mxu0 %v566
  %598 = vmatpush1.bf16.msra.mxu0 %v565
  %599 = vmatprep.subr.bf16.mxu0 %v568
  %600 = vmatpush1.bf16.msra.mxu0 %v567
  %601 = vmatprep.subr.bf16.mxu0 %v570
  %602 = vmatpush1.bf16.msra.mxu0 %v569
  %603 = vmatprep.subr.bf16.mxu0 0
  %604 = vmatpush1.bf16.msra.mxu0 0
  %605 = vmatprep.subr.bf16.mxu0 0
  %606 = vmatpush1.bf16.msra.mxu0 0
  %607 = vmatprep.subr.bf16.mxu0 0
  %608 = vmatpush1.bf16.msra.mxu0 0
  %609 = vmatprep.subr.bf16.mxu0 0
  %610 = vmatpush1.bf16.msra.mxu0 0
  %611 = vmatprep.subr.bf16.mxu0 0
  %612 = vmatpush1.bf16.msra.mxu0 0
  %613 = vmatprep.subr.bf16.mxu0 0
  %614 = vmatpush1.bf16.msra.mxu0 0
  %615 = vmatprep.subr.bf16.mxu0 0
  %616 = vmatpush1.bf16.msra.mxu0 0
  %617 = vmatprep.subr.bf16.mxu0 0
  %618 = vmatpush1.bf16.msra.mxu0 0
  %619 = vmatprep.mubr.bf16.mxu0 0
  %620 = vmatmul.mubr.bf16.gmra.mrb[0].mxu0 %v491
  %v621 = vpop.f32.mrb[0].mxu0
  %v622 = vadd.f32 0.0, %v621
  %v623 = vpop.f32.mrb[0].mxu0
  %v624 = vadd.f32 0.0, %v623
  %v625 = vpop.f32.mrb[0].mxu0
  %v626 = vadd.f32 0.0, %v625
  %v627 = vpop.f32.mrb[0].mxu0
  %v628 = vadd.f32 0.0, %v627
  %629 = vmatprep.mubr.bf16.mxu0 0
  %630 = vmatmul.mubr.bf16.gmra.mrb[0].mxu0 %v492
  %v631 = vpop.f32.mrb[0].mxu0
  %v632 = vadd.f32 0.0, %v631
  %v633 = vpop.f32.mrb[0].mxu0
  %v634 = vadd.f32 0.0, %v633
  %v635 = vpop.f32.mrb[0].mxu0
  %v636 = vadd.f32 0.0, %v635
  %v637 = vpop.f32.mrb[0].mxu0
  %v638 = vadd.f32 0.0, %v637
  %639 = vmatprep.mubr.bf16.mxu0 0
  %640 = vmatmul.mubr.bf16.gmra.mrb[0].mxu0 %v493
  %v641 = vpop.f32.mrb[0].mxu0
  %v642 = vadd.f32 0.0, %v641
  %v643 = vpop.f32.mrb[0].mxu0
  %v644 = vadd.f32 0.0, %v643
  %v645 = vpop.f32.mrb[0].mxu0
  %v646 = vadd.f32 0.0, %v645
  %v647 = vpop.f32.mrb[0].mxu0
  %v648 = vadd.f32 0.0, %v647
  %649 = vmatprep.mubr.bf16.mxu0 0
  %650 = vmatmul.mubr.bf16.gmra.mrb[0].mxu0 %v494
  %v651 = vpop.f32.mrb[0].mxu0
  %v652 = vadd.f32 0.0, %v651
  %v653 = vpop.f32.mrb[0].mxu0
  %v654 = vadd.f32 0.0, %v653
  %v655 = vpop.f32.mrb[0].mxu0
  %v656 = vadd.f32 0.0, %v655
  %v657 = vpop.f32.mrb[0].mxu0
  %v658 = vadd.f32 0.0, %v657
  %659 = vmatprep.mubr.bf16.mxu0 0
  %660 = vmatmul.mubr.bf16.gmra.mrb[0].mxu0 %v495
  %v661 = vpop.f32.mrb[0].mxu0
  %v662 = vadd.f32 0.0, %v661
  %v663 = vpop.f32.mrb[0].mxu0
  %v664 = vadd.f32 0.0, %v663
  %v665 = vpop.f32.mrb[0].mxu0
  %v666 = vadd.f32 0.0, %v665
  %v667 = vpop.f32.mrb[0].mxu0
  %v668 = vadd.f32 0.0, %v667
  %669 = vmatprep.mubr.bf16.mxu0 0
  %670 = vmatmul.mubr.bf16.gmra.mrb[0].mxu0 %v496
  %v671 = vpop.f32.mrb[0].mxu0
  %v672 = vadd.f32 0.0, %v671
  %v673 = vpop.f32.mrb[0].mxu0
  %v674 = vadd.f32 0.0, %v673
  %v675 = vpop.f32.mrb[0].mxu0
  %v676 = vadd.f32 0.0, %v675
  %v677 = vpop.f32.mrb[0].mxu0
  %v678 = vadd.f32 0.0, %v677
  %679 = vmatprep.mubr.bf16.mxu0 0
  %680 = vmatmul.mubr.bf16.gmra.mrb[0].mxu0 %v497
  %v681 = vpop.f32.mrb[0].mxu0
  %v682 = vadd.f32 0.0, %v681
  %v683 = vpop.f32.mrb[0].mxu0
  %v684 = vadd.f32 0.0, %v683
  %v685 = vpop.f32.mrb[0].mxu0
  %v686 = vadd.f32 0.0, %v685
  %v687 = vpop.f32.mrb[0].mxu0
  %v688 = vadd.f32 0.0, %v687
  %689 = vmatprep.mubr.bf16.mxu0 0
  %690 = vmatmul.mubr.bf16.gmra.mrb[0].mxu0 %v498
  %v691 = vpop.f32.mrb[0].mxu0
  %v692 = vadd.f32 0.0, %v691
  %v693 = vpop.f32.mrb[0].mxu0
  %v694 = vadd.f32 0.0, %v693
  %v695 = vpop.f32.mrb[0].mxu0
  %v696 = vadd.f32 0.0, %v695
  %v697 = vpop.f32.mrb[0].mxu0
  %v698 = vadd.f32 0.0, %v697
  %699 = vdwg.mxu0
  %v716 = vunpack.c.l.b16 %v411
  %v717 = vunpack.c.h.b16 %v411
  %v718 = vunpack.c.l.b16 %v412
  %v719 = vunpack.c.h.b16 %v412
  %v720 = vunpack.c.l.b16 %v413
  %v721 = vunpack.c.h.b16 %v413
  %v722 = vunpack.c.l.b16 %v414
  %v723 = vunpack.c.h.b16 %v414
  %v724 = vunpack.c.l.b16 %v415
  %v725 = vunpack.c.h.b16 %v415
  %v726 = vunpack.c.l.b16 %v416
  %v727 = vunpack.c.h.b16 %v416
  %v728 = vunpack.c.l.b16 %v417
  %v729 = vunpack.c.h.b16 %v417
  %v730 = vunpack.c.l.b16 %v418
  %v731 = vunpack.c.h.b16 %v418
  %v732 = vunpack.c.l.b16 %v419
  %v733 = vunpack.c.h.b16 %v419
  %v734 = vunpack.c.l.b16 %v420
  %v735 = vunpack.c.h.b16 %v420
  %v736 = vunpack.c.l.b16 %v421
  %v737 = vunpack.c.h.b16 %v421
  %v738 = vunpack.c.l.b16 %v422
  %v739 = vunpack.c.h.b16 %v422
  %v740 = vunpack.c.l.b16 %v423
  %v741 = vunpack.c.h.b16 %v423
  %v742 = vunpack.c.l.b16 %v424
  %v743 = vunpack.c.h.b16 %v424
  %v744 = vunpack.c.l.b16 %v425
  %v745 = vunpack.c.h.b16 %v425
  %v746 = vunpack.c.l.b16 %v426
  %v747 = vunpack.c.h.b16 %v426
  %v748 = vpack.c.b16 %v718, %v716
  %v749 = vpack.c.b16 %v719, %v717
  %v750 = vpack.c.b16 %v722, %v720
  %v751 = vpack.c.b16 %v723, %v721
  %v752 = vpack.c.b16 %v726, %v724
  %v753 = vpack.c.b16 %v727, %v725
  %v754 = vpack.c.b16 %v730, %v728
  %v755 = vpack.c.b16 %v731, %v729
  %v756 = vpack.c.b16 %v734, %v732
  %v757 = vpack.c.b16 %v735, %v733
  %v758 = vpack.c.b16 %v738, %v736
  %v759 = vpack.c.b16 %v739, %v737
  %v760 = vpack.c.b16 %v742, %v740
  %v761 = vpack.c.b16 %v743, %v741
  %v762 = vpack.c.b16 %v746, %v744
  %v763 = vpack.c.b16 %v747, %v745
  %780 = vmatprep.subr.bf16.mxu0 %v749
  %781 = vmatpush1.bf16.msra.mxu0 %v748
  %782 = vmatprep.subr.bf16.mxu0 %v751
  %783 = vmatpush1.bf16.msra.mxu0 %v750
  %784 = vmatprep.subr.bf16.mxu0 %v753
  %785 = vmatpush1.bf16.msra.mxu0 %v752
  %786 = vmatprep.subr.bf16.mxu0 %v755
  %787 = vmatpush1.bf16.msra.mxu0 %v754
  %788 = vmatprep.subr.bf16.mxu0 %v757
  %789 = vmatpush1.bf16.msra.mxu0 %v756
  %790 = vmatprep.subr.bf16.mxu0 %v759
  %791 = vmatpush1.bf16.msra.mxu0 %v758
  %792 = vmatprep.subr.bf16.mxu0 %v761
  %793 = vmatpush1.bf16.msra.mxu0 %v760
  %794 = vmatprep.subr.bf16.mxu0 %v763
  %795 = vmatpush1.bf16.msra.mxu0 %v762
  %796 = vmatprep.subr.bf16.mxu0 0
  %797 = vmatpush1.bf16.msra.mxu0 0
  %798 = vmatprep.subr.bf16.mxu0 0
  %799 = vmatpush1.bf16.msra.mxu0 0
  %800 = vmatprep.subr.bf16.mxu0 0
  %801 = vmatpush1.bf16.msra.mxu0 0
  %802 = vmatprep.subr.bf16.mxu0 0
  %803 = vmatpush1.bf16.msra.mxu0 0
  %804 = vmatprep.subr.bf16.mxu0 0
  %805 = vmatpush1.bf16.msra.mxu0 0
  %806 = vmatprep.subr.bf16.mxu0 0
  %807 = vmatpush1.bf16.msra.mxu0 0
  %808 = vmatprep.subr.bf16.mxu0 0
  %809 = vmatpush1.bf16.msra.mxu0 0
  %810 = vmatprep.subr.bf16.mxu0 0
  %811 = vmatpush1.bf16.msra.mxu0 0
  %812 = vmatprep.mubr.bf16.mxu0 0
  %813 = vmatmul.mubr.bf16.gmra.mrb[0].mxu0 %v403
  %v814 = vpop.f32.mrb[0].mxu0
  %v815 = vadd.f32 %v622, %v814
  %v816 = vpop.f32.mrb[0].mxu0
  %v817 = vadd.f32 %v624, %v816
  %v818 = vpop.f32.mrb[0].mxu0
  %v819 = vadd.f32 %v626, %v818
  %v820 = vpop.f32.mrb[0].mxu0
  %v821 = vadd.f32 %v628, %v820
  %822 = vmatprep.mubr.bf16.mxu0 0
  %823 = vmatmul.mubr.bf16.gmra.mrb[0].mxu0 %v404
  %v824 = vpop.f32.mrb[0].mxu0
  %v825 = vadd.f32 %v632, %v824
  %v826 = vpop.f32.mrb[0].mxu0
  %v827 = vadd.f32 %v634, %v826
  %v828 = vpop.f32.mrb[0].mxu0
  %v829 = vadd.f32 %v636, %v828
  %v830 = vpop.f32.mrb[0].mxu0
  %v831 = vadd.f32 %v638, %v830
  %832 = vmatprep.mubr.bf16.mxu0 0
  %833 = vmatmul.mubr.bf16.gmra.mrb[0].mxu0 %v405
  %v834 = vpop.f32.mrb[0].mxu0
  %v835 = vadd.f32 %v642, %v834
  %v836 = vpop.f32.mrb[0].mxu0
  %v837 = vadd.f32 %v644, %v836
  %v838 = vpop.f32.mrb[0].mxu0
  %v839 = vadd.f32 %v646, %v838
  %v840 = vpop.f32.mrb[0].mxu0
  %v841 = vadd.f32 %v648, %v840
  %842 = vmatprep.mubr.bf16.mxu0 0
  %843 = vmatmul.mubr.bf16.gmra.mrb[0].mxu0 %v406
  %v844 = vpop.f32.mrb[0].mxu0
  %v845 = vadd.f32 %v652, %v844
  %v846 = vpop.f32.mrb[0].mxu0
  %v847 = vadd.f32 %v654, %v846
  %v848 = vpop.f32.mrb[0].mxu0
  %v849 = vadd.f32 %v656, %v848
  %v850 = vpop.f32.mrb[0].mxu0
  %v851 = vadd.f32 %v658, %v850
  %852 = vmatprep.mubr.bf16.mxu0 0
  %853 = vmatmul.mubr.bf16.gmra.mrb[0].mxu0 %v407
  %v854 = vpop.f32.mrb[0].mxu0
  %v855 = vadd.f32 %v662, %v854
  %v856 = vpop.f32.mrb[0].mxu0
  %v857 = vadd.f32 %v664, %v856
  %v858 = vpop.f32.mrb[0].mxu0
  %v859 = vadd.f32 %v666, %v858
  %v860 = vpop.f32.mrb[0].mxu0
  %v861 = vadd.f32 %v668, %v860
  %862 = vmatprep.mubr.bf16.mxu0 0
  %863 = vmatmul.mubr.bf16.gmra.mrb[0].mxu0 %v408
  %v864 = vpop.f32.mrb[0].mxu0
  %v865 = vadd.f32 %v672, %v864
  %v866 = vpop.f32.mrb[0].mxu0
  %v867 = vadd.f32 %v674, %v866
  %v868 = vpop.f32.mrb[0].mxu0
  %v869 = vadd.f32 %v676, %v868
  %v870 = vpop.f32.mrb[0].mxu0
  %v871 = vadd.f32 %v678, %v870
  %872 = vmatprep.mubr.bf16.mxu0 0
  %873 = vmatmul.mubr.bf16.gmra.mrb[0].mxu0 %v409
  %v874 = vpop.f32.mrb[0].mxu0
  %v875 = vadd.f32 %v682, %v874
  %v876 = vpop.f32.mrb[0].mxu0
  %v877 = vadd.f32 %v684, %v876
  %v878 = vpop.f32.mrb[0].mxu0
  %v879 = vadd.f32 %v686, %v878
  %v880 = vpop.f32.mrb[0].mxu0
  %v881 = vadd.f32 %v688, %v880
  %882 = vmatprep.mubr.bf16.mxu0 0
  %883 = vmatmul.mubr.bf16.gmra.mrb[0].mxu0 %v410
  %v884 = vpop.f32.mrb[0].mxu0
  %v885 = vadd.f32 %v692, %v884
  %v886 = vpop.f32.mrb[0].mxu0
  %v887 = vadd.f32 %v694, %v886
  %v888 = vpop.f32.mrb[0].mxu0
  %v889 = vadd.f32 %v696, %v888
  %v890 = vpop.f32.mrb[0].mxu0
  %v891 = vadd.f32 %v698, %v890
  %892 = vdwg.mxu0
  %v893 = vld [vmem:[%s6] sm:$0x3]
  %v895 = vlaneseq
  %v896 = vshrl.u32 %v895, 7
  %v897 = vsub.s32 0, %v896
  %v898 = vrot.slane %v893, %v897
  %v899 = vlaneseq
  %v900 = vshrl.u32 %v899, 7
  %v901 = vsub.s32 1, %v900
  %v902 = vrot.slane %v893, %v901
  %v905 = vadd.f32 %v815, %v898
  %v906 = vadd.f32 %v817, %v902
  %v907 = vadd.f32 %v819, %v898
  %v908 = vadd.f32 %v821, %v902
  %v909 = vadd.f32 %v825, %v898
  %v910 = vadd.f32 %v827, %v902
  %v911 = vadd.f32 %v829, %v898
  %v912 = vadd.f32 %v831, %v902
  %v913 = vadd.f32 %v835, %v898
  %v914 = vadd.f32 %v837, %v902
  %v915 = vadd.f32 %v839, %v898
  %v916 = vadd.f32 %v841, %v902
  %v917 = vadd.f32 %v845, %v898
  %v918 = vadd.f32 %v847, %v902
  %v919 = vadd.f32 %v849, %v898
  %v920 = vadd.f32 %v851, %v902
  %v921 = vadd.f32 %v855, %v898
  %v922 = vadd.f32 %v857, %v902
  %v923 = vadd.f32 %v859, %v898
  %v924 = vadd.f32 %v861, %v902
  %v925 = vadd.f32 %v865, %v898
  %v926 = vadd.f32 %v867, %v902
  %v927 = vadd.f32 %v869, %v898
  %v928 = vadd.f32 %v871, %v902
  %v929 = vadd.f32 %v875, %v898
  %v930 = vadd.f32 %v877, %v902
  %v931 = vadd.f32 %v879, %v898
  %v932 = vadd.f32 %v881, %v902
  %v933 = vadd.f32 %v885, %v898
  %v934 = vadd.f32 %v887, %v902
  %v935 = vadd.f32 %v889, %v898
  %v936 = vadd.f32 %v891, %v902
  %v937 = vmin.f32 %v905, 20.0
  %v938 = vmin.f32 %v906, 20.0
  %v939 = vmin.f32 %v907, 20.0
  %v940 = vmin.f32 %v908, 20.0
  %v941 = vmin.f32 %v909, 20.0
  %v942 = vmin.f32 %v910, 20.0
  %v943 = vmin.f32 %v911, 20.0
  %v944 = vmin.f32 %v912, 20.0
  %v945 = vmin.f32 %v913, 20.0
  %v946 = vmin.f32 %v914, 20.0
  %v947 = vmin.f32 %v915, 20.0
  %v948 = vmin.f32 %v916, 20.0
  %v949 = vmin.f32 %v917, 20.0
  %v950 = vmin.f32 %v918, 20.0
  %v951 = vmin.f32 %v919, 20.0
  %v952 = vmin.f32 %v920, 20.0
  %v953 = vmin.f32 %v921, 20.0
  %v954 = vmin.f32 %v922, 20.0
  %v955 = vmin.f32 %v923, 20.0
  %v956 = vmin.f32 %v924, 20.0
  %v957 = vmin.f32 %v925, 20.0
  %v958 = vmin.f32 %v926, 20.0
  %v959 = vmin.f32 %v927, 20.0
  %v960 = vmin.f32 %v928, 20.0
  %v961 = vmin.f32 %v929, 20.0
  %v962 = vmin.f32 %v930, 20.0
  %v963 = vmin.f32 %v931, 20.0
  %v964 = vmin.f32 %v932, 20.0
  %v965 = vmin.f32 %v933, 20.0
  %v966 = vmin.f32 %v934, 20.0
  %v967 = vmin.f32 %v935, 20.0
  %v968 = vmin.f32 %v936, 20.0
  %v969 = vmul.f32 %v937, 1.442695
  %v970 = vpow.pop %v969
  %v971 = vmul.f32 %v938, 1.442695
  %v972 = vpow.pop %v971
  %v973 = vmul.f32 %v939, 1.442695
  %v974 = vpow.pop %v973
  %v975 = vmul.f32 %v940, 1.442695
  %v976 = vpow.pop %v975
  %v977 = vmul.f32 %v941, 1.442695
  %v978 = vpow.pop %v977
  %v979 = vmul.f32 %v942, 1.442695
  %v980 = vpow.pop %v979
  %v981 = vmul.f32 %v943, 1.442695
  %v982 = vpow.pop %v981
  %v983 = vmul.f32 %v944, 1.442695
  %v984 = vpow.pop %v983
  %v985 = vmul.f32 %v945, 1.442695
  %v986 = vpow.pop %v985
  %v987 = vmul.f32 %v946, 1.442695
  %v988 = vpow.pop %v987
  %v989 = vmul.f32 %v947, 1.442695
  %v990 = vpow.pop %v989
  %v991 = vmul.f32 %v948, 1.442695
  %v992 = vpow.pop %v991
  %v993 = vmul.f32 %v949, 1.442695
  %v994 = vpow.pop %v993
  %v995 = vmul.f32 %v950, 1.442695
  %v996 = vpow.pop %v995
  %v997 = vmul.f32 %v951, 1.442695
  %v998 = vpow.pop %v997
  %v999 = vmul.f32 %v952, 1.442695
  %v1000 = vpow.pop %v999
  %v1001 = vmul.f32 %v953, 1.442695
  %v1002 = vpow.pop %v1001
  %v1003 = vmul.f32 %v954, 1.442695
  %v1004 = vpow.pop %v1003
  %v1005 = vmul.f32 %v955, 1.442695
  %v1006 = vpow.pop %v1005
  %v1007 = vmul.f32 %v956, 1.442695
  %v1008 = vpow.pop %v1007
  %v1009 = vmul.f32 %v957, 1.442695
  %v1010 = vpow.pop %v1009
  %v1011 = vmul.f32 %v958, 1.442695
  %v1012 = vpow.pop %v1011
  %v1013 = vmul.f32 %v959, 1.442695
  %v1014 = vpow.pop %v1013
  %v1015 = vmul.f32 %v960, 1.442695
  %v1016 = vpow.pop %v1015
  %v1017 = vmul.f32 %v961, 1.442695
  %v1018 = vpow.pop %v1017
  %v1019 = vmul.f32 %v962, 1.442695
  %v1020 = vpow.pop %v1019
  %v1021 = vmul.f32 %v963, 1.442695
  %v1022 = vpow.pop %v1021
  %v1023 = vmul.f32 %v964, 1.442695
  %v1024 = vpow.pop %v1023
  %v1025 = vmul.f32 %v965, 1.442695
  %v1026 = vpow.pop %v1025
  %v1027 = vmul.f32 %v966, 1.442695
  %v1028 = vpow.pop %v1027
  %v1029 = vmul.f32 %v967, 1.442695
  %v1030 = vpow.pop %v1029
  %v1031 = vmul.f32 %v968, 1.442695
  %v1032 = vpow.pop %v1031
  %v1033 = vadd.f32 %v970, 2.0
  %v1034 = vadd.f32 %v972, 2.0
  %v1035 = vadd.f32 %v974, 2.0
  %v1036 = vadd.f32 %v976, 2.0
  %v1037 = vadd.f32 %v978, 2.0
  %v1038 = vadd.f32 %v980, 2.0
  %v1039 = vadd.f32 %v982, 2.0
  %v1040 = vadd.f32 %v984, 2.0
  %v1041 = vadd.f32 %v986, 2.0
  %v1042 = vadd.f32 %v988, 2.0
  %v1043 = vadd.f32 %v990, 2.0
  %v1044 = vadd.f32 %v992, 2.0
  %v1045 = vadd.f32 %v994, 2.0
  %v1046 = vadd.f32 %v996, 2.0
  %v1047 = vadd.f32 %v998, 2.0
  %v1048 = vadd.f32 %v1000, 2.0
  %v1049 = vadd.f32 %v1002, 2.0
  %v1050 = vadd.f32 %v1004, 2.0
  %v1051 = vadd.f32 %v1006, 2.0
  %v1052 = vadd.f32 %v1008, 2.0
  %v1053 = vadd.f32 %v1010, 2.0
  %v1054 = vadd.f32 %v1012, 2.0
  %v1055 = vadd.f32 %v1014, 2.0
  %v1056 = vadd.f32 %v1016, 2.0
  %v1057 = vadd.f32 %v1018, 2.0
  %v1058 = vadd.f32 %v1020, 2.0
  %v1059 = vadd.f32 %v1022, 2.0
  %v1060 = vadd.f32 %v1024, 2.0
  %v1061 = vadd.f32 %v1026, 2.0
  %v1062 = vadd.f32 %v1028, 2.0
  %v1063 = vadd.f32 %v1030, 2.0
  %v1064 = vadd.f32 %v1032, 2.0
  %v1065 = vmul.f32 %v970, %v1033
  %v1066 = vmul.f32 %v972, %v1034
  %v1067 = vmul.f32 %v974, %v1035
  %v1068 = vmul.f32 %v976, %v1036
  %v1069 = vmul.f32 %v978, %v1037
  %v1070 = vmul.f32 %v980, %v1038
  %v1071 = vmul.f32 %v982, %v1039
  %v1072 = vmul.f32 %v984, %v1040
  %v1073 = vmul.f32 %v986, %v1041
  %v1074 = vmul.f32 %v988, %v1042
  %v1075 = vmul.f32 %v990, %v1043
  %v1076 = vmul.f32 %v992, %v1044
  %v1077 = vmul.f32 %v994, %v1045
  %v1078 = vmul.f32 %v996, %v1046
  %v1079 = vmul.f32 %v998, %v1047
  %v1080 = vmul.f32 %v1000, %v1048
  %v1081 = vmul.f32 %v1002, %v1049
  %v1082 = vmul.f32 %v1004, %v1050
  %v1083 = vmul.f32 %v1006, %v1051
  %v1084 = vmul.f32 %v1008, %v1052
  %v1085 = vmul.f32 %v1010, %v1053
  %v1086 = vmul.f32 %v1012, %v1054
  %v1087 = vmul.f32 %v1014, %v1055
  %v1088 = vmul.f32 %v1016, %v1056
  %v1089 = vmul.f32 %v1018, %v1057
  %v1090 = vmul.f32 %v1020, %v1058
  %v1091 = vmul.f32 %v1022, %v1059
  %v1092 = vmul.f32 %v1024, %v1060
  %v1093 = vmul.f32 %v1026, %v1061
  %v1094 = vmul.f32 %v1028, %v1062
  %v1095 = vmul.f32 %v1030, %v1063
  %v1096 = vmul.f32 %v1032, %v1064
  %v1097 = vmul.f32 %v905, %v1065
  %v1098 = vmul.f32 %v906, %v1066
  %v1099 = vmul.f32 %v907, %v1067
  %v1100 = vmul.f32 %v908, %v1068
  %v1101 = vmul.f32 %v909, %v1069
  %v1102 = vmul.f32 %v910, %v1070
  %v1103 = vmul.f32 %v911, %v1071
  %v1104 = vmul.f32 %v912, %v1072
  %v1105 = vmul.f32 %v913, %v1073
  %v1106 = vmul.f32 %v914, %v1074
  %v1107 = vmul.f32 %v915, %v1075
  %v1108 = vmul.f32 %v916, %v1076
  %v1109 = vmul.f32 %v917, %v1077
  %v1110 = vmul.f32 %v918, %v1078
  %v1111 = vmul.f32 %v919, %v1079
  %v1112 = vmul.f32 %v920, %v1080
  %v1113 = vmul.f32 %v921, %v1081
  %v1114 = vmul.f32 %v922, %v1082
  %v1115 = vmul.f32 %v923, %v1083
  %v1116 = vmul.f32 %v924, %v1084
  %v1117 = vmul.f32 %v925, %v1085
  %v1118 = vmul.f32 %v926, %v1086
  %v1119 = vmul.f32 %v927, %v1087
  %v1120 = vmul.f32 %v928, %v1088
  %v1121 = vmul.f32 %v929, %v1089
  %v1122 = vmul.f32 %v930, %v1090
  %v1123 = vmul.f32 %v931, %v1091
  %v1124 = vmul.f32 %v932, %v1092
  %v1125 = vmul.f32 %v933, %v1093
  %v1126 = vmul.f32 %v934, %v1094
  %v1127 = vmul.f32 %v935, %v1095
  %v1128 = vmul.f32 %v936, %v1096
  %v1129 = vadd.f32 %v1065, 2.0
  %v1130 = vadd.f32 %v1066, 2.0
  %v1131 = vadd.f32 %v1067, 2.0
  %v1132 = vadd.f32 %v1068, 2.0
  %v1133 = vadd.f32 %v1069, 2.0
  %v1134 = vadd.f32 %v1070, 2.0
  %v1135 = vadd.f32 %v1071, 2.0
  %v1136 = vadd.f32 %v1072, 2.0
  %v1137 = vadd.f32 %v1073, 2.0
  %v1138 = vadd.f32 %v1074, 2.0
  %v1139 = vadd.f32 %v1075, 2.0
  %v1140 = vadd.f32 %v1076, 2.0
  %v1141 = vadd.f32 %v1077, 2.0
  %v1142 = vadd.f32 %v1078, 2.0
  %v1143 = vadd.f32 %v1079, 2.0
  %v1144 = vadd.f32 %v1080, 2.0
  %v1145 = vadd.f32 %v1081, 2.0
  %v1146 = vadd.f32 %v1082, 2.0
  %v1147 = vadd.f32 %v1083, 2.0
  %v1148 = vadd.f32 %v1084, 2.0
  %v1149 = vadd.f32 %v1085, 2.0
  %v1150 = vadd.f32 %v1086, 2.0
  %v1151 = vadd.f32 %v1087, 2.0
  %v1152 = vadd.f32 %v1088, 2.0
  %v1153 = vadd.f32 %v1089, 2.0
  %v1154 = vadd.f32 %v1090, 2.0
  %v1155 = vadd.f32 %v1091, 2.0
  %v1156 = vadd.f32 %v1092, 2.0
  %v1157 = vadd.f32 %v1093, 2.0
  %v1158 = vadd.f32 %v1094, 2.0
  %v1159 = vadd.f32 %v1095, 2.0
  %v1160 = vadd.f32 %v1096, 2.0
  %v1161 = vrcp.pop %v1129
  %v1162 = vrcp.pop %v1130
  %v1163 = vrcp.pop %v1131
  %v1164 = vrcp.pop %v1132
  %v1165 = vrcp.pop %v1133
  %v1166 = vrcp.pop %v1134
  %v1167 = vrcp.pop %v1135
  %v1168 = vrcp.pop %v1136
  %v1169 = vrcp.pop %v1137
  %v1170 = vrcp.pop %v1138
  %v1171 = vrcp.pop %v1139
  %v1172 = vrcp.pop %v1140
  %v1173 = vrcp.pop %v1141
  %v1174 = vrcp.pop %v1142
  %v1175 = vrcp.pop %v1143
  %v1176 = vrcp.pop %v1144
  %v1177 = vrcp.pop %v1145
  %v1178 = vrcp.pop %v1146
  %v1179 = vrcp.pop %v1147
  %v1180 = vrcp.pop %v1148
  %v1181 = vrcp.pop %v1149
  %v1182 = vrcp.pop %v1150
  %v1183 = vrcp.pop %v1151
  %v1184 = vrcp.pop %v1152
  %v1185 = vrcp.pop %v1153
  %v1186 = vrcp.pop %v1154
  %v1187 = vrcp.pop %v1155
  %v1188 = vrcp.pop %v1156
  %v1189 = vrcp.pop %v1157
  %v1190 = vrcp.pop %v1158
  %v1191 = vrcp.pop %v1159
  %v1192 = vrcp.pop %v1160
  %v1193 = vmul.f32 %v1097, %v1161
  %v1194 = vmul.f32 %v1098, %v1162
  %v1195 = vmul.f32 %v1099, %v1163
  %v1196 = vmul.f32 %v1100, %v1164
  %v1197 = vmul.f32 %v1101, %v1165
  %v1198 = vmul.f32 %v1102, %v1166
  %v1199 = vmul.f32 %v1103, %v1167
  %v1200 = vmul.f32 %v1104, %v1168
  %v1201 = vmul.f32 %v1105, %v1169
  %v1202 = vmul.f32 %v1106, %v1170
  %v1203 = vmul.f32 %v1107, %v1171
  %v1204 = vmul.f32 %v1108, %v1172
  %v1205 = vmul.f32 %v1109, %v1173
  %v1206 = vmul.f32 %v1110, %v1174
  %v1207 = vmul.f32 %v1111, %v1175
  %v1208 = vmul.f32 %v1112, %v1176
  %v1209 = vmul.f32 %v1113, %v1177
  %v1210 = vmul.f32 %v1114, %v1178
  %v1211 = vmul.f32 %v1115, %v1179
  %v1212 = vmul.f32 %v1116, %v1180
  %v1213 = vmul.f32 %v1117, %v1181
  %v1214 = vmul.f32 %v1118, %v1182
  %v1215 = vmul.f32 %v1119, %v1183
  %v1216 = vmul.f32 %v1120, %v1184
  %v1217 = vmul.f32 %v1121, %v1185
  %v1218 = vmul.f32 %v1122, %v1186
  %v1219 = vmul.f32 %v1123, %v1187
  %v1220 = vmul.f32 %v1124, %v1188
  %v1221 = vmul.f32 %v1125, %v1189
  %v1222 = vmul.f32 %v1126, %v1190
  %v1223 = vmul.f32 %v1127, %v1191
  %v1224 = vmul.f32 %v1128, %v1192
  %v1225 = vpack.c.bf16 %v1195, %v1193
  %v1226 = vpack.c.bf16 %v1196, %v1194
  %v1227 = vpack.c.bf16 %v1199, %v1197
  %v1228 = vpack.c.bf16 %v1200, %v1198
  %v1229 = vpack.c.bf16 %v1203, %v1201
  %v1230 = vpack.c.bf16 %v1204, %v1202
  %v1231 = vpack.c.bf16 %v1207, %v1205
  %v1232 = vpack.c.bf16 %v1208, %v1206
  %v1233 = vpack.c.bf16 %v1211, %v1209
  %v1234 = vpack.c.bf16 %v1212, %v1210
  %v1235 = vpack.c.bf16 %v1215, %v1213
  %v1236 = vpack.c.bf16 %v1216, %v1214
  %v1237 = vpack.c.bf16 %v1219, %v1217
  %v1238 = vpack.c.bf16 %v1220, %v1218
  %v1239 = vpack.c.bf16 %v1223, %v1221
  %v1240 = vpack.c.bf16 %v1224, %v1222
  %v1257 = vunpack.c.l.b16 %v1225
  %v1258 = vunpack.c.l.b16 %v1226
  %v1259 = vunpack.c.h.b16 %v1225
  %v1260 = vunpack.c.h.b16 %v1226
  %v1261 = vunpack.c.l.b16 %v1227
  %v1262 = vunpack.c.l.b16 %v1228
  %v1263 = vunpack.c.h.b16 %v1227
  %v1264 = vunpack.c.h.b16 %v1228
  %v1265 = vunpack.c.l.b16 %v1229
  %v1266 = vunpack.c.l.b16 %v1230
  %v1267 = vunpack.c.h.b16 %v1229
  %v1268 = vunpack.c.h.b16 %v1230
  %v1269 = vunpack.c.l.b16 %v1231
  %v1270 = vunpack.c.l.b16 %v1232
  %v1271 = vunpack.c.h.b16 %v1231
  %v1272 = vunpack.c.h.b16 %v1232
  %v1273 = vunpack.c.l.b16 %v1233
  %v1274 = vunpack.c.l.b16 %v1234
  %v1275 = vunpack.c.h.b16 %v1233
  %v1276 = vunpack.c.h.b16 %v1234
  %v1277 = vunpack.c.l.b16 %v1235
  %v1278 = vunpack.c.l.b16 %v1236
  %v1279 = vunpack.c.h.b16 %v1235
  %v1280 = vunpack.c.h.b16 %v1236
  %v1281 = vunpack.c.l.b16 %v1237
  %v1282 = vunpack.c.l.b16 %v1238
  %v1283 = vunpack.c.h.b16 %v1237
  %v1284 = vunpack.c.h.b16 %v1238
  %v1285 = vunpack.c.l.b16 %v1239
  %v1286 = vunpack.c.l.b16 %v1240
  %v1287 = vunpack.c.h.b16 %v1239
  %v1288 = vunpack.c.h.b16 %v1240
  %v1289 = vpack.c.b16 %v1258, %v1257
  %v1290 = vpack.c.b16 %v1260, %v1259
  %v1291 = vpack.c.b16 %v1262, %v1261
  %v1292 = vpack.c.b16 %v1264, %v1263
  %v1293 = vpack.c.b16 %v1266, %v1265
  %v1294 = vpack.c.b16 %v1268, %v1267
  %v1295 = vpack.c.b16 %v1270, %v1269
  %v1296 = vpack.c.b16 %v1272, %v1271
  %v1297 = vpack.c.b16 %v1274, %v1273
  %v1298 = vpack.c.b16 %v1276, %v1275
  %v1299 = vpack.c.b16 %v1278, %v1277
  %v1300 = vpack.c.b16 %v1280, %v1279
  %v1301 = vpack.c.b16 %v1282, %v1281
  %v1302 = vpack.c.b16 %v1284, %v1283
  %v1303 = vpack.c.b16 %v1286, %v1285
  %v1304 = vpack.c.b16 %v1288, %v1287
  %1321 = vst [vmem:[%s7] sm:$0xff] %v1289
  %1322 = vst [vmem:[%s7 + $0x8] sm:$0xff] %v1290
  %1323 = vst [vmem:[%s7 + $0x10] sm:$0xff] %v1291
  %1324 = vst [vmem:[%s7 + $0x18] sm:$0xff] %v1292
  %1325 = vst [vmem:[%s7 + $0x20] sm:$0xff] %v1293
  %1326 = vst [vmem:[%s7 + $0x28] sm:$0xff] %v1294
  %1327 = vst [vmem:[%s7 + $0x30] sm:$0xff] %v1295
  %1328 = vst [vmem:[%s7 + $0x38] sm:$0xff] %v1296
  %1329 = vst [vmem:[%s7 + $0x40] sm:$0xff] %v1297
  %1330 = vst [vmem:[%s7 + $0x48] sm:$0xff] %v1298
  %1331 = vst [vmem:[%s7 + $0x50] sm:$0xff] %v1299
  %1332 = vst [vmem:[%s7 + $0x58] sm:$0xff] %v1300
  %1333 = vst [vmem:[%s7 + $0x60] sm:$0xff] %v1301
  %1334 = vst [vmem:[%s7 + $0x68] sm:$0xff] %v1302
  %1335 = vst [vmem:[%s7 + $0x70] sm:$0xff] %v1303
  %1336 = vst [vmem:[%s7 + $0x78] sm:$0xff] %v1304
  // Predicated region
  $region30: #{downsample5_forward.13} parent=0 // pred_check
    _
  $region31: #{downsample5_forward.13} parent=0 // pred_check_branch
    %1338 = sbr.rel (0) target = $region33
  $region32: #{downsample5_forward.13} parent=0 // pred_region
    _
  $region33: #{downsample5_forward.13} parent=0 // pred_fallthru
    _
  // Predicated region
  $region34: #{downsample5_forward.13} parent=0 // pred_check
    _
  $region35: #{downsample5_forward.13} parent=0 // pred_check_branch
    %1340 = sbr.rel (0) target = $region37
  $region36: #{downsample5_forward.13} parent=0 // pred_region
    _
  $region37: #{downsample5_forward.13} parent=0 // pred_fallthru
    _

// kernel: downsample5_forward.9
$region0: #{downsample5_forward.9}
  #allocation0 [shape = 'u32[]', space=smem, size = 0x4, offset = 0x4, fixed_abs, tag = 'smem constant byte address 0x4 - core index']
  #allocation1 [shape = 'u32[144,128]{1,0:T(1,128)}', space=vmem, size = 0x12000, scoped, tag = 'internal scratch']
  #allocation2 [shape = 'bf16[10,16,128]{2,1,0:T(16,128)(2,1)}', space=vmem, size = 0xa000, scoped, tag = 'scratch operand']
  #allocation3 [shape = 'f32[64,128]{1,0:T(8,128)}', space=vmem, size = 0x8000, scoped, tag = 'scratch operand']
  %s0 = inlined_call_operand.vmem [shape: bf16[2,8,8,128], index: 0, kind: input, shape index: {}]
  %s1 = inlined_call_operand.vmem [shape: bf16[128,128], index: 1, kind: input, shape index: {}]
  %s2 = inlined_call_operand.vmem [shape: f32[1,128], index: 2, kind: input, shape index: {}]
  %s3 = inlined_call_operand.vmem [shape: bf16[3,3,128,128], index: 3, kind: input, shape index: {}]
  %s4 = inlined_call_operand.vmem [shape: f32[1,128], index: 4, kind: input, shape index: {}]
  %s5 = inlined_call_operand.vmem [shape: bf16[2,8,8,128], index: 5, kind: output, shape index: {}]
  %s6 = sld [smem:[#allocation0]]
  $region53: #{downsample5_forward.9} parent=0
    _
  %s8 = ssub.s32 1, %s6
  %s9 = scalar_select 0, %s8, %s6
  loop: start=0, step=1, limit=4
  $region2: #{downsample5_forward.9} parent=0 // loop_pre_header
    _
  $region3: #{downsample5_forward.9} parent=0 // loop_header
    %s11 = sphi 0, %s15
    %p12 = scmp.ge.s32.totalorder %s11, 4
    %s21 = sphi 0, %s23
    %s24 = sphi 0, %s21
    %s25 = sphi 0, %s24
    %s41 = sphi 0, %s25
    %s45 = sphi 0, %s45
    %s47 = sphi 0, %s45
    %s48 = sphi 0, %s47
    %s62 = sphi 0, %s48
    %s66 = sphi 0, %s66
    %s68 = sphi 0, %s66
    %s69 = sphi 0, %s68
    %s83 = sphi 0, %s69
    %s87 = sphi 0, %s87
    %s89 = sphi 0, %s87
    %s90 = sphi 0, %s89
    %s104 = sphi 0, %s90
    %s108 = sphi 0, %s108
    %s110 = sphi 0, %s108
    %s111 = sphi 0, %s110
    %s125 = sphi 0, %s111
    %s131 = sphi 0, %s133
    %s134 = sphi 0, %s131
    %s135 = sphi 0, %s134
    %s151 = sphi 0, %s135
  $region4: #{downsample5_forward.9} parent=0 // loop_header_branch
    %14 = sbr.rel (%p12) target = $region8
  $region5: #{downsample5_forward.9} parent=0 // loop_body
    %s16 = ssub.s32 %s11, 1
    %s17 = ssub.s32 %s11, 2
    %s18 = sadd.s32 %s11, 1
    %s19 = ssub.s32 %s11, %s18
    %p20 = scmp.eq.s32.totalorder %s19, 0
    %s22 = sadd.s32 %s21, 1
    %s23 = scalar_select %p20, %s21, %s22
    %p26 = pneg %p20
    %p27 = scmp.eq.s32.totalorder %s11, 1
    %p28 = por %p26, %p27
    %p29 = scmp.ne.s32.totalorder %s21, %s24
    %p30 = scmp.eq.s32.totalorder %s11, 0
    %p31 = por %p29, %p30
    %p32 = scmp.ne.s32.totalorder %s21, %s24
    %p33 = scmp.eq.s32.totalorder %s16, 1
    %p34 = por %p32, %p33
    %p35 = scmp.ne.s32.totalorder %s24, %s25
    %p36 = scmp.eq.s32.totalorder %s16, 0
    %p37 = por %p35, %p36
    %p38 = scmp.ne.s32.totalorder %s24, %s25
    %p39 = scmp.eq.s32.totalorder %s17, 1
    %p40 = por %p38, %p39
    %p42 = scmp.ne.s32.totalorder %s25, %s41
    %p43 = scmp.eq.s32.totalorder %s17, 0
    %p44 = por %p42, %p43
    %s46 = sadd.s32 %s45, 1
    %p49 = scmp.eq.s32.totalorder %s11, 1
    %p50 = scmp.ne.s32.totalorder %s45, %s47
    %p51 = scmp.eq.s32.totalorder %s11, 0
    %p52 = por %p50, %p51
    %p53 = scmp.ne.s32.totalorder %s45, %s47
    %p54 = scmp.eq.s32.totalorder %s16, 1
    %p55 = por %p53, %p54
    %p56 = scmp.ne.s32.totalorder %s47, %s48
    %p57 = scmp.eq.s32.totalorder %s16, 0
    %p58 = por %p56, %p57
    %p59 = scmp.ne.s32.totalorder %s47, %s48
    %p60 = scmp.eq.s32.totalorder %s17, 1
    %p61 = por %p59, %p60
    %p63 = scmp.ne.s32.totalorder %s48, %s62
    %p64 = scmp.eq.s32.totalorder %s17, 0
    %p65 = por %p63, %p64
    %s67 = sadd.s32 %s66, 1
    %p70 = scmp.eq.s32.totalorder %s11, 1
    %p71 = scmp.ne.s32.totalorder %s66, %s68
    %p72 = scmp.eq.s32.totalorder %s11, 0
    %p73 = por %p71, %p72
    %p74 = scmp.ne.s32.totalorder %s66, %s68
    %p75 = scmp.eq.s32.totalorder %s16, 1
    %p76 = por %p74, %p75
    %p77 = scmp.ne.s32.totalorder %s68, %s69
    %p78 = scmp.eq.s32.totalorder %s16, 0
    %p79 = por %p77, %p78
    %p80 = scmp.ne.s32.totalorder %s68, %s69
    %p81 = scmp.eq.s32.totalorder %s17, 1
    %p82 = por %p80, %p81
    %p84 = scmp.ne.s32.totalorder %s69, %s83
    %p85 = scmp.eq.s32.totalorder %s17, 0
    %p86 = por %p84, %p85
    %s88 = sadd.s32 %s87, 1
    %p91 = scmp.eq.s32.totalorder %s11, 1
    %p92 = scmp.ne.s32.totalorder %s87, %s89
    %p93 = scmp.eq.s32.totalorder %s11, 0
    %p94 = por %p92, %p93
    %p95 = scmp.ne.s32.totalorder %s87, %s89
    %p96 = scmp.eq.s32.totalorder %s16, 1
    %p97 = por %p95, %p96
    %p98 = scmp.ne.s32.totalorder %s89, %s90
    %p99 = scmp.eq.s32.totalorder %s16, 0
    %p100 = por %p98, %p99
    %p101 = scmp.ne.s32.totalorder %s89, %s90
    %p102 = scmp.eq.s32.totalorder %s17, 1
    %p103 = por %p101, %p102
    %p105 = scmp.ne.s32.totalorder %s90, %s104
    %p106 = scmp.eq.s32.totalorder %s17, 0
    %p107 = por %p105, %p106
    %s109 = sadd.s32 %s108, 1
    %p112 = scmp.eq.s32.totalorder %s11, 1
    %p113 = scmp.ne.s32.totalorder %s108, %s110
    %p114 = scmp.eq.s32.totalorder %s11, 0
    %p115 = por %p113, %p114
    %p116 = scmp.ne.s32.totalorder %s108, %s110
    %p117 = scmp.eq.s32.totalorder %s16, 1
    %p118 = por %p116, %p117
    %p119 = scmp.ne.s32.totalorder %s110, %s111
    %p120 = scmp.eq.s32.totalorder %s16, 0
    %p121 = por %p119, %p120
    %p122 = scmp.ne.s32.totalorder %s110, %s111
    %p123 = scmp.eq.s32.totalorder %s17, 1
    %p124 = por %p122, %p123
    %p126 = scmp.ne.s32.totalorder %s111, %s125
    %p127 = scmp.eq.s32.totalorder %s17, 0
    %p128 = por %p126, %p127
    %s129 = ssub.s32 %s11, %s18
    %p130 = scmp.eq.s32.totalorder %s129, 0
    %s132 = sadd.s32 %s131, 1
    %s133 = scalar_select %p130, %s131, %s132
    %p136 = pneg %p130
    %p137 = scmp.eq.s32.totalorder %s11, 1
    %p138 = por %p136, %p137
    %p139 = scmp.ne.s32.totalorder %s131, %s134
    %p140 = scmp.eq.s32.totalorder %s11, 0
    %p141 = por %p139, %p140
    %p142 = scmp.ne.s32.totalorder %s131, %s134
    %p143 = scmp.eq.s32.totalorder %s16, 1
    %p144 = por %p142, %p143
    %p145 = scmp.ne.s32.totalorder %s134, %s135
    %p146 = scmp.eq.s32.totalorder %s16, 0
    %p147 = por %p145, %p146
    %p148 = scmp.ne.s32.totalorder %s134, %s135
    %p149 = scmp.eq.s32.totalorder %s17, 1
    %p150 = por %p148, %p149
    %p152 = scmp.ne.s32.totalorder %s135, %s151
    %p153 = scmp.eq.s32.totalorder %s17, 0
    %p154 = por %p152, %p153
    %p155 = scmp.le.s32.totalorder 1, %s11
    %p156 = scmp.lt.s32.totalorder %s11, 3
    %p157 = pnand %p155, %p156
    %p158 = pneg %p157
    // Predicated region
    $region9: #{downsample5_forward.9} parent=5 // pred_check
      _
    $region10: #{downsample5_forward.9} parent=5 // pred_check_branch
      %160 = sbr.rel (%p157) target = $region12
    $region11: #{downsample5_forward.9} parent=5 // pred_region
      %s161 = ssub.s32 %s11, 1
      // Predicated region
      $region13: #{downsample5_forward.9} parent=11 // pred_check
        %p162 = pneg %p58
      $region14: #{downsample5_forward.9} parent=11 // pred_check_branch
        %164 = sbr.rel (%p162) target = $region16
      $region15: #{downsample5_forward.9} parent=11 // pred_region
        _
      $region16: #{downsample5_forward.9} parent=11 // pred_fallthru
        _
      // Predicated region
      $region17: #{downsample5_forward.9} parent=11 // pred_check
        %p165 = pneg %p79
      $region18: #{downsample5_forward.9} parent=11 // pred_check_branch
        %167 = sbr.rel (%p165) target = $region20
      $region19: #{downsample5_forward.9} parent=11 // pred_region
        _
      $region20: #{downsample5_forward.9} parent=11 // pred_fallthru
        _
      // Predicated region
      $region21: #{downsample5_forward.9} parent=11 // pred_check
        %p168 = pneg %p100
      $region22: #{downsample5_forward.9} parent=11 // pred_check_branch
        %170 = sbr.rel (%p168) target = $region24
      $region23: #{downsample5_forward.9} parent=11 // pred_region
        _
      $region24: #{downsample5_forward.9} parent=11 // pred_fallthru
        _
      // Predicated region
      $region25: #{downsample5_forward.9} parent=11 // pred_check
        %p171 = pneg %p121
      $region26: #{downsample5_forward.9} parent=11 // pred_check_branch
        %173 = sbr.rel (%p171) target = $region28
      $region27: #{downsample5_forward.9} parent=11 // pred_region
        _
      $region28: #{downsample5_forward.9} parent=11 // pred_fallthru
        _
    $region12: #{downsample5_forward.9} parent=5 // pred_fallthru
      _
    %p174 = scmp.lt.s32.totalorder %s11, 2
    // Predicated region
    $region29: #{downsample5_forward.9} parent=5 // pred_check
      %p175 = pneg %p174
    $region30: #{downsample5_forward.9} parent=5 // pred_check_branch
      %177 = sbr.rel (%p175) target = $region32
    $region31: #{downsample5_forward.9} parent=5 // pred_region
      // Predicated region
      $region33: #{downsample5_forward.9} parent=31 // pred_check
        %p178 = pneg %p31
      $region34: #{downsample5_forward.9} parent=31 // pred_check_branch
        %180 = sbr.rel (%p178) target = $region36
      $region35: #{downsample5_forward.9} parent=31 // pred_region
        %p181 = scmp.lt.s32.totalorder %s11, 1
        %s182 = scalar_select %p181, %s11, 1
        %s183 = smul.addr %s182, 8
        %s184 = smul.addr %s183, 4
        %s185 = scalar_lea.vmem %s0, %s184
      $region36: #{downsample5_forward.9} parent=31 // pred_fallthru
        _
    $region32: #{downsample5_forward.9} parent=5 // pred_fallthru
      _
    %p186 = scmp.le.s32.totalorder 1, %s11
    %p187 = scmp.lt.s32.totalorder %s11, 3
    %p188 = pnand %p186, %p187
    %p189 = pneg %p188
    // Predicated region
    $region37: #{downsample5_forward.9} parent=5 // pred_check
      _
    $region38: #{downsample5_forward.9} parent=5 // pred_check_branch
      %191 = sbr.rel (%p188) target = $region40
    $region39: #{downsample5_forward.9} parent=5 // pred_region
      %s192 = ssub.s32 %s11, 1
      %p193 = scmp.lt.s32.totalorder %s16, 1
      %s194 = scalar_select %p193, %s16, 1
      %s195 = smul.addr %s194, 8
      %s196 = smul.addr %s195, 4
      %s197 = scalar_lea.vmem %s0, %s196
      %p198 = pneg %p37
      %p199 = pneg %p34
      %p200 = pneg %p58
      %p201 = pneg %p55
      %p202 = pneg %p79
      %p203 = pneg %p76
      %p204 = pneg %p100
      %p205 = pneg %p97
      %p206 = pneg %p121
      %p207 = pneg %p118
      %p208 = pneg %p147
      %p209 = pneg %p144
      %p210 = scmp.lt.s32.totalorder %s16, 1
      %s211 = scalar_select %p210, %s16, 1
      %s212 = smul.addr %s211, 8
      %s213 = smul.addr %s212, 4
      %s214 = scalar_lea.vmem %s5, %s213
      %p215 = scmp.lt.s32.totalorder %s16, 1
      %s216 = scalar_select %p215, %s16, 1
      %s217 = smul.addr %s216, 8
      %s218 = smul.addr %s217, 4
      %s219 = scalar_lea.vmem %s0, %s218
      %p220 = scmp.lt.s32.totalorder %s16, 1
      %s221 = scalar_select %p220, %s16, 1
      %s222 = smul.addr %s221, 8
      %s223 = smul.addr %s222, 4
      %s224 = scalar_lea.vmem %s5, %s223
      %v226 = vld [vmem:[%s219] sm:$0xf]
      %v227 = vld [vmem:[%s219 + $0x4] sm:$0xf]
      %v228 = vld [vmem:[%s219 + $0x8] sm:$0xf]
      %v229 = vld [vmem:[%s219 + $0xc] sm:$0xf]
      %v230 = vld [vmem:[%s219 + $0x10] sm:$0xf]
      %v231 = vld [vmem:[%s219 + $0x14] sm:$0xf]
      %v232 = vld [vmem:[%s219 + $0x18] sm:$0xf]
      %v233 = vld [vmem:[%s219 + $0x1c] sm:$0xf]
      %v234 = vld [vmem:[%s1] sm:$0xf]
      %v235 = vld [vmem:[%s1 + $0x4] sm:$0xf]
      %v236 = vld [vmem:[%s1 + $0x8] sm:$0xf]
      %v237 = vld [vmem:[%s1 + $0xc] sm:$0xf]
      %v238 = vld [vmem:[%s1 + $0x10] sm:$0xf]
      %v239 = vld [vmem:[%s1 + $0x14] sm:$0xf]
      %v240 = vld [vmem:[%s1 + $0x18] sm:$0xf]
      %v241 = vld [vmem:[%s1 + $0x1c] sm:$0xf]
      %v242 = vld [vmem:[%s1 + $0x20] sm:$0xf]
      %v243 = vld [vmem:[%s1 + $0x24] sm:$0xf]
      %v244 = vld [vmem:[%s1 + $0x28] sm:$0xf]
      %v245 = vld [vmem:[%s1 + $0x2c] sm:$0xf]
      %v246 = vld [vmem:[%s1 + $0x30] sm:$0xf]
      %v247 = vld [vmem:[%s1 + $0x34] sm:$0xf]
      %v248 = vld [vmem:[%s1 + $0x38] sm:$0xf]
      %v249 = vld [vmem:[%s1 + $0x3c] sm:$0xf]
      %v250 = vld [vmem:[%s2] sm:$0x1]
      %v252 = vlaneseq
      %v253 = vshrl.u32 %v252, 7
      %v254 = vsub.s32 0, %v253
      %v255 = vrot.slane %v250, %v254
      %v265 = vunpack.c.l.b16 %v226
      %v266 = vunpack.c.l.b16 %v227
      %v267 = vunpack.c.l.b16 %v228
      %v268 = vunpack.c.l.b16 %v229
      %v269 = vunpack.c.l.b16 %v230
      %v270 = vunpack.c.l.b16 %v231
      %v271 = vunpack.c.l.b16 %v232
      %v272 = vunpack.c.l.b16 %v233
      %v273 = vpack.c.b16 %v266, %v265
      %v274 = vpack.c.b16 %v268, %v267
      %v275 = vpack.c.b16 %v270, %v269
      %v276 = vpack.c.b16 %v272, %v271
      %v297 = vunpack.c.l.b16 %v234
      %v298 = vunpack.c.l.b16 %v235
      %v299 = vunpack.c.l.b16 %v236
      %v300 = vunpack.c.l.b16 %v237
      %v301 = vunpack.c.l.b16 %v238
      %v302 = vunpack.c.l.b16 %v239
      %v303 = vunpack.c.l.b16 %v240
      %v304 = vunpack.c.l.b16 %v241
      %v305 = vunpack.c.l.b16 %v242
      %v306 = vunpack.c.l.b16 %v243
      %v307 = vunpack.c.l.b16 %v244
      %v308 = vunpack.c.l.b16 %v245
      %v309 = vunpack.c.l.b16 %v246
      %v310 = vunpack.c.l.b16 %v247
      %v311 = vunpack.c.l.b16 %v248
      %v312 = vunpack.c.l.b16 %v249
      %v313 = vpack.c.b16 %v298, %v297
      %v314 = vpack.c.b16 %v300, %v299
      %v315 = vpack.c.b16 %v302, %v301
      %v316 = vpack.c.b16 %v304, %v303
      %v317 = vpack.c.b16 %v306, %v305
      %v318 = vpack.c.b16 %v308, %v307
      %v319 = vpack.c.b16 %v310, %v309
      %v320 = vpack.c.b16 %v312, %v311
      %329 = vmatprep.subr.bf16.mxu0 0
      %330 = vmatpush1.bf16.msra.mxu0 %v313
      %331 = vmatprep.subr.bf16.mxu0 0
      %332 = vmatpush1.bf16.msra.mxu0 %v314
      %333 = vmatprep.subr.bf16.mxu0 0
      %334 = vmatpush1.bf16.msra.mxu0 %v315
      %335 = vmatprep.subr.bf16.mxu0 0
      %336 = vmatpush1.bf16.msra.mxu0 %v316
      %337 = vmatprep.subr.bf16.mxu0 0
      %338 = vmatpush1.bf16.msra.mxu0 %v317
      %339 = vmatprep.subr.bf16.mxu0 0
      %340 = vmatpush1.bf16.msra.mxu0 %v318
      %341 = vmatprep.subr.bf16.mxu0 0
      %342 = vmatpush1.bf16.msra.mxu0 %v319
      %343 = vmatprep.subr.bf16.mxu0 0
      %344 = vmatpush1.bf16.msra.mxu0 %v320
      %345 = vmatprep.subr.bf16.mxu0 0
      %346 = vmatpush1.bf16.msra.mxu0 0
      %347 = vmatprep.subr.bf16.mxu0 0
      %348 = vmatpush1.bf16.msra.mxu0 0
      %349 = vmatprep.subr.bf16.mxu0 0
      %350 = vmatpush1.bf16.msra.mxu0 0
      %351 = vmatprep.subr.bf16.mxu0 0
      %352 = vmatpush1.bf16.msra.mxu0 0
      %353 = vmatprep.subr.bf16.mxu0 0
      %354 = vmatpush1.bf16.msra.mxu0 0
      %355 = vmatprep.subr.bf16.mxu0 0
      %356 = vmatpush1.bf16.msra.mxu0 0
      %357 = vmatprep.subr.bf16.mxu0 0
      %358 = vmatpush1.bf16.msra.mxu0 0
      %359 = vmatprep.subr.bf16.mxu0 0
      %360 = vmatpush1.bf16.msra.mxu0 0
      %361 = vmatprep.mubr.bf16.mxu0 0
      %362 = vmatmul.mubr.bf16.gmra.mrb[0].mxu0 %v273
      %v363 = vpop.f32.mrb[0].mxu0
      %v364 = vadd.f32 %v255, %v363
      %v365 = vpop.f32.mrb[0].mxu0
      %v366 = vpop.f32.mrb[0].mxu0
      %v367 = vadd.f32 %v255, %v366
      %v368 = vpop.f32.mrb[0].mxu0
      %369 = vmatprep.mubr.bf16.mxu0 0
      %370 = vmatmul.mubr.bf16.gmra.mrb[0].mxu0 %v274
      %v371 = vpop.f32.mrb[0].mxu0
      %v372 = vadd.f32 %v255, %v371
      %v373 = vpop.f32.mrb[0].mxu0
      %v374 = vpop.f32.mrb[0].mxu0
      %v375 = vadd.f32 %v255, %v374
      %v376 = vpop.f32.mrb[0].mxu0
      %377 = vmatprep.mubr.bf16.mxu0 0
      %378 = vmatmul.mubr.bf16.gmra.mrb[0].mxu0 %v275
      %v379 = vpop.f32.mrb[0].mxu0
      %v380 = vadd.f32 %v255, %v379
      %v381 = vpop.f32.mrb[0].mxu0
      %v382 = vpop.f32.mrb[0].mxu0
      %v383 = vadd.f32 %v255, %v382
      %v384 = vpop.f32.mrb[0].mxu0
      %385 = vmatprep.mubr.bf16.mxu0 0
      %386 = vmatmul.mubr.bf16.gmra.mrb[0].mxu0 %v276
      %v387 = vpop.f32.mrb[0].mxu0
      %v388 = vadd.f32 %v255, %v387
      %v389 = vpop.f32.mrb[0].mxu0
      %v390 = vpop.f32.mrb[0].mxu0
      %v391 = vadd.f32 %v255, %v390
      %v392 = vpop.f32.mrb[0].mxu0
      %393 = vdwg.mxu0
      %v394 = vmin.f32 %v364, 20.0
      %v395 = vmin.f32 %v367, 20.0
      %v396 = vmin.f32 %v372, 20.0
      %v397 = vmin.f32 %v375, 20.0
      %v398 = vmin.f32 %v380, 20.0
      %v399 = vmin.f32 %v383, 20.0
      %v400 = vmin.f32 %v388, 20.0
      %v401 = vmin.f32 %v391, 20.0
      %v402 = vmul.f32 %v394, 1.442695
      %v403 = vpow.pop %v402
      %v404 = vmul.f32 %v395, 1.442695
      %v405 = vpow.pop %v404
      %v406 = vmul.f32 %v396, 1.442695
      %v407 = vpow.pop %v406
      %v408 = vmul.f32 %v397, 1.442695
      %v409 = vpow.pop %v408
      %v410 = vmul.f32 %v398, 1.442695
      %v411 = vpow.pop %v410
      %v412 = vmul.f32 %v399, 1.442695
      %v413 = vpow.pop %v412
      %v414 = vmul.f32 %v400, 1.442695
      %v415 = vpow.pop %v414
      %v416 = vmul.f32 %v401, 1.442695
      %v417 = vpow.pop %v416
      %v418 = vadd.f32 %v403, 2.0
      %v419 = vadd.f32 %v405, 2.0
      %v420 = vadd.f32 %v407, 2.0
      %v421 = vadd.f32 %v409, 2.0
      %v422 = vadd.f32 %v411, 2.0
      %v423 = vadd.f32 %v413, 2.0
      %v424 = vadd.f32 %v415, 2.0
      %v425 = vadd.f32 %v417, 2.0
      %v426 = vmul.f32 %v403, %v418
      %v427 = vmul.f32 %v405, %v419
      %v428 = vmul.f32 %v407, %v420
      %v429 = vmul.f32 %v409, %v421
      %v430 = vmul.f32 %v411, %v422
      %v431 = vmul.f32 %v413, %v423
      %v432 = vmul.f32 %v415, %v424
      %v433 = vmul.f32 %v417, %v425
      %v434 = vmul.f32 %v364, %v426
      %v435 = vmul.f32 %v367, %v427
      %v436 = vmul.f32 %v372, %v428
      %v437 = vmul.f32 %v375, %v429
      %v438 = vmul.f32 %v380, %v430
      %v439 = vmul.f32 %v383, %v431
      %v440 = vmul.f32 %v388, %v432
      %v441 = vmul.f32 %v391, %v433
      %v442 = vadd.f32 %v426, 2.0
      %v443 = vadd.f32 %v427, 2.0
      %v444 = vadd.f32 %v428, 2.0
      %v445 = vadd.f32 %v429, 2.0
      %v446 = vadd.f32 %v430, 2.0
      %v447 = vadd.f32 %v431, 2.0
      %v448 = vadd.f32 %v432, 2.0
      %v449 = vadd.f32 %v433, 2.0
      %v450 = vrcp.pop %v442
      %v451 = vrcp.pop %v443
      %v452 = vrcp.pop %v444
      %v453 = vrcp.pop %v445
      %v454 = vrcp.pop %v446
      %v455 = vrcp.pop %v447
      %v456 = vrcp.pop %v448
      %v457 = vrcp.pop %v449
      %v458 = vmul.f32 %v434, %v450
      %v459 = vmul.f32 %v435, %v451
      %v460 = vmul.f32 %v436, %v452
      %v461 = vmul.f32 %v437, %v453
      %v462 = vmul.f32 %v438, %v454
      %v463 = vmul.f32 %v439, %v455
      %v464 = vmul.f32 %v440, %v456
      %v465 = vmul.f32 %v441, %v457
      %v466 = vpack.c.bf16 %v459, %v458
      %v467 = vpack.c.bf16 %v461, %v460
      %v468 = vpack.c.bf16 %v463, %v462
      %v469 = vpack.c.bf16 %v465, %v464
      %470 = vst [vmem:[#allocation2] sm:$0xff] 0
      %471 = vst [vmem:[#allocation2 + $0x8] sm:$0xff] 0
      %472 = vst [vmem:[#allocation2 + $0x10] sm:$0xff] 0
      %473 = vst [vmem:[#allocation2 + $0x18] sm:$0xff] 0
      %474 = vst [vmem:[#allocation2 + $0x20] sm:$0xff] 0
      %475 = vst [vmem:[#allocation2 + $0x28] sm:$0xff] 0
      %476 = vst [vmem:[#allocation2 + $0x30] sm:$0xff] 0
      %477 = vst [vmem:[#allocation2 + $0x38] sm:$0xff] 0
      %478 = vst [vmem:[#allocation2 + $0x40] sm:$0xff] 0
      %479 = vst [vmem:[#allocation2 + $0x48] sm:$0xff] 0
      %v484 = vunpack.c.l.b16 %v466
      %v485 = vunpack.c.h.b16 %v466
      %v486 = vunpack.c.l.b16 %v467
      %v487 = vunpack.c.h.b16 %v467
      %v488 = vunpack.c.l.b16 %v468
      %v489 = vunpack.c.h.b16 %v468
      %v490 = vunpack.c.l.b16 %v469
      %v491 = vunpack.c.h.b16 %v469
      %v492 = vpack.c.b16 %v484, %v484
      %v493 = vpack.c.b16 %v485, %v485
      %v494 = vpack.c.b16 %v486, %v486
      %v495 = vpack.c.b16 %v487, %v487
      %v496 = vpack.c.b16 %v488, %v488
      %v497 = vpack.c.b16 %v489, %v489
      %v498 = vpack.c.b16 %v490, %v490
      %v499 = vpack.c.b16 %v491, %v491
      %v501 = vshrl.u32 %v492, 16
      %v503 = vrot.slane %v501, 7
      %v504 = vshll.u32 %v492, 16
      %v506 = vor.u32 %v503, %v504
      %v508 = vshrl.u32 %v493, 16
      %v510 = vrot.slane %v508, 7
      %v511 = vshll.u32 %v493, 16
      %v513 = vor.u32 %v510, %v511
      %v515 = vshrl.u32 %v494, 16
      %v517 = vrot.slane %v515, 7
      %v518 = vshll.u32 %v494, 16
      %v520 = vor.u32 %v517, %v518
      %v522 = vshrl.u32 %v495, 16
      %v524 = vrot.slane %v522, 7
      %v525 = vshll.u32 %v495, 16
      %v527 = vor.u32 %v524, %v525
      %v529 = vshrl.u32 %v496, 16
      %v531 = vrot.slane %v529, 7
      %v532 = vshll.u32 %v496, 16
      %v534 = vor.u32 %v531, %v532
      %v536 = vshrl.u32 %v497, 16
      %v538 = vrot.slane %v536, 7
      %v539 = vshll.u32 %v497, 16
      %v541 = vor.u32 %v538, %v539
      %v543 = vshrl.u32 %v498, 16
      %v545 = vrot.slane %v543, 7
      %v546 = vshll.u32 %v498, 16
      %v548 = vor.u32 %v545, %v546
      %v550 = vshrl.u32 %v499, 16
      %v552 = vrot.slane %v550, 7
      %v553 = vshll.u32 %v499, 16
      %v555 = vor.u32 %v552, %v553
      %s564 = scalar_lea.vmem [#allocation2], 8
      %vm565 = vcmask 1044480
      %vm566 = vsmask.f32 4354
      %vm567 = vmand %vm565, %vm566
      %v568 = vld [vmem:[%s564] sm:$0x1f]
      %v569 = vsel %vm567, %v506, %v568
      %570 = vst [vmem:[%s564] sm:$0x1f] %v569
      %v571 = vld [vmem:[%s564 + $0x8] sm:$0x1f]
      %v572 = vsel %vm567, %v513, %v571
      %573 = vst [vmem:[%s564 + $0x8] sm:$0x1f] %v572
      %v574 = vld [vmem:[%s564 + $0x10] sm:$0x1f]
      %v575 = vsel %vm567, %v520, %v574
      %576 = vst [vmem:[%s564 + $0x10] sm:$0x1f] %v575
      %v577 = vld [vmem:[%s564 + $0x18] sm:$0x1f]
      %v578 = vsel %vm567, %v527, %v577
      %579 = vst [vmem:[%s564 + $0x18] sm:$0x1f] %v578
      %v580 = vld [vmem:[%s564 + $0x20] sm:$0x1f]
      %v581 = vsel %vm567, %v534, %v580
      %582 = vst [vmem:[%s564 + $0x20] sm:$0x1f] %v581
      %v583 = vld [vmem:[%s564 + $0x28] sm:$0x1f]
      %v584 = vsel %vm567, %v541, %v583
      %585 = vst [vmem:[%s564 + $0x28] sm:$0x1f] %v584
      %v586 = vld [vmem:[%s564 + $0x30] sm:$0x1f]
      %v587 = vsel %vm567, %v548, %v586
      %588 = vst [vmem:[%s564 + $0x30] sm:$0x1f] %v587
      %v589 = vld [vmem:[%s564 + $0x38] sm:$0x1f]
      %v590 = vsel %vm567, %v555, %v589
      %591 = vst [vmem:[%s564 + $0x38] sm:$0x1f] %v590
      %v592 = vld [vmem:[#allocation2] sm:$0xf]
      %v593 = vld [vmem:[#allocation2 + $0x8] sm:$0xf]
      %v594 = vld [vmem:[#allocation2 + $0x10] sm:$0xf]
      %v595 = vld [vmem:[#allocation2 + $0x18] sm:$0xf]
      %v596 = vld [vmem:[#allocation2 + $0x20] sm:$0xf]
      %v597 = vld [vmem:[#allocation2 + $0x28] sm:$0xf]
      %v598 = vld [vmem:[#allocation2 + $0x30] sm:$0xf]
      %v599 = vld [vmem:[#allocation2 + $0x38] sm:$0xf]
      %v600 = vld [vmem:[%s3] sm:$0xf]
      %v601 = vld [vmem:[%s3 + $0x4] sm:$0xf]
      %v602 = vld [vmem:[%s3 + $0x8] sm:$0xf]
      %v603 = vld [vmem:[%s3 + $0xc] sm:$0xf]
      %v604 = vld [vmem:[%s3 + $0x10] sm:$0xf]
      %v605 = vld [vmem:[%s3 + $0x14] sm:$0xf]
      %v606 = vld [vmem:[%s3 + $0x18] sm:$0xf]
      %v607 = vld [vmem:[%s3 + $0x1c] sm:$0xf]
      %v608 = vld [vmem:[%s3 + $0x20] sm:$0xf]
      %v609 = vld [vmem:[%s3 + $0x24] sm:$0xf]
      %v610 = vld [vmem:[%s3 + $0x28] sm:$0xf]
      %v611 = vld [vmem:[%s3 + $0x2c] sm:$0xf]
      %v612 = vld [vmem:[%s3 + $0x30] sm:$0xf]
      %v613 = vld [vmem:[%s3 + $0x34] sm:$0xf]
      %v614 = vld [vmem:[%s3 + $0x38] sm:$0xf]
      %v615 = vld [vmem:[%s3 + $0x3c] sm:$0xf]
      %v624 = vunpack.c.l.b16 %v592
      %v625 = vunpack.c.l.b16 %v593
      %v626 = vunpack.c.l.b16 %v594
      %v627 = vunpack.c.l.b16 %v595
      %v628 = vunpack.c.l.b16 %v596
      %v629 = vunpack.c.l.b16 %v597
      %v630 = vunpack.c.l.b16 %v598
      %v631 = vunpack.c.l.b16 %v599
      %v632 = vpack.c.b16 %v625, %v624
      %v633 = vpack.c.b16 %v627, %v626
      %v634 = vpack.c.b16 %v629, %v628
      %v635 = vpack.c.b16 %v631, %v630
      %v656 = vunpack.c.l.b16 %v600
      %v657 = vunpack.c.l.b16 %v601
      %v658 = vunpack.c.l.b16 %v602
      %v659 = vunpack.c.l.b16 %v603
      %v660 = vunpack.c.l.b16 %v604
      %v661 = vunpack.c.l.b16 %v605
      %v662 = vunpack.c.l.b16 %v606
      %v663 = vunpack.c.l.b16 %v607
      %v664 = vunpack.c.l.b16 %v608
      %v665 = vunpack.c.l.b16 %v609
      %v666 = vunpack.c.l.b16 %v610
      %v667 = vunpack.c.l.b16 %v611
      %v668 = vunpack.c.l.b16 %v612
      %v669 = vunpack.c.l.b16 %v613
      %v670 = vunpack.c.l.b16 %v614
      %v671 = vunpack.c.l.b16 %v615
      %v672 = vpack.c.b16 %v657, %v656
      %v673 = vpack.c.b16 %v659, %v658
      %v674 = vpack.c.b16 %v661, %v660
      %v675 = vpack.c.b16 %v663, %v662
      %v676 = vpack.c.b16 %v665, %v664
      %v677 = vpack.c.b16 %v667, %v666
      %v678 = vpack.c.b16 %v669, %v668
      %v679 = vpack.c.b16 %v671, %v670
      %688 = vmatprep.subr.bf16.mxu0 0
      %689 = vmatpush1.bf16.msra.mxu0 %v672
      %690 = vmatprep.subr.bf16.mxu0 0
      %691 = vmatpush1.bf16.msra.mxu0 %v673
      %692 = vmatprep.subr.bf16.mxu0 0
      %693 = vmatpush1.bf16.msra.mxu0 %v674
      %694 = vmatprep.subr.bf16.mxu0 0
      %695 = vmatpush1.bf16.msra.mxu0 %v675
      %696 = vmatprep.subr.bf16.mxu0 0
      %697 = vmatpush1.bf16.msra.mxu0 %v676
      %698 = vmatprep.subr.bf16.mxu0 0
      %699 = vmatpush1.bf16.msra.mxu0 %v677
      %700 = vmatprep.subr.bf16.mxu0 0
      %701 = vmatpush1.bf16.msra.mxu0 %v678
      %702 = vmatprep.subr.bf16.mxu0 0
      %703 = vmatpush1.bf16.msra.mxu0 %v679
      %704 = vmatprep.subr.bf16.mxu0 0
      %705 = vmatpush1.bf16.msra.mxu0 0
      %706 = vmatprep.subr.bf16.mxu0 0
      %707 = vmatpush1.bf16.msra.mxu0 0
      %708 = vmatprep.subr.bf16.mxu0 0
      %709 = vmatpush1.bf16.msra.mxu0 0
      %710 = vmatprep.subr.bf16.mxu0 0
      %711 = vmatpush1.bf16.msra.mxu0 0
      %712 = vmatprep.subr.bf16.mxu0 0
      %713 = vmatpush1.bf16.msra.mxu0 0
      %714 = vmatprep.subr.bf16.mxu0 0
      %715 = vmatpush1.bf16.msra.mxu0 0
      %716 = vmatprep.subr.bf16.mxu0 0
      %717 = vmatpush1.bf16.msra.mxu0 0
      %718 = vmatprep.subr.bf16.mxu0 0
      %719 = vmatpush1.bf16.msra.mxu0 0
      %720 = vmatprep.mubr.bf16.mxu0 0
      %721 = vmatmul.mubr.bf16.gmra.mrb[0].mxu0 %v632
      %v722 = vpop.f32.mrb[0].mxu0
      %v723 = vadd.f32 0.0, %v722
      %v724 = vpop.f32.mrb[0].mxu0
      %v725 = vpop.f32.mrb[0].mxu0
      %v726 = vadd.f32 0.0, %v725
      %v727 = vpop.f32.mrb[0].mxu0
      %728 = vmatprep.mubr.bf16.mxu0 0
      %729 = vmatmul.mubr.bf16.gmra.mrb[0].mxu0 %v633
      %v730 = vpop.f32.mrb[0].mxu0
      %v731 = vadd.f32 0.0, %v730
      %v732 = vpop.f32.mrb[0].mxu0
      %v733 = vpop.f32.mrb[0].mxu0
      %v734 = vadd.f32 0.0, %v733
      %v735 = vpop.f32.mrb[0].mxu0
      %736 = vmatprep.mubr.bf16.mxu0 0
      %737 = vmatmul.mubr.bf16.gmra.mrb[0].mxu0 %v634
      %v738 = vpop.f32.mrb[0].mxu0
      %v739 = vadd.f32 0.0, %v738
      %v740 = vpop.f32.mrb[0].mxu0
      %v741 = vpop.f32.mrb[0].mxu0
      %v742 = vadd.f32 0.0, %v741
      %v743 = vpop.f32.mrb[0].mxu0
      %744 = vmatprep.mubr.bf16.mxu0 0
      %745 = vmatmul.mubr.bf16.gmra.mrb[0].mxu0 %v635
      %v746 = vpop.f32.mrb[0].mxu0
      %v747 = vadd.f32 0.0, %v746
      %v748 = vpop.f32.mrb[0].mxu0
      %v749 = vpop.f32.mrb[0].mxu0
      %v750 = vadd.f32 0.0, %v749
      %v751 = vpop.f32.mrb[0].mxu0
      %752 = vdwg.mxu0
      %753 = vst [vmem:[#allocation3] sm:$0xff] %v723
      %754 = vst [vmem:[#allocation3 + $0x8] sm:$0xff] %v726
      %755 = vst [vmem:[#allocation3 + $0x10] sm:$0xff] %v731
      %756 = vst [vmem:[#allocation3 + $0x18] sm:$0xff] %v734
      %757 = vst [vmem:[#allocation3 + $0x20] sm:$0xff] %v739
      %758 = vst [vmem:[#allocation3 + $0x28] sm:$0xff] %v742
      %759 = vst [vmem:[#allocation3 + $0x30] sm:$0xff] %v747
      %760 = vst [vmem:[#allocation3 + $0x38] sm:$0xff] %v750
      %v761 = vld [vmem:[#allocation2] sm:$0x1f]
      %v762 = vld [vmem:[#allocation2 + $0x8] sm:$0x1f]
      %v763 = vld [vmem:[#allocation2 + $0x10] sm:$0x1f]
      %v764 = vld [vmem:[#allocation2 + $0x18] sm:$0x1f]
      %v765 = vld [vmem:[#allocation2 + $0x20] sm:$0x1f]
      %v766 = vld [vmem:[#allocation2 + $0x28] sm:$0x1f]
      %v767 = vld [vmem:[#allocation2 + $0x30] sm:$0x1f]
      %v768 = vld [vmem:[#allocation2 + $0x38] sm:$0x1f]
      %v777 = vunpack.c.l.b16 %v761
      %v778 = vunpack.c.h.b16 %v761
      %v779 = vunpack.c.l.b16 %v762
      %v780 = vunpack.c.h.b16 %v762
      %v781 = vunpack.c.l.b16 %v763
      %v782 = vunpack.c.h.b16 %v763
      %v783 = vunpack.c.l.b16 %v764
      %v784 = vunpack.c.h.b16 %v764
      %v785 = vunpack.c.l.b16 %v765
      %v786 = vunpack.c.h.b16 %v765
      %v787 = vunpack.c.l.b16 %v766
      %v788 = vunpack.c.h.b16 %v766
      %v789 = vunpack.c.l.b16 %v767
      %v790 = vunpack.c.h.b16 %v767
      %v791 = vunpack.c.l.b16 %v768
      %v792 = vunpack.c.h.b16 %v768
      %v793 = vpack.c.b16 %v777, %v777
      %v794 = vpack.c.b16 %v778, %v778
      %v795 = vpack.c.b16 %v779, %v779
      %v796 = vpack.c.b16 %v780, %v780
      %v797 = vpack.c.b16 %v781, %v781
      %v798 = vpack.c.b16 %v782, %v782
      %v799 = vpack.c.b16 %v783, %v783
      %v800 = vpack.c.b16 %v784, %v784
      %v801 = vpack.c.b16 %v785, %v785
      %v802 = vpack.c.b16 %v786, %v786
      %v803 = vpack.c.b16 %v787, %v787
      %v804 = vpack.c.b16 %v788, %v788
      %v805 = vpack.c.b16 %v789, %v789
      %v806 = vpack.c.b16 %v790, %v790
      %v807 = vpack.c.b16 %v791, %v791
      %v808 = vpack.c.b16 %v792, %v792
      %vm809 = vsmask.f32 3328
      %vm810 = vsmask.f32 7440
      %vm811 = vmor %vm809, %vm810
      %v813 = vshrl.u32 %v793, 16
      %v815 = vrot.slane %v813, 4
      %v816 = vshll.u32 %v793, 16
      %v818 = vrot.slane %v816, 5
      %v819 = vor.u32 %v815, %v818
      %v820 = vrot.slane %v819, 4
      %v822 = vshll.u32 %v794, 16
      %v824 = vrot.slane %v822, 5
      %v825 = vsel %vm811, %v820, %v824
      %v827 = vshrl.u32 %v795, 16
      %v829 = vrot.slane %v827, 4
      %v830 = vshll.u32 %v795, 16
      %v832 = vrot.slane %v830, 5
      %v833 = vor.u32 %v829, %v832
      %v834 = vrot.slane %v833, 4
      %v836 = vshll.u32 %v796, 16
      %v838 = vrot.slane %v836, 5
      %v839 = vsel %vm811, %v834, %v838
      %v841 = vshrl.u32 %v797, 16
      %v843 = vrot.slane %v841, 4
      %v844 = vshll.u32 %v797, 16
      %v846 = vrot.slane %v844, 5
      %v847 = vor.u32 %v843, %v846
      %v848 = vrot.slane %v847, 4
      %v850 = vshll.u32 %v798, 16
      %v852 = vrot.slane %v850, 5
      %v853 = vsel %vm811, %v848, %v852
      %v855 = vshrl.u32 %v799, 16
      %v857 = vrot.slane %v855, 4
      %v858 = vshll.u32 %v799, 16
      %v860 = vrot.slane %v858, 5
      %v861 = vor.u32 %v857, %v860
      %v862 = vrot.slane %v861, 4
      %v864 = vshll.u32 %v800, 16
      %v866 = vrot.slane %v864, 5
      %v867 = vsel %vm811, %v862, %v866
      %v869 = vshrl.u32 %v801, 16
      %v871 = vrot.slane %v869, 4
      %v872 = vshll.u32 %v801, 16
      %v874 = vrot.slane %v872, 5
      %v875 = vor.u32 %v871, %v874
      %v876 = vrot.slane %v875, 4
      %v878 = vshll.u32 %v802, 16
      %v880 = vrot.slane %v878, 5
      %v881 = vsel %vm811, %v876, %v880
      %v883 = vshrl.u32 %v803, 16
      %v885 = vrot.slane %v883, 4
      %v886 = vshll.u32 %v803, 16
      %v888 = vrot.slane %v886, 5
      %v889 = vor.u32 %v885, %v888
      %v890 = vrot.slane %v889, 4
      %v892 = vshll.u32 %v804, 16
      %v894 = vrot.slane %v892, 5
      %v895 = vsel %vm811, %v890, %v894
      %v897 = vshrl.u32 %v805, 16
      %v899 = vrot.slane %v897, 4
      %v900 = vshll.u32 %v805, 16
      %v902 = vrot.slane %v900, 5
      %v903 = vor.u32 %v899, %v902
      %v904 = vrot.slane %v903, 4
      %v906 = vshll.u32 %v806, 16
      %v908 = vrot.slane %v906, 5
      %v909 = vsel %vm811, %v904, %v908
      %v911 = vshrl.u32 %v807, 16
      %v913 = vrot.slane %v911, 4
      %v914 = vshll.u32 %v807, 16
      %v916 = vrot.slane %v914, 5
      %v917 = vor.u32 %v913, %v916
      %v918 = vrot.slane %v917, 4
      %v920 = vshll.u32 %v808, 16
      %v922 = vrot.slane %v920, 5
      %v923 = vsel %vm811, %v918, %v922
      %s924 = scalar_lea.vmem %s3, 64
      %v925 = vld [vmem:[%s924] sm:$0xf]
      %v926 = vld [vmem:[%s924 + $0x4] sm:$0xf]
      %v927 = vld [vmem:[%s924 + $0x8] sm:$0xf]
      %v928 = vld [vmem:[%s924 + $0xc] sm:$0xf]
      %v929 = vld [vmem:[%s924 + $0x10] sm:$0xf]
      %v930 = vld [vmem:[%s924 + $0x14] sm:$0xf]
      %v931 = vld [vmem:[%s924 + $0x18] sm:$0xf]
      %v932 = vld [vmem:[%s924 + $0x1c] sm:$0xf]
      %v933 = vld [vmem:[%s924 + $0x20] sm:$0xf]
      %v934 = vld [vmem:[%s924 + $0x24] sm:$0xf]
      %v935 = vld [vmem:[%s924 + $0x28] sm:$0xf]
      %v936 = vld [vmem:[%s924 + $0x2c] sm:$0xf]
      %v937 = vld [vmem:[%s924 + $0x30] sm:$0xf]
      %v938 = vld [vmem:[%s924 + $0x34] sm:$0xf]
      %v939 = vld [vmem:[%s924 + $0x38] sm:$0xf]
      %v940 = vld [vmem:[%s924 + $0x3c] sm:$0xf]
      %v941 = vunpack.c.l.b16 %v825
      %v942 = vunpack.c.l.b16 %v839
      %v943 = vunpack.c.l.b16 %v853
      %v944 = vunpack.c.l.b16 %v867
      %v945 = vunpack.c.l.b16 %v881
      %v946 = vunpack.c.l.b16 %v895
      %v947 = vunpack.c.l.b16 %v909
      %v948 = vunpack.c.l.b16 %v923
      %v949 = vpack.c.b16 %v942, %v941
      %v950 = vpack.c.b16 %v944, %v943
      %v951 = vpack.c.b16 %v946, %v945
      %v952 = vpack.c.b16 %v948, %v947
      %v973 = vunpack.c.l.b16 %v925
      %v974 = vunpack.c.l.b16 %v926
      %v975 = vunpack.c.l.b16 %v927
      %v976 = vunpack.c.l.b16 %v928
      %v977 = vunpack.c.l.b16 %v929
      %v978 = vunpack.c.l.b16 %v930
      %v979 = vunpack.c.l.b16 %v931
      %v980 = vunpack.c.l.b16 %v932
      %v981 = vunpack.c.l.b16 %v933
      %v982 = vunpack.c.l.b16 %v934
      %v983 = vunpack.c.l.b16 %v935
      %v984 = vunpack.c.l.b16 %v936
      %v985 = vunpack.c.l.b16 %v937
      %v986 = vunpack.c.l.b16 %v938
      %v987 = vunpack.c.l.b16 %v939
      %v988 = vunpack.c.l.b16 %v940
      %v989 = vpack.c.b16 %v974, %v973
      %v990 = vpack.c.b16 %v976, %v975
      %v991 = vpack.c.b16 %v978, %v977
      %v992 = vpack.c.b16 %v980, %v979
      %v993 = vpack.c.b16 %v982, %v981
      %v994 = vpack.c.b16 %v984, %v983
      %v995 = vpack.c.b16 %v986, %v985
      %v996 = vpack.c.b16 %v988, %v987
      %1005 = vmatprep.subr.bf16.mxu0 0
      %1006 = vmatpush1.bf16.msra.mxu0 %v989
      %1007 = vmatprep.subr.bf16.mxu0 0
      %1008 = vmatpush1.bf16.msra.mxu0 %v990
      %1009 = vmatprep.subr.bf16.mxu0 0
      %1010 = vmatpush1.bf16.msra.mxu0 %v991
      %1011 = vmatprep.subr.bf16.mxu0 0
      %1012 = vmatpush1.bf16.msra.mxu0 %v992
      %1013 = vmatprep.subr.bf16.mxu0 0
      %1014 = vmatpush1.bf16.msra.mxu0 %v993
      %1015 = vmatprep.subr.bf16.mxu0 0
      %1016 = vmatpush1.bf16.msra.mxu0 %v994
      %1017 = vmatprep.subr.bf16.mxu0 0
      %1018 = vmatpush1.bf16.msra.mxu0 %v995
      %1019 = vmatprep.subr.bf16.mxu0 0
      %1020 = vmatpush1.bf16.msra.mxu0 %v996
      %1021 = vmatprep.subr.bf16.mxu0 0
      %1022 = vmatpush1.bf16.msra.mxu0 0
      %1023 = vmatprep.subr.bf16.mxu0 0
      %1024 = vmatpush1.bf16.msra.mxu0 0
      %1025 = vmatprep.subr.bf16.mxu0 0
      %1026 = vmatpush1.bf16.msra.mxu0 0
      %1027 = vmatprep.subr.bf16.mxu0 0
      %1028 = vmatpush1.bf16.msra.mxu0 0
      %1029 = vmatprep.subr.bf16.mxu0 0
      %1030 = vmatpush1.bf16.msra.mxu0 0
      %1031 = vmatprep.subr.bf16.mxu0 0
      %1032 = vmatpush1.bf16.msra.mxu0 0
      %1033 = vmatprep.subr.bf16.mxu0 0
      %1034 = vmatpush1.bf16.msra.mxu0 0
      %1035 = vmatprep.subr.bf16.mxu0 0
      %1036 = vmatpush1.bf16.msra.mxu0 0
      %1037 = vmatprep.mubr.bf16.mxu0 0
      %1038 = vmatmul.mubr.bf16.gmra.mrb[0].mxu0 %v949
      %v1039 = vpop.f32.mrb[0].mxu0
      %v1040 = vadd.f32 0.0, %v1039
      %v1041 = vpop.f32.mrb[0].mxu0
      %v1042 = vpop.f32.mrb[0].mxu0
      %v1043 = vadd.f32 0.0, %v1042
      %v1044 = vpop.f32.mrb[0].mxu0
      %1045 = vmatprep.mubr.bf16.mxu0 0
      %1046 = vmatmul.mubr.bf16.gmra.mrb[0].mxu0 %v950
      %v1047 = vpop.f32.mrb[0].mxu0
      %v1048 = vadd.f32 0.0, %v1047
      %v1049 = vpop.f32.mrb[0].mxu0
      %v1050 = vpop.f32.mrb[0].mxu0
      %v1051 = vadd.f32 0.0, %v1050
      %v1052 = vpop.f32.mrb[0].mxu0
      %1053 = vmatprep.mubr.bf16.mxu0 0
      %1054 = vmatmul.mubr.bf16.gmra.mrb[0].mxu0 %v951
      %v1055 = vpop.f32.mrb[0].mxu0
      %v1056 = vadd.f32 0.0, %v1055
      %v1057 = vpop.f32.mrb[0].mxu0
      %v1058 = vpop.f32.mrb[0].mxu0
      %v1059 = vadd.f32 0.0, %v1058
      %v1060 = vpop.f32.mrb[0].mxu0
      %1061 = vmatprep.mubr.bf16.mxu0 0
      %1062 = vmatmul.mubr.bf16.gmra.mrb[0].mxu0 %v952
      %v1063 = vpop.f32.mrb[0].mxu0
      %v1064 = vadd.f32 0.0, %v1063
      %v1065 = vpop.f32.mrb[0].mxu0
      %v1066 = vpop.f32.mrb[0].mxu0
      %v1067 = vadd.f32 0.0, %v1066
      %v1068 = vpop.f32.mrb[0].mxu0
      %1069 = vdwg.mxu0
      %v1070 = vld [vmem:[#allocation3] sm:$0xff]
      %v1071 = vld [vmem:[#allocation3 + $0x8] sm:$0xff]
      %v1072 = vld [vmem:[#allocation3 + $0x10] sm:$0xff]
      %v1073 = vld [vmem:[#allocation3 + $0x18] sm:$0xff]
      %v1074 = vld [vmem:[#allocation3 + $0x20] sm:$0xff]
      %v1075 = vld [vmem:[#allocation3 + $0x28] sm:$0xff]
      %v1076 = vld [vmem:[#allocation3 + $0x30] sm:$0xff]
      %v1077 = vld [vmem:[#allocation3 + $0x38] sm:$0xff]
      %v1078 = vadd.f32 %v1070, %v1040
      %v1079 = vadd.f32 %v1071, %v1043
      %v1080 = vadd.f32 %v1072, %v1048
      %v1081 = vadd.f32 %v1073, %v1051
      %v1082 = vadd.f32 %v1074, %v1056
      %v1083 = vadd.f32 %v1075, %v1059
      %v1084 = vadd.f32 %v1076, %v1064
      %v1085 = vadd.f32 %v1077, %v1067
      %1086 = vst [vmem:[#allocation3] sm:$0xff] %v1078
      %1087 = vst [vmem:[#allocation3 + $0x8] sm:$0xff] %v1079
      %1088 = vst [vmem:[#allocation3 + $0x10] sm:$0xff] %v1080
      %1089 = vst [vmem:[#allocation3 + $0x18] sm:$0xff] %v1081
      %1090 = vst [vmem:[#allocation3 + $0x20] sm:$0xff] %v1082
      %1091 = vst [vmem:[#allocation3 + $0x28] sm:$0xff] %v1083
      %1092 = vst [vmem:[#allocation3 + $0x30] sm:$0xff] %v1084
      %1093 = vst [vmem:[#allocation3 + $0x38] sm:$0xff] %v1085
      %v1094 = vld [vmem:[#allocation2] sm:$0x1e]
      %v1095 = vld [vmem:[#allocation2 + $0x8] sm:$0x1e]
      %v1096 = vld [vmem:[#allocation2 + $0x10] sm:$0x1e]
      %v1097 = vld [vmem:[#allocation2 + $0x18] sm:$0x1e]
      %v1098 = vld [vmem:[#allocation2 + $0x20] sm:$0x1e]
      %v1099 = vld [vmem:[#allocation2 + $0x28] sm:$0x1e]
      %v1100 = vld [vmem:[#allocation2 + $0x30] sm:$0x1e]
      %v1101 = vld [vmem:[#allocation2 + $0x38] sm:$0x1e]
      %v1110 = vunpack.c.l.b16 %v1094
      %v1111 = vunpack.c.h.b16 %v1094
      %v1112 = vunpack.c.l.b16 %v1095
      %v1113 = vunpack.c.h.b16 %v1095
      %v1114 = vunpack.c.l.b16 %v1096
      %v1115 = vunpack.c.h.b16 %v1096
      %v1116 = vunpack.c.l.b16 %v1097
      %v1117 = vunpack.c.h.b16 %v1097
      %v1118 = vunpack.c.l.b16 %v1098
      %v1119 = vunpack.c.h.b16 %v1098
      %v1120 = vunpack.c.l.b16 %v1099
      %v1121 = vunpack.c.h.b16 %v1099
      %v1122 = vunpack.c.l.b16 %v1100
      %v1123 = vunpack.c.h.b16 %v1100
      %v1124 = vunpack.c.l.b16 %v1101
      %v1125 = vunpack.c.h.b16 %v1101
      %v1126 = vpack.c.b16 %v1110, %v1110
      %v1127 = vpack.c.b16 %v1111, %v1111
      %v1128 = vpack.c.b16 %v1112, %v1112
      %v1129 = vpack.c.b16 %v1113, %v1113
      %v1130 = vpack.c.b16 %v1114, %v1114
      %v1131 = vpack.c.b16 %v1115, %v1115
      %v1132 = vpack.c.b16 %v1116, %v1116
      %v1133 = vpack.c.b16 %v1117, %v1117
      %v1134 = vpack.c.b16 %v1118, %v1118
      %v1135 = vpack.c.b16 %v1119, %v1119
      %v1136 = vpack.c.b16 %v1120, %v1120
      %v1137 = vpack.c.b16 %v1121, %v1121
      %v1138 = vpack.c.b16 %v1122, %v1122
      %v1139 = vpack.c.b16 %v1123, %v1123
      %v1140 = vpack.c.b16 %v1124, %v1124
      %v1141 = vpack.c.b16 %v1125, %v1125
      %vm1142 = vcmask 1042432
      %vm1143 = vcmask 1046532
      %vm1144 = vmor %vm1142, %vm1143
      %v1145 = vrot.slane %v1126, 5
      %v1146 = vrot.slane %v1145, 4
      %v1147 = vrot.slane %v1127, 5
      %v1148 = vsel %vm1144, %v1146, %v1147
      %v1149 = vrot.slane %v1128, 5
      %v1150 = vrot.slane %v1149, 4
      %v1151 = vrot.slane %v1129, 5
      %v1152 = vsel %vm1144, %v1150, %v1151
      %v1153 = vrot.slane %v1130, 5
      %v1154 = vrot.slane %v1153, 4
      %v1155 = vrot.slane %v1131, 5
      %v1156 = vsel %vm1144, %v1154, %v1155
      %v1157 = vrot.slane %v1132, 5
      %v1158 = vrot.slane %v1157, 4
      %v1159 = vrot.slane %v1133, 5
      %v1160 = vsel %vm1144, %v1158, %v1159
      %v1161 = vrot.slane %v1134, 5
      %v1162 = vrot.slane %v1161, 4
      %v1163 = vrot.slane %v1135, 5
      %v1164 = vsel %vm1144, %v1162, %v1163
      %v1165 = vrot.slane %v1136, 5
      %v1166 = vrot.slane %v1165, 4
      %v1167 = vrot.slane %v1137, 5
      %v1168 = vsel %vm1144, %v1166, %v1167
      %v1169 = vrot.slane %v1138, 5
      %v1170 = vrot.slane %v1169, 4
      %v1171 = vrot.slane %v1139, 5
      %v1172 = vsel %vm1144, %v1170, %v1171
      %v1173 = vrot.slane %v1140, 5
      %v1174 = vrot.slane %v1173, 4
      %v1175 = vrot.slane %v1141, 5
      %v1176 = vsel %vm1144, %v1174, %v1175
      %s1177 = scalar_lea.vmem %s3, 128
      %v1178 = vld [vmem:[%s1177] sm:$0xf]
      %v1179 = vld [vmem:[%s1177 + $0x4] sm:$0xf]
      %v1180 = vld [vmem:[%s1177 + $0x8] sm:$0xf]
      %v1181 = vld [vmem:[%s1177 + $0xc] sm:$0xf]
      %v1182 = vld [vmem:[%s1177 + $0x10] sm:$0xf]
      %v1183 = vld [vmem:[%s1177 + $0x14] sm:$0xf]
      %v1184 = vld [vmem:[%s1177 + $0x18] sm:$0xf]
      %v1185 = vld [vmem:[%s1177 + $0x1c] sm:$0xf]
      %v1186 = vld [vmem:[%s1177 + $0x20] sm:$0xf]
      %v1187 = vld [vmem:[%s1177 + $0x24] sm:$0xf]
      %v1188 = vld [vmem:[%s1177 + $0x28] sm:$0xf]
      %v1189 = vld [vmem:[%s1177 + $0x2c] sm:$0xf]
      %v1190 = vld [vmem:[%s1177 + $0x30] sm:$0xf]
      %v1191 = vld [vmem:[%s1177 + $0x34] sm:$0xf]
      %v1192 = vld [vmem:[%s1177 + $0x38] sm:$0xf]
      %v1193 = vld [vmem:[%s1177 + $0x3c] sm:$0xf]
      %v1194 = vunpack.c.l.b16 %v1148
      %v1195 = vunpack.c.l.b16 %v1152
      %v1196 = vunpack.c.l.b16 %v1156
      %v1197 = vunpack.c.l.b16 %v1160
      %v1198 = vunpack.c.l.b16 %v1164
      %v1199 = vunpack.c.l.b16 %v1168
      %v1200 = vunpack.c.l.b16 %v1172
      %v1201 = vunpack.c.l.b16 %v1176
      %v1202 = vpack.c.b16 %v1195, %v1194
      %v1203 = vpack.c.b16 %v1197, %v1196
      %v1204 = vpack.c.b16 %v1199, %v1198
      %v1205 = vpack.c.b16 %v1201, %v1200
      %v1226 = vunpack.c.l.b16 %v1178
      %v1227 = vunpack.c.l.b16 %v1179
      %v1228 = vunpack.c.l.b16 %v1180
      %v1229 = vunpack.c.l.b16 %v1181
      %v1230 = vunpack.c.l.b16 %v1182
      %v1231 = vunpack.c.l.b16 %v1183
      %v1232 = vunpack.c.l.b16 %v1184
      %v1233 = vunpack.c.l.b16 %v1185
      %v1234 = vunpack.c.l.b16 %v1186
      %v1235 = vunpack.c.l.b16 %v1187
      %v1236 = vunpack.c.l.b16 %v1188
      %v1237 = vunpack.c.l.b16 %v1189
      %v1238 = vunpack.c.l.b16 %v1190
      %v1239 = vunpack.c.l.b16 %v1191
      %v1240 = vunpack.c.l.b16 %v1192
      %v1241 = vunpack.c.l.b16 %v1193
      %v1242 = vpack.c.b16 %v1227, %v1226
      %v1243 = vpack.c.b16 %v1229, %v1228
      %v1244 = vpack.c.b16 %v1231, %v1230
      %v1245 = vpack.c.b16 %v1233, %v1232
      %v1246 = vpack.c.b16 %v1235, %v1234
      %v1247 = vpack.c.b16 %v1237, %v1236
      %v1248 = vpack.c.b16 %v1239, %v1238
      %v1249 = vpack.c.b16 %v1241, %v1240
      %1258 = vmatprep.subr.bf16.mxu0 0
      %1259 = vmatpush1.bf16.msra.mxu0 %v1242
      %1260 = vmatprep.subr.bf16.mxu0 0
      %1261 = vmatpush1.bf16.msra.mxu0 %v1243
      %1262 = vmatprep.subr.bf16.mxu0 0
      %1263 = vmatpush1.bf16.msra.mxu0 %v1244
      %1264 = vmatprep.subr.bf16.mxu0 0
      %1265 = vmatpush1.bf16.msra.mxu0 %v1245
      %1266 = vmatprep.subr.bf16.mxu0 0
      %1267 = vmatpush1.bf16.msra.mxu0 %v1246
      %1268 = vmatprep.subr.bf16.mxu0 0
      %1269 = vmatpush1.bf16.msra.mxu0 %v1247
      %1270 = vmatprep.subr.bf16.mxu0 0
      %1271 = vmatpush1.bf16.msra.mxu0 %v1248
      %1272 = vmatprep.subr.bf16.mxu0 0
      %1273 = vmatpush1.bf16.msra.mxu0 %v1249
      %1274 = vmatprep.subr.bf16.mxu0 0
      %1275 = vmatpush1.bf16.msra.mxu0 0
      %1276 = vmatprep.subr.bf16.mxu0 0
      %1277 = vmatpush1.bf16.msra.mxu0 0
      %1278 = vmatprep.subr.bf16.mxu0 0
      %1279 = vmatpush1.bf16.msra.mxu0 0
      %1280 = vmatprep.subr.bf16.mxu0 0
      %1281 = vmatpush1.bf16.msra.mxu0 0
      %1282 = vmatprep.subr.bf16.mxu0 0
      %1283 = vmatpush1.bf16.msra.mxu0 0
      %1284 = vmatprep.subr.bf16.mxu0 0
      %1285 = vmatpush1.bf16.msra.mxu0 0
      %1286 = vmatprep.subr.bf16.mxu0 0
      %1287 = vmatpush1.bf16.msra.mxu0 0
      %1288 = vmatprep.subr.bf16.mxu0 0
      %1289 = vmatpush1.bf16.msra.mxu0 0
      %1290 = vmatprep.mubr.bf16.mxu0 0
      %1291 = vmatmul.mubr.bf16.gmra.mrb[0].mxu0 %v1202
      %v1292 = vpop.f32.mrb[0].mxu0
      %v1293 = vadd.f32 0.0, %v1292
      %v1294 = vpop.f32.mrb[0].mxu0
      %v1295 = vpop.f32.mrb[0].mxu0
      %v1296 = vadd.f32 0.0, %v1295
      %v1297 = vpop.f32.mrb[0].mxu0
      %1298 = vmatprep.mubr.bf16.mxu0 0
      %1299 = vmatmul.mubr.bf16.gmra.mrb[0].mxu0 %v1203
      %v1300 = vpop.f32.mrb[0].mxu0
      %v1301 = vadd.f32 0.0, %v1300
      %v1302 = vpop.f32.mrb[0].mxu0
      %v1303 = vpop.f32.mrb[0].mxu0
      %v1304 = vadd.f32 0.0, %v1303
      %v1305 = vpop.f32.mrb[0].mxu0
      %1306 = vmatprep.mubr.bf16.mxu0 0
      %1307 = vmatmul.mubr.bf16.gmra.mrb[0].mxu0 %v1204
      %v1308 = vpop.f32.mrb[0].mxu0
      %v1309 = vadd.f32 0.0, %v1308
      %v1310 = vpop.f32.mrb[0].mxu0
      %v1311 = vpop.f32.mrb[0].mxu0
      %v1312 = vadd.f32 0.0, %v1311
      %v1313 = vpop.f32.mrb[0].mxu0
      %1314 = vmatprep.mubr.bf16.mxu0 0
      %1315 = vmatmul.mubr.bf16.gmra.mrb[0].mxu0 %v1205
      %v1316 = vpop.f32.mrb[0].mxu0
      %v1317 = vadd.f32 0.0, %v1316
      %v1318 = vpop.f32.mrb[0].mxu0
      %v1319 = vpop.f32.mrb[0].mxu0
      %v1320 = vadd.f32 0.0, %v1319
      %v1321 = vpop.f32.mrb[0].mxu0
      %1322 = vdwg.mxu0
      %v1323 = vld [vmem:[#allocation3] sm:$0xff]
      %v1324 = vld [vmem:[#allocation3 + $0x8] sm:$0xff]
      %v1325 = vld [vmem:[#allocation3 + $0x10] sm:$0xff]
      %v1326 = vld [vmem:[#allocation3 + $0x18] sm:$0xff]
      %v1327 = vld [vmem:[#allocation3 + $0x20] sm:$0xff]
      %v1328 = vld [vmem:[#allocation3 + $0x28] sm:$0xff]
      %v1329 = vld [vmem:[#allocation3 + $0x30] sm:$0xff]
      %v1330 = vld [vmem:[#allocation3 + $0x38] sm:$0xff]
      %v1331 = vadd.f32 %v1323, %v1293
      %v1332 = vadd.f32 %v1324, %v1296
      %v1333 = vadd.f32 %v1325, %v1301
      %v1334 = vadd.f32 %v1326, %v1304
      %v1335 = vadd.f32 %v1327, %v1309
      %v1336 = vadd.f32 %v1328, %v1312
      %v1337 = vadd.f32 %v1329, %v1317
      %v1338 = vadd.f32 %v1330, %v1320
      %1339 = vst [vmem:[#allocation3] sm:$0xff] %v1331
      %1340 = vst [vmem:[#allocation3 + $0x8] sm:$0xff] %v1332
      %1341 = vst [vmem:[#allocation3 + $0x10] sm:$0xff] %v1333
      %1342 = vst [vmem:[#allocation3 + $0x18] sm:$0xff] %v1334
      %1343 = vst [vmem:[#allocation3 + $0x20] sm:$0xff] %v1335
      %1344 = vst [vmem:[#allocation3 + $0x28] sm:$0xff] %v1336
      %1345 = vst [vmem:[#allocation3 + $0x30] sm:$0xff] %v1337
      %1346 = vst [vmem:[#allocation3 + $0x38] sm:$0xff] %v1338
      %v1347 = vld [vmem:[%s564] sm:$0xf]
      %v1348 = vld [vmem:[%s564 + $0x8] sm:$0xf]
      %v1349 = vld [vmem:[%s564 + $0x10] sm:$0xf]
      %v1350 = vld [vmem:[%s564 + $0x18] sm:$0xf]
      %v1351 = vld [vmem:[%s564 + $0x20] sm:$0xf]
      %v1352 = vld [vmem:[%s564 + $0x28] sm:$0xf]
      %v1353 = vld [vmem:[%s564 + $0x30] sm:$0xf]
      %v1354 = vld [vmem:[%s564 + $0x38] sm:$0xf]
      %s1355 = scalar_lea.vmem %s3, 192
      %v1356 = vld [vmem:[%s1355] sm:$0xf]
      %v1357 = vld [vmem:[%s1355 + $0x4] sm:$0xf]
      %v1358 = vld [vmem:[%s1355 + $0x8] sm:$0xf]
      %v1359 = vld [vmem:[%s1355 + $0xc] sm:$0xf]
      %v1360 = vld [vmem:[%s1355 + $0x10] sm:$0xf]
      %v1361 = vld [vmem:[%s1355 + $0x14] sm:$0xf]
      %v1362 = vld [vmem:[%s1355 + $0x18] sm:$0xf]
      %v1363 = vld [vmem:[%s1355 + $0x1c] sm:$0xf]
      %v1364 = vld [vmem:[%s1355 + $0x20] sm:$0xf]
      %v1365 = vld [vmem:[%s1355 + $0x24] sm:$0xf]
      %v1366 = vld [vmem:[%s1355 + $0x28] sm:$0xf]
      %v1367 = vld [vmem:[%s1355 + $0x2c] sm:$0xf]
      %v1368 = vld [vmem:[%s1355 + $0x30] sm:$0xf]
      %v1369 = vld [vmem:[%s1355 + $0x34] sm:$0xf]
      %v1370 = vld [vmem:[%s1355 + $0x38] sm:$0xf]
      %v1371 = vld [vmem:[%s1355 + $0x3c] sm:$0xf]
      %v1380 = vunpack.c.l.b16 %v1347
      %v1381 = vunpack.c.l.b16 %v1348
      %v1382 = vunpack.c.l.b16 %v1349
      %v1383 = vunpack.c.l.b16 %v1350
      %v1384 = vunpack.c.l.b16 %v1351
      %v1385 = vunpack.c.l.b16 %v1352
      %v1386 = vunpack.c.l.b16 %v1353
      %v1387 = vunpack.c.l.b16 %v1354
      %v1388 = vpack.c.b16 %v1381, %v1380
      %v1389 = vpack.c.b16 %v1383, %v1382
      %v1390 = vpack.c.b16 %v1385, %v1384
      %v1391 = vpack.c.b16 %v1387, %v1386
      %v1412 = vunpack.c.l.b16 %v1356
      %v1413 = vunpack.c.l.b16 %v1357
      %v1414 = vunpack.c.l.b16 %v1358
      %v1415 = vunpack.c.l.b16 %v1359
      %v1416 = vunpack.c.l.b16 %v1360
      %v1417 = vunpack.c.l.b16 %v1361
      %v1418 = vunpack.c.l.b16 %v1362
      %v1419 = vunpack.c.l.b16 %v1363
      %v1420 = vunpack.c.l.b16 %v1364
      %v1421 = vunpack.c.l.b16 %v1365
      %v1422 = vunpack.c.l.b16 %v1366
      %v1423 = vunpack.c.l.b16 %v1367
      %v1424 = vunpack.c.l.b16 %v1368
      %v1425 = vunpack.c.l.b16 %v1369
      %v1426 = vunpack.c.l.b16 %v1370
      %v1427 = vunpack.c.l.b16 %v1371
      %v1428 = vpack.c.b16 %v1413, %v1412
      %v1429 = vpack.c.b16 %v1415, %v1414
      %v1430 = vpack.c.b16 %v1417, %v1416
      %v1431 = vpack.c.b16 %v1419, %v1418
      %v1432 = vpack.c.b16 %v1421, %v1420
      %v1433 = vpack.c.b16 %v1423, %v1422
      %v1434 = vpack.c.b16 %v1425, %v1424
      %v1435 = vpack.c.b16 %v1427, %v1426
      %1444 = vmatprep.subr.bf16.mxu0 0
      %1445 = vmatpush1.bf16.msra.mxu0 %v1428
      %1446 = vmatprep.subr.bf16.mxu0 0
      %1447 = vmatpush1.bf16.msra.mxu0 %v1429
      %1448 = vmatprep.subr.bf16.mxu0 0
      %1449 = vmatpush1.bf16.msra.mxu0 %v1430
      %1450 = vmatprep.subr.bf16.mxu0 0
      %1451 = vmatpush1.bf16.msra.mxu0 %v1431
      %1452 = vmatprep.subr.bf16.mxu0 0
      %1453 = vmatpush1.bf16.msra.mxu0 %v1432
      %1454 = vmatprep.subr.bf16.mxu0 0
      %1455 = vmatpush1.bf16.msra.mxu0 %v1433
      %1456 = vmatprep.subr.bf16.mxu0 0
      %1457 = vmatpush1.bf16.msra.mxu0 %v1434
      %1458 = vmatprep.subr.bf16.mxu0 0
      %1459 = vmatpush1.bf16.msra.mxu0 %v1435
      %1460 = vmatprep.subr.bf16.mxu0 0
      %1461 = vmatpush1.bf16.msra.mxu0 0
      %1462 = vmatprep.subr.bf16.mxu0 0
      %1463 = vmatpush1.bf16.msra.mxu0 0
      %1464 = vmatprep.subr.bf16.mxu0 0
      %1465 = vmatpush1.bf16.msra.mxu0 0
      %1466 = vmatprep.subr.bf16.mxu0 0
      %1467 = vmatpush1.bf16.msra.mxu0 0
      %1468 = vmatprep.subr.bf16.mxu0 0
      %1469 = vmatpush1.bf16.msra.mxu0 0
      %1470 = vmatprep.subr.bf16.mxu0 0
      %1471 = vmatpush1.bf16.msra.mxu0 0
      %1472 = vmatprep.subr.bf16.mxu0 0
      %1473 = vmatpush1.bf16.msra.mxu0 0
      %1474 = vmatprep.subr.bf16.mxu0 0
      %1475 = vmatpush1.bf16.msra.mxu0 0
      %1476 = vmatprep.mubr.bf16.mxu0 0
      %1477 = vmatmul.mubr.bf16.gmra.mrb[0].mxu0 %v1388
      %v1478 = vpop.f32.mrb[0].mxu0
      %v1479 = vadd.f32 0.0, %v1478
      %v1480 = vpop.f32.mrb[0].mxu0
      %v1481 = vpop.f32.mrb[0].mxu0
      %v1482 = vadd.f32 0.0, %v1481
      %v1483 = vpop.f32.mrb[0].mxu0
      %1484 = vmatprep.mubr.bf16.mxu0 0
      %1485 = vmatmul.mubr.bf16.gmra.mrb[0].mxu0 %v1389
      %v1486 = vpop.f32.mrb[0].mxu0
      %v1487 = vadd.f32 0.0, %v1486
      %v1488 = vpop.f32.mrb[0].mxu0
      %v1489 = vpop.f32.mrb[0].mxu0
      %v1490 = vadd.f32 0.0, %v1489
      %v1491 = vpop.f32.mrb[0].mxu0
      %1492 = vmatprep.mubr.bf16.mxu0 0
      %1493 = vmatmul.mubr.bf16.gmra.mrb[0].mxu0 %v1390
      %v1494 = vpop.f32.mrb[0].mxu0
      %v1495 = vadd.f32 0.0, %v1494
      %v1496 = vpop.f32.mrb[0].mxu0
      %v1497 = vpop.f32.mrb[0].mxu0
      %v1498 = vadd.f32 0.0, %v1497
      %v1499 = vpop.f32.mrb[0].mxu0
      %1500 = vmatprep.mubr.bf16.mxu0 0
      %1501 = vmatmul.mubr.bf16.gmra.mrb[0].mxu0 %v1391
      %v1502 = vpop.f32.mrb[0].mxu0
      %v1503 = vadd.f32 0.0, %v1502
      %v1504 = vpop.f32.mrb[0].mxu0
      %v1505 = vpop.f32.mrb[0].mxu0
      %v1506 = vadd.f32 0.0, %v1505
      %v1507 = vpop.f32.mrb[0].mxu0
      %1508 = vdwg.mxu0
      %v1509 = vld [vmem:[#allocation3] sm:$0xff]
      %v1510 = vld [vmem:[#allocation3 + $0x8] sm:$0xff]
      %v1511 = vld [vmem:[#allocation3 + $0x10] sm:$0xff]
      %v1512 = vld [vmem:[#allocation3 + $0x18] sm:$0xff]
      %v1513 = vld [vmem:[#allocation3 + $0x20] sm:$0xff]
      %v1514 = vld [vmem:[#allocation3 + $0x28] sm:$0xff]
      %v1515 = vld [vmem:[#allocation3 + $0x30] sm:$0xff]
      %v1516 = vld [vmem:[#allocation3 + $0x38] sm:$0xff]
      %v1517 = vadd.f32 %v1509, %v1479
      %v1518 = vadd.f32 %v1510, %v1482
      %v1519 = vadd.f32 %v1511, %v1487
      %v1520 = vadd.f32 %v1512, %v1490
      %v1521 = vadd.f32 %v1513, %v1495
      %v1522 = vadd.f32 %v1514, %v1498
      %v1523 = vadd.f32 %v1515, %v1503
      %v1524 = vadd.f32 %v1516, %v1506
      %1525 = vst [vmem:[#allocation3] sm:$0xff] %v1517
      %1526 = vst [vmem:[#allocation3 + $0x8] sm:$0xff] %v1518
      %1527 = vst [vmem:[#allocation3 + $0x10] sm:$0xff] %v1519
      %1528 = vst [vmem:[#allocation3 + $0x18] sm:$0xff] %v1520
      %1529 = vst [vmem:[#allocation3 + $0x20] sm:$0xff] %v1521
      %1530 = vst [vmem:[#allocation3 + $0x28] sm:$0xff] %v1522
      %1531 = vst [vmem:[#allocation3 + $0x30] sm:$0xff] %v1523
      %1532 = vst [vmem:[#allocation3 + $0x38] sm:$0xff] %v1524
      %v1533 = vld [vmem:[%s564] sm:$0x1f]
      %v1534 = vld [vmem:[%s564 + $0x8] sm:$0x1f]
      %v1535 = vld [vmem:[%s564 + $0x10] sm:$0x1f]
      %v1536 = vld [vmem:[%s564 + $0x18] sm:$0x1f]
      %v1537 = vld [vmem:[%s564 + $0x20] sm:$0x1f]
      %v1538 = vld [vmem:[%s564 + $0x28] sm:$0x1f]
      %v1539 = vld [vmem:[%s564 + $0x30] sm:$0x1f]
      %v1540 = vld [vmem:[%s564 + $0x38] sm:$0x1f]
      %v1549 = vunpack.c.l.b16 %v1533
      %v1550 = vunpack.c.h.b16 %v1533
      %v1551 = vunpack.c.l.b16 %v1534
      %v1552 = vunpack.c.h.b16 %v1534
      %v1553 = vunpack.c.l.b16 %v1535
      %v1554 = vunpack.c.h.b16 %v1535
      %v1555 = vunpack.c.l.b16 %v1536
      %v1556 = vunpack.c.h.b16 %v1536
      %v1557 = vunpack.c.l.b16 %v1537
      %v1558 = vunpack.c.h.b16 %v1537
      %v1559 = vunpack.c.l.b16 %v1538
      %v1560 = vunpack.c.h.b16 %v1538
      %v1561 = vunpack.c.l.b16 %v1539
      %v1562 = vunpack.c.h.b16 %v1539
      %v1563 = vunpack.c.l.b16 %v1540
      %v1564 = vunpack.c.h.b16 %v1540
      %v1565 = vpack.c.b16 %v1549, %v1549
      %v1566 = vpack.c.b16 %v1550, %v1550
      %v1567 = vpack.c.b16 %v1551, %v1551
      %v1568 = vpack.c.b16 %v1552, %v1552
      %v1569 = vpack.c.b16 %v1553, %v1553
      %v1570 = vpack.c.b16 %v1554, %v1554
      %v1571 = vpack.c.b16 %v1555, %v1555
      %v1572 = vpack.c.b16 %v1556, %v1556
      %v1573 = vpack.c.b16 %v1557, %v1557
      %v1574 = vpack.c.b16 %v1558, %v1558
      %v1575 = vpack.c.b16 %v1559, %v1559
      %v1576 = vpack.c.b16 %v1560, %v1560
      %v1577 = vpack.c.b16 %v1561, %v1561
      %v1578 = vpack.c.b16 %v1562, %v1562
      %v1579 = vpack.c.b16 %v1563, %v1563
      %v1580 = vpack.c.b16 %v1564, %v1564
      %v1582 = vshrl.u32 %v1565, 16
      %v1584 = vrot.slane %v1582, 4
      %v1585 = vshll.u32 %v1565, 16
      %v1587 = vrot.slane %v1585, 5
      %v1588 = vor.u32 %v1584, %v1587
      %v1589 = vrot.slane %v1588, 4
      %v1591 = vshll.u32 %v1566, 16
      %v1593 = vrot.slane %v1591, 5
      %v1594 = vsel %vm811, %v1589, %v1593
      %v1596 = vshrl.u32 %v1567, 16
      %v1598 = vrot.slane %v1596, 4
      %v1599 = vshll.u32 %v1567, 16
      %v1601 = vrot.slane %v1599, 5
      %v1602 = vor.u32 %v1598, %v1601
      %v1603 = vrot.slane %v1602, 4
      %v1605 = vshll.u32 %v1568, 16
      %v1607 = vrot.slane %v1605, 5
      %v1608 = vsel %vm811, %v1603, %v1607
      %v1610 = vshrl.u32 %v1569, 16
      %v1612 = vrot.slane %v1610, 4
      %v1613 = vshll.u32 %v1569, 16
      %v1615 = vrot.slane %v1613, 5
      %v1616 = vor.u32 %v1612, %v1615
      %v1617 = vrot.slane %v1616, 4
      %v1619 = vshll.u32 %v1570, 16
      %v1621 = vrot.slane %v1619, 5
      %v1622 = vsel %vm811, %v1617, %v1621
      %v1624 = vshrl.u32 %v1571, 16
      %v1626 = vrot.slane %v1624, 4
      %v1627 = vshll.u32 %v1571, 16
      %v1629 = vrot.slane %v1627, 5
      %v1630 = vor.u32 %v1626, %v1629
      %v1631 = vrot.slane %v1630, 4
      %v1633 = vshll.u32 %v1572, 16
      %v1635 = vrot.slane %v1633, 5
      %v1636 = vsel %vm811, %v1631, %v1635
      %v1638 = vshrl.u32 %v1573, 16
      %v1640 = vrot.slane %v1638, 4
      %v1641 = vshll.u32 %v1573, 16
      %v1643 = vrot.slane %v1641, 5
      %v1644 = vor.u32 %v1640, %v1643
      %v1645 = vrot.slane %v1644, 4
      %v1647 = vshll.u32 %v1574, 16
      %v1649 = vrot.slane %v1647, 5
      %v1650 = vsel %vm811, %v1645, %v1649
      %v1652 = vshrl.u32 %v1575, 16
      %v1654 = vrot.slane %v1652, 4
      %v1655 = vshll.u32 %v1575, 16
      %v1657 = vrot.slane %v1655, 5
      %v1658 = vor.u32 %v1654, %v1657
      %v1659 = vrot.slane %v1658, 4
      %v1661 = vshll.u32 %v1576, 16
      %v1663 = vrot.slane %v1661, 5
      %v1664 = vsel %vm811, %v1659, %v1663
      %v1666 = vshrl.u32 %v1577, 16
      %v1668 = vrot.slane %v1666, 4
      %v1669 = vshll.u32 %v1577, 16
      %v1671 = vrot.slane %v1669, 5
      %v1672 = vor.u32 %v1668, %v1671
      %v1673 = vrot.slane %v1672, 4
      %v1675 = vshll.u32 %v1578, 16
      %v1677 = vrot.slane %v1675, 5
      %v1678 = vsel %vm811, %v1673, %v1677
      %v1680 = vshrl.u32 %v1579, 16
      %v1682 = vrot.slane %v1680, 4
      %v1683 = vshll.u32 %v1579, 16
      %v1685 = vrot.slane %v1683, 5
      %v1686 = vor.u32 %v1682, %v1685
      %v1687 = vrot.slane %v1686, 4
      %v1689 = vshll.u32 %v1580, 16
      %v1691 = vrot.slane %v1689, 5
      %v1692 = vsel %vm811, %v1687, %v1691
      %s1693 = scalar_lea.vmem %s3, 256
      %v1694 = vld [vmem:[%s1693] sm:$0xf]
      %v1695 = vld [vmem:[%s1693 + $0x4] sm:$0xf]
      %v1696 = vld [vmem:[%s1693 + $0x8] sm:$0xf]
      %v1697 = vld [vmem:[%s1693 + $0xc] sm:$0xf]
      %v1698 = vld [vmem:[%s1693 + $0x10] sm:$0xf]
      %v1699 = vld [vmem:[%s1693 + $0x14] sm:$0xf]
      %v1700 = vld [vmem:[%s1693 + $0x18] sm:$0xf]
      %v1701 = vld [vmem:[%s1693 + $0x1c] sm:$0xf]
      %v1702 = vld [vmem:[%s1693 + $0x20] sm:$0xf]
      %v1703 = vld [vmem:[%s1693 + $0x24] sm:$0xf]
      %v1704 = vld [vmem:[%s1693 + $0x28] sm:$0xf]
      %v1705 = vld [vmem:[%s1693 + $0x2c] sm:$0xf]
      %v1706 = vld [vmem:[%s1693 + $0x30] sm:$0xf]
      %v1707 = vld [vmem:[%s1693 + $0x34] sm:$0xf]
      %v1708 = vld [vmem:[%s1693 + $0x38] sm:$0xf]
      %v1709 = vld [vmem:[%s1693 + $0x3c] sm:$0xf]
      %v1710 = vunpack.c.l.b16 %v1594
      %v1711 = vunpack.c.l.b16 %v1608
      %v1712 = vunpack.c.l.b16 %v1622
      %v1713 = vunpack.c.l.b16 %v1636
      %v1714 = vunpack.c.l.b16 %v1650
      %v1715 = vunpack.c.l.b16 %v1664
      %v1716 = vunpack.c.l.b16 %v1678
      %v1717 = vunpack.c.l.b16 %v1692
      %v1718 = vpack.c.b16 %v1711, %v1710
      %v1719 = vpack.c.b16 %v1713, %v1712
      %v1720 = vpack.c.b16 %v1715, %v1714
      %v1721 = vpack.c.b16 %v1717, %v1716
      %v1742 = vunpack.c.l.b16 %v1694
      %v1743 = vunpack.c.l.b16 %v1695
      %v1744 = vunpack.c.l.b16 %v1696
      %v1745 = vunpack.c.l.b16 %v1697
      %v1746 = vunpack.c.l.b16 %v1698
      %v1747 = vunpack.c.l.b16 %v1699
      %v1748 = vunpack.c.l.b16 %v1700
      %v1749 = vunpack.c.l.b16 %v1701
      %v1750 = vunpack.c.l.b16 %v1702
      %v1751 = vunpack.c.l.b16 %v1703
      %v1752 = vunpack.c.l.b16 %v1704
      %v1753 = vunpack.c.l.b16 %v1705
      %v1754 = vunpack.c.l.b16 %v1706
      %v1755 = vunpack.c.l.b16 %v1707
      %v1756 = vunpack.c.l.b16 %v1708
      %v1757 = vunpack.c.l.b16 %v1709
      %v1758 = vpack.c.b16 %v1743, %v1742
      %v1759 = vpack.c.b16 %v1745, %v1744
      %v1760 = vpack.c.b16 %v1747, %v1746
      %v1761 = vpack.c.b16 %v1749, %v1748
      %v1762 = vpack.c.b16 %v1751, %v1750
      %v1763 = vpack.c.b16 %v1753, %v1752
      %v1764 = vpack.c.b16 %v1755, %v1754
      %v1765 = vpack.c.b16 %v1757, %v1756
      %1774 = vmatprep.subr.bf16.mxu0 0
      %1775 = vmatpush1.bf16.msra.mxu0 %v1758
      %1776 = vmatprep.subr.bf16.mxu0 0
      %1777 = vmatpush1.bf16.msra.mxu0 %v1759
      %1778 = vmatprep.subr.bf16.mxu0 0
      %1779 = vmatpush1.bf16.msra.mxu0 %v1760
      %1780 = vmatprep.subr.bf16.mxu0 0
      %1781 = vmatpush1.bf16.msra.mxu0 %v1761
      %1782 = vmatprep.subr.bf16.mxu0 0
      %1783 = vmatpush1.bf16.msra.mxu0 %v1762
      %1784 = vmatprep.subr.bf16.mxu0 0
      %1785 = vmatpush1.bf16.msra.mxu0 %v1763
      %1786 = vmatprep.subr.bf16.mxu0 0
      %1787 = vmatpush1.bf16.msra.mxu0 %v1764
      %1788 = vmatprep.subr.bf16.mxu0 0
      %1789 = vmatpush1.bf16.msra.mxu0 %v1765
      %1790 = vmatprep.subr.bf16.mxu0 0
      %1791 = vmatpush1.bf16.msra.mxu0 0
      %1792 = vmatprep.subr.bf16.mxu0 0
      %1793 = vmatpush1.bf16.msra.mxu0 0
      %1794 = vmatprep.subr.bf16.mxu0 0
      %1795 = vmatpush1.bf16.msra.mxu0 0
      %1796 = vmatprep.subr.bf16.mxu0 0
      %1797 = vmatpush1.bf16.msra.mxu0 0
      %1798 = vmatprep.subr.bf16.mxu0 0
      %1799 = vmatpush1.bf16.msra.mxu0 0
      %1800 = vmatprep.subr.bf16.mxu0 0
      %1801 = vmatpush1.bf16.msra.mxu0 0
      %1802 = vmatprep.subr.bf16.mxu0 0
      %1803 = vmatpush1.bf16.msra.mxu0 0
      %1804 = vmatprep.subr.bf16.mxu0 0
      %1805 = vmatpush1.bf16.msra.mxu0 0
      %1806 = vmatprep.mubr.bf16.mxu0 0
      %1807 = vmatmul.mubr.bf16.gmra.mrb[0].mxu0 %v1718
      %v1808 = vpop.f32.mrb[0].mxu0
      %v1809 = vadd.f32 0.0, %v1808
      %v1810 = vpop.f32.mrb[0].mxu0
      %v1811 = vpop.f32.mrb[0].mxu0
      %v1812 = vadd.f32 0.0, %v1811
      %v1813 = vpop.f32.mrb[0].mxu0
      %1814 = vmatprep.mubr.bf16.mxu0 0
      %1815 = vmatmul.mubr.bf16.gmra.mrb[0].mxu0 %v1719
      %v1816 = vpop.f32.mrb[0].mxu0
      %v1817 = vadd.f32 0.0, %v1816
      %v1818 = vpop.f32.mrb[0].mxu0
      %v1819 = vpop.f32.mrb[0].mxu0
      %v1820 = vadd.f32 0.0, %v1819
      %v1821 = vpop.f32.mrb[0].mxu0
      %1822 = vmatprep.mubr.bf16.mxu0 0
      %1823 = vmatmul.mubr.bf16.gmra.mrb[0].mxu0 %v1720
      %v1824 = vpop.f32.mrb[0].mxu0
      %v1825 = vadd.f32 0.0, %v1824
      %v1826 = vpop.f32.mrb[0].mxu0
      %v1827 = vpop.f32.mrb[0].mxu0
      %v1828 = vadd.f32 0.0, %v1827
      %v1829 = vpop.f32.mrb[0].mxu0
      %1830 = vmatprep.mubr.bf16.mxu0 0
      %1831 = vmatmul.mubr.bf16.gmra.mrb[0].mxu0 %v1721
      %v1832 = vpop.f32.mrb[0].mxu0
      %v1833 = vadd.f32 0.0, %v1832
      %v1834 = vpop.f32.mrb[0].mxu0
      %v1835 = vpop.f32.mrb[0].mxu0
      %v1836 = vadd.f32 0.0, %v1835
      %v1837 = vpop.f32.mrb[0].mxu0
      %1838 = vdwg.mxu0
      %v1839 = vld [vmem:[#allocation3] sm:$0xff]
      %v1840 = vld [vmem:[#allocation3 + $0x8] sm:$0xff]
      %v1841 = vld [vmem:[#allocation3 + $0x10] sm:$0xff]
      %v1842 = vld [vmem:[#allocation3 + $0x18] sm:$0xff]
      %v1843 = vld [vmem:[#allocation3 + $0x20] sm:$0xff]
      %v1844 = vld [vmem:[#allocation3 + $0x28] sm:$0xff]
      %v1845 = vld [vmem:[#allocation3 + $0x30] sm:$0xff]
      %v1846 = vld [vmem:[#allocation3 + $0x38] sm:$0xff]
      %v1847 = vadd.f32 %v1839, %v1809
      %v1848 = vadd.f32 %v1840, %v1812
      %v1849 = vadd.f32 %v1841, %v1817
      %v1850 = vadd.f32 %v1842, %v1820
      %v1851 = vadd.f32 %v1843, %v1825
      %v1852 = vadd.f32 %v1844, %v1828
      %v1853 = vadd.f32 %v1845, %v1833
      %v1854 = vadd.f32 %v1846, %v1836
      %1855 = vst [vmem:[#allocation3] sm:$0xff] %v1847
      %1856 = vst [vmem:[#allocation3 + $0x8] sm:$0xff] %v1848
      %1857 = vst [vmem:[#allocation3 + $0x10] sm:$0xff] %v1849
      %1858 = vst [vmem:[#allocation3 + $0x18] sm:$0xff] %v1850
      %1859 = vst [vmem:[#allocation3 + $0x20] sm:$0xff] %v1851
      %1860 = vst [vmem:[#allocation3 + $0x28] sm:$0xff] %v1852
      %1861 = vst [vmem:[#allocation3 + $0x30] sm:$0xff] %v1853
      %1862 = vst [vmem:[#allocation3 + $0x38] sm:$0xff] %v1854
      %v1863 = vld [vmem:[%s564] sm:$0x1e]
      %v1864 = vld [vmem:[%s564 + $0x8] sm:$0x1e]
      %v1865 = vld [vmem:[%s564 + $0x10] sm:$0x1e]
      %v1866 = vld [vmem:[%s564 + $0x18] sm:$0x1e]
      %v1867 = vld [vmem:[%s564 + $0x20] sm:$0x1e]
      %v1868 = vld [vmem:[%s564 + $0x28] sm:$0x1e]
      %v1869 = vld [vmem:[%s564 + $0x30] sm:$0x1e]
      %v1870 = vld [vmem:[%s564 + $0x38] sm:$0x1e]
      %v1879 = vunpack.c.l.b16 %v1863
      %v1880 = vunpack.c.h.b16 %v1863
      %v1881 = vunpack.c.l.b16 %v1864
      %v1882 = vunpack.c.h.b16 %v1864
      %v1883 = vunpack.c.l.b16 %v1865
      %v1884 = vunpack.c.h.b16 %v1865
      %v1885 = vunpack.c.l.b16 %v1866
      %v1886 = vunpack.c.h.b16 %v1866
      %v1887 = vunpack.c.l.b16 %v1867
      %v1888 = vunpack.c.h.b16 %v1867
      %v1889 = vunpack.c.l.b16 %v1868
      %v1890 = vunpack.c.h.b16 %v1868
      %v1891 = vunpack.c.l.b16 %v1869
      %v1892 = vunpack.c.h.b16 %v1869
      %v1893 = vunpack.c.l.b16 %v1870
      %v1894 = vunpack.c.h.b16 %v1870
      %v1895 = vpack.c.b16 %v1879, %v1879
      %v1896 = vpack.c.b16 %v1880, %v1880
      %v1897 = vpack.c.b16 %v1881, %v1881
      %v1898 = vpack.c.b16 %v1882, %v1882
      %v1899 = vpack.c.b16 %v1883, %v1883
      %v1900 = vpack.c.b16 %v1884, %v1884
      %v1901 = vpack.c.b16 %v1885, %v1885
      %v1902 = vpack.c.b16 %v1886, %v1886
      %v1903 = vpack.c.b16 %v1887, %v1887
      %v1904 = vpack.c.b16 %v1888, %v1888
      %v1905 = vpack.c.b16 %v1889, %v1889
      %v1906 = vpack.c.b16 %v1890, %v1890
      %v1907 = vpack.c.b16 %v1891, %v1891
      %v1908 = vpack.c.b16 %v1892, %v1892
      %v1909 = vpack.c.b16 %v1893, %v1893
      %v1910 = vpack.c.b16 %v1894, %v1894
      %v1911 = vrot.slane %v1895, 5
      %v1912 = vrot.slane %v1911, 4
      %v1913 = vrot.slane %v1896, 5
      %v1914 = vsel %vm1144, %v1912, %v1913
      %v1915 = vrot.slane %v1897, 5
      %v1916 = vrot.slane %v1915, 4
      %v1917 = vrot.slane %v1898, 5
      %v1918 = vsel %vm1144, %v1916, %v1917
      %v1919 = vrot.slane %v1899, 5
      %v1920 = vrot.slane %v1919, 4
      %v1921 = vrot.slane %v1900, 5
      %v1922 = vsel %vm1144, %v1920, %v1921
      %v1923 = vrot.slane %v1901, 5
      %v1924 = vrot.slane %v1923, 4
      %v1925 = vrot.slane %v1902, 5
      %v1926 = vsel %vm1144, %v1924, %v1925
      %v1927 = vrot.slane %v1903, 5
      %v1928 = vrot.slane %v1927, 4
      %v1929 = vrot.slane %v1904, 5
      %v1930 = vsel %vm1144, %v1928, %v1929
      %v1931 = vrot.slane %v1905, 5
      %v1932 = vrot.slane %v1931, 4
      %v1933 = vrot.slane %v1906, 5
      %v1934 = vsel %vm1144, %v1932, %v1933
      %v1935 = vrot.slane %v1907, 5
      %v1936 = vrot.slane %v1935, 4
      %v1937 = vrot.slane %v1908, 5
      %v1938 = vsel %vm1144, %v1936, %v1937
      %v1939 = vrot.slane %v1909, 5
      %v1940 = vrot.slane %v1939, 4
      %v1941 = vrot.slane %v1910, 5
      %v1942 = vsel %vm1144, %v1940, %v1941
      %s1943 = scalar_lea.vmem %s3, 320
      %v1944 = vld [vmem:[%s1943] sm:$0xf]
      %v1945 = vld [vmem:[%s1943 + $0x4] sm:$0xf]
      %v1946 = vld [vmem:[%s1943 + $0x8] sm:$0xf]
      %v1947 = vld [vmem:[%s1943 + $0xc] sm:$0xf]
      %v1948 = vld [vmem:[%s1943 + $0x10] sm:$0xf]
      %v1949 = vld [vmem:[%s1943 + $0x14] sm:$0xf]
      %v1950 = vld [vmem:[%s1943 + $0x18] sm:$0xf]
      %v1951 = vld [vmem:[%s1943 + $0x1c] sm:$0xf]
      %v1952 = vld [vmem:[%s1943 + $0x20] sm:$0xf]
      %v1953 = vld [vmem:[%s1943 + $0x24] sm:$0xf]
      %v1954 = vld [vmem:[%s1943 + $0x28] sm:$0xf]
      %v1955 = vld [vmem:[%s1943 + $0x2c] sm:$0xf]
      %v1956 = vld [vmem:[%s1943 + $0x30] sm:$0xf]
      %v1957 = vld [vmem:[%s1943 + $0x34] sm:$0xf]
      %v1958 = vld [vmem:[%s1943 + $0x38] sm:$0xf]
      %v1959 = vld [vmem:[%s1943 + $0x3c] sm:$0xf]
      %v1960 = vunpack.c.l.b16 %v1914
      %v1961 = vunpack.c.l.b16 %v1918
      %v1962 = vunpack.c.l.b16 %v1922
      %v1963 = vunpack.c.l.b16 %v1926
      %v1964 = vunpack.c.l.b16 %v1930
      %v1965 = vunpack.c.l.b16 %v1934
      %v1966 = vunpack.c.l.b16 %v1938
      %v1967 = vunpack.c.l.b16 %v1942
      %v1968 = vpack.c.b16 %v1961, %v1960
      %v1969 = vpack.c.b16 %v1963, %v1962
      %v1970 = vpack.c.b16 %v1965, %v1964
      %v1971 = vpack.c.b16 %v1967, %v1966
      %v1992 = vunpack.c.l.b16 %v1944
      %v1993 = vunpack.c.l.b16 %v1945
      %v1994 = vunpack.c.l.b16 %v1946
      %v1995 = vunpack.c.l.b16 %v1947
      %v1996 = vunpack.c.l.b16 %v1948
      %v1997 = vunpack.c.l.b16 %v1949
      %v1998 = vunpack.c.l.b16 %v1950
      %v1999 = vunpack.c.l.b16 %v1951
      %v2000 = vunpack.c.l.b16 %v1952
      %v2001 = vunpack.c.l.b16 %v1953
      %v2002 = vunpack.c.l.b16 %v1954
      %v2003 = vunpack.c.l.b16 %v1955
      %v2004 = vunpack.c.l.b16 %v1956
      %v2005 = vunpack.c.l.b16 %v1957
      %v2006 = vunpack.c.l.b16 %v1958
      %v2007 = vunpack.c.l.b16 %v1959
      %v2008 = vpack.c.b16 %v1993, %v1992
      %v2009 = vpack.c.b16 %v1995, %v1994
      %v2010 = vpack.c.b16 %v1997, %v1996
      %v2011 = vpack.c.b16 %v1999, %v1998
      %v2012 = vpack.c.b16 %v2001, %v2000
      %v2013 = vpack.c.b16 %v2003, %v2002
      %v2014 = vpack.c.b16 %v2005, %v2004
      %v2015 = vpack.c.b16 %v2007, %v2006
      %2024 = vmatprep.subr.bf16.mxu0 0
      %2025 = vmatpush1.bf16.msra.mxu0 %v2008
      %2026 = vmatprep.subr.bf16.mxu0 0
      %2027 = vmatpush1.bf16.msra.mxu0 %v2009
      %2028 = vmatprep.subr.bf16.mxu0 0
      %2029 = vmatpush1.bf16.msra.mxu0 %v2010
      %2030 = vmatprep.subr.bf16.mxu0 0
      %2031 = vmatpush1.bf16.msra.mxu0 %v2011
      %2032 = vmatprep.subr.bf16.mxu0 0
      %2033 = vmatpush1.bf16.msra.mxu0 %v2012
      %2034 = vmatprep.subr.bf16.mxu0 0
      %2035 = vmatpush1.bf16.msra.mxu0 %v2013
      %2036 = vmatprep.subr.bf16.mxu0 0
      %2037 = vmatpush1.bf16.msra.mxu0 %v2014
      %2038 = vmatprep.subr.bf16.mxu0 0
      %2039 = vmatpush1.bf16.msra.mxu0 %v2015
      %2040 = vmatprep.subr.bf16.mxu0 0
      %2041 = vmatpush1.bf16.msra.mxu0 0
      %2042 = vmatprep.subr.bf16.mxu0 0
      %2043 = vmatpush1.bf16.msra.mxu0 0
      %2044 = vmatprep.subr.bf16.mxu0 0
      %2045 = vmatpush1.bf16.msra.mxu0 0
      %2046 = vmatprep.subr.bf16.mxu0 0
      %2047 = vmatpush1.bf16.msra.mxu0 0
      %2048 = vmatprep.subr.bf16.mxu0 0
      %2049 = vmatpush1.bf16.msra.mxu0 0
      %2050 = vmatprep.subr.bf16.mxu0 0
      %2051 = vmatpush1.bf16.msra.mxu0 0
      %2052 = vmatprep.subr.bf16.mxu0 0
      %2053 = vmatpush1.bf16.msra.mxu0 0
      %2054 = vmatprep.subr.bf16.mxu0 0
      %2055 = vmatpush1.bf16.msra.mxu0 0
      %2056 = vmatprep.mubr.bf16.mxu0 0
      %2057 = vmatmul.mubr.bf16.gmra.mrb[0].mxu0 %v1968
      %v2058 = vpop.f32.mrb[0].mxu0
      %v2059 = vadd.f32 0.0, %v2058
      %v2060 = vpop.f32.mrb[0].mxu0
      %v2061 = vpop.f32.mrb[0].mxu0
      %v2062 = vadd.f32 0.0, %v2061
      %v2063 = vpop.f32.mrb[0].mxu0
      %2064 = vmatprep.mubr.bf16.mxu0 0
      %2065 = vmatmul.mubr.bf16.gmra.mrb[0].mxu0 %v1969
      %v2066 = vpop.f32.mrb[0].mxu0
      %v2067 = vadd.f32 0.0, %v2066
      %v2068 = vpop.f32.mrb[0].mxu0
      %v2069 = vpop.f32.mrb[0].mxu0
      %v2070 = vadd.f32 0.0, %v2069
      %v2071 = vpop.f32.mrb[0].mxu0
      %2072 = vmatprep.mubr.bf16.mxu0 0
      %2073 = vmatmul.mubr.bf16.gmra.mrb[0].mxu0 %v1970
      %v2074 = vpop.f32.mrb[0].mxu0
      %v2075 = vadd.f32 0.0, %v2074
      %v2076 = vpop.f32.mrb[0].mxu0
      %v2077 = vpop.f32.mrb[0].mxu0
      %v2078 = vadd.f32 0.0, %v2077
      %v2079 = vpop.f32.mrb[0].mxu0
      %2080 = vmatprep.mubr.bf16.mxu0 0
      %2081 = vmatmul.mubr.bf16.gmra.mrb[0].mxu0 %v1971
      %v2082 = vpop.f32.mrb[0].mxu0
      %v2083 = vadd.f32 0.0, %v2082
      %v2084 = vpop.f32.mrb[0].mxu0
      %v2085 = vpop.f32.mrb[0].mxu0
      %v2086 = vadd.f32 0.0, %v2085
      %v2087 = vpop.f32.mrb[0].mxu0
      %2088 = vdwg.mxu0
      %v2089 = vld [vmem:[#allocation3] sm:$0xff]
      %v2090 = vld [vmem:[#allocation3 + $0x8] sm:$0xff]
      %v2091 = vld [vmem:[#allocation3 + $0x10] sm:$0xff]
      %v2092 = vld [vmem:[#allocation3 + $0x18] sm:$0xff]
      %v2093 = vld [vmem:[#allocation3 + $0x20] sm:$0xff]
      %v2094 = vld [vmem:[#allocation3 + $0x28] sm:$0xff]
      %v2095 = vld [vmem:[#allocation3 + $0x30] sm:$0xff]
      %v2096 = vld [vmem:[#allocation3 + $0x38] sm:$0xff]
      %v2097 = vadd.f32 %v2089, %v2059
      %v2098 = vadd.f32 %v2090, %v2062
      %v2099 = vadd.f32 %v2091, %v2067
      %v2100 = vadd.f32 %v2092, %v2070
      %v2101 = vadd.f32 %v2093, %v2075
      %v2102 = vadd.f32 %v2094, %v2078
      %v2103 = vadd.f32 %v2095, %v2083
      %v2104 = vadd.f32 %v2096, %v2086
      %2105 = vst [vmem:[#allocation3] sm:$0xff] %v2097
      %2106 = vst [vmem:[#allocation3 + $0x8] sm:$0xff] %v2098
      %2107 = vst [vmem:[#allocation3 + $0x10] sm:$0xff] %v2099
      %2108 = vst [vmem:[#allocation3 + $0x18] sm:$0xff] %v2100
      %2109 = vst [vmem:[#allocation3 + $0x20] sm:$0xff] %v2101
      %2110 = vst [vmem:[#allocation3 + $0x28] sm:$0xff] %v2102
      %2111 = vst [vmem:[#allocation3 + $0x30] sm:$0xff] %v2103
      %2112 = vst [vmem:[#allocation3 + $0x38] sm:$0xff] %v2104
      %s2113 = scalar_lea.vmem [#allocation2], 16
      %v2114 = vld [vmem:[%s2113] sm:$0xf]
      %v2115 = vld [vmem:[%s2113 + $0x8] sm:$0xf]
      %v2116 = vld [vmem:[%s2113 + $0x10] sm:$0xf]
      %v2117 = vld [vmem:[%s2113 + $0x18] sm:$0xf]
      %v2118 = vld [vmem:[%s2113 + $0x20] sm:$0xf]
      %v2119 = vld [vmem:[%s2113 + $0x28] sm:$0xf]
      %v2120 = vld [vmem:[%s2113 + $0x30] sm:$0xf]
      %v2121 = vld [vmem:[%s2113 + $0x38] sm:$0xf]
      %s2122 = scalar_lea.vmem %s3, 384
      %v2123 = vld [vmem:[%s2122] sm:$0xf]
      %v2124 = vld [vmem:[%s2122 + $0x4] sm:$0xf]
      %v2125 = vld [vmem:[%s2122 + $0x8] sm:$0xf]
      %v2126 = vld [vmem:[%s2122 + $0xc] sm:$0xf]
      %v2127 = vld [vmem:[%s2122 + $0x10] sm:$0xf]
      %v2128 = vld [vmem:[%s2122 + $0x14] sm:$0xf]
      %v2129 = vld [vmem:[%s2122 + $0x18] sm:$0xf]
      %v2130 = vld [vmem:[%s2122 + $0x1c] sm:$0xf]
      %v2131 = vld [vmem:[%s2122 + $0x20] sm:$0xf]
      %v2132 = vld [vmem:[%s2122 + $0x24] sm:$0xf]
      %v2133 = vld [vmem:[%s2122 + $0x28] sm:$0xf]
      %v2134 = vld [vmem:[%s2122 + $0x2c] sm:$0xf]
      %v2135 = vld [vmem:[%s2122 + $0x30] sm:$0xf]
      %v2136 = vld [vmem:[%s2122 + $0x34] sm:$0xf]
      %v2137 = vld [vmem:[%s2122 + $0x38] sm:$0xf]
      %v2138 = vld [vmem:[%s2122 + $0x3c] sm:$0xf]
      %v2147 = vunpack.c.l.b16 %v2114
      %v2148 = vunpack.c.l.b16 %v2115
      %v2149 = vunpack.c.l.b16 %v2116
      %v2150 = vunpack.c.l.b16 %v2117
      %v2151 = vunpack.c.l.b16 %v2118
      %v2152 = vunpack.c.l.b16 %v2119
      %v2153 = vunpack.c.l.b16 %v2120
      %v2154 = vunpack.c.l.b16 %v2121
      %v2155 = vpack.c.b16 %v2148, %v2147
      %v2156 = vpack.c.b16 %v2150, %v2149
      %v2157 = vpack.c.b16 %v2152, %v2151
      %v2158 = vpack.c.b16 %v2154, %v2153
      %v2179 = vunpack.c.l.b16 %v2123
      %v2180 = vunpack.c.l.b16 %v2124
      %v2181 = vunpack.c.l.b16 %v2125
      %v2182 = vunpack.c.l.b16 %v2126
      %v2183 = vunpack.c.l.b16 %v2127
      %v2184 = vunpack.c.l.b16 %v2128
      %v2185 = vunpack.c.l.b16 %v2129
      %v2186 = vunpack.c.l.b16 %v2130
      %v2187 = vunpack.c.l.b16 %v2131
      %v2188 = vunpack.c.l.b16 %v2132
      %v2189 = vunpack.c.l.b16 %v2133
      %v2190 = vunpack.c.l.b16 %v2134
      %v2191 = vunpack.c.l.b16 %v2135
      %v2192 = vunpack.c.l.b16 %v2136
      %v2193 = vunpack.c.l.b16 %v2137
      %v2194 = vunpack.c.l.b16 %v2138
      %v2195 = vpack.c.b16 %v2180, %v2179
      %v2196 = vpack.c.b16 %v2182, %v2181
      %v2197 = vpack.c.b16 %v2184, %v2183
      %v2198 = vpack.c.b16 %v2186, %v2185
      %v2199 = vpack.c.b16 %v2188, %v2187
      %v2200 = vpack.c.b16 %v2190, %v2189
      %v2201 = vpack.c.b16 %v2192, %v2191
      %v2202 = vpack.c.b16 %v2194, %v2193
      %2211 = vmatprep.subr.bf16.mxu0 0
      %2212 = vmatpush1.bf16.msra.mxu0 %v2195
      %2213 = vmatprep.subr.bf16.mxu0 0
      %2214 = vmatpush1.bf16.msra.mxu0 %v2196
      %2215 = vmatprep.subr.bf16.mxu0 0
      %2216 = vmatpush1.bf16.msra.mxu0 %v2197
      %2217 = vmatprep.subr.bf16.mxu0 0
      %2218 = vmatpush1.bf16.msra.mxu0 %v2198
      %2219 = vmatprep.subr.bf16.mxu0 0
      %2220 = vmatpush1.bf16.msra.mxu0 %v2199
      %2221 = vmatprep.subr.bf16.mxu0 0
      %2222 = vmatpush1.bf16.msra.mxu0 %v2200
      %2223 = vmatprep.subr.bf16.mxu0 0
      %2224 = vmatpush1.bf16.msra.mxu0 %v2201
      %2225 = vmatprep.subr.bf16.mxu0 0
      %2226 = vmatpush1.bf16.msra.mxu0 %v2202
      %2227 = vmatprep.subr.bf16.mxu0 0
      %2228 = vmatpush1.bf16.msra.mxu0 0
      %2229 = vmatprep.subr.bf16.mxu0 0
      %2230 = vmatpush1.bf16.msra.mxu0 0
      %2231 = vmatprep.subr.bf16.mxu0 0
      %2232 = vmatpush1.bf16.msra.mxu0 0
      %2233 = vmatprep.subr.bf16.mxu0 0
      %2234 = vmatpush1.bf16.msra.mxu0 0
      %2235 = vmatprep.subr.bf16.mxu0 0
      %2236 = vmatpush1.bf16.msra.mxu0 0
      %2237 = vmatprep.subr.bf16.mxu0 0
      %2238 = vmatpush1.bf16.msra.mxu0 0
      %2239 = vmatprep.subr.bf16.mxu0 0
      %2240 = vmatpush1.bf16.msra.mxu0 0
      %2241 = vmatprep.subr.bf16.mxu0 0
      %2242 = vmatpush1.bf16.msra.mxu0 0
      %2243 = vmatprep.mubr.bf16.mxu0 0
      %2244 = vmatmul.mubr.bf16.gmra.mrb[0].mxu0 %v2155
      %v2245 = vpop.f32.mrb[0].mxu0
      %v2246 = vadd.f32 0.0, %v2245
      %v2247 = vpop.f32.mrb[0].mxu0
      %v2248 = vpop.f32.mrb[0].mxu0
      %v2249 = vadd.f32 0.0, %v2248
      %v2250 = vpop.f32.mrb[0].mxu0
      %2251 = vmatprep.mubr.bf16.mxu0 0
      %2252 = vmatmul.mubr.bf16.gmra.mrb[0].mxu0 %v2156
      %v2253 = vpop.f32.mrb[0].mxu0
      %v2254 = vadd.f32 0.0, %v2253
      %v2255 = vpop.f32.mrb[0].mxu0
      %v2256 = vpop.f32.mrb[0].mxu0
      %v2257 = vadd.f32 0.0, %v2256
      %v2258 = vpop.f32.mrb[0].mxu0
      %2259 = vmatprep.mubr.bf16.mxu0 0
      %2260 = vmatmul.mubr.bf16.gmra.mrb[0].mxu0 %v2157
      %v2261 = vpop.f32.mrb[0].mxu0
      %v2262 = vadd.f32 0.0, %v2261
      %v2263 = vpop.f32.mrb[0].mxu0
      %v2264 = vpop.f32.mrb[0].mxu0
      %v2265 = vadd.f32 0.0, %v2264
      %v2266 = vpop.f32.mrb[0].mxu0
      %2267 = vmatprep.mubr.bf16.mxu0 0
      %2268 = vmatmul.mubr.bf16.gmra.mrb[0].mxu0 %v2158
      %v2269 = vpop.f32.mrb[0].mxu0
      %v2270 = vadd.f32 0.0, %v2269
      %v2271 = vpop.f32.mrb[0].mxu0
      %v2272 = vpop.f32.mrb[0].mxu0
      %v2273 = vadd.f32 0.0, %v2272
      %v2274 = vpop.f32.mrb[0].mxu0
      %2275 = vdwg.mxu0
      %v2276 = vld [vmem:[#allocation3] sm:$0xff]
      %v2277 = vld [vmem:[#allocation3 + $0x8] sm:$0xff]
      %v2278 = vld [vmem:[#allocation3 + $0x10] sm:$0xff]
      %v2279 = vld [vmem:[#allocation3 + $0x18] sm:$0xff]
      %v2280 = vld [vmem:[#allocation3 + $0x20] sm:$0xff]
      %v2281 = vld [vmem:[#allocation3 + $0x28] sm:$0xff]
      %v2282 = vld [vmem:[#allocation3 + $0x30] sm:$0xff]
      %v2283 = vld [vmem:[#allocation3 + $0x38] sm:$0xff]
      %v2284 = vadd.f32 %v2276, %v2246
      %v2285 = vadd.f32 %v2277, %v2249
      %v2286 = vadd.f32 %v2278, %v2254
      %v2287 = vadd.f32 %v2279, %v2257
      %v2288 = vadd.f32 %v2280, %v2262
      %v2289 = vadd.f32 %v2281, %v2265
      %v2290 = vadd.f32 %v2282, %v2270
      %v2291 = vadd.f32 %v2283, %v2273
      %2292 = vst [vmem:[#allocation3] sm:$0xff] %v2284
      %2293 = vst [vmem:[#allocation3 + $0x8] sm:$0xff] %v2285
      %2294 = vst [vmem:[#allocation3 + $0x10] sm:$0xff] %v2286
      %2295 = vst [vmem:[#allocation3 + $0x18] sm:$0xff] %v2287
      %2296 = vst [vmem:[#allocation3 + $0x20] sm:$0xff] %v2288
      %2297 = vst [vmem:[#allocation3 + $0x28] sm:$0xff] %v2289
      %2298 = vst [vmem:[#allocation3 + $0x30] sm:$0xff] %v2290
      %2299 = vst [vmem:[#allocation3 + $0x38] sm:$0xff] %v2291
      %v2300 = vld [vmem:[%s2113] sm:$0x1f]
      %v2301 = vld [vmem:[%s2113 + $0x8] sm:$0x1f]
      %v2302 = vld [vmem:[%s2113 + $0x10] sm:$0x1f]
      %v2303 = vld [vmem:[%s2113 + $0x18] sm:$0x1f]
      %v2304 = vld [vmem:[%s2113 + $0x20] sm:$0x1f]
      %v2305 = vld [vmem:[%s2113 + $0x28] sm:$0x1f]
      %v2306 = vld [vmem:[%s2113 + $0x30] sm:$0x1f]
      %v2307 = vld [vmem:[%s2113 + $0x38] sm:$0x1f]
      %v2316 = vunpack.c.l.b16 %v2300
      %v2317 = vunpack.c.h.b16 %v2300
      %v2318 = vunpack.c.l.b16 %v2301
      %v2319 = vunpack.c.h.b16 %v2301
      %v2320 = vunpack.c.l.b16 %v2302
      %v2321 = vunpack.c.h.b16 %v2302
      %v2322 = vunpack.c.l.b16 %v2303
      %v2323 = vunpack.c.h.b16 %v2303
      %v2324 = vunpack.c.l.b16 %v2304
      %v2325 = vunpack.c.h.b16 %v2304
      %v2326 = vunpack.c.l.b16 %v2305
      %v2327 = vunpack.c.h.b16 %v2305
      %v2328 = vunpack.c.l.b16 %v2306
      %v2329 = vunpack.c.h.b16 %v2306
      %v2330 = vunpack.c.l.b16 %v2307
      %v2331 = vunpack.c.h.b16 %v2307
      %v2332 = vpack.c.b16 %v2316, %v2316
      %v2333 = vpack.c.b16 %v2317, %v2317
      %v2334 = vpack.c.b16 %v2318, %v2318
      %v2335 = vpack.c.b16 %v2319, %v2319
      %v2336 = vpack.c.b16 %v2320, %v2320
      %v2337 = vpack.c.b16 %v2321, %v2321
      %v2338 = vpack.c.b16 %v2322, %v2322
      %v2339 = vpack.c.b16 %v2323, %v2323
      %v2340 = vpack.c.b16 %v2324, %v2324
      %v2341 = vpack.c.b16 %v2325, %v2325
      %v2342 = vpack.c.b16 %v2326, %v2326
      %v2343 = vpack.c.b16 %v2327, %v2327
      %v2344 = vpack.c.b16 %v2328, %v2328
      %v2345 = vpack.c.b16 %v2329, %v2329
      %v2346 = vpack.c.b16 %v2330, %v2330
      %v2347 = vpack.c.b16 %v2331, %v2331
      %v2349 = vshrl.u32 %v2332, 16
      %v2351 = vrot.slane %v2349, 4
      %v2352 = vshll.u32 %v2332, 16
      %v2354 = vrot.slane %v2352, 5
      %v2355 = vor.u32 %v2351, %v2354
      %v2356 = vrot.slane %v2355, 4
      %v2358 = vshll.u32 %v2333, 16
      %v2360 = vrot.slane %v2358, 5
      %v2361 = vsel %vm811, %v2356, %v2360
      %v2363 = vshrl.u32 %v2334, 16
      %v2365 = vrot.slane %v2363, 4
      %v2366 = vshll.u32 %v2334, 16
      %v2368 = vrot.slane %v2366, 5
      %v2369 = vor.u32 %v2365, %v2368
      %v2370 = vrot.slane %v2369, 4
      %v2372 = vshll.u32 %v2335, 16
      %v2374 = vrot.slane %v2372, 5
      %v2375 = vsel %vm811, %v2370, %v2374
      %v2377 = vshrl.u32 %v2336, 16
      %v2379 = vrot.slane %v2377, 4
      %v2380 = vshll.u32 %v2336, 16
      %v2382 = vrot.slane %v2380, 5
      %v2383 = vor.u32 %v2379, %v2382
      %v2384 = vrot.slane %v2383, 4
      %v2386 = vshll.u32 %v2337, 16
      %v2388 = vrot.slane %v2386, 5
      %v2389 = vsel %vm811, %v2384, %v2388
      %v2391 = vshrl.u32 %v2338, 16
      %v2393 = vrot.slane %v2391, 4
      %v2394 = vshll.u32 %v2338, 16
      %v2396 = vrot.slane %v2394, 5
      %v2397 = vor.u32 %v2393, %v2396
      %v2398 = vrot.slane %v2397, 4
      %v2400 = vshll.u32 %v2339, 16
      %v2402 = vrot.slane %v2400, 5
      %v2403 = vsel %vm811, %v2398, %v2402
      %v2405 = vshrl.u32 %v2340, 16
      %v2407 = vrot.slane %v2405, 4
      %v2408 = vshll.u32 %v2340, 16
      %v2410 = vrot.slane %v2408, 5
      %v2411 = vor.u32 %v2407, %v2410
      %v2412 = vrot.slane %v2411, 4
      %v2414 = vshll.u32 %v2341, 16
      %v2416 = vrot.slane %v2414, 5
      %v2417 = vsel %vm811, %v2412, %v2416
      %v2419 = vshrl.u32 %v2342, 16
      %v2421 = vrot.slane %v2419, 4
      %v2422 = vshll.u32 %v2342, 16
      %v2424 = vrot.slane %v2422, 5
      %v2425 = vor.u32 %v2421, %v2424
      %v2426 = vrot.slane %v2425, 4
      %v2428 = vshll.u32 %v2343, 16
      %v2430 = vrot.slane %v2428, 5
      %v2431 = vsel %vm811, %v2426, %v2430
      %v2433 = vshrl.u32 %v2344, 16
      %v2435 = vrot.slane %v2433, 4
      %v2436 = vshll.u32 %v2344, 16
      %v2438 = vrot.slane %v2436, 5
      %v2439 = vor.u32 %v2435, %v2438
      %v2440 = vrot.slane %v2439, 4
      %v2442 = vshll.u32 %v2345, 16
      %v2444 = vrot.slane %v2442, 5
      %v2445 = vsel %vm811, %v2440, %v2444
      %v2447 = vshrl.u32 %v2346, 16
      %v2449 = vrot.slane %v2447, 4
      %v2450 = vshll.u32 %v2346, 16
      %v2452 = vrot.slane %v2450, 5
      %v2453 = vor.u32 %v2449, %v2452
      %v2454 = vrot.slane %v2453, 4
      %v2456 = vshll.u32 %v2347, 16
      %v2458 = vrot.slane %v2456, 5
      %v2459 = vsel %vm811, %v2454, %v2458
      %s2460 = scalar_lea.vmem %s3, 448
      %v2461 = vld [vmem:[%s2460] sm:$0xf]
      %v2462 = vld [vmem:[%s2460 + $0x4] sm:$0xf]
      %v2463 = vld [vmem:[%s2460 + $0x8] sm:$0xf]
      %v2464 = vld [vmem:[%s2460 + $0xc] sm:$0xf]
      %v2465 = vld [vmem:[%s2460 + $0x10] sm:$0xf]
      %v2466 = vld [vmem:[%s2460 + $0x14] sm:$0xf]
      %v2467 = vld [vmem:[%s2460 + $0x18] sm:$0xf]
      %v2468 = vld [vmem:[%s2460 + $0x1c] sm:$0xf]
      %v2469 = vld [vmem:[%s2460 + $0x20] sm:$0xf]
      %v2470 = vld [vmem:[%s2460 + $0x24] sm:$0xf]
      %v2471 = vld [vmem:[%s2460 + $0x28] sm:$0xf]
      %v2472 = vld [vmem:[%s2460 + $0x2c] sm:$0xf]
      %v2473 = vld [vmem:[%s2460 + $0x30] sm:$0xf]
      %v2474 = vld [vmem:[%s2460 + $0x34] sm:$0xf]
      %v2475 = vld [vmem:[%s2460 + $0x38] sm:$0xf]
      %v2476 = vld [vmem:[%s2460 + $0x3c] sm:$0xf]
      %v2477 = vunpack.c.l.b16 %v2361
      %v2478 = vunpack.c.l.b16 %v2375
      %v2479 = vunpack.c.l.b16 %v2389
      %v2480 = vunpack.c.l.b16 %v2403
      %v2481 = vunpack.c.l.b16 %v2417
      %v2482 = vunpack.c.l.b16 %v2431
      %v2483 = vunpack.c.l.b16 %v2445
      %v2484 = vunpack.c.l.b16 %v2459
      %v2485 = vpack.c.b16 %v2478, %v2477
      %v2486 = vpack.c.b16 %v2480, %v2479
      %v2487 = vpack.c.b16 %v2482, %v2481
      %v2488 = vpack.c.b16 %v2484, %v2483
      %v2509 = vunpack.c.l.b16 %v2461
      %v2510 = vunpack.c.l.b16 %v2462
      %v2511 = vunpack.c.l.b16 %v2463
      %v2512 = vunpack.c.l.b16 %v2464
      %v2513 = vunpack.c.l.b16 %v2465
      %v2514 = vunpack.c.l.b16 %v2466
      %v2515 = vunpack.c.l.b16 %v2467
      %v2516 = vunpack.c.l.b16 %v2468
      %v2517 = vunpack.c.l.b16 %v2469
      %v2518 = vunpack.c.l.b16 %v2470
      %v2519 = vunpack.c.l.b16 %v2471
      %v2520 = vunpack.c.l.b16 %v2472
      %v2521 = vunpack.c.l.b16 %v2473
      %v2522 = vunpack.c.l.b16 %v2474
      %v2523 = vunpack.c.l.b16 %v2475
      %v2524 = vunpack.c.l.b16 %v2476
      %v2525 = vpack.c.b16 %v2510, %v2509
      %v2526 = vpack.c.b16 %v2512, %v2511
      %v2527 = vpack.c.b16 %v2514, %v2513
      %v2528 = vpack.c.b16 %v2516, %v2515
      %v2529 = vpack.c.b16 %v2518, %v2517
      %v2530 = vpack.c.b16 %v2520, %v2519
      %v2531 = vpack.c.b16 %v2522, %v2521
      %v2532 = vpack.c.b16 %v2524, %v2523
      %2541 = vmatprep.subr.bf16.mxu0 0
      %2542 = vmatpush1.bf16.msra.mxu0 %v2525
      %2543 = vmatprep.subr.bf16.mxu0 0
      %2544 = vmatpush1.bf16.msra.mxu0 %v2526
      %2545 = vmatprep.subr.bf16.mxu0 0
      %2546 = vmatpush1.bf16.msra.mxu0 %v2527
      %2547 = vmatprep.subr.bf16.mxu0 0
      %2548 = vmatpush1.bf16.msra.mxu0 %v2528
      %2549 = vmatprep.subr.bf16.mxu0 0
      %2550 = vmatpush1.bf16.msra.mxu0 %v2529
      %2551 = vmatprep.subr.bf16.mxu0 0
      %2552 = vmatpush1.bf16.msra.mxu0 %v2530
      %2553 = vmatprep.subr.bf16.mxu0 0
      %2554 = vmatpush1.bf16.msra.mxu0 %v2531
      %2555 = vmatprep.subr.bf16.mxu0 0
      %2556 = vmatpush1.bf16.msra.mxu0 %v2532
      %2557 = vmatprep.subr.bf16.mxu0 0
      %2558 = vmatpush1.bf16.msra.mxu0 0
      %2559 = vmatprep.subr.bf16.mxu0 0
      %2560 = vmatpush1.bf16.msra.mxu0 0
      %2561 = vmatprep.subr.bf16.mxu0 0
      %2562 = vmatpush1.bf16.msra.mxu0 0
      %2563 = vmatprep.subr.bf16.mxu0 0
      %2564 = vmatpush1.bf16.msra.mxu0 0
      %2565 = vmatprep.subr.bf16.mxu0 0
      %2566 = vmatpush1.bf16.msra.mxu0 0
      %2567 = vmatprep.subr.bf16.mxu0 0
      %2568 = vmatpush1.bf16.msra.mxu0 0
      %2569 = vmatprep.subr.bf16.mxu0 0
      %2570 = vmatpush1.bf16.msra.mxu0 0
      %2571 = vmatprep.subr.bf16.mxu0 0
      %2572 = vmatpush1.bf16.msra.mxu0 0
      %2573 = vmatprep.mubr.bf16.mxu0 0
      %2574 = vmatmul.mubr.bf16.gmra.mrb[0].mxu0 %v2485
      %v2575 = vpop.f32.mrb[0].mxu0
      %v2576 = vadd.f32 0.0, %v2575
      %v2577 = vpop.f32.mrb[0].mxu0
      %v2578 = vpop.f32.mrb[0].mxu0
      %v2579 = vadd.f32 0.0, %v2578
      %v2580 = vpop.f32.mrb[0].mxu0
      %2581 = vmatprep.mubr.bf16.mxu0 0
      %2582 = vmatmul.mubr.bf16.gmra.mrb[0].mxu0 %v2486
      %v2583 = vpop.f32.mrb[0].mxu0
      %v2584 = vadd.f32 0.0, %v2583
      %v2585 = vpop.f32.mrb[0].mxu0
      %v2586 = vpop.f32.mrb[0].mxu0
      %v2587 = vadd.f32 0.0, %v2586
      %v2588 = vpop.f32.mrb[0].mxu0
      %2589 = vmatprep.mubr.bf16.mxu0 0
      %2590 = vmatmul.mubr.bf16.gmra.mrb[0].mxu0 %v2487
      %v2591 = vpop.f32.mrb[0].mxu0
      %v2592 = vadd.f32 0.0, %v2591
      %v2593 = vpop.f32.mrb[0].mxu0
      %v2594 = vpop.f32.mrb[0].mxu0
      %v2595 = vadd.f32 0.0, %v2594
      %v2596 = vpop.f32.mrb[0].mxu0
      %2597 = vmatprep.mubr.bf16.mxu0 0
      %2598 = vmatmul.mubr.bf16.gmra.mrb[0].mxu0 %v2488
      %v2599 = vpop.f32.mrb[0].mxu0
      %v2600 = vadd.f32 0.0, %v2599
      %v2601 = vpop.f32.mrb[0].mxu0
      %v2602 = vpop.f32.mrb[0].mxu0
      %v2603 = vadd.f32 0.0, %v2602
      %v2604 = vpop.f32.mrb[0].mxu0
      %2605 = vdwg.mxu0
      %v2606 = vld [vmem:[#allocation3] sm:$0xff]
      %v2607 = vld [vmem:[#allocation3 + $0x8] sm:$0xff]
      %v2608 = vld [vmem:[#allocation3 + $0x10] sm:$0xff]
      %v2609 = vld [vmem:[#allocation3 + $0x18] sm:$0xff]
      %v2610 = vld [vmem:[#allocation3 + $0x20] sm:$0xff]
      %v2611 = vld [vmem:[#allocation3 + $0x28] sm:$0xff]
      %v2612 = vld [vmem:[#allocation3 + $0x30] sm:$0xff]
      %v2613 = vld [vmem:[#allocation3 + $0x38] sm:$0xff]
      %v2614 = vadd.f32 %v2606, %v2576
      %v2615 = vadd.f32 %v2607, %v2579
      %v2616 = vadd.f32 %v2608, %v2584
      %v2617 = vadd.f32 %v2609, %v2587
      %v2618 = vadd.f32 %v2610, %v2592
      %v2619 = vadd.f32 %v2611, %v2595
      %v2620 = vadd.f32 %v2612, %v2600
      %v2621 = vadd.f32 %v2613, %v2603
      %2622 = vst [vmem:[#allocation3] sm:$0xff] %v2614
      %2623 = vst [vmem:[#allocation3 + $0x8] sm:$0xff] %v2615
      %2624 = vst [vmem:[#allocation3 + $0x10] sm:$0xff] %v2616
      %2625 = vst [vmem:[#allocation3 + $0x18] sm:$0xff] %v2617
      %2626 = vst [vmem:[#allocation3 + $0x20] sm:$0xff] %v2618
      %2627 = vst [vmem:[#allocation3 + $0x28] sm:$0xff] %v2619
      %2628 = vst [vmem:[#allocation3 + $0x30] sm:$0xff] %v2620
      %2629 = vst [vmem:[#allocation3 + $0x38] sm:$0xff] %v2621
      %v2630 = vld [vmem:[%s2113] sm:$0x1e]
      %v2631 = vld [vmem:[%s2113 + $0x8] sm:$0x1e]
      %v2632 = vld [vmem:[%s2113 + $0x10] sm:$0x1e]
      %v2633 = vld [vmem:[%s2113 + $0x18] sm:$0x1e]
      %v2634 = vld [vmem:[%s2113 + $0x20] sm:$0x1e]
      %v2635 = vld [vmem:[%s2113 + $0x28] sm:$0x1e]
      %v2636 = vld [vmem:[%s2113 + $0x30] sm:$0x1e]
      %v2637 = vld [vmem:[%s2113 + $0x38] sm:$0x1e]
      %v2646 = vunpack.c.l.b16 %v2630
      %v2647 = vunpack.c.h.b16 %v2630
      %v2648 = vunpack.c.l.b16 %v2631
      %v2649 = vunpack.c.h.b16 %v2631
      %v2650 = vunpack.c.l.b16 %v2632
      %v2651 = vunpack.c.h.b16 %v2632
      %v2652 = vunpack.c.l.b16 %v2633
      %v2653 = vunpack.c.h.b16 %v2633
      %v2654 = vunpack.c.l.b16 %v2634
      %v2655 = vunpack.c.h.b16 %v2634
      %v2656 = vunpack.c.l.b16 %v2635
      %v2657 = vunpack.c.h.b16 %v2635
      %v2658 = vunpack.c.l.b16 %v2636
      %v2659 = vunpack.c.h.b16 %v2636
      %v2660 = vunpack.c.l.b16 %v2637
      %v2661 = vunpack.c.h.b16 %v2637
      %v2662 = vpack.c.b16 %v2646, %v2646
      %v2663 = vpack.c.b16 %v2647, %v2647
      %v2664 = vpack.c.b16 %v2648, %v2648
      %v2665 = vpack.c.b16 %v2649, %v2649
      %v2666 = vpack.c.b16 %v2650, %v2650
      %v2667 = vpack.c.b16 %v2651, %v2651
      %v2668 = vpack.c.b16 %v2652, %v2652
      %v2669 = vpack.c.b16 %v2653, %v2653
      %v2670 = vpack.c.b16 %v2654, %v2654
      %v2671 = vpack.c.b16 %v2655, %v2655
      %v2672 = vpack.c.b16 %v2656, %v2656
      %v2673 = vpack.c.b16 %v2657, %v2657
      %v2674 = vpack.c.b16 %v2658, %v2658
      %v2675 = vpack.c.b16 %v2659, %v2659
      %v2676 = vpack.c.b16 %v2660, %v2660
      %v2677 = vpack.c.b16 %v2661, %v2661
      %v2678 = vrot.slane %v2662, 5
      %v2679 = vrot.slane %v2678, 4
      %v2680 = vrot.slane %v2663, 5
      %v2681 = vsel %vm1144, %v2679, %v2680
      %v2682 = vrot.slane %v2664, 5
      %v2683 = vrot.slane %v2682, 4
      %v2684 = vrot.slane %v2665, 5
      %v2685 = vsel %vm1144, %v2683, %v2684
      %v2686 = vrot.slane %v2666, 5
      %v2687 = vrot.slane %v2686, 4
      %v2688 = vrot.slane %v2667, 5
      %v2689 = vsel %vm1144, %v2687, %v2688
      %v2690 = vrot.slane %v2668, 5
      %v2691 = vrot.slane %v2690, 4
      %v2692 = vrot.slane %v2669, 5
      %v2693 = vsel %vm1144, %v2691, %v2692
      %v2694 = vrot.slane %v2670, 5
      %v2695 = vrot.slane %v2694, 4
      %v2696 = vrot.slane %v2671, 5
      %v2697 = vsel %vm1144, %v2695, %v2696
      %v2698 = vrot.slane %v2672, 5
      %v2699 = vrot.slane %v2698, 4
      %v2700 = vrot.slane %v2673, 5
      %v2701 = vsel %vm1144, %v2699, %v2700
      %v2702 = vrot.slane %v2674, 5
      %v2703 = vrot.slane %v2702, 4
      %v2704 = vrot.slane %v2675, 5
      %v2705 = vsel %vm1144, %v2703, %v2704
      %v2706 = vrot.slane %v2676, 5
      %v2707 = vrot.slane %v2706, 4
      %v2708 = vrot.slane %v2677, 5
      %v2709 = vsel %vm1144, %v2707, %v2708
      %s2710 = scalar_lea.vmem %s3, 512
      %v2711 = vld [vmem:[%s2710] sm:$0xf]
      %v2712 = vld [vmem:[%s2710 + $0x4] sm:$0xf]
      %v2713 = vld [vmem:[%s2710 + $0x8] sm:$0xf]
      %v2714 = vld [vmem:[%s2710 + $0xc] sm:$0xf]
      %v2715 = vld [vmem:[%s2710 + $0x10] sm:$0xf]
      %v2716 = vld [vmem:[%s2710 + $0x14] sm:$0xf]
      %v2717 = vld [vmem:[%s2710 + $0x18] sm:$0xf]
      %v2718 = vld [vmem:[%s2710 + $0x1c] sm:$0xf]
      %v2719 = vld [vmem:[%s2710 + $0x20] sm:$0xf]
      %v2720 = vld [vmem:[%s2710 + $0x24] sm:$0xf]
      %v2721 = vld [vmem:[%s2710 + $0x28] sm:$0xf]
      %v2722 = vld [vmem:[%s2710 + $0x2c] sm:$0xf]
      %v2723 = vld [vmem:[%s2710 + $0x30] sm:$0xf]
      %v2724 = vld [vmem:[%s2710 + $0x34] sm:$0xf]
      %v2725 = vld [vmem:[%s2710 + $0x38] sm:$0xf]
      %v2726 = vld [vmem:[%s2710 + $0x3c] sm:$0xf]
      %v2727 = vunpack.c.l.b16 %v2681
      %v2728 = vunpack.c.l.b16 %v2685
      %v2729 = vunpack.c.l.b16 %v2689
      %v2730 = vunpack.c.l.b16 %v2693
      %v2731 = vunpack.c.l.b16 %v2697
      %v2732 = vunpack.c.l.b16 %v2701
      %v2733 = vunpack.c.l.b16 %v2705
      %v2734 = vunpack.c.l.b16 %v2709
      %v2735 = vpack.c.b16 %v2728, %v2727
      %v2736 = vpack.c.b16 %v2730, %v2729
      %v2737 = vpack.c.b16 %v2732, %v2731
      %v2738 = vpack.c.b16 %v2734, %v2733
      %v2759 = vunpack.c.l.b16 %v2711
      %v2760 = vunpack.c.l.b16 %v2712
      %v2761 = vunpack.c.l.b16 %v2713
      %v2762 = vunpack.c.l.b16 %v2714
      %v2763 = vunpack.c.l.b16 %v2715
      %v2764 = vunpack.c.l.b16 %v2716
      %v2765 = vunpack.c.l.b16 %v2717
      %v2766 = vunpack.c.l.b16 %v2718
      %v2767 = vunpack.c.l.b16 %v2719
      %v2768 = vunpack.c.l.b16 %v2720
      %v2769 = vunpack.c.l.b16 %v2721
      %v2770 = vunpack.c.l.b16 %v2722
      %v2771 = vunpack.c.l.b16 %v2723
      %v2772 = vunpack.c.l.b16 %v2724
      %v2773 = vunpack.c.l.b16 %v2725
      %v2774 = vunpack.c.l.b16 %v2726
      %v2775 = vpack.c.b16 %v2760, %v2759
      %v2776 = vpack.c.b16 %v2762, %v2761
      %v2777 = vpack.c.b16 %v2764, %v2763
      %v2778 = vpack.c.b16 %v2766, %v2765
      %v2779 = vpack.c.b16 %v2768, %v2767
      %v2780 = vpack.c.b16 %v2770, %v2769
      %v2781 = vpack.c.b16 %v2772, %v2771
      %v2782 = vpack.c.b16 %v2774, %v2773
      %2791 = vmatprep.subr.bf16.mxu0 0
      %2792 = vmatpush1.bf16.msra.mxu0 %v2775
      %2793 = vmatprep.subr.bf16.mxu0 0
      %2794 = vmatpush1.bf16.msra.mxu0 %v2776
      %2795 = vmatprep.subr.bf16.mxu0 0
      %2796 = vmatpush1.bf16.msra.mxu0 %v2777
      %2797 = vmatprep.subr.bf16.mxu0 0
      %2798 = vmatpush1.bf16.msra.mxu0 %v2778
      %2799 = vmatprep.subr.bf16.mxu0 0
      %2800 = vmatpush1.bf16.msra.mxu0 %v2779
      %2801 = vmatprep.subr.bf16.mxu0 0
      %2802 = vmatpush1.bf16.msra.mxu0 %v2780
      %2803 = vmatprep.subr.bf16.mxu0 0
      %2804 = vmatpush1.bf16.msra.mxu0 %v2781
      %2805 = vmatprep.subr.bf16.mxu0 0
      %2806 = vmatpush1.bf16.msra.mxu0 %v2782
      %2807 = vmatprep.subr.bf16.mxu0 0
      %2808 = vmatpush1.bf16.msra.mxu0 0
      %2809 = vmatprep.subr.bf16.mxu0 0
      %2810 = vmatpush1.bf16.msra.mxu0 0
      %2811 = vmatprep.subr.bf16.mxu0 0
      %2812 = vmatpush1.bf16.msra.mxu0 0
      %2813 = vmatprep.subr.bf16.mxu0 0
      %2814 = vmatpush1.bf16.msra.mxu0 0
      %2815 = vmatprep.subr.bf16.mxu0 0
      %2816 = vmatpush1.bf16.msra.mxu0 0
      %2817 = vmatprep.subr.bf16.mxu0 0
      %2818 = vmatpush1.bf16.msra.mxu0 0
      %2819 = vmatprep.subr.bf16.mxu0 0
      %2820 = vmatpush1.bf16.msra.mxu0 0
      %2821 = vmatprep.subr.bf16.mxu0 0
      %2822 = vmatpush1.bf16.msra.mxu0 0
      %2823 = vmatprep.mubr.bf16.mxu0 0
      %2824 = vmatmul.mubr.bf16.gmra.mrb[0].mxu0 %v2735
      %v2825 = vpop.f32.mrb[0].mxu0
      %v2826 = vadd.f32 0.0, %v2825
      %v2827 = vpop.f32.mrb[0].mxu0
      %v2828 = vpop.f32.mrb[0].mxu0
      %v2829 = vadd.f32 0.0, %v2828
      %v2830 = vpop.f32.mrb[0].mxu0
      %2831 = vmatprep.mubr.bf16.mxu0 0
      %2832 = vmatmul.mubr.bf16.gmra.mrb[0].mxu0 %v2736
      %v2833 = vpop.f32.mrb[0].mxu0
      %v2834 = vadd.f32 0.0, %v2833
      %v2835 = vpop.f32.mrb[0].mxu0
      %v2836 = vpop.f32.mrb[0].mxu0
      %v2837 = vadd.f32 0.0, %v2836
      %v2838 = vpop.f32.mrb[0].mxu0
      %2839 = vmatprep.mubr.bf16.mxu0 0
      %2840 = vmatmul.mubr.bf16.gmra.mrb[0].mxu0 %v2737
      %v2841 = vpop.f32.mrb[0].mxu0
      %v2842 = vadd.f32 0.0, %v2841
      %v2843 = vpop.f32.mrb[0].mxu0
      %v2844 = vpop.f32.mrb[0].mxu0
      %v2845 = vadd.f32 0.0, %v2844
      %v2846 = vpop.f32.mrb[0].mxu0
      %2847 = vmatprep.mubr.bf16.mxu0 0
      %2848 = vmatmul.mubr.bf16.gmra.mrb[0].mxu0 %v2738
      %v2849 = vpop.f32.mrb[0].mxu0
      %v2850 = vadd.f32 0.0, %v2849
      %v2851 = vpop.f32.mrb[0].mxu0
      %v2852 = vpop.f32.mrb[0].mxu0
      %v2853 = vadd.f32 0.0, %v2852
      %v2854 = vpop.f32.mrb[0].mxu0
      %2855 = vdwg.mxu0
      %v2856 = vld [vmem:[#allocation3] sm:$0xff]
      %v2857 = vld [vmem:[#allocation3 + $0x8] sm:$0xff]
      %v2858 = vld [vmem:[#allocation3 + $0x10] sm:$0xff]
      %v2859 = vld [vmem:[#allocation3 + $0x18] sm:$0xff]
      %v2860 = vld [vmem:[#allocation3 + $0x20] sm:$0xff]
      %v2861 = vld [vmem:[#allocation3 + $0x28] sm:$0xff]
      %v2862 = vld [vmem:[#allocation3 + $0x30] sm:$0xff]
      %v2863 = vld [vmem:[#allocation3 + $0x38] sm:$0xff]
      %v2864 = vadd.f32 %v2856, %v2826
      %v2865 = vadd.f32 %v2857, %v2829
      %v2866 = vadd.f32 %v2858, %v2834
      %v2867 = vadd.f32 %v2859, %v2837
      %v2868 = vadd.f32 %v2860, %v2842
      %v2869 = vadd.f32 %v2861, %v2845
      %v2870 = vadd.f32 %v2862, %v2850
      %v2871 = vadd.f32 %v2863, %v2853
      %2872 = vst [vmem:[#allocation3] sm:$0xff] %v2864
      %2873 = vst [vmem:[#allocation3 + $0x8] sm:$0xff] %v2865
      %2874 = vst [vmem:[#allocation3 + $0x10] sm:$0xff] %v2866
      %2875 = vst [vmem:[#allocation3 + $0x18] sm:$0xff] %v2867
      %2876 = vst [vmem:[#allocation3 + $0x20] sm:$0xff] %v2868
      %2877 = vst [vmem:[#allocation3 + $0x28] sm:$0xff] %v2869
      %2878 = vst [vmem:[#allocation3 + $0x30] sm:$0xff] %v2870
      %2879 = vst [vmem:[#allocation3 + $0x38] sm:$0xff] %v2871
      %v2880 = vld [vmem:[#allocation3] sm:$0xff]
      %v2881 = vld [vmem:[#allocation3 + $0x8] sm:$0xff]
      %v2882 = vld [vmem:[#allocation3 + $0x10] sm:$0xff]
      %v2883 = vld [vmem:[#allocation3 + $0x18] sm:$0xff]
      %v2884 = vld [vmem:[#allocation3 + $0x20] sm:$0xff]
      %v2885 = vld [vmem:[#allocation3 + $0x28] sm:$0xff]
      %v2886 = vld [vmem:[#allocation3 + $0x30] sm:$0xff]
      %v2887 = vld [vmem:[#allocation3 + $0x38] sm:$0xff]
      %v2888 = vld [vmem:[%s4] sm:$0x1]
      %v2890 = vlaneseq
      %v2891 = vshrl.u32 %v2890, 7
      %v2892 = vsub.s32 0, %v2891
      %v2893 = vrot.slane %v2888, %v2892
      %v2895 = vadd.f32 %v2880, %v2893
      %v2896 = vadd.f32 %v2881, %v2893
      %v2897 = vadd.f32 %v2882, %v2893
      %v2898 = vadd.f32 %v2883, %v2893
      %v2899 = vadd.f32 %v2884, %v2893
      %v2900 = vadd.f32 %v2885, %v2893
      %v2901 = vadd.f32 %v2886, %v2893
      %v2902 = vadd.f32 %v2887, %v2893
      %v2903 = vmin.f32 %v2895, 20.0
      %v2904 = vmin.f32 %v2896, 20.0
      %v2905 = vmin.f32 %v2897, 20.0
      %v2906 = vmin.f32 %v2898, 20.0
      %v2907 = vmin.f32 %v2899, 20.0
      %v2908 = vmin.f32 %v2900, 20.0
      %v2909 = vmin.f32 %v2901, 20.0
      %v2910 = vmin.f32 %v2902, 20.0
      %v2911 = vmul.f32 %v2903, 1.442695
      %v2912 = vpow.pop %v2911
      %v2913 = vmul.f32 %v2904, 1.442695
      %v2914 = vpow.pop %v2913
      %v2915 = vmul.f32 %v2905, 1.442695
      %v2916 = vpow.pop %v2915
      %v2917 = vmul.f32 %v2906, 1.442695
      %v2918 = vpow.pop %v2917
      %v2919 = vmul.f32 %v2907, 1.442695
      %v2920 = vpow.pop %v2919
      %v2921 = vmul.f32 %v2908, 1.442695
      %v2922 = vpow.pop %v2921
      %v2923 = vmul.f32 %v2909, 1.442695
      %v2924 = vpow.pop %v2923
      %v2925 = vmul.f32 %v2910, 1.442695
      %v2926 = vpow.pop %v2925
      %v2927 = vadd.f32 %v2912, 2.0
      %v2928 = vadd.f32 %v2914, 2.0
      %v2929 = vadd.f32 %v2916, 2.0
      %v2930 = vadd.f32 %v2918, 2.0
      %v2931 = vadd.f32 %v2920, 2.0
      %v2932 = vadd.f32 %v2922, 2.0
      %v2933 = vadd.f32 %v2924, 2.0
      %v2934 = vadd.f32 %v2926, 2.0
      %v2935 = vmul.f32 %v2912, %v2927
      %v2936 = vmul.f32 %v2914, %v2928
      %v2937 = vmul.f32 %v2916, %v2929
      %v2938 = vmul.f32 %v2918, %v2930
      %v2939 = vmul.f32 %v2920, %v2931
      %v2940 = vmul.f32 %v2922, %v2932
      %v2941 = vmul.f32 %v2924, %v2933
      %v2942 = vmul.f32 %v2926, %v2934
      %v2943 = vmul.f32 %v2895, %v2935
      %v2944 = vmul.f32 %v2896, %v2936
      %v2945 = vmul.f32 %v2897, %v2937
      %v2946 = vmul.f32 %v2898, %v2938
      %v2947 = vmul.f32 %v2899, %v2939
      %v2948 = vmul.f32 %v2900, %v2940
      %v2949 = vmul.f32 %v2901, %v2941
      %v2950 = vmul.f32 %v2902, %v2942
      %v2951 = vadd.f32 %v2935, 2.0
      %v2952 = vadd.f32 %v2936, 2.0
      %v2953 = vadd.f32 %v2937, 2.0
      %v2954 = vadd.f32 %v2938, 2.0
      %v2955 = vadd.f32 %v2939, 2.0
      %v2956 = vadd.f32 %v2940, 2.0
      %v2957 = vadd.f32 %v2941, 2.0
      %v2958 = vadd.f32 %v2942, 2.0
      %v2959 = vrcp.pop %v2951
      %v2960 = vrcp.pop %v2952
      %v2961 = vrcp.pop %v2953
      %v2962 = vrcp.pop %v2954
      %v2963 = vrcp.pop %v2955
      %v2964 = vrcp.pop %v2956
      %v2965 = vrcp.pop %v2957
      %v2966 = vrcp.pop %v2958
      %v2967 = vmul.f32 %v2943, %v2959
      %v2968 = vmul.f32 %v2944, %v2960
      %v2969 = vmul.f32 %v2945, %v2961
      %v2970 = vmul.f32 %v2946, %v2962
      %v2971 = vmul.f32 %v2947, %v2963
      %v2972 = vmul.f32 %v2948, %v2964
      %v2973 = vmul.f32 %v2949, %v2965
      %v2974 = vmul.f32 %v2950, %v2966
      %v2975 = vunpack.c.l.bf16 %v226
      %v2976 = vunpack.c.l.bf16 %v227
      %v2977 = vunpack.c.l.bf16 %v228
      %v2978 = vunpack.c.l.bf16 %v229
      %v2979 = vunpack.c.l.bf16 %v230
      %v2980 = vunpack.c.l.bf16 %v231
      %v2981 = vunpack.c.l.bf16 %v232
      %v2982 = vunpack.c.l.bf16 %v233
      %v2983 = vadd.f32 %v2967, %v2975
      %v2984 = vadd.f32 %v2968, %v2976
      %v2985 = vadd.f32 %v2969, %v2977
      %v2986 = vadd.f32 %v2970, %v2978
      %v2987 = vadd.f32 %v2971, %v2979
      %v2988 = vadd.f32 %v2972, %v2980
      %v2989 = vadd.f32 %v2973, %v2981
      %v2990 = vadd.f32 %v2974, %v2982
      %v2991 = vpack.c.bf16 %v2983, %v2983
      %v2992 = vpack.c.bf16 %v2984, %v2984
      %v2993 = vpack.c.bf16 %v2985, %v2985
      %v2994 = vpack.c.bf16 %v2986, %v2986
      %v2995 = vpack.c.bf16 %v2987, %v2987
      %v2996 = vpack.c.bf16 %v2988, %v2988
      %v2997 = vpack.c.bf16 %v2989, %v2989
      %v2998 = vpack.c.bf16 %v2990, %v2990
      %2999 = vst [vmem:[%s224] sm:$0xf] %v2991
      %3000 = vst [vmem:[%s224 + $0x4] sm:$0xf] %v2992
      %3001 = vst [vmem:[%s224 + $0x8] sm:$0xf] %v2993
      %3002 = vst [vmem:[%s224 + $0xc] sm:$0xf] %v2994
      %3003 = vst [vmem:[%s224 + $0x10] sm:$0xf] %v2995
      %3004 = vst [vmem:[%s224 + $0x14] sm:$0xf] %v2996
      %3005 = vst [vmem:[%s224 + $0x18] sm:$0xf] %v2997
      %3006 = vst [vmem:[%s224 + $0x1c] sm:$0xf] %v2998
      %p3007 = scmp.lt.s32.totalorder %s16, 1
      %s3008 = scalar_select %p3007, %s16, 1
      %s3009 = smul.addr %s3008, 8
      %s3010 = smul.addr %s3009, 4
      %s3011 = scalar_lea.vmem %s5, %s3010
      // Predicated region
      $region41: #{downsample5_forward.9} parent=39 // pred_check
        %p3012 = pneg %p144
      $region42: #{downsample5_forward.9} parent=39 // pred_check_branch
        %3014 = sbr.rel (%p3012) target = $region44
      $region43: #{downsample5_forward.9} parent=39 // pred_region
        _
      $region44: #{downsample5_forward.9} parent=39 // pred_fallthru
        _
    $region40: #{downsample5_forward.9} parent=5 // pred_fallthru
      _
    %p3015 = scmp.le.s32.totalorder 2, %s11
    // Predicated region
    $region45: #{downsample5_forward.9} parent=5 // pred_check
      %p3016 = pneg %p3015
    $region46: #{downsample5_forward.9} parent=5 // pred_check_branch
      %3018 = sbr.rel (%p3016) target = $region48
    $region47: #{downsample5_forward.9} parent=5 // pred_region
      %s3019 = ssub.s32 %s11, 2
      // Predicated region
      $region49: #{downsample5_forward.9} parent=47 // pred_check
        %p3020 = pneg %p150
      $region50: #{downsample5_forward.9} parent=47 // pred_check_branch
        %3022 = sbr.rel (%p3020) target = $region52
      $region51: #{downsample5_forward.9} parent=47 // pred_region
        %p3023 = scmp.lt.s32.totalorder %s17, 1
        %s3024 = scalar_select %p3023, %s17, 1
        %s3025 = smul.addr %s3024, 8
        %s3026 = smul.addr %s3025, 4
        %s3027 = scalar_lea.vmem %s5, %s3026
      $region52: #{downsample5_forward.9} parent=47 // pred_fallthru
        _
    $region48: #{downsample5_forward.9} parent=5 // pred_fallthru
      _
  $region6: #{downsample5_forward.9} parent=0 // loop_footer
    %s15 = sadd.s32 1, %s11
  $region7: #{downsample5_forward.9} parent=0 // loop_footer_branch
    %10 = sbr.rel target = $region3
  $region8: #{downsample5_forward.9} parent=0 // loop_exit
    _

// kernel: downsample5_forward.7
$region0: #{downsample5_forward.7}
  #allocation0 [shape = 'u32[]', space=smem, size = 0x4, offset = 0x4, fixed_abs, tag = 'smem constant byte address 0x4 - core index']
  #allocation1 [shape = 'u32[144,128]{1,0:T(1,128)}', space=vmem, size = 0x12000, scoped, tag = 'internal scratch']
  #allocation2 [shape = 'f32[64,256]{1,0:T(8,128)}', space=vmem, size = 0x10000, scoped, tag = 'scratch operand']
  %s0 = inlined_call_operand.vmem [shape: bf16[2,2,2,9,9,128], index: 0, kind: input, shape index: {}]
  %s1 = inlined_call_operand.vmem [shape: bf16[3,3,128,256], index: 1, kind: input, shape index: {}]
  %s2 = inlined_call_operand.vmem [shape: f32[1,256], index: 2, kind: input, shape index: {}]
  %s3 = inlined_call_operand.vmem [shape: bf16[2,8,8,256], index: 3, kind: output, shape index: {}]
  %s4 = sld [smem:[#allocation0]]
  $region45: #{downsample5_forward.7} parent=0
    _
  %s6 = ssub.s32 1, %s4
  %s7 = scalar_select 0, %s6, %s4
  loop: start=0, step=1, limit=4
  $region2: #{downsample5_forward.7} parent=0 // loop_pre_header
    _
  $region3: #{downsample5_forward.7} parent=0 // loop_header
    %s9 = sphi 0, %s13
    %p10 = scmp.ge.s32.totalorder %s9, 4
    %s19 = sphi 0, %s21
    %s22 = sphi 0, %s19
    %s23 = sphi 0, %s22
    %s39 = sphi 0, %s23
    %s43 = sphi 0, %s43
    %s45 = sphi 0, %s43
    %s46 = sphi 0, %s45
    %s60 = sphi 0, %s46
    %s64 = sphi 0, %s64
    %s66 = sphi 0, %s64
    %s67 = sphi 0, %s66
    %s81 = sphi 0, %s67
    %s87 = sphi 0, %s89
    %s90 = sphi 0, %s87
    %s91 = sphi 0, %s90
    %s107 = sphi 0, %s91
  $region4: #{downsample5_forward.7} parent=0 // loop_header_branch
    %12 = sbr.rel (%p10) target = $region8
  $region5: #{downsample5_forward.7} parent=0 // loop_body
    %s14 = ssub.s32 %s9, 1
    %s15 = ssub.s32 %s9, 2
    %s16 = sadd.s32 %s9, 1
    %s17 = ssub.s32 %s9, %s16
    %p18 = scmp.eq.s32.totalorder %s17, 0
    %s20 = sadd.s32 %s19, 1
    %s21 = scalar_select %p18, %s19, %s20
    %p24 = pneg %p18
    %p25 = scmp.eq.s32.totalorder %s9, 1
    %p26 = por %p24, %p25
    %p27 = scmp.ne.s32.totalorder %s19, %s22
    %p28 = scmp.eq.s32.totalorder %s9, 0
    %p29 = por %p27, %p28
    %p30 = scmp.ne.s32.totalorder %s19, %s22
    %p31 = scmp.eq.s32.totalorder %s14, 1
    %p32 = por %p30, %p31
    %p33 = scmp.ne.s32.totalorder %s22, %s23
    %p34 = scmp.eq.s32.totalorder %s14, 0
    %p35 = por %p33, %p34
    %p36 = scmp.ne.s32.totalorder %s22, %s23
    %p37 = scmp.eq.s32.totalorder %s15, 1
    %p38 = por %p36, %p37
    %p40 = scmp.ne.s32.totalorder %s23, %s39
    %p41 = scmp.eq.s32.totalorder %s15, 0
    %p42 = por %p40, %p41
    %s44 = sadd.s32 %s43, 1
    %p47 = scmp.eq.s32.totalorder %s9, 1
    %p48 = scmp.ne.s32.totalorder %s43, %s45
    %p49 = scmp.eq.s32.totalorder %s9, 0
    %p50 = por %p48, %p49
    %p51 = scmp.ne.s32.totalorder %s43, %s45
    %p52 = scmp.eq.s32.totalorder %s14, 1
    %p53 = por %p51, %p52
    %p54 = scmp.ne.s32.totalorder %s45, %s46
    %p55 = scmp.eq.s32.totalorder %s14, 0
    %p56 = por %p54, %p55
    %p57 = scmp.ne.s32.totalorder %s45, %s46
    %p58 = scmp.eq.s32.totalorder %s15, 1
    %p59 = por %p57, %p58
    %p61 = scmp.ne.s32.totalorder %s46, %s60
    %p62 = scmp.eq.s32.totalorder %s15, 0
    %p63 = por %p61, %p62
    %s65 = sadd.s32 %s64, 1
    %p68 = scmp.eq.s32.totalorder %s9, 1
    %p69 = scmp.ne.s32.totalorder %s64, %s66
    %p70 = scmp.eq.s32.totalorder %s9, 0
    %p71 = por %p69, %p70
    %p72 = scmp.ne.s32.totalorder %s64, %s66
    %p73 = scmp.eq.s32.totalorder %s14, 1
    %p74 = por %p72, %p73
    %p75 = scmp.ne.s32.totalorder %s66, %s67
    %p76 = scmp.eq.s32.totalorder %s14, 0
    %p77 = por %p75, %p76
    %p78 = scmp.ne.s32.totalorder %s66, %s67
    %p79 = scmp.eq.s32.totalorder %s15, 1
    %p80 = por %p78, %p79
    %p82 = scmp.ne.s32.totalorder %s67, %s81
    %p83 = scmp.eq.s32.totalorder %s15, 0
    %p84 = por %p82, %p83
    %s85 = ssub.s32 %s9, %s16
    %p86 = scmp.eq.s32.totalorder %s85, 0
    %s88 = sadd.s32 %s87, 1
    %s89 = scalar_select %p86, %s87, %s88
    %p92 = pneg %p86
    %p93 = scmp.eq.s32.totalorder %s9, 1
    %p94 = por %p92, %p93
    %p95 = scmp.ne.s32.totalorder %s87, %s90
    %p96 = scmp.eq.s32.totalorder %s9, 0
    %p97 = por %p95, %p96
    %p98 = scmp.ne.s32.totalorder %s87, %s90
    %p99 = scmp.eq.s32.totalorder %s14, 1
    %p100 = por %p98, %p99
    %p101 = scmp.ne.s32.totalorder %s90, %s91
    %p102 = scmp.eq.s32.totalorder %s14, 0
    %p103 = por %p101, %p102
    %p104 = scmp.ne.s32.totalorder %s90, %s91
    %p105 = scmp.eq.s32.totalorder %s15, 1
    %p106 = por %p104, %p105
    %p108 = scmp.ne.s32.totalorder %s91, %s107
    %p109 = scmp.eq.s32.totalorder %s15, 0
    %p110 = por %p108, %p109
    %p111 = scmp.le.s32.totalorder 1, %s9
    %p112 = scmp.lt.s32.totalorder %s9, 3
    %p113 = pnand %p111, %p112
    %p114 = pneg %p113
    // Predicated region
    $region9: #{downsample5_forward.7} parent=5 // pred_check
      _
    $region10: #{downsample5_forward.7} parent=5 // pred_check_branch
      %116 = sbr.rel (%p113) target = $region12
    $region11: #{downsample5_forward.7} parent=5 // pred_region
      %s117 = ssub.s32 %s9, 1
      // Predicated region
      $region13: #{downsample5_forward.7} parent=11 // pred_check
        %p118 = pneg %p56
      $region14: #{downsample5_forward.7} parent=11 // pred_check_branch
        %120 = sbr.rel (%p118) target = $region16
      $region15: #{downsample5_forward.7} parent=11 // pred_region
        _
      $region16: #{downsample5_forward.7} parent=11 // pred_fallthru
        _
      // Predicated region
      $region17: #{downsample5_forward.7} parent=11 // pred_check
        %p121 = pneg %p77
      $region18: #{downsample5_forward.7} parent=11 // pred_check_branch
        %123 = sbr.rel (%p121) target = $region20
      $region19: #{downsample5_forward.7} parent=11 // pred_region
        _
      $region20: #{downsample5_forward.7} parent=11 // pred_fallthru
        _
    $region12: #{downsample5_forward.7} parent=5 // pred_fallthru
      _
    %p124 = scmp.lt.s32.totalorder %s9, 2
    // Predicated region
    $region21: #{downsample5_forward.7} parent=5 // pred_check
      %p125 = pneg %p124
    $region22: #{downsample5_forward.7} parent=5 // pred_check_branch
      %127 = sbr.rel (%p125) target = $region24
    $region23: #{downsample5_forward.7} parent=5 // pred_region
      // Predicated region
      $region25: #{downsample5_forward.7} parent=23 // pred_check
        %p128 = pneg %p29
      $region26: #{downsample5_forward.7} parent=23 // pred_check_branch
        %130 = sbr.rel (%p128) target = $region28
      $region27: #{downsample5_forward.7} parent=23 // pred_region
        %p131 = scmp.lt.s32.totalorder %s9, 1
        %s132 = scalar_select %p131, %s9, 1
        %s133 = smul.addr %s132, 72
        %s134 = smul.addr %s133, 4
        %s135 = scalar_lea.vmem %s0, %s134
      $region28: #{downsample5_forward.7} parent=23 // pred_fallthru
        _
    $region24: #{downsample5_forward.7} parent=5 // pred_fallthru
      _
    %p136 = scmp.le.s32.totalorder 1, %s9
    %p137 = scmp.lt.s32.totalorder %s9, 3
    %p138 = pnand %p136, %p137
    %p139 = pneg %p138
    // Predicated region
    $region29: #{downsample5_forward.7} parent=5 // pred_check
      _
    $region30: #{downsample5_forward.7} parent=5 // pred_check_branch
      %141 = sbr.rel (%p138) target = $region32
    $region31: #{downsample5_forward.7} parent=5 // pred_region
      %s142 = ssub.s32 %s9, 1
      %p143 = scmp.lt.s32.totalorder %s14, 1
      %s144 = scalar_select %p143, %s14, 1
      %s145 = smul.addr %s144, 72
      %s146 = smul.addr %s145, 4
      %s147 = scalar_lea.vmem %s0, %s146
      %p148 = pneg %p35
      %p149 = pneg %p32
      %p150 = pneg %p56
      %p151 = pneg %p53
      %p152 = pneg %p77
      %p153 = pneg %p74
      %p154 = pneg %p103
      %p155 = pneg %p100
      %p156 = scmp.lt.s32.totalorder %s14, 1
      %s157 = scalar_select %p156, %s14, 1
      %s158 = smul.addr %s157, 16
      %s159 = smul.addr %s158, 4
      %s160 = scalar_lea.vmem %s3, %s159
      %p161 = scmp.lt.s32.totalorder %s14, 1
      %s162 = scalar_select %p161, %s14, 1
      %s163 = smul.addr %s162, 72
      %s164 = smul.addr %s163, 4
      %s165 = scalar_lea.vmem %s0, %s164
      %p166 = scmp.lt.s32.totalorder %s14, 1
      %s167 = scalar_select %p166, %s14, 1
      %s168 = smul.addr %s167, 16
      %s169 = smul.addr %s168, 4
      %s170 = scalar_lea.vmem %s3, %s169
      %v172 = vld [vmem:[%s165] sm:$0xf]
      %v173 = vld [vmem:[%s165 + $0x8] sm:$0xf]
      %v174 = vld [vmem:[%s165 + $0x10] sm:$0xf]
      %v175 = vld [vmem:[%s165 + $0x18] sm:$0xf]
      %v176 = vld [vmem:[%s165 + $0x20] sm:$0xf]
      %v177 = vld [vmem:[%s165 + $0x28] sm:$0xf]
      %v178 = vld [vmem:[%s165 + $0x30] sm:$0xf]
      %v179 = vld [vmem:[%s165 + $0x38] sm:$0xf]
      %v180 = vld [vmem:[%s1] sm:$0xff]
      %v181 = vld [vmem:[%s1 + $0x8] sm:$0xff]
      %v182 = vld [vmem:[%s1 + $0x10] sm:$0xff]
      %v183 = vld [vmem:[%s1 + $0x18] sm:$0xff]
      %v184 = vld [vmem:[%s1 + $0x20] sm:$0xff]
      %v185 = vld [vmem:[%s1 + $0x28] sm:$0xff]
      %v186 = vld [vmem:[%s1 + $0x30] sm:$0xff]
      %v187 = vld [vmem:[%s1 + $0x38] sm:$0xff]
      %v188 = vld [vmem:[%s1 + $0x40] sm:$0xff]
      %v189 = vld [vmem:[%s1 + $0x48] sm:$0xff]
      %v190 = vld [vmem:[%s1 + $0x50] sm:$0xff]
      %v191 = vld [vmem:[%s1 + $0x58] sm:$0xff]
      %v192 = vld [vmem:[%s1 + $0x60] sm:$0xff]
      %v193 = vld [vmem:[%s1 + $0x68] sm:$0xff]
      %v194 = vld [vmem:[%s1 + $0x70] sm:$0xff]
      %v195 = vld [vmem:[%s1 + $0x78] sm:$0xff]
      %v204 = vunpack.c.l.b16 %v172
      %v205 = vunpack.c.l.b16 %v173
      %v206 = vunpack.c.l.b16 %v174
      %v207 = vunpack.c.l.b16 %v175
      %v208 = vunpack.c.l.b16 %v176
      %v209 = vunpack.c.l.b16 %v177
      %v210 = vunpack.c.l.b16 %v178
      %v211 = vunpack.c.l.b16 %v179
      %v212 = vpack.c.b16 %v205, %v204
      %v213 = vpack.c.b16 %v207, %v206
      %v214 = vpack.c.b16 %v209, %v208
      %v215 = vpack.c.b16 %v211, %v210
      %v236 = vunpack.c.l.b16 %v180
      %v237 = vunpack.c.h.b16 %v180
      %v238 = vunpack.c.l.b16 %v181
      %v239 = vunpack.c.h.b16 %v181
      %v240 = vunpack.c.l.b16 %v182
      %v241 = vunpack.c.h.b16 %v182
      %v242 = vunpack.c.l.b16 %v183
      %v243 = vunpack.c.h.b16 %v183
      %v244 = vunpack.c.l.b16 %v184
      %v245 = vunpack.c.h.b16 %v184
      %v246 = vunpack.c.l.b16 %v185
      %v247 = vunpack.c.h.b16 %v185
      %v248 = vunpack.c.l.b16 %v186
      %v249 = vunpack.c.h.b16 %v186
      %v250 = vunpack.c.l.b16 %v187
      %v251 = vunpack.c.h.b16 %v187
      %v252 = vunpack.c.l.b16 %v188
      %v253 = vunpack.c.h.b16 %v188
      %v254 = vunpack.c.l.b16 %v189
      %v255 = vunpack.c.h.b16 %v189
      %v256 = vunpack.c.l.b16 %v190
      %v257 = vunpack.c.h.b16 %v190
      %v258 = vunpack.c.l.b16 %v191
      %v259 = vunpack.c.h.b16 %v191
      %v260 = vunpack.c.l.b16 %v192
      %v261 = vunpack.c.h.b16 %v192
      %v262 = vunpack.c.l.b16 %v193
      %v263 = vunpack.c.h.b16 %v193
      %v264 = vunpack.c.l.b16 %v194
      %v265 = vunpack.c.h.b16 %v194
      %v266 = vunpack.c.l.b16 %v195
      %v267 = vunpack.c.h.b16 %v195
      %v268 = vpack.c.b16 %v238, %v236
      %v269 = vpack.c.b16 %v239, %v237
      %v270 = vpack.c.b16 %v242, %v240
      %v271 = vpack.c.b16 %v243, %v241
      %v272 = vpack.c.b16 %v246, %v244
      %v273 = vpack.c.b16 %v247, %v245
      %v274 = vpack.c.b16 %v250, %v248
      %v275 = vpack.c.b16 %v251, %v249
      %v276 = vpack.c.b16 %v254, %v252
      %v277 = vpack.c.b16 %v255, %v253
      %v278 = vpack.c.b16 %v258, %v256
      %v279 = vpack.c.b16 %v259, %v257
      %v280 = vpack.c.b16 %v262, %v260
      %v281 = vpack.c.b16 %v263, %v261
      %v282 = vpack.c.b16 %v266, %v264
      %v283 = vpack.c.b16 %v267, %v265
      %300 = vmatprep.subr.bf16.mxu0 %v269
      %301 = vmatpush1.bf16.msra.mxu0 %v268
      %302 = vmatprep.subr.bf16.mxu0 %v271
      %303 = vmatpush1.bf16.msra.mxu0 %v270
      %304 = vmatprep.subr.bf16.mxu0 %v273
      %305 = vmatpush1.bf16.msra.mxu0 %v272
      %306 = vmatprep.subr.bf16.mxu0 %v275
      %307 = vmatpush1.bf16.msra.mxu0 %v274
      %308 = vmatprep.subr.bf16.mxu0 %v277
      %309 = vmatpush1.bf16.msra.mxu0 %v276
      %310 = vmatprep.subr.bf16.mxu0 %v279
      %311 = vmatpush1.bf16.msra.mxu0 %v278
      %312 = vmatprep.subr.bf16.mxu0 %v281
      %313 = vmatpush1.bf16.msra.mxu0 %v280
      %314 = vmatprep.subr.bf16.mxu0 %v283
      %315 = vmatpush1.bf16.msra.mxu0 %v282
      %316 = vmatprep.subr.bf16.mxu0 0
      %317 = vmatpush1.bf16.msra.mxu0 0
      %318 = vmatprep.subr.bf16.mxu0 0
      %319 = vmatpush1.bf16.msra.mxu0 0
      %320 = vmatprep.subr.bf16.mxu0 0
      %321 = vmatpush1.bf16.msra.mxu0 0
      %322 = vmatprep.subr.bf16.mxu0 0
      %323 = vmatpush1.bf16.msra.mxu0 0
      %324 = vmatprep.subr.bf16.mxu0 0
      %325 = vmatpush1.bf16.msra.mxu0 0
      %326 = vmatprep.subr.bf16.mxu0 0
      %327 = vmatpush1.bf16.msra.mxu0 0
      %328 = vmatprep.subr.bf16.mxu0 0
      %329 = vmatpush1.bf16.msra.mxu0 0
      %330 = vmatprep.subr.bf16.mxu0 0
      %331 = vmatpush1.bf16.msra.mxu0 0
      %332 = vmatprep.mubr.bf16.mxu0 0
      %333 = vmatmul.mubr.bf16.gmra.mrb[0].mxu0 %v212
      %v334 = vpop.f32.mrb[0].mxu0
      %v335 = vadd.f32 0.0, %v334
      %v336 = vpop.f32.mrb[0].mxu0
      %v337 = vadd.f32 0.0, %v336
      %v338 = vpop.f32.mrb[0].mxu0
      %v339 = vadd.f32 0.0, %v338
      %v340 = vpop.f32.mrb[0].mxu0
      %v341 = vadd.f32 0.0, %v340
      %342 = vmatprep.mubr.bf16.mxu0 0
      %343 = vmatmul.mubr.bf16.gmra.mrb[0].mxu0 %v213
      %v344 = vpop.f32.mrb[0].mxu0
      %v345 = vadd.f32 0.0, %v344
      %v346 = vpop.f32.mrb[0].mxu0
      %v347 = vadd.f32 0.0, %v346
      %v348 = vpop.f32.mrb[0].mxu0
      %v349 = vadd.f32 0.0, %v348
      %v350 = vpop.f32.mrb[0].mxu0
      %v351 = vadd.f32 0.0, %v350
      %352 = vmatprep.mubr.bf16.mxu0 0
      %353 = vmatmul.mubr.bf16.gmra.mrb[0].mxu0 %v214
      %v354 = vpop.f32.mrb[0].mxu0
      %v355 = vadd.f32 0.0, %v354
      %v356 = vpop.f32.mrb[0].mxu0
      %v357 = vadd.f32 0.0, %v356
      %v358 = vpop.f32.mrb[0].mxu0
      %v359 = vadd.f32 0.0, %v358
      %v360 = vpop.f32.mrb[0].mxu0
      %v361 = vadd.f32 0.0, %v360
      %362 = vmatprep.mubr.bf16.mxu0 0
      %363 = vmatmul.mubr.bf16.gmra.mrb[0].mxu0 %v215
      %v364 = vpop.f32.mrb[0].mxu0
      %v365 = vadd.f32 0.0, %v364
      %v366 = vpop.f32.mrb[0].mxu0
      %v367 = vadd.f32 0.0, %v366
      %v368 = vpop.f32.mrb[0].mxu0
      %v369 = vadd.f32 0.0, %v368
      %v370 = vpop.f32.mrb[0].mxu0
      %v371 = vadd.f32 0.0, %v370
      %372 = vdwg.mxu0
      %373 = vst [vmem:[#allocation2] sm:$0xff] %v335
      %374 = vst [vmem:[#allocation2 + $0x8] sm:$0xff] %v337
      %375 = vst [vmem:[#allocation2 + $0x10] sm:$0xff] %v339
      %376 = vst [vmem:[#allocation2 + $0x18] sm:$0xff] %v341
      %377 = vst [vmem:[#allocation2 + $0x20] sm:$0xff] %v345
      %378 = vst [vmem:[#allocation2 + $0x28] sm:$0xff] %v347
      %379 = vst [vmem:[#allocation2 + $0x30] sm:$0xff] %v349
      %380 = vst [vmem:[#allocation2 + $0x38] sm:$0xff] %v351
      %381 = vst [vmem:[#allocation2 + $0x40] sm:$0xff] %v355
      %382 = vst [vmem:[#allocation2 + $0x48] sm:$0xff] %v357
      %383 = vst [vmem:[#allocation2 + $0x50] sm:$0xff] %v359
      %384 = vst [vmem:[#allocation2 + $0x58] sm:$0xff] %v361
      %385 = vst [vmem:[#allocation2 + $0x60] sm:$0xff] %v365
      %386 = vst [vmem:[#allocation2 + $0x68] sm:$0xff] %v367
      %387 = vst [vmem:[#allocation2 + $0x70] sm:$0xff] %v369
      %388 = vst [vmem:[#allocation2 + $0x78] sm:$0xff] %v371
      %s389 = scalar_lea.vmem %s165, 72
      %v390 = vld [vmem:[%s389] sm:$0xf]
      %v391 = vld [vmem:[%s389 + $0x8] sm:$0xf]
      %v392 = vld [vmem:[%s389 + $0x10] sm:$0xf]
      %v393 = vld [vmem:[%s389 + $0x18] sm:$0xf]
      %v394 = vld [vmem:[%s389 + $0x20] sm:$0xf]
      %v395 = vld [vmem:[%s389 + $0x28] sm:$0xf]
      %v396 = vld [vmem:[%s389 + $0x30] sm:$0xf]
      %v397 = vld [vmem:[%s389 + $0x38] sm:$0xf]
      %s398 = scalar_lea.vmem %s1, 128
      %v399 = vld [vmem:[%s398] sm:$0xff]
      %v400 = vld [vmem:[%s398 + $0x8] sm:$0xff]
      %v401 = vld [vmem:[%s398 + $0x10] sm:$0xff]
      %v402 = vld [vmem:[%s398 + $0x18] sm:$0xff]
      %v403 = vld [vmem:[%s398 + $0x20] sm:$0xff]
      %v404 = vld [vmem:[%s398 + $0x28] sm:$0xff]
      %v405 = vld [vmem:[%s398 + $0x30] sm:$0xff]
      %v406 = vld [vmem:[%s398 + $0x38] sm:$0xff]
      %v407 = vld [vmem:[%s398 + $0x40] sm:$0xff]
      %v408 = vld [vmem:[%s398 + $0x48] sm:$0xff]
      %v409 = vld [vmem:[%s398 + $0x50] sm:$0xff]
      %v410 = vld [vmem:[%s398 + $0x58] sm:$0xff]
      %v411 = vld [vmem:[%s398 + $0x60] sm:$0xff]
      %v412 = vld [vmem:[%s398 + $0x68] sm:$0xff]
      %v413 = vld [vmem:[%s398 + $0x70] sm:$0xff]
      %v414 = vld [vmem:[%s398 + $0x78] sm:$0xff]
      %v423 = vunpack.c.l.b16 %v390
      %v424 = vunpack.c.l.b16 %v391
      %v425 = vunpack.c.l.b16 %v392
      %v426 = vunpack.c.l.b16 %v393
      %v427 = vunpack.c.l.b16 %v394
      %v428 = vunpack.c.l.b16 %v395
      %v429 = vunpack.c.l.b16 %v396
      %v430 = vunpack.c.l.b16 %v397
      %v431 = vpack.c.b16 %v424, %v423
      %v432 = vpack.c.b16 %v426, %v425
      %v433 = vpack.c.b16 %v428, %v427
      %v434 = vpack.c.b16 %v430, %v429
      %v455 = vunpack.c.l.b16 %v399
      %v456 = vunpack.c.h.b16 %v399
      %v457 = vunpack.c.l.b16 %v400
      %v458 = vunpack.c.h.b16 %v400
      %v459 = vunpack.c.l.b16 %v401
      %v460 = vunpack.c.h.b16 %v401
      %v461 = vunpack.c.l.b16 %v402
      %v462 = vunpack.c.h.b16 %v402
      %v463 = vunpack.c.l.b16 %v403
      %v464 = vunpack.c.h.b16 %v403
      %v465 = vunpack.c.l.b16 %v404
      %v466 = vunpack.c.h.b16 %v404
      %v467 = vunpack.c.l.b16 %v405
      %v468 = vunpack.c.h.b16 %v405
      %v469 = vunpack.c.l.b16 %v406
      %v470 = vunpack.c.h.b16 %v406
      %v471 = vunpack.c.l.b16 %v407
      %v472 = vunpack.c.h.b16 %v407
      %v473 = vunpack.c.l.b16 %v408
      %v474 = vunpack.c.h.b16 %v408
      %v475 = vunpack.c.l.b16 %v409
      %v476 = vunpack.c.h.b16 %v409
      %v477 = vunpack.c.l.b16 %v410
      %v478 = vunpack.c.h.b16 %v410
      %v479 = vunpack.c.l.b16 %v411
      %v480 = vunpack.c.h.b16 %v411
      %v481 = vunpack.c.l.b16 %v412
      %v482 = vunpack.c.h.b16 %v412
      %v483 = vunpack.c.l.b16 %v413
      %v484 = vunpack.c.h.b16 %v413
      %v485 = vunpack.c.l.b16 %v414
      %v486 = vunpack.c.h.b16 %v414
      %v487 = vpack.c.b16 %v457, %v455
      %v488 = vpack.c.b16 %v458, %v456
      %v489 = vpack.c.b16 %v461, %v459
      %v490 = vpack.c.b16 %v462, %v460
      %v491 = vpack.c.b16 %v465, %v463
      %v492 = vpack.c.b16 %v466, %v464
      %v493 = vpack.c.b16 %v469, %v467
      %v494 = vpack.c.b16 %v470, %v468
      %v495 = vpack.c.b16 %v473, %v471
      %v496 = vpack.c.b16 %v474, %v472
      %v497 = vpack.c.b16 %v477, %v475
      %v498 = vpack.c.b16 %v478, %v476
      %v499 = vpack.c.b16 %v481, %v479
      %v500 = vpack.c.b16 %v482, %v480
      %v501 = vpack.c.b16 %v485, %v483
      %v502 = vpack.c.b16 %v486, %v484
      %519 = vmatprep.subr.bf16.mxu0 %v488
      %520 = vmatpush1.bf16.msra.mxu0 %v487
      %521 = vmatprep.subr.bf16.mxu0 %v490
      %522 = vmatpush1.bf16.msra.mxu0 %v489
      %523 = vmatprep.subr.bf16.mxu0 %v492
      %524 = vmatpush1.bf16.msra.mxu0 %v491
      %525 = vmatprep.subr.bf16.mxu0 %v494
      %526 = vmatpush1.bf16.msra.mxu0 %v493
      %527 = vmatprep.subr.bf16.mxu0 %v496
      %528 = vmatpush1.bf16.msra.mxu0 %v495
      %529 = vmatprep.subr.bf16.mxu0 %v498
      %530 = vmatpush1.bf16.msra.mxu0 %v497
      %531 = vmatprep.subr.bf16.mxu0 %v500
      %532 = vmatpush1.bf16.msra.mxu0 %v499
      %533 = vmatprep.subr.bf16.mxu0 %v502
      %534 = vmatpush1.bf16.msra.mxu0 %v501
      %535 = vmatprep.subr.bf16.mxu0 0
      %536 = vmatpush1.bf16.msra.mxu0 0
      %537 = vmatprep.subr.bf16.mxu0 0
      %538 = vmatpush1.bf16.msra.mxu0 0
      %539 = vmatprep.subr.bf16.mxu0 0
      %540 = vmatpush1.bf16.msra.mxu0 0
      %541 = vmatprep.subr.bf16.mxu0 0
      %542 = vmatpush1.bf16.msra.mxu0 0
      %543 = vmatprep.subr.bf16.mxu0 0
      %544 = vmatpush1.bf16.msra.mxu0 0
      %545 = vmatprep.subr.bf16.mxu0 0
      %546 = vmatpush1.bf16.msra.mxu0 0
      %547 = vmatprep.subr.bf16.mxu0 0
      %548 = vmatpush1.bf16.msra.mxu0 0
      %549 = vmatprep.subr.bf16.mxu0 0
      %550 = vmatpush1.bf16.msra.mxu0 0
      %551 = vmatprep.mubr.bf16.mxu0 0
      %552 = vmatmul.mubr.bf16.gmra.mrb[0].mxu0 %v431
      %v553 = vpop.f32.mrb[0].mxu0
      %v554 = vadd.f32 0.0, %v553
      %v555 = vpop.f32.mrb[0].mxu0
      %v556 = vadd.f32 0.0, %v555
      %v557 = vpop.f32.mrb[0].mxu0
      %v558 = vadd.f32 0.0, %v557
      %v559 = vpop.f32.mrb[0].mxu0
      %v560 = vadd.f32 0.0, %v559
      %561 = vmatprep.mubr.bf16.mxu0 0
      %562 = vmatmul.mubr.bf16.gmra.mrb[0].mxu0 %v432
      %v563 = vpop.f32.mrb[0].mxu0
      %v564 = vadd.f32 0.0, %v563
      %v565 = vpop.f32.mrb[0].mxu0
      %v566 = vadd.f32 0.0, %v565
      %v567 = vpop.f32.mrb[0].mxu0
      %v568 = vadd.f32 0.0, %v567
      %v569 = vpop.f32.mrb[0].mxu0
      %v570 = vadd.f32 0.0, %v569
      %571 = vmatprep.mubr.bf16.mxu0 0
      %572 = vmatmul.mubr.bf16.gmra.mrb[0].mxu0 %v433
      %v573 = vpop.f32.mrb[0].mxu0
      %v574 = vadd.f32 0.0, %v573
      %v575 = vpop.f32.mrb[0].mxu0
      %v576 = vadd.f32 0.0, %v575
      %v577 = vpop.f32.mrb[0].mxu0
      %v578 = vadd.f32 0.0, %v577
      %v579 = vpop.f32.mrb[0].mxu0
      %v580 = vadd.f32 0.0, %v579
      %581 = vmatprep.mubr.bf16.mxu0 0
      %582 = vmatmul.mubr.bf16.gmra.mrb[0].mxu0 %v434
      %v583 = vpop.f32.mrb[0].mxu0
      %v584 = vadd.f32 0.0, %v583
      %v585 = vpop.f32.mrb[0].mxu0
      %v586 = vadd.f32 0.0, %v585
      %v587 = vpop.f32.mrb[0].mxu0
      %v588 = vadd.f32 0.0, %v587
      %v589 = vpop.f32.mrb[0].mxu0
      %v590 = vadd.f32 0.0, %v589
      %591 = vdwg.mxu0
      %v592 = vld [vmem:[#allocation2] sm:$0xff]
      %v593 = vld [vmem:[#allocation2 + $0x8] sm:$0xff]
      %v594 = vld [vmem:[#allocation2 + $0x10] sm:$0xff]
      %v595 = vld [vmem:[#allocation2 + $0x18] sm:$0xff]
      %v596 = vld [vmem:[#allocation2 + $0x20] sm:$0xff]
      %v597 = vld [vmem:[#allocation2 + $0x28] sm:$0xff]
      %v598 = vld [vmem:[#allocation2 + $0x30] sm:$0xff]
      %v599 = vld [vmem:[#allocation2 + $0x38] sm:$0xff]
      %v600 = vld [vmem:[#allocation2 + $0x40] sm:$0xff]
      %v601 = vld [vmem:[#allocation2 + $0x48] sm:$0xff]
      %v602 = vld [vmem:[#allocation2 + $0x50] sm:$0xff]
      %v603 = vld [vmem:[#allocation2 + $0x58] sm:$0xff]
      %v604 = vld [vmem:[#allocation2 + $0x60] sm:$0xff]
      %v605 = vld [vmem:[#allocation2 + $0x68] sm:$0xff]
      %v606 = vld [vmem:[#allocation2 + $0x70] sm:$0xff]
      %v607 = vld [vmem:[#allocation2 + $0x78] sm:$0xff]
      %v608 = vadd.f32 %v592, %v554
      %v609 = vadd.f32 %v593, %v556
      %v610 = vadd.f32 %v594, %v558
      %v611 = vadd.f32 %v595, %v560
      %v612 = vadd.f32 %v596, %v564
      %v613 = vadd.f32 %v597, %v566
      %v614 = vadd.f32 %v598, %v568
      %v615 = vadd.f32 %v599, %v570
      %v616 = vadd.f32 %v600, %v574
      %v617 = vadd.f32 %v601, %v576
      %v618 = vadd.f32 %v602, %v578
      %v619 = vadd.f32 %v603, %v580
      %v620 = vadd.f32 %v604, %v584
      %v621 = vadd.f32 %v605, %v586
      %v622 = vadd.f32 %v606, %v588
      %v623 = vadd.f32 %v607, %v590
      %624 = vst [vmem:[#allocation2] sm:$0xff] %v608
      %625 = vst [vmem:[#allocation2 + $0x8] sm:$0xff] %v609
      %626 = vst [vmem:[#allocation2 + $0x10] sm:$0xff] %v610
      %627 = vst [vmem:[#allocation2 + $0x18] sm:$0xff] %v611
      %628 = vst [vmem:[#allocation2 + $0x20] sm:$0xff] %v612
      %629 = vst [vmem:[#allocation2 + $0x28] sm:$0xff] %v613
      %630 = vst [vmem:[#allocation2 + $0x30] sm:$0xff] %v614
      %631 = vst [vmem:[#allocation2 + $0x38] sm:$0xff] %v615
      %632 = vst [vmem:[#allocation2 + $0x40] sm:$0xff] %v616
      %633 = vst [vmem:[#allocation2 + $0x48] sm:$0xff] %v617
      %634 = vst [vmem:[#allocation2 + $0x50] sm:$0xff] %v618
      %635 = vst [vmem:[#allocation2 + $0x58] sm:$0xff] %v619
      %636 = vst [vmem:[#allocation2 + $0x60] sm:$0xff] %v620
      %637 = vst [vmem:[#allocation2 + $0x68] sm:$0xff] %v621
      %638 = vst [vmem:[#allocation2 + $0x70] sm:$0xff] %v622
      %639 = vst [vmem:[#allocation2 + $0x78] sm:$0xff] %v623
      %v640 = vld [vmem:[%s165] sm:$0xf]
      %v641 = vld [vmem:[%s165 + $0x4] sm:$0x1]
      %v642 = vld [vmem:[%s165 + $0x8] sm:$0xf]
      %v643 = vld [vmem:[%s165 + $0xc] sm:$0x1]
      %v644 = vld [vmem:[%s165 + $0x10] sm:$0xf]
      %v645 = vld [vmem:[%s165 + $0x14] sm:$0x1]
      %v646 = vld [vmem:[%s165 + $0x18] sm:$0xf]
      %v647 = vld [vmem:[%s165 + $0x1c] sm:$0x1]
      %v648 = vld [vmem:[%s165 + $0x20] sm:$0xf]
      %v649 = vld [vmem:[%s165 + $0x24] sm:$0x1]
      %v650 = vld [vmem:[%s165 + $0x28] sm:$0xf]
      %v651 = vld [vmem:[%s165 + $0x2c] sm:$0x1]
      %v652 = vld [vmem:[%s165 + $0x30] sm:$0xf]
      %v653 = vld [vmem:[%s165 + $0x34] sm:$0x1]
      %v654 = vld [vmem:[%s165 + $0x38] sm:$0xf]
      %v655 = vld [vmem:[%s165 + $0x3c] sm:$0x1]
      %vm656 = vsmask.f32 3328
      %vm657 = vsmask.f32 7440
      %vm658 = vmor %vm656, %vm657
      %v660 = vshrl.u32 %v640, 16
      %v662 = vrot.slane %v660, 4
      %v663 = vshll.u32 %v640, 16
      %v665 = vrot.slane %v663, 5
      %v666 = vor.u32 %v662, %v665
      %v667 = vrot.slane %v666, 4
      %v669 = vshll.u32 %v641, 16
      %v671 = vrot.slane %v669, 5
      %v672 = vsel %vm658, %v667, %v671
      %v674 = vshrl.u32 %v642, 16
      %v676 = vrot.slane %v674, 4
      %v677 = vshll.u32 %v642, 16
      %v679 = vrot.slane %v677, 5
      %v680 = vor.u32 %v676, %v679
      %v681 = vrot.slane %v680, 4
      %v683 = vshll.u32 %v643, 16
      %v685 = vrot.slane %v683, 5
      %v686 = vsel %vm658, %v681, %v685
      %v688 = vshrl.u32 %v644, 16
      %v690 = vrot.slane %v688, 4
      %v691 = vshll.u32 %v644, 16
      %v693 = vrot.slane %v691, 5
      %v694 = vor.u32 %v690, %v693
      %v695 = vrot.slane %v694, 4
      %v697 = vshll.u32 %v645, 16
      %v699 = vrot.slane %v697, 5
      %v700 = vsel %vm658, %v695, %v699
      %v702 = vshrl.u32 %v646, 16
      %v704 = vrot.slane %v702, 4
      %v705 = vshll.u32 %v646, 16
      %v707 = vrot.slane %v705, 5
      %v708 = vor.u32 %v704, %v707
      %v709 = vrot.slane %v708, 4
      %v711 = vshll.u32 %v647, 16
      %v713 = vrot.slane %v711, 5
      %v714 = vsel %vm658, %v709, %v713
      %v716 = vshrl.u32 %v648, 16
      %v718 = vrot.slane %v716, 4
      %v719 = vshll.u32 %v648, 16
      %v721 = vrot.slane %v719, 5
      %v722 = vor.u32 %v718, %v721
      %v723 = vrot.slane %v722, 4
      %v725 = vshll.u32 %v649, 16
      %v727 = vrot.slane %v725, 5
      %v728 = vsel %vm658, %v723, %v727
      %v730 = vshrl.u32 %v650, 16
      %v732 = vrot.slane %v730, 4
      %v733 = vshll.u32 %v650, 16
      %v735 = vrot.slane %v733, 5
      %v736 = vor.u32 %v732, %v735
      %v737 = vrot.slane %v736, 4
      %v739 = vshll.u32 %v651, 16
      %v741 = vrot.slane %v739, 5
      %v742 = vsel %vm658, %v737, %v741
      %v744 = vshrl.u32 %v652, 16
      %v746 = vrot.slane %v744, 4
      %v747 = vshll.u32 %v652, 16
      %v749 = vrot.slane %v747, 5
      %v750 = vor.u32 %v746, %v749
      %v751 = vrot.slane %v750, 4
      %v753 = vshll.u32 %v653, 16
      %v755 = vrot.slane %v753, 5
      %v756 = vsel %vm658, %v751, %v755
      %v758 = vshrl.u32 %v654, 16
      %v760 = vrot.slane %v758, 4
      %v761 = vshll.u32 %v654, 16
      %v763 = vrot.slane %v761, 5
      %v764 = vor.u32 %v760, %v763
      %v765 = vrot.slane %v764, 4
      %v767 = vshll.u32 %v655, 16
      %v769 = vrot.slane %v767, 5
      %v770 = vsel %vm658, %v765, %v769
      %s771 = scalar_lea.vmem %s1, 256
      %v772 = vld [vmem:[%s771] sm:$0xff]
      %v773 = vld [vmem:[%s771 + $0x8] sm:$0xff]
      %v774 = vld [vmem:[%s771 + $0x10] sm:$0xff]
      %v775 = vld [vmem:[%s771 + $0x18] sm:$0xff]
      %v776 = vld [vmem:[%s771 + $0x20] sm:$0xff]
      %v777 = vld [vmem:[%s771 + $0x28] sm:$0xff]
      %v778 = vld [vmem:[%s771 + $0x30] sm:$0xff]
      %v779 = vld [vmem:[%s771 + $0x38] sm:$0xff]
      %v780 = vld [vmem:[%s771 + $0x40] sm:$0xff]
      %v781 = vld [vmem:[%s771 + $0x48] sm:$0xff]
      %v782 = vld [vmem:[%s771 + $0x50] sm:$0xff]
      %v783 = vld [vmem:[%s771 + $0x58] sm:$0xff]
      %v784 = vld [vmem:[%s771 + $0x60] sm:$0xff]
      %v785 = vld [vmem:[%s771 + $0x68] sm:$0xff]
      %v786 = vld [vmem:[%s771 + $0x70] sm:$0xff]
      %v787 = vld [vmem:[%s771 + $0x78] sm:$0xff]
      %v788 = vunpack.c.l.b16 %v672
      %v789 = vunpack.c.l.b16 %v686
      %v790 = vunpack.c.l.b16 %v700
      %v791 = vunpack.c.l.b16 %v714
      %v792 = vunpack.c.l.b16 %v728
      %v793 = vunpack.c.l.b16 %v742
      %v794 = vunpack.c.l.b16 %v756
      %v795 = vunpack.c.l.b16 %v770
      %v796 = vpack.c.b16 %v789, %v788
      %v797 = vpack.c.b16 %v791, %v790
      %v798 = vpack.c.b16 %v793, %v792
      %v799 = vpack.c.b16 %v795, %v794
      %v820 = vunpack.c.l.b16 %v772
      %v821 = vunpack.c.h.b16 %v772
      %v822 = vunpack.c.l.b16 %v773
      %v823 = vunpack.c.h.b16 %v773
      %v824 = vunpack.c.l.b16 %v774
      %v825 = vunpack.c.h.b16 %v774
      %v826 = vunpack.c.l.b16 %v775
      %v827 = vunpack.c.h.b16 %v775
      %v828 = vunpack.c.l.b16 %v776
      %v829 = vunpack.c.h.b16 %v776
      %v830 = vunpack.c.l.b16 %v777
      %v831 = vunpack.c.h.b16 %v777
      %v832 = vunpack.c.l.b16 %v778
      %v833 = vunpack.c.h.b16 %v778
      %v834 = vunpack.c.l.b16 %v779
      %v835 = vunpack.c.h.b16 %v779
      %v836 = vunpack.c.l.b16 %v780
      %v837 = vunpack.c.h.b16 %v780
      %v838 = vunpack.c.l.b16 %v781
      %v839 = vunpack.c.h.b16 %v781
      %v840 = vunpack.c.l.b16 %v782
      %v841 = vunpack.c.h.b16 %v782
      %v842 = vunpack.c.l.b16 %v783
      %v843 = vunpack.c.h.b16 %v783
      %v844 = vunpack.c.l.b16 %v784
      %v845 = vunpack.c.h.b16 %v784
      %v846 = vunpack.c.l.b16 %v785
      %v847 = vunpack.c.h.b16 %v785
      %v848 = vunpack.c.l.b16 %v786
      %v849 = vunpack.c.h.b16 %v786
      %v850 = vunpack.c.l.b16 %v787
      %v851 = vunpack.c.h.b16 %v787
      %v852 = vpack.c.b16 %v822, %v820
      %v853 = vpack.c.b16 %v823, %v821
      %v854 = vpack.c.b16 %v826, %v824
      %v855 = vpack.c.b16 %v827, %v825
      %v856 = vpack.c.b16 %v830, %v828
      %v857 = vpack.c.b16 %v831, %v829
      %v858 = vpack.c.b16 %v834, %v832
      %v859 = vpack.c.b16 %v835, %v833
      %v860 = vpack.c.b16 %v838, %v836
      %v861 = vpack.c.b16 %v839, %v837
      %v862 = vpack.c.b16 %v842, %v840
      %v863 = vpack.c.b16 %v843, %v841
      %v864 = vpack.c.b16 %v846, %v844
      %v865 = vpack.c.b16 %v847, %v845
      %v866 = vpack.c.b16 %v850, %v848
      %v867 = vpack.c.b16 %v851, %v849
      %884 = vmatprep.subr.bf16.mxu0 %v853
      %885 = vmatpush1.bf16.msra.mxu0 %v852
      %886 = vmatprep.subr.bf16.mxu0 %v855
      %887 = vmatpush1.bf16.msra.mxu0 %v854
      %888 = vmatprep.subr.bf16.mxu0 %v857
      %889 = vmatpush1.bf16.msra.mxu0 %v856
      %890 = vmatprep.subr.bf16.mxu0 %v859
      %891 = vmatpush1.bf16.msra.mxu0 %v858
      %892 = vmatprep.subr.bf16.mxu0 %v861
      %893 = vmatpush1.bf16.msra.mxu0 %v860
      %894 = vmatprep.subr.bf16.mxu0 %v863
      %895 = vmatpush1.bf16.msra.mxu0 %v862
      %896 = vmatprep.subr.bf16.mxu0 %v865
      %897 = vmatpush1.bf16.msra.mxu0 %v864
      %898 = vmatprep.subr.bf16.mxu0 %v867
      %899 = vmatpush1.bf16.msra.mxu0 %v866
      %900 = vmatprep.subr.bf16.mxu0 0
      %901 = vmatpush1.bf16.msra.mxu0 0
      %902 = vmatprep.subr.bf16.mxu0 0
      %903 = vmatpush1.bf16.msra.mxu0 0
      %904 = vmatprep.subr.bf16.mxu0 0
      %905 = vmatpush1.bf16.msra.mxu0 0
      %906 = vmatprep.subr.bf16.mxu0 0
      %907 = vmatpush1.bf16.msra.mxu0 0
      %908 = vmatprep.subr.bf16.mxu0 0
      %909 = vmatpush1.bf16.msra.mxu0 0
      %910 = vmatprep.subr.bf16.mxu0 0
      %911 = vmatpush1.bf16.msra.mxu0 0
      %912 = vmatprep.subr.bf16.mxu0 0
      %913 = vmatpush1.bf16.msra.mxu0 0
      %914 = vmatprep.subr.bf16.mxu0 0
      %915 = vmatpush1.bf16.msra.mxu0 0
      %916 = vmatprep.mubr.bf16.mxu0 0
      %917 = vmatmul.mubr.bf16.gmra.mrb[0].mxu0 %v796
      %v918 = vpop.f32.mrb[0].mxu0
      %v919 = vadd.f32 0.0, %v918
      %v920 = vpop.f32.mrb[0].mxu0
      %v921 = vadd.f32 0.0, %v920
      %v922 = vpop.f32.mrb[0].mxu0
      %v923 = vadd.f32 0.0, %v922
      %v924 = vpop.f32.mrb[0].mxu0
      %v925 = vadd.f32 0.0, %v924
      %926 = vmatprep.mubr.bf16.mxu0 0
      %927 = vmatmul.mubr.bf16.gmra.mrb[0].mxu0 %v797
      %v928 = vpop.f32.mrb[0].mxu0
      %v929 = vadd.f32 0.0, %v928
      %v930 = vpop.f32.mrb[0].mxu0
      %v931 = vadd.f32 0.0, %v930
      %v932 = vpop.f32.mrb[0].mxu0
      %v933 = vadd.f32 0.0, %v932
      %v934 = vpop.f32.mrb[0].mxu0
      %v935 = vadd.f32 0.0, %v934
      %936 = vmatprep.mubr.bf16.mxu0 0
      %937 = vmatmul.mubr.bf16.gmra.mrb[0].mxu0 %v798
      %v938 = vpop.f32.mrb[0].mxu0
      %v939 = vadd.f32 0.0, %v938
      %v940 = vpop.f32.mrb[0].mxu0
      %v941 = vadd.f32 0.0, %v940
      %v942 = vpop.f32.mrb[0].mxu0
      %v943 = vadd.f32 0.0, %v942
      %v944 = vpop.f32.mrb[0].mxu0
      %v945 = vadd.f32 0.0, %v944
      %946 = vmatprep.mubr.bf16.mxu0 0
      %947 = vmatmul.mubr.bf16.gmra.mrb[0].mxu0 %v799
      %v948 = vpop.f32.mrb[0].mxu0
      %v949 = vadd.f32 0.0, %v948
      %v950 = vpop.f32.mrb[0].mxu0
      %v951 = vadd.f32 0.0, %v950
      %v952 = vpop.f32.mrb[0].mxu0
      %v953 = vadd.f32 0.0, %v952
      %v954 = vpop.f32.mrb[0].mxu0
      %v955 = vadd.f32 0.0, %v954
      %956 = vdwg.mxu0
      %v957 = vld [vmem:[#allocation2] sm:$0xff]
      %v958 = vld [vmem:[#allocation2 + $0x8] sm:$0xff]
      %v959 = vld [vmem:[#allocation2 + $0x10] sm:$0xff]
      %v960 = vld [vmem:[#allocation2 + $0x18] sm:$0xff]
      %v961 = vld [vmem:[#allocation2 + $0x20] sm:$0xff]
      %v962 = vld [vmem:[#allocation2 + $0x28] sm:$0xff]
      %v963 = vld [vmem:[#allocation2 + $0x30] sm:$0xff]
      %v964 = vld [vmem:[#allocation2 + $0x38] sm:$0xff]
      %v965 = vld [vmem:[#allocation2 + $0x40] sm:$0xff]
      %v966 = vld [vmem:[#allocation2 + $0x48] sm:$0xff]
      %v967 = vld [vmem:[#allocation2 + $0x50] sm:$0xff]
      %v968 = vld [vmem:[#allocation2 + $0x58] sm:$0xff]
      %v969 = vld [vmem:[#allocation2 + $0x60] sm:$0xff]
      %v970 = vld [vmem:[#allocation2 + $0x68] sm:$0xff]
      %v971 = vld [vmem:[#allocation2 + $0x70] sm:$0xff]
      %v972 = vld [vmem:[#allocation2 + $0x78] sm:$0xff]
      %v973 = vadd.f32 %v957, %v919
      %v974 = vadd.f32 %v958, %v921
      %v975 = vadd.f32 %v959, %v923
      %v976 = vadd.f32 %v960, %v925
      %v977 = vadd.f32 %v961, %v929
      %v978 = vadd.f32 %v962, %v931
      %v979 = vadd.f32 %v963, %v933
      %v980 = vadd.f32 %v964, %v935
      %v981 = vadd.f32 %v965, %v939
      %v982 = vadd.f32 %v966, %v941
      %v983 = vadd.f32 %v967, %v943
      %v984 = vadd.f32 %v968, %v945
      %v985 = vadd.f32 %v969, %v949
      %v986 = vadd.f32 %v970, %v951
      %v987 = vadd.f32 %v971, %v953
      %v988 = vadd.f32 %v972, %v955
      %989 = vst [vmem:[#allocation2] sm:$0xff] %v973
      %990 = vst [vmem:[#allocation2 + $0x8] sm:$0xff] %v974
      %991 = vst [vmem:[#allocation2 + $0x10] sm:$0xff] %v975
      %992 = vst [vmem:[#allocation2 + $0x18] sm:$0xff] %v976
      %993 = vst [vmem:[#allocation2 + $0x20] sm:$0xff] %v977
      %994 = vst [vmem:[#allocation2 + $0x28] sm:$0xff] %v978
      %995 = vst [vmem:[#allocation2 + $0x30] sm:$0xff] %v979
      %996 = vst [vmem:[#allocation2 + $0x38] sm:$0xff] %v980
      %997 = vst [vmem:[#allocation2 + $0x40] sm:$0xff] %v981
      %998 = vst [vmem:[#allocation2 + $0x48] sm:$0xff] %v982
      %999 = vst [vmem:[#allocation2 + $0x50] sm:$0xff] %v983
      %1000 = vst [vmem:[#allocation2 + $0x58] sm:$0xff] %v984
      %1001 = vst [vmem:[#allocation2 + $0x60] sm:$0xff] %v985
      %1002 = vst [vmem:[#allocation2 + $0x68] sm:$0xff] %v986
      %1003 = vst [vmem:[#allocation2 + $0x70] sm:$0xff] %v987
      %1004 = vst [vmem:[#allocation2 + $0x78] sm:$0xff] %v988
      %s1005 = scalar_lea.vmem %s165, 144
      %v1006 = vld [vmem:[%s1005] sm:$0xf]
      %v1007 = vld [vmem:[%s1005 + $0x8] sm:$0xf]
      %v1008 = vld [vmem:[%s1005 + $0x10] sm:$0xf]
      %v1009 = vld [vmem:[%s1005 + $0x18] sm:$0xf]
      %v1010 = vld [vmem:[%s1005 + $0x20] sm:$0xf]
      %v1011 = vld [vmem:[%s1005 + $0x28] sm:$0xf]
      %v1012 = vld [vmem:[%s1005 + $0x30] sm:$0xf]
      %v1013 = vld [vmem:[%s1005 + $0x38] sm:$0xf]
      %s1014 = scalar_lea.vmem %s1, 384
      %v1015 = vld [vmem:[%s1014] sm:$0xff]
      %v1016 = vld [vmem:[%s1014 + $0x8] sm:$0xff]
      %v1017 = vld [vmem:[%s1014 + $0x10] sm:$0xff]
      %v1018 = vld [vmem:[%s1014 + $0x18] sm:$0xff]
      %v1019 = vld [vmem:[%s1014 + $0x20] sm:$0xff]
      %v1020 = vld [vmem:[%s1014 + $0x28] sm:$0xff]
      %v1021 = vld [vmem:[%s1014 + $0x30] sm:$0xff]
      %v1022 = vld [vmem:[%s1014 + $0x38] sm:$0xff]
      %v1023 = vld [vmem:[%s1014 + $0x40] sm:$0xff]
      %v1024 = vld [vmem:[%s1014 + $0x48] sm:$0xff]
      %v1025 = vld [vmem:[%s1014 + $0x50] sm:$0xff]
      %v1026 = vld [vmem:[%s1014 + $0x58] sm:$0xff]
      %v1027 = vld [vmem:[%s1014 + $0x60] sm:$0xff]
      %v1028 = vld [vmem:[%s1014 + $0x68] sm:$0xff]
      %v1029 = vld [vmem:[%s1014 + $0x70] sm:$0xff]
      %v1030 = vld [vmem:[%s1014 + $0x78] sm:$0xff]
      %v1039 = vunpack.c.l.b16 %v1006
      %v1040 = vunpack.c.l.b16 %v1007
      %v1041 = vunpack.c.l.b16 %v1008
      %v1042 = vunpack.c.l.b16 %v1009
      %v1043 = vunpack.c.l.b16 %v1010
      %v1044 = vunpack.c.l.b16 %v1011
      %v1045 = vunpack.c.l.b16 %v1012
      %v1046 = vunpack.c.l.b16 %v1013
      %v1047 = vpack.c.b16 %v1040, %v1039
      %v1048 = vpack.c.b16 %v1042, %v1041
      %v1049 = vpack.c.b16 %v1044, %v1043
      %v1050 = vpack.c.b16 %v1046, %v1045
      %v1071 = vunpack.c.l.b16 %v1015
      %v1072 = vunpack.c.h.b16 %v1015
      %v1073 = vunpack.c.l.b16 %v1016
      %v1074 = vunpack.c.h.b16 %v1016
      %v1075 = vunpack.c.l.b16 %v1017
      %v1076 = vunpack.c.h.b16 %v1017
      %v1077 = vunpack.c.l.b16 %v1018
      %v1078 = vunpack.c.h.b16 %v1018
      %v1079 = vunpack.c.l.b16 %v1019
      %v1080 = vunpack.c.h.b16 %v1019
      %v1081 = vunpack.c.l.b16 %v1020
      %v1082 = vunpack.c.h.b16 %v1020
      %v1083 = vunpack.c.l.b16 %v1021
      %v1084 = vunpack.c.h.b16 %v1021
      %v1085 = vunpack.c.l.b16 %v1022
      %v1086 = vunpack.c.h.b16 %v1022
      %v1087 = vunpack.c.l.b16 %v1023
      %v1088 = vunpack.c.h.b16 %v1023
      %v1089 = vunpack.c.l.b16 %v1024
      %v1090 = vunpack.c.h.b16 %v1024
      %v1091 = vunpack.c.l.b16 %v1025
      %v1092 = vunpack.c.h.b16 %v1025
      %v1093 = vunpack.c.l.b16 %v1026
      %v1094 = vunpack.c.h.b16 %v1026
      %v1095 = vunpack.c.l.b16 %v1027
      %v1096 = vunpack.c.h.b16 %v1027
      %v1097 = vunpack.c.l.b16 %v1028
      %v1098 = vunpack.c.h.b16 %v1028
      %v1099 = vunpack.c.l.b16 %v1029
      %v1100 = vunpack.c.h.b16 %v1029
      %v1101 = vunpack.c.l.b16 %v1030
      %v1102 = vunpack.c.h.b16 %v1030
      %v1103 = vpack.c.b16 %v1073, %v1071
      %v1104 = vpack.c.b16 %v1074, %v1072
      %v1105 = vpack.c.b16 %v1077, %v1075
      %v1106 = vpack.c.b16 %v1078, %v1076
      %v1107 = vpack.c.b16 %v1081, %v1079
      %v1108 = vpack.c.b16 %v1082, %v1080
      %v1109 = vpack.c.b16 %v1085, %v1083
      %v1110 = vpack.c.b16 %v1086, %v1084
      %v1111 = vpack.c.b16 %v1089, %v1087
      %v1112 = vpack.c.b16 %v1090, %v1088
      %v1113 = vpack.c.b16 %v1093, %v1091
      %v1114 = vpack.c.b16 %v1094, %v1092
      %v1115 = vpack.c.b16 %v1097, %v1095
      %v1116 = vpack.c.b16 %v1098, %v1096
      %v1117 = vpack.c.b16 %v1101, %v1099
      %v1118 = vpack.c.b16 %v1102, %v1100
      %1135 = vmatprep.subr.bf16.mxu0 %v1104
      %1136 = vmatpush1.bf16.msra.mxu0 %v1103
      %1137 = vmatprep.subr.bf16.mxu0 %v1106
      %1138 = vmatpush1.bf16.msra.mxu0 %v1105
      %1139 = vmatprep.subr.bf16.mxu0 %v1108
      %1140 = vmatpush1.bf16.msra.mxu0 %v1107
      %1141 = vmatprep.subr.bf16.mxu0 %v1110
      %1142 = vmatpush1.bf16.msra.mxu0 %v1109
      %1143 = vmatprep.subr.bf16.mxu0 %v1112
      %1144 = vmatpush1.bf16.msra.mxu0 %v1111
      %1145 = vmatprep.subr.bf16.mxu0 %v1114
      %1146 = vmatpush1.bf16.msra.mxu0 %v1113
      %1147 = vmatprep.subr.bf16.mxu0 %v1116
      %1148 = vmatpush1.bf16.msra.mxu0 %v1115
      %1149 = vmatprep.subr.bf16.mxu0 %v1118
      %1150 = vmatpush1.bf16.msra.mxu0 %v1117
      %1151 = vmatprep.subr.bf16.mxu0 0
      %1152 = vmatpush1.bf16.msra.mxu0 0
      %1153 = vmatprep.subr.bf16.mxu0 0
      %1154 = vmatpush1.bf16.msra.mxu0 0
      %1155 = vmatprep.subr.bf16.mxu0 0
      %1156 = vmatpush1.bf16.msra.mxu0 0
      %1157 = vmatprep.subr.bf16.mxu0 0
      %1158 = vmatpush1.bf16.msra.mxu0 0
      %1159 = vmatprep.subr.bf16.mxu0 0
      %1160 = vmatpush1.bf16.msra.mxu0 0
      %1161 = vmatprep.subr.bf16.mxu0 0
      %1162 = vmatpush1.bf16.msra.mxu0 0
      %1163 = vmatprep.subr.bf16.mxu0 0
      %1164 = vmatpush1.bf16.msra.mxu0 0
      %1165 = vmatprep.subr.bf16.mxu0 0
      %1166 = vmatpush1.bf16.msra.mxu0 0
      %1167 = vmatprep.mubr.bf16.mxu0 0
      %1168 = vmatmul.mubr.bf16.gmra.mrb[0].mxu0 %v1047
      %v1169 = vpop.f32.mrb[0].mxu0
      %v1170 = vadd.f32 0.0, %v1169
      %v1171 = vpop.f32.mrb[0].mxu0
      %v1172 = vadd.f32 0.0, %v1171
      %v1173 = vpop.f32.mrb[0].mxu0
      %v1174 = vadd.f32 0.0, %v1173
      %v1175 = vpop.f32.mrb[0].mxu0
      %v1176 = vadd.f32 0.0, %v1175
      %1177 = vmatprep.mubr.bf16.mxu0 0
      %1178 = vmatmul.mubr.bf16.gmra.mrb[0].mxu0 %v1048
      %v1179 = vpop.f32.mrb[0].mxu0
      %v1180 = vadd.f32 0.0, %v1179
      %v1181 = vpop.f32.mrb[0].mxu0
      %v1182 = vadd.f32 0.0, %v1181
      %v1183 = vpop.f32.mrb[0].mxu0
      %v1184 = vadd.f32 0.0, %v1183
      %v1185 = vpop.f32.mrb[0].mxu0
      %v1186 = vadd.f32 0.0, %v1185
      %1187 = vmatprep.mubr.bf16.mxu0 0
      %1188 = vmatmul.mubr.bf16.gmra.mrb[0].mxu0 %v1049
      %v1189 = vpop.f32.mrb[0].mxu0
      %v1190 = vadd.f32 0.0, %v1189
      %v1191 = vpop.f32.mrb[0].mxu0
      %v1192 = vadd.f32 0.0, %v1191
      %v1193 = vpop.f32.mrb[0].mxu0
      %v1194 = vadd.f32 0.0, %v1193
      %v1195 = vpop.f32.mrb[0].mxu0
      %v1196 = vadd.f32 0.0, %v1195
      %1197 = vmatprep.mubr.bf16.mxu0 0
      %1198 = vmatmul.mubr.bf16.gmra.mrb[0].mxu0 %v1050
      %v1199 = vpop.f32.mrb[0].mxu0
      %v1200 = vadd.f32 0.0, %v1199
      %v1201 = vpop.f32.mrb[0].mxu0
      %v1202 = vadd.f32 0.0, %v1201
      %v1203 = vpop.f32.mrb[0].mxu0
      %v1204 = vadd.f32 0.0, %v1203
      %v1205 = vpop.f32.mrb[0].mxu0
      %v1206 = vadd.f32 0.0, %v1205
      %1207 = vdwg.mxu0
      %v1208 = vld [vmem:[#allocation2] sm:$0xff]
      %v1209 = vld [vmem:[#allocation2 + $0x8] sm:$0xff]
      %v1210 = vld [vmem:[#allocation2 + $0x10] sm:$0xff]
      %v1211 = vld [vmem:[#allocation2 + $0x18] sm:$0xff]
      %v1212 = vld [vmem:[#allocation2 + $0x20] sm:$0xff]
      %v1213 = vld [vmem:[#allocation2 + $0x28] sm:$0xff]
      %v1214 = vld [vmem:[#allocation2 + $0x30] sm:$0xff]
      %v1215 = vld [vmem:[#allocation2 + $0x38] sm:$0xff]
      %v1216 = vld [vmem:[#allocation2 + $0x40] sm:$0xff]
      %v1217 = vld [vmem:[#allocation2 + $0x48] sm:$0xff]
      %v1218 = vld [vmem:[#allocation2 + $0x50] sm:$0xff]
      %v1219 = vld [vmem:[#allocation2 + $0x58] sm:$0xff]
      %v1220 = vld [vmem:[#allocation2 + $0x60] sm:$0xff]
      %v1221 = vld [vmem:[#allocation2 + $0x68] sm:$0xff]
      %v1222 = vld [vmem:[#allocation2 + $0x70] sm:$0xff]
      %v1223 = vld [vmem:[#allocation2 + $0x78] sm:$0xff]
      %v1224 = vadd.f32 %v1208, %v1170
      %v1225 = vadd.f32 %v1209, %v1172
      %v1226 = vadd.f32 %v1210, %v1174
      %v1227 = vadd.f32 %v1211, %v1176
      %v1228 = vadd.f32 %v1212, %v1180
      %v1229 = vadd.f32 %v1213, %v1182
      %v1230 = vadd.f32 %v1214, %v1184
      %v1231 = vadd.f32 %v1215, %v1186
      %v1232 = vadd.f32 %v1216, %v1190
      %v1233 = vadd.f32 %v1217, %v1192
      %v1234 = vadd.f32 %v1218, %v1194
      %v1235 = vadd.f32 %v1219, %v1196
      %v1236 = vadd.f32 %v1220, %v1200
      %v1237 = vadd.f32 %v1221, %v1202
      %v1238 = vadd.f32 %v1222, %v1204
      %v1239 = vadd.f32 %v1223, %v1206
      %1240 = vst [vmem:[#allocation2] sm:$0xff] %v1224
      %1241 = vst [vmem:[#allocation2 + $0x8] sm:$0xff] %v1225
      %1242 = vst [vmem:[#allocation2 + $0x10] sm:$0xff] %v1226
      %1243 = vst [vmem:[#allocation2 + $0x18] sm:$0xff] %v1227
      %1244 = vst [vmem:[#allocation2 + $0x20] sm:$0xff] %v1228
      %1245 = vst [vmem:[#allocation2 + $0x28] sm:$0xff] %v1229
      %1246 = vst [vmem:[#allocation2 + $0x30] sm:$0xff] %v1230
      %1247 = vst [vmem:[#allocation2 + $0x38] sm:$0xff] %v1231
      %1248 = vst [vmem:[#allocation2 + $0x40] sm:$0xff] %v1232
      %1249 = vst [vmem:[#allocation2 + $0x48] sm:$0xff] %v1233
      %1250 = vst [vmem:[#allocation2 + $0x50] sm:$0xff] %v1234
      %1251 = vst [vmem:[#allocation2 + $0x58] sm:$0xff] %v1235
      %1252 = vst [vmem:[#allocation2 + $0x60] sm:$0xff] %v1236
      %1253 = vst [vmem:[#allocation2 + $0x68] sm:$0xff] %v1237
      %1254 = vst [vmem:[#allocation2 + $0x70] sm:$0xff] %v1238
      %1255 = vst [vmem:[#allocation2 + $0x78] sm:$0xff] %v1239
      %s1256 = scalar_lea.vmem %s165, 216
      %v1257 = vld [vmem:[%s1256] sm:$0xf]
      %v1258 = vld [vmem:[%s1256 + $0x8] sm:$0xf]
      %v1259 = vld [vmem:[%s1256 + $0x10] sm:$0xf]
      %v1260 = vld [vmem:[%s1256 + $0x18] sm:$0xf]
      %v1261 = vld [vmem:[%s1256 + $0x20] sm:$0xf]
      %v1262 = vld [vmem:[%s1256 + $0x28] sm:$0xf]
      %v1263 = vld [vmem:[%s1256 + $0x30] sm:$0xf]
      %v1264 = vld [vmem:[%s1256 + $0x38] sm:$0xf]
      %s1265 = scalar_lea.vmem %s1, 512
      %v1266 = vld [vmem:[%s1265] sm:$0xff]
      %v1267 = vld [vmem:[%s1265 + $0x8] sm:$0xff]
      %v1268 = vld [vmem:[%s1265 + $0x10] sm:$0xff]
      %v1269 = vld [vmem:[%s1265 + $0x18] sm:$0xff]
      %v1270 = vld [vmem:[%s1265 + $0x20] sm:$0xff]
      %v1271 = vld [vmem:[%s1265 + $0x28] sm:$0xff]
      %v1272 = vld [vmem:[%s1265 + $0x30] sm:$0xff]
      %v1273 = vld [vmem:[%s1265 + $0x38] sm:$0xff]
      %v1274 = vld [vmem:[%s1265 + $0x40] sm:$0xff]
      %v1275 = vld [vmem:[%s1265 + $0x48] sm:$0xff]
      %v1276 = vld [vmem:[%s1265 + $0x50] sm:$0xff]
      %v1277 = vld [vmem:[%s1265 + $0x58] sm:$0xff]
      %v1278 = vld [vmem:[%s1265 + $0x60] sm:$0xff]
      %v1279 = vld [vmem:[%s1265 + $0x68] sm:$0xff]
      %v1280 = vld [vmem:[%s1265 + $0x70] sm:$0xff]
      %v1281 = vld [vmem:[%s1265 + $0x78] sm:$0xff]
      %v1290 = vunpack.c.l.b16 %v1257
      %v1291 = vunpack.c.l.b16 %v1258
      %v1292 = vunpack.c.l.b16 %v1259
      %v1293 = vunpack.c.l.b16 %v1260
      %v1294 = vunpack.c.l.b16 %v1261
      %v1295 = vunpack.c.l.b16 %v1262
      %v1296 = vunpack.c.l.b16 %v1263
      %v1297 = vunpack.c.l.b16 %v1264
      %v1298 = vpack.c.b16 %v1291, %v1290
      %v1299 = vpack.c.b16 %v1293, %v1292
      %v1300 = vpack.c.b16 %v1295, %v1294
      %v1301 = vpack.c.b16 %v1297, %v1296
      %v1322 = vunpack.c.l.b16 %v1266
      %v1323 = vunpack.c.h.b16 %v1266
      %v1324 = vunpack.c.l.b16 %v1267
      %v1325 = vunpack.c.h.b16 %v1267
      %v1326 = vunpack.c.l.b16 %v1268
      %v1327 = vunpack.c.h.b16 %v1268
      %v1328 = vunpack.c.l.b16 %v1269
      %v1329 = vunpack.c.h.b16 %v1269
      %v1330 = vunpack.c.l.b16 %v1270
      %v1331 = vunpack.c.h.b16 %v1270
      %v1332 = vunpack.c.l.b16 %v1271
      %v1333 = vunpack.c.h.b16 %v1271
      %v1334 = vunpack.c.l.b16 %v1272
      %v1335 = vunpack.c.h.b16 %v1272
      %v1336 = vunpack.c.l.b16 %v1273
      %v1337 = vunpack.c.h.b16 %v1273
      %v1338 = vunpack.c.l.b16 %v1274
      %v1339 = vunpack.c.h.b16 %v1274
      %v1340 = vunpack.c.l.b16 %v1275
      %v1341 = vunpack.c.h.b16 %v1275
      %v1342 = vunpack.c.l.b16 %v1276
      %v1343 = vunpack.c.h.b16 %v1276
      %v1344 = vunpack.c.l.b16 %v1277
      %v1345 = vunpack.c.h.b16 %v1277
      %v1346 = vunpack.c.l.b16 %v1278
      %v1347 = vunpack.c.h.b16 %v1278
      %v1348 = vunpack.c.l.b16 %v1279
      %v1349 = vunpack.c.h.b16 %v1279
      %v1350 = vunpack.c.l.b16 %v1280
      %v1351 = vunpack.c.h.b16 %v1280
      %v1352 = vunpack.c.l.b16 %v1281
      %v1353 = vunpack.c.h.b16 %v1281
      %v1354 = vpack.c.b16 %v1324, %v1322
      %v1355 = vpack.c.b16 %v1325, %v1323
      %v1356 = vpack.c.b16 %v1328, %v1326
      %v1357 = vpack.c.b16 %v1329, %v1327
      %v1358 = vpack.c.b16 %v1332, %v1330
      %v1359 = vpack.c.b16 %v1333, %v1331
      %v1360 = vpack.c.b16 %v1336, %v1334
      %v1361 = vpack.c.b16 %v1337, %v1335
      %v1362 = vpack.c.b16 %v1340, %v1338
      %v1363 = vpack.c.b16 %v1341, %v1339
      %v1364 = vpack.c.b16 %v1344, %v1342
      %v1365 = vpack.c.b16 %v1345, %v1343
      %v1366 = vpack.c.b16 %v1348, %v1346
      %v1367 = vpack.c.b16 %v1349, %v1347
      %v1368 = vpack.c.b16 %v1352, %v1350
      %v1369 = vpack.c.b16 %v1353, %v1351
      %1386 = vmatprep.subr.bf16.mxu0 %v1355
      %1387 = vmatpush1.bf16.msra.mxu0 %v1354
      %1388 = vmatprep.subr.bf16.mxu0 %v1357
      %1389 = vmatpush1.bf16.msra.mxu0 %v1356
      %1390 = vmatprep.subr.bf16.mxu0 %v1359
      %1391 = vmatpush1.bf16.msra.mxu0 %v1358
      %1392 = vmatprep.subr.bf16.mxu0 %v1361
      %1393 = vmatpush1.bf16.msra.mxu0 %v1360
      %1394 = vmatprep.subr.bf16.mxu0 %v1363
      %1395 = vmatpush1.bf16.msra.mxu0 %v1362
      %1396 = vmatprep.subr.bf16.mxu0 %v1365
      %1397 = vmatpush1.bf16.msra.mxu0 %v1364
      %1398 = vmatprep.subr.bf16.mxu0 %v1367
      %1399 = vmatpush1.bf16.msra.mxu0 %v1366
      %1400 = vmatprep.subr.bf16.mxu0 %v1369
      %1401 = vmatpush1.bf16.msra.mxu0 %v1368
      %1402 = vmatprep.subr.bf16.mxu0 0
      %1403 = vmatpush1.bf16.msra.mxu0 0
      %1404 = vmatprep.subr.bf16.mxu0 0
      %1405 = vmatpush1.bf16.msra.mxu0 0
      %1406 = vmatprep.subr.bf16.mxu0 0
      %1407 = vmatpush1.bf16.msra.mxu0 0
      %1408 = vmatprep.subr.bf16.mxu0 0
      %1409 = vmatpush1.bf16.msra.mxu0 0
      %1410 = vmatprep.subr.bf16.mxu0 0
      %1411 = vmatpush1.bf16.msra.mxu0 0
      %1412 = vmatprep.subr.bf16.mxu0 0
      %1413 = vmatpush1.bf16.msra.mxu0 0
      %1414 = vmatprep.subr.bf16.mxu0 0
      %1415 = vmatpush1.bf16.msra.mxu0 0
      %1416 = vmatprep.subr.bf16.mxu0 0
      %1417 = vmatpush1.bf16.msra.mxu0 0
      %1418 = vmatprep.mubr.bf16.mxu0 0
      %1419 = vmatmul.mubr.bf16.gmra.mrb[0].mxu0 %v1298
      %v1420 = vpop.f32.mrb[0].mxu0
      %v1421 = vadd.f32 0.0, %v1420
      %v1422 = vpop.f32.mrb[0].mxu0
      %v1423 = vadd.f32 0.0, %v1422
      %v1424 = vpop.f32.mrb[0].mxu0
      %v1425 = vadd.f32 0.0, %v1424
      %v1426 = vpop.f32.mrb[0].mxu0
      %v1427 = vadd.f32 0.0, %v1426
      %1428 = vmatprep.mubr.bf16.mxu0 0
      %1429 = vmatmul.mubr.bf16.gmra.mrb[0].mxu0 %v1299
      %v1430 = vpop.f32.mrb[0].mxu0
      %v1431 = vadd.f32 0.0, %v1430
      %v1432 = vpop.f32.mrb[0].mxu0
      %v1433 = vadd.f32 0.0, %v1432
      %v1434 = vpop.f32.mrb[0].mxu0
      %v1435 = vadd.f32 0.0, %v1434
      %v1436 = vpop.f32.mrb[0].mxu0
      %v1437 = vadd.f32 0.0, %v1436
      %1438 = vmatprep.mubr.bf16.mxu0 0
      %1439 = vmatmul.mubr.bf16.gmra.mrb[0].mxu0 %v1300
      %v1440 = vpop.f32.mrb[0].mxu0
      %v1441 = vadd.f32 0.0, %v1440
      %v1442 = vpop.f32.mrb[0].mxu0
      %v1443 = vadd.f32 0.0, %v1442
      %v1444 = vpop.f32.mrb[0].mxu0
      %v1445 = vadd.f32 0.0, %v1444
      %v1446 = vpop.f32.mrb[0].mxu0
      %v1447 = vadd.f32 0.0, %v1446
      %1448 = vmatprep.mubr.bf16.mxu0 0
      %1449 = vmatmul.mubr.bf16.gmra.mrb[0].mxu0 %v1301
      %v1450 = vpop.f32.mrb[0].mxu0
      %v1451 = vadd.f32 0.0, %v1450
      %v1452 = vpop.f32.mrb[0].mxu0
      %v1453 = vadd.f32 0.0, %v1452
      %v1454 = vpop.f32.mrb[0].mxu0
      %v1455 = vadd.f32 0.0, %v1454
      %v1456 = vpop.f32.mrb[0].mxu0
      %v1457 = vadd.f32 0.0, %v1456
      %1458 = vdwg.mxu0
      %v1459 = vld [vmem:[#allocation2] sm:$0xff]
      %v1460 = vld [vmem:[#allocation2 + $0x8] sm:$0xff]
      %v1461 = vld [vmem:[#allocation2 + $0x10] sm:$0xff]
      %v1462 = vld [vmem:[#allocation2 + $0x18] sm:$0xff]
      %v1463 = vld [vmem:[#allocation2 + $0x20] sm:$0xff]
      %v1464 = vld [vmem:[#allocation2 + $0x28] sm:$0xff]
      %v1465 = vld [vmem:[#allocation2 + $0x30] sm:$0xff]
      %v1466 = vld [vmem:[#allocation2 + $0x38] sm:$0xff]
      %v1467 = vld [vmem:[#allocation2 + $0x40] sm:$0xff]
      %v1468 = vld [vmem:[#allocation2 + $0x48] sm:$0xff]
      %v1469 = vld [vmem:[#allocation2 + $0x50] sm:$0xff]
      %v1470 = vld [vmem:[#allocation2 + $0x58] sm:$0xff]
      %v1471 = vld [vmem:[#allocation2 + $0x60] sm:$0xff]
      %v1472 = vld [vmem:[#allocation2 + $0x68] sm:$0xff]
      %v1473 = vld [vmem:[#allocation2 + $0x70] sm:$0xff]
      %v1474 = vld [vmem:[#allocation2 + $0x78] sm:$0xff]
      %v1475 = vadd.f32 %v1459, %v1421
      %v1476 = vadd.f32 %v1460, %v1423
      %v1477 = vadd.f32 %v1461, %v1425
      %v1478 = vadd.f32 %v1462, %v1427
      %v1479 = vadd.f32 %v1463, %v1431
      %v1480 = vadd.f32 %v1464, %v1433
      %v1481 = vadd.f32 %v1465, %v1435
      %v1482 = vadd.f32 %v1466, %v1437
      %v1483 = vadd.f32 %v1467, %v1441
      %v1484 = vadd.f32 %v1468, %v1443
      %v1485 = vadd.f32 %v1469, %v1445
      %v1486 = vadd.f32 %v1470, %v1447
      %v1487 = vadd.f32 %v1471, %v1451
      %v1488 = vadd.f32 %v1472, %v1453
      %v1489 = vadd.f32 %v1473, %v1455
      %v1490 = vadd.f32 %v1474, %v1457
      %1491 = vst [vmem:[#allocation2] sm:$0xff] %v1475
      %1492 = vst [vmem:[#allocation2 + $0x8] sm:$0xff] %v1476
      %1493 = vst [vmem:[#allocation2 + $0x10] sm:$0xff] %v1477
      %1494 = vst [vmem:[#allocation2 + $0x18] sm:$0xff] %v1478
      %1495 = vst [vmem:[#allocation2 + $0x20] sm:$0xff] %v1479
      %1496 = vst [vmem:[#allocation2 + $0x28] sm:$0xff] %v1480
      %1497 = vst [vmem:[#allocation2 + $0x30] sm:$0xff] %v1481
      %1498 = vst [vmem:[#allocation2 + $0x38] sm:$0xff] %v1482
      %1499 = vst [vmem:[#allocation2 + $0x40] sm:$0xff] %v1483
      %1500 = vst [vmem:[#allocation2 + $0x48] sm:$0xff] %v1484
      %1501 = vst [vmem:[#allocation2 + $0x50] sm:$0xff] %v1485
      %1502 = vst [vmem:[#allocation2 + $0x58] sm:$0xff] %v1486
      %1503 = vst [vmem:[#allocation2 + $0x60] sm:$0xff] %v1487
      %1504 = vst [vmem:[#allocation2 + $0x68] sm:$0xff] %v1488
      %1505 = vst [vmem:[#allocation2 + $0x70] sm:$0xff] %v1489
      %1506 = vst [vmem:[#allocation2 + $0x78] sm:$0xff] %v1490
      %v1507 = vld [vmem:[%s1005] sm:$0xf]
      %v1508 = vld [vmem:[%s1005 + $0x4] sm:$0x1]
      %v1509 = vld [vmem:[%s1005 + $0x8] sm:$0xf]
      %v1510 = vld [vmem:[%s1005 + $0xc] sm:$0x1]
      %v1511 = vld [vmem:[%s1005 + $0x10] sm:$0xf]
      %v1512 = vld [vmem:[%s1005 + $0x14] sm:$0x1]
      %v1513 = vld [vmem:[%s1005 + $0x18] sm:$0xf]
      %v1514 = vld [vmem:[%s1005 + $0x1c] sm:$0x1]
      %v1515 = vld [vmem:[%s1005 + $0x20] sm:$0xf]
      %v1516 = vld [vmem:[%s1005 + $0x24] sm:$0x1]
      %v1517 = vld [vmem:[%s1005 + $0x28] sm:$0xf]
      %v1518 = vld [vmem:[%s1005 + $0x2c] sm:$0x1]
      %v1519 = vld [vmem:[%s1005 + $0x30] sm:$0xf]
      %v1520 = vld [vmem:[%s1005 + $0x34] sm:$0x1]
      %v1521 = vld [vmem:[%s1005 + $0x38] sm:$0xf]
      %v1522 = vld [vmem:[%s1005 + $0x3c] sm:$0x1]
      %v1524 = vshrl.u32 %v1507, 16
      %v1526 = vrot.slane %v1524, 4
      %v1527 = vshll.u32 %v1507, 16
      %v1529 = vrot.slane %v1527, 5
      %v1530 = vor.u32 %v1526, %v1529
      %v1531 = vrot.slane %v1530, 4
      %v1533 = vshll.u32 %v1508, 16
      %v1535 = vrot.slane %v1533, 5
      %v1536 = vsel %vm658, %v1531, %v1535
      %v1538 = vshrl.u32 %v1509, 16
      %v1540 = vrot.slane %v1538, 4
      %v1541 = vshll.u32 %v1509, 16
      %v1543 = vrot.slane %v1541, 5
      %v1544 = vor.u32 %v1540, %v1543
      %v1545 = vrot.slane %v1544, 4
      %v1547 = vshll.u32 %v1510, 16
      %v1549 = vrot.slane %v1547, 5
      %v1550 = vsel %vm658, %v1545, %v1549
      %v1552 = vshrl.u32 %v1511, 16
      %v1554 = vrot.slane %v1552, 4
      %v1555 = vshll.u32 %v1511, 16
      %v1557 = vrot.slane %v1555, 5
      %v1558 = vor.u32 %v1554, %v1557
      %v1559 = vrot.slane %v1558, 4
      %v1561 = vshll.u32 %v1512, 16
      %v1563 = vrot.slane %v1561, 5
      %v1564 = vsel %vm658, %v1559, %v1563
      %v1566 = vshrl.u32 %v1513, 16
      %v1568 = vrot.slane %v1566, 4
      %v1569 = vshll.u32 %v1513, 16
      %v1571 = vrot.slane %v1569, 5
      %v1572 = vor.u32 %v1568, %v1571
      %v1573 = vrot.slane %v1572, 4
      %v1575 = vshll.u32 %v1514, 16
      %v1577 = vrot.slane %v1575, 5
      %v1578 = vsel %vm658, %v1573, %v1577
      %v1580 = vshrl.u32 %v1515, 16
      %v1582 = vrot.slane %v1580, 4
      %v1583 = vshll.u32 %v1515, 16
      %v1585 = vrot.slane %v1583, 5
      %v1586 = vor.u32 %v1582, %v1585
      %v1587 = vrot.slane %v1586, 4
      %v1589 = vshll.u32 %v1516, 16
      %v1591 = vrot.slane %v1589, 5
      %v1592 = vsel %vm658, %v1587, %v1591
      %v1594 = vshrl.u32 %v1517, 16
      %v1596 = vrot.slane %v1594, 4
      %v1597 = vshll.u32 %v1517, 16
      %v1599 = vrot.slane %v1597, 5
      %v1600 = vor.u32 %v1596, %v1599
      %v1601 = vrot.slane %v1600, 4
      %v1603 = vshll.u32 %v1518, 16
      %v1605 = vrot.slane %v1603, 5
      %v1606 = vsel %vm658, %v1601, %v1605
      %v1608 = vshrl.u32 %v1519, 16
      %v1610 = vrot.slane %v1608, 4
      %v1611 = vshll.u32 %v1519, 16
      %v1613 = vrot.slane %v1611, 5
      %v1614 = vor.u32 %v1610, %v1613
      %v1615 = vrot.slane %v1614, 4
      %v1617 = vshll.u32 %v1520, 16
      %v1619 = vrot.slane %v1617, 5
      %v1620 = vsel %vm658, %v1615, %v1619
      %v1622 = vshrl.u32 %v1521, 16
      %v1624 = vrot.slane %v1622, 4
      %v1625 = vshll.u32 %v1521, 16
      %v1627 = vrot.slane %v1625, 5
      %v1628 = vor.u32 %v1624, %v1627
      %v1629 = vrot.slane %v1628, 4
      %v1631 = vshll.u32 %v1522, 16
      %v1633 = vrot.slane %v1631, 5
      %v1634 = vsel %vm658, %v1629, %v1633
      %s1635 = scalar_lea.vmem %s1, 640
      %v1636 = vld [vmem:[%s1635] sm:$0xff]
      %v1637 = vld [vmem:[%s1635 + $0x8] sm:$0xff]
      %v1638 = vld [vmem:[%s1635 + $0x10] sm:$0xff]
      %v1639 = vld [vmem:[%s1635 + $0x18] sm:$0xff]
      %v1640 = vld [vmem:[%s1635 + $0x20] sm:$0xff]
      %v1641 = vld [vmem:[%s1635 + $0x28] sm:$0xff]
      %v1642 = vld [vmem:[%s1635 + $0x30] sm:$0xff]
      %v1643 = vld [vmem:[%s1635 + $0x38] sm:$0xff]
      %v1644 = vld [vmem:[%s1635 + $0x40] sm:$0xff]
      %v1645 = vld [vmem:[%s1635 + $0x48] sm:$0xff]
      %v1646 = vld [vmem:[%s1635 + $0x50] sm:$0xff]
      %v1647 = vld [vmem:[%s1635 + $0x58] sm:$0xff]
      %v1648 = vld [vmem:[%s1635 + $0x60] sm:$0xff]
      %v1649 = vld [vmem:[%s1635 + $0x68] sm:$0xff]
      %v1650 = vld [vmem:[%s1635 + $0x70] sm:$0xff]
      %v1651 = vld [vmem:[%s1635 + $0x78] sm:$0xff]
      %v1652 = vunpack.c.l.b16 %v1536
      %v1653 = vunpack.c.l.b16 %v1550
      %v1654 = vunpack.c.l.b16 %v1564
      %v1655 = vunpack.c.l.b16 %v1578
      %v1656 = vunpack.c.l.b16 %v1592
      %v1657 = vunpack.c.l.b16 %v1606
      %v1658 = vunpack.c.l.b16 %v1620
      %v1659 = vunpack.c.l.b16 %v1634
      %v1660 = vpack.c.b16 %v1653, %v1652
      %v1661 = vpack.c.b16 %v1655, %v1654
      %v1662 = vpack.c.b16 %v1657, %v1656
      %v1663 = vpack.c.b16 %v1659, %v1658
      %v1684 = vunpack.c.l.b16 %v1636
      %v1685 = vunpack.c.h.b16 %v1636
      %v1686 = vunpack.c.l.b16 %v1637
      %v1687 = vunpack.c.h.b16 %v1637
      %v1688 = vunpack.c.l.b16 %v1638
      %v1689 = vunpack.c.h.b16 %v1638
      %v1690 = vunpack.c.l.b16 %v1639
      %v1691 = vunpack.c.h.b16 %v1639
      %v1692 = vunpack.c.l.b16 %v1640
      %v1693 = vunpack.c.h.b16 %v1640
      %v1694 = vunpack.c.l.b16 %v1641
      %v1695 = vunpack.c.h.b16 %v1641
      %v1696 = vunpack.c.l.b16 %v1642
      %v1697 = vunpack.c.h.b16 %v1642
      %v1698 = vunpack.c.l.b16 %v1643
      %v1699 = vunpack.c.h.b16 %v1643
      %v1700 = vunpack.c.l.b16 %v1644
      %v1701 = vunpack.c.h.b16 %v1644
      %v1702 = vunpack.c.l.b16 %v1645
      %v1703 = vunpack.c.h.b16 %v1645
      %v1704 = vunpack.c.l.b16 %v1646
      %v1705 = vunpack.c.h.b16 %v1646
      %v1706 = vunpack.c.l.b16 %v1647
      %v1707 = vunpack.c.h.b16 %v1647
      %v1708 = vunpack.c.l.b16 %v1648
      %v1709 = vunpack.c.h.b16 %v1648
      %v1710 = vunpack.c.l.b16 %v1649
      %v1711 = vunpack.c.h.b16 %v1649
      %v1712 = vunpack.c.l.b16 %v1650
      %v1713 = vunpack.c.h.b16 %v1650
      %v1714 = vunpack.c.l.b16 %v1651
      %v1715 = vunpack.c.h.b16 %v1651
      %v1716 = vpack.c.b16 %v1686, %v1684
      %v1717 = vpack.c.b16 %v1687, %v1685
      %v1718 = vpack.c.b16 %v1690, %v1688
      %v1719 = vpack.c.b16 %v1691, %v1689
      %v1720 = vpack.c.b16 %v1694, %v1692
      %v1721 = vpack.c.b16 %v1695, %v1693
      %v1722 = vpack.c.b16 %v1698, %v1696
      %v1723 = vpack.c.b16 %v1699, %v1697
      %v1724 = vpack.c.b16 %v1702, %v1700
      %v1725 = vpack.c.b16 %v1703, %v1701
      %v1726 = vpack.c.b16 %v1706, %v1704
      %v1727 = vpack.c.b16 %v1707, %v1705
      %v1728 = vpack.c.b16 %v1710, %v1708
      %v1729 = vpack.c.b16 %v1711, %v1709
      %v1730 = vpack.c.b16 %v1714, %v1712
      %v1731 = vpack.c.b16 %v1715, %v1713
      %1748 = vmatprep.subr.bf16.mxu0 %v1717
      %1749 = vmatpush1.bf16.msra.mxu0 %v1716
      %1750 = vmatprep.subr.bf16.mxu0 %v1719
      %1751 = vmatpush1.bf16.msra.mxu0 %v1718
      %1752 = vmatprep.subr.bf16.mxu0 %v1721
      %1753 = vmatpush1.bf16.msra.mxu0 %v1720
      %1754 = vmatprep.subr.bf16.mxu0 %v1723
      %1755 = vmatpush1.bf16.msra.mxu0 %v1722
      %1756 = vmatprep.subr.bf16.mxu0 %v1725
      %1757 = vmatpush1.bf16.msra.mxu0 %v1724
      %1758 = vmatprep.subr.bf16.mxu0 %v1727
      %1759 = vmatpush1.bf16.msra.mxu0 %v1726
      %1760 = vmatprep.subr.bf16.mxu0 %v1729
      %1761 = vmatpush1.bf16.msra.mxu0 %v1728
      %1762 = vmatprep.subr.bf16.mxu0 %v1731
      %1763 = vmatpush1.bf16.msra.mxu0 %v1730
      %1764 = vmatprep.subr.bf16.mxu0 0
      %1765 = vmatpush1.bf16.msra.mxu0 0
      %1766 = vmatprep.subr.bf16.mxu0 0
      %1767 = vmatpush1.bf16.msra.mxu0 0
      %1768 = vmatprep.subr.bf16.mxu0 0
      %1769 = vmatpush1.bf16.msra.mxu0 0
      %1770 = vmatprep.subr.bf16.mxu0 0
      %1771 = vmatpush1.bf16.msra.mxu0 0
      %1772 = vmatprep.subr.bf16.mxu0 0
      %1773 = vmatpush1.bf16.msra.mxu0 0
      %1774 = vmatprep.subr.bf16.mxu0 0
      %1775 = vmatpush1.bf16.msra.mxu0 0
      %1776 = vmatprep.subr.bf16.mxu0 0
      %1777 = vmatpush1.bf16.msra.mxu0 0
      %1778 = vmatprep.subr.bf16.mxu0 0
      %1779 = vmatpush1.bf16.msra.mxu0 0
      %1780 = vmatprep.mubr.bf16.mxu0 0
      %1781 = vmatmul.mubr.bf16.gmra.mrb[0].mxu0 %v1660
      %v1782 = vpop.f32.mrb[0].mxu0
      %v1783 = vadd.f32 0.0, %v1782
      %v1784 = vpop.f32.mrb[0].mxu0
      %v1785 = vadd.f32 0.0, %v1784
      %v1786 = vpop.f32.mrb[0].mxu0
      %v1787 = vadd.f32 0.0, %v1786
      %v1788 = vpop.f32.mrb[0].mxu0
      %v1789 = vadd.f32 0.0, %v1788
      %1790 = vmatprep.mubr.bf16.mxu0 0
      %1791 = vmatmul.mubr.bf16.gmra.mrb[0].mxu0 %v1661
      %v1792 = vpop.f32.mrb[0].mxu0
      %v1793 = vadd.f32 0.0, %v1792
      %v1794 = vpop.f32.mrb[0].mxu0
      %v1795 = vadd.f32 0.0, %v1794
      %v1796 = vpop.f32.mrb[0].mxu0
      %v1797 = vadd.f32 0.0, %v1796
      %v1798 = vpop.f32.mrb[0].mxu0
      %v1799 = vadd.f32 0.0, %v1798
      %1800 = vmatprep.mubr.bf16.mxu0 0
      %1801 = vmatmul.mubr.bf16.gmra.mrb[0].mxu0 %v1662
      %v1802 = vpop.f32.mrb[0].mxu0
      %v1803 = vadd.f32 0.0, %v1802
      %v1804 = vpop.f32.mrb[0].mxu0
      %v1805 = vadd.f32 0.0, %v1804
      %v1806 = vpop.f32.mrb[0].mxu0
      %v1807 = vadd.f32 0.0, %v1806
      %v1808 = vpop.f32.mrb[0].mxu0
      %v1809 = vadd.f32 0.0, %v1808
      %1810 = vmatprep.mubr.bf16.mxu0 0
      %1811 = vmatmul.mubr.bf16.gmra.mrb[0].mxu0 %v1663
      %v1812 = vpop.f32.mrb[0].mxu0
      %v1813 = vadd.f32 0.0, %v1812
      %v1814 = vpop.f32.mrb[0].mxu0
      %v1815 = vadd.f32 0.0, %v1814
      %v1816 = vpop.f32.mrb[0].mxu0
      %v1817 = vadd.f32 0.0, %v1816
      %v1818 = vpop.f32.mrb[0].mxu0
      %v1819 = vadd.f32 0.0, %v1818
      %1820 = vdwg.mxu0
      %v1821 = vld [vmem:[#allocation2] sm:$0xff]
      %v1822 = vld [vmem:[#allocation2 + $0x8] sm:$0xff]
      %v1823 = vld [vmem:[#allocation2 + $0x10] sm:$0xff]
      %v1824 = vld [vmem:[#allocation2 + $0x18] sm:$0xff]
      %v1825 = vld [vmem:[#allocation2 + $0x20] sm:$0xff]
      %v1826 = vld [vmem:[#allocation2 + $0x28] sm:$0xff]
      %v1827 = vld [vmem:[#allocation2 + $0x30] sm:$0xff]
      %v1828 = vld [vmem:[#allocation2 + $0x38] sm:$0xff]
      %v1829 = vld [vmem:[#allocation2 + $0x40] sm:$0xff]
      %v1830 = vld [vmem:[#allocation2 + $0x48] sm:$0xff]
      %v1831 = vld [vmem:[#allocation2 + $0x50] sm:$0xff]
      %v1832 = vld [vmem:[#allocation2 + $0x58] sm:$0xff]
      %v1833 = vld [vmem:[#allocation2 + $0x60] sm:$0xff]
      %v1834 = vld [vmem:[#allocation2 + $0x68] sm:$0xff]
      %v1835 = vld [vmem:[#allocation2 + $0x70] sm:$0xff]
      %v1836 = vld [vmem:[#allocation2 + $0x78] sm:$0xff]
      %v1837 = vadd.f32 %v1821, %v1783
      %v1838 = vadd.f32 %v1822, %v1785
      %v1839 = vadd.f32 %v1823, %v1787
      %v1840 = vadd.f32 %v1824, %v1789
      %v1841 = vadd.f32 %v1825, %v1793
      %v1842 = vadd.f32 %v1826, %v1795
      %v1843 = vadd.f32 %v1827, %v1797
      %v1844 = vadd.f32 %v1828, %v1799
      %v1845 = vadd.f32 %v1829, %v1803
      %v1846 = vadd.f32 %v1830, %v1805
      %v1847 = vadd.f32 %v1831, %v1807
      %v1848 = vadd.f32 %v1832, %v1809
      %v1849 = vadd.f32 %v1833, %v1813
      %v1850 = vadd.f32 %v1834, %v1815
      %v1851 = vadd.f32 %v1835, %v1817
      %v1852 = vadd.f32 %v1836, %v1819
      %1853 = vst [vmem:[#allocation2] sm:$0xff] %v1837
      %1854 = vst [vmem:[#allocation2 + $0x8] sm:$0xff] %v1838
      %1855 = vst [vmem:[#allocation2 + $0x10] sm:$0xff] %v1839
      %1856 = vst [vmem:[#allocation2 + $0x18] sm:$0xff] %v1840
      %1857 = vst [vmem:[#allocation2 + $0x20] sm:$0xff] %v1841
      %1858 = vst [vmem:[#allocation2 + $0x28] sm:$0xff] %v1842
      %1859 = vst [vmem:[#allocation2 + $0x30] sm:$0xff] %v1843
      %1860 = vst [vmem:[#allocation2 + $0x38] sm:$0xff] %v1844
      %1861 = vst [vmem:[#allocation2 + $0x40] sm:$0xff] %v1845
      %1862 = vst [vmem:[#allocation2 + $0x48] sm:$0xff] %v1846
      %1863 = vst [vmem:[#allocation2 + $0x50] sm:$0xff] %v1847
      %1864 = vst [vmem:[#allocation2 + $0x58] sm:$0xff] %v1848
      %1865 = vst [vmem:[#allocation2 + $0x60] sm:$0xff] %v1849
      %1866 = vst [vmem:[#allocation2 + $0x68] sm:$0xff] %v1850
      %1867 = vst [vmem:[#allocation2 + $0x70] sm:$0xff] %v1851
      %1868 = vst [vmem:[#allocation2 + $0x78] sm:$0xff] %v1852
      %s1869 = scalar_lea.vmem %s165, 8
      %v1870 = vld [vmem:[%s1869] sm:$0xf]
      %v1871 = vld [vmem:[%s1869 + $0x8] sm:$0xf]
      %v1872 = vld [vmem:[%s1869 + $0x10] sm:$0xf]
      %v1873 = vld [vmem:[%s1869 + $0x18] sm:$0xf]
      %v1874 = vld [vmem:[%s1869 + $0x20] sm:$0xf]
      %v1875 = vld [vmem:[%s1869 + $0x28] sm:$0xf]
      %v1876 = vld [vmem:[%s1869 + $0x30] sm:$0xf]
      %v1877 = vld [vmem:[%s1869 + $0x38] sm:$0xf]
      %s1878 = scalar_lea.vmem %s1, 768
      %v1879 = vld [vmem:[%s1878] sm:$0xff]
      %v1880 = vld [vmem:[%s1878 + $0x8] sm:$0xff]
      %v1881 = vld [vmem:[%s1878 + $0x10] sm:$0xff]
      %v1882 = vld [vmem:[%s1878 + $0x18] sm:$0xff]
      %v1883 = vld [vmem:[%s1878 + $0x20] sm:$0xff]
      %v1884 = vld [vmem:[%s1878 + $0x28] sm:$0xff]
      %v1885 = vld [vmem:[%s1878 + $0x30] sm:$0xff]
      %v1886 = vld [vmem:[%s1878 + $0x38] sm:$0xff]
      %v1887 = vld [vmem:[%s1878 + $0x40] sm:$0xff]
      %v1888 = vld [vmem:[%s1878 + $0x48] sm:$0xff]
      %v1889 = vld [vmem:[%s1878 + $0x50] sm:$0xff]
      %v1890 = vld [vmem:[%s1878 + $0x58] sm:$0xff]
      %v1891 = vld [vmem:[%s1878 + $0x60] sm:$0xff]
      %v1892 = vld [vmem:[%s1878 + $0x68] sm:$0xff]
      %v1893 = vld [vmem:[%s1878 + $0x70] sm:$0xff]
      %v1894 = vld [vmem:[%s1878 + $0x78] sm:$0xff]
      %v1903 = vunpack.c.l.b16 %v1870
      %v1904 = vunpack.c.l.b16 %v1871
      %v1905 = vunpack.c.l.b16 %v1872
      %v1906 = vunpack.c.l.b16 %v1873
      %v1907 = vunpack.c.l.b16 %v1874
      %v1908 = vunpack.c.l.b16 %v1875
      %v1909 = vunpack.c.l.b16 %v1876
      %v1910 = vunpack.c.l.b16 %v1877
      %v1911 = vpack.c.b16 %v1904, %v1903
      %v1912 = vpack.c.b16 %v1906, %v1905
      %v1913 = vpack.c.b16 %v1908, %v1907
      %v1914 = vpack.c.b16 %v1910, %v1909
      %v1935 = vunpack.c.l.b16 %v1879
      %v1936 = vunpack.c.h.b16 %v1879
      %v1937 = vunpack.c.l.b16 %v1880
      %v1938 = vunpack.c.h.b16 %v1880
      %v1939 = vunpack.c.l.b16 %v1881
      %v1940 = vunpack.c.h.b16 %v1881
      %v1941 = vunpack.c.l.b16 %v1882
      %v1942 = vunpack.c.h.b16 %v1882
      %v1943 = vunpack.c.l.b16 %v1883
      %v1944 = vunpack.c.h.b16 %v1883
      %v1945 = vunpack.c.l.b16 %v1884
      %v1946 = vunpack.c.h.b16 %v1884
      %v1947 = vunpack.c.l.b16 %v1885
      %v1948 = vunpack.c.h.b16 %v1885
      %v1949 = vunpack.c.l.b16 %v1886
      %v1950 = vunpack.c.h.b16 %v1886
      %v1951 = vunpack.c.l.b16 %v1887
      %v1952 = vunpack.c.h.b16 %v1887
      %v1953 = vunpack.c.l.b16 %v1888
      %v1954 = vunpack.c.h.b16 %v1888
      %v1955 = vunpack.c.l.b16 %v1889
      %v1956 = vunpack.c.h.b16 %v1889
      %v1957 = vunpack.c.l.b16 %v1890
      %v1958 = vunpack.c.h.b16 %v1890
      %v1959 = vunpack.c.l.b16 %v1891
      %v1960 = vunpack.c.h.b16 %v1891
      %v1961 = vunpack.c.l.b16 %v1892
      %v1962 = vunpack.c.h.b16 %v1892
      %v1963 = vunpack.c.l.b16 %v1893
      %v1964 = vunpack.c.h.b16 %v1893
      %v1965 = vunpack.c.l.b16 %v1894
      %v1966 = vunpack.c.h.b16 %v1894
      %v1967 = vpack.c.b16 %v1937, %v1935
      %v1968 = vpack.c.b16 %v1938, %v1936
      %v1969 = vpack.c.b16 %v1941, %v1939
      %v1970 = vpack.c.b16 %v1942, %v1940
      %v1971 = vpack.c.b16 %v1945, %v1943
      %v1972 = vpack.c.b16 %v1946, %v1944
      %v1973 = vpack.c.b16 %v1949, %v1947
      %v1974 = vpack.c.b16 %v1950, %v1948
      %v1975 = vpack.c.b16 %v1953, %v1951
      %v1976 = vpack.c.b16 %v1954, %v1952
      %v1977 = vpack.c.b16 %v1957, %v1955
      %v1978 = vpack.c.b16 %v1958, %v1956
      %v1979 = vpack.c.b16 %v1961, %v1959
      %v1980 = vpack.c.b16 %v1962, %v1960
      %v1981 = vpack.c.b16 %v1965, %v1963
      %v1982 = vpack.c.b16 %v1966, %v1964
      %1999 = vmatprep.subr.bf16.mxu0 %v1968
      %2000 = vmatpush1.bf16.msra.mxu0 %v1967
      %2001 = vmatprep.subr.bf16.mxu0 %v1970
      %2002 = vmatpush1.bf16.msra.mxu0 %v1969
      %2003 = vmatprep.subr.bf16.mxu0 %v1972
      %2004 = vmatpush1.bf16.msra.mxu0 %v1971
      %2005 = vmatprep.subr.bf16.mxu0 %v1974
      %2006 = vmatpush1.bf16.msra.mxu0 %v1973
      %2007 = vmatprep.subr.bf16.mxu0 %v1976
      %2008 = vmatpush1.bf16.msra.mxu0 %v1975
      %2009 = vmatprep.subr.bf16.mxu0 %v1978
      %2010 = vmatpush1.bf16.msra.mxu0 %v1977
      %2011 = vmatprep.subr.bf16.mxu0 %v1980
      %2012 = vmatpush1.bf16.msra.mxu0 %v1979
      %2013 = vmatprep.subr.bf16.mxu0 %v1982
      %2014 = vmatpush1.bf16.msra.mxu0 %v1981
      %2015 = vmatprep.subr.bf16.mxu0 0
      %2016 = vmatpush1.bf16.msra.mxu0 0
      %2017 = vmatprep.subr.bf16.mxu0 0
      %2018 = vmatpush1.bf16.msra.mxu0 0
      %2019 = vmatprep.subr.bf16.mxu0 0
      %2020 = vmatpush1.bf16.msra.mxu0 0
      %2021 = vmatprep.subr.bf16.mxu0 0
      %2022 = vmatpush1.bf16.msra.mxu0 0
      %2023 = vmatprep.subr.bf16.mxu0 0
      %2024 = vmatpush1.bf16.msra.mxu0 0
      %2025 = vmatprep.subr.bf16.mxu0 0
      %2026 = vmatpush1.bf16.msra.mxu0 0
      %2027 = vmatprep.subr.bf16.mxu0 0
      %2028 = vmatpush1.bf16.msra.mxu0 0
      %2029 = vmatprep.subr.bf16.mxu0 0
      %2030 = vmatpush1.bf16.msra.mxu0 0
      %2031 = vmatprep.mubr.bf16.mxu0 0
      %2032 = vmatmul.mubr.bf16.gmra.mrb[0].mxu0 %v1911
      %v2033 = vpop.f32.mrb[0].mxu0
      %v2034 = vadd.f32 0.0, %v2033
      %v2035 = vpop.f32.mrb[0].mxu0
      %v2036 = vadd.f32 0.0, %v2035
      %v2037 = vpop.f32.mrb[0].mxu0
      %v2038 = vadd.f32 0.0, %v2037
      %v2039 = vpop.f32.mrb[0].mxu0
      %v2040 = vadd.f32 0.0, %v2039
      %2041 = vmatprep.mubr.bf16.mxu0 0
      %2042 = vmatmul.mubr.bf16.gmra.mrb[0].mxu0 %v1912
      %v2043 = vpop.f32.mrb[0].mxu0
      %v2044 = vadd.f32 0.0, %v2043
      %v2045 = vpop.f32.mrb[0].mxu0
      %v2046 = vadd.f32 0.0, %v2045
      %v2047 = vpop.f32.mrb[0].mxu0
      %v2048 = vadd.f32 0.0, %v2047
      %v2049 = vpop.f32.mrb[0].mxu0
      %v2050 = vadd.f32 0.0, %v2049
      %2051 = vmatprep.mubr.bf16.mxu0 0
      %2052 = vmatmul.mubr.bf16.gmra.mrb[0].mxu0 %v1913
      %v2053 = vpop.f32.mrb[0].mxu0
      %v2054 = vadd.f32 0.0, %v2053
      %v2055 = vpop.f32.mrb[0].mxu0
      %v2056 = vadd.f32 0.0, %v2055
      %v2057 = vpop.f32.mrb[0].mxu0
      %v2058 = vadd.f32 0.0, %v2057
      %v2059 = vpop.f32.mrb[0].mxu0
      %v2060 = vadd.f32 0.0, %v2059
      %2061 = vmatprep.mubr.bf16.mxu0 0
      %2062 = vmatmul.mubr.bf16.gmra.mrb[0].mxu0 %v1914
      %v2063 = vpop.f32.mrb[0].mxu0
      %v2064 = vadd.f32 0.0, %v2063
      %v2065 = vpop.f32.mrb[0].mxu0
      %v2066 = vadd.f32 0.0, %v2065
      %v2067 = vpop.f32.mrb[0].mxu0
      %v2068 = vadd.f32 0.0, %v2067
      %v2069 = vpop.f32.mrb[0].mxu0
      %v2070 = vadd.f32 0.0, %v2069
      %2071 = vdwg.mxu0
      %v2072 = vld [vmem:[#allocation2] sm:$0xff]
      %v2073 = vld [vmem:[#allocation2 + $0x8] sm:$0xff]
      %v2074 = vld [vmem:[#allocation2 + $0x10] sm:$0xff]
      %v2075 = vld [vmem:[#allocation2 + $0x18] sm:$0xff]
      %v2076 = vld [vmem:[#allocation2 + $0x20] sm:$0xff]
      %v2077 = vld [vmem:[#allocation2 + $0x28] sm:$0xff]
      %v2078 = vld [vmem:[#allocation2 + $0x30] sm:$0xff]
      %v2079 = vld [vmem:[#allocation2 + $0x38] sm:$0xff]
      %v2080 = vld [vmem:[#allocation2 + $0x40] sm:$0xff]
      %v2081 = vld [vmem:[#allocation2 + $0x48] sm:$0xff]
      %v2082 = vld [vmem:[#allocation2 + $0x50] sm:$0xff]
      %v2083 = vld [vmem:[#allocation2 + $0x58] sm:$0xff]
      %v2084 = vld [vmem:[#allocation2 + $0x60] sm:$0xff]
      %v2085 = vld [vmem:[#allocation2 + $0x68] sm:$0xff]
      %v2086 = vld [vmem:[#allocation2 + $0x70] sm:$0xff]
      %v2087 = vld [vmem:[#allocation2 + $0x78] sm:$0xff]
      %v2088 = vadd.f32 %v2072, %v2034
      %v2089 = vadd.f32 %v2073, %v2036
      %v2090 = vadd.f32 %v2074, %v2038
      %v2091 = vadd.f32 %v2075, %v2040
      %v2092 = vadd.f32 %v2076, %v2044
      %v2093 = vadd.f32 %v2077, %v2046
      %v2094 = vadd.f32 %v2078, %v2048
      %v2095 = vadd.f32 %v2079, %v2050
      %v2096 = vadd.f32 %v2080, %v2054
      %v2097 = vadd.f32 %v2081, %v2056
      %v2098 = vadd.f32 %v2082, %v2058
      %v2099 = vadd.f32 %v2083, %v2060
      %v2100 = vadd.f32 %v2084, %v2064
      %v2101 = vadd.f32 %v2085, %v2066
      %v2102 = vadd.f32 %v2086, %v2068
      %v2103 = vadd.f32 %v2087, %v2070
      %2104 = vst [vmem:[#allocation2] sm:$0xff] %v2088
      %2105 = vst [vmem:[#allocation2 + $0x8] sm:$0xff] %v2089
      %2106 = vst [vmem:[#allocation2 + $0x10] sm:$0xff] %v2090
      %2107 = vst [vmem:[#allocation2 + $0x18] sm:$0xff] %v2091
      %2108 = vst [vmem:[#allocation2 + $0x20] sm:$0xff] %v2092
      %2109 = vst [vmem:[#allocation2 + $0x28] sm:$0xff] %v2093
      %2110 = vst [vmem:[#allocation2 + $0x30] sm:$0xff] %v2094
      %2111 = vst [vmem:[#allocation2 + $0x38] sm:$0xff] %v2095
      %2112 = vst [vmem:[#allocation2 + $0x40] sm:$0xff] %v2096
      %2113 = vst [vmem:[#allocation2 + $0x48] sm:$0xff] %v2097
      %2114 = vst [vmem:[#allocation2 + $0x50] sm:$0xff] %v2098
      %2115 = vst [vmem:[#allocation2 + $0x58] sm:$0xff] %v2099
      %2116 = vst [vmem:[#allocation2 + $0x60] sm:$0xff] %v2100
      %2117 = vst [vmem:[#allocation2 + $0x68] sm:$0xff] %v2101
      %2118 = vst [vmem:[#allocation2 + $0x70] sm:$0xff] %v2102
      %2119 = vst [vmem:[#allocation2 + $0x78] sm:$0xff] %v2103
      %s2120 = scalar_lea.vmem %s165, 80
      %v2121 = vld [vmem:[%s2120] sm:$0xf]
      %v2122 = vld [vmem:[%s2120 + $0x8] sm:$0xf]
      %v2123 = vld [vmem:[%s2120 + $0x10] sm:$0xf]
      %v2124 = vld [vmem:[%s2120 + $0x18] sm:$0xf]
      %v2125 = vld [vmem:[%s2120 + $0x20] sm:$0xf]
      %v2126 = vld [vmem:[%s2120 + $0x28] sm:$0xf]
      %v2127 = vld [vmem:[%s2120 + $0x30] sm:$0xf]
      %v2128 = vld [vmem:[%s2120 + $0x38] sm:$0xf]
      %s2129 = scalar_lea.vmem %s1, 896
      %v2130 = vld [vmem:[%s2129] sm:$0xff]
      %v2131 = vld [vmem:[%s2129 + $0x8] sm:$0xff]
      %v2132 = vld [vmem:[%s2129 + $0x10] sm:$0xff]
      %v2133 = vld [vmem:[%s2129 + $0x18] sm:$0xff]
      %v2134 = vld [vmem:[%s2129 + $0x20] sm:$0xff]
      %v2135 = vld [vmem:[%s2129 + $0x28] sm:$0xff]
      %v2136 = vld [vmem:[%s2129 + $0x30] sm:$0xff]
      %v2137 = vld [vmem:[%s2129 + $0x38] sm:$0xff]
      %v2138 = vld [vmem:[%s2129 + $0x40] sm:$0xff]
      %v2139 = vld [vmem:[%s2129 + $0x48] sm:$0xff]
      %v2140 = vld [vmem:[%s2129 + $0x50] sm:$0xff]
      %v2141 = vld [vmem:[%s2129 + $0x58] sm:$0xff]
      %v2142 = vld [vmem:[%s2129 + $0x60] sm:$0xff]
      %v2143 = vld [vmem:[%s2129 + $0x68] sm:$0xff]
      %v2144 = vld [vmem:[%s2129 + $0x70] sm:$0xff]
      %v2145 = vld [vmem:[%s2129 + $0x78] sm:$0xff]
      %v2154 = vunpack.c.l.b16 %v2121
      %v2155 = vunpack.c.l.b16 %v2122
      %v2156 = vunpack.c.l.b16 %v2123
      %v2157 = vunpack.c.l.b16 %v2124
      %v2158 = vunpack.c.l.b16 %v2125
      %v2159 = vunpack.c.l.b16 %v2126
      %v2160 = vunpack.c.l.b16 %v2127
      %v2161 = vunpack.c.l.b16 %v2128
      %v2162 = vpack.c.b16 %v2155, %v2154
      %v2163 = vpack.c.b16 %v2157, %v2156
      %v2164 = vpack.c.b16 %v2159, %v2158
      %v2165 = vpack.c.b16 %v2161, %v2160
      %v2186 = vunpack.c.l.b16 %v2130
      %v2187 = vunpack.c.h.b16 %v2130
      %v2188 = vunpack.c.l.b16 %v2131
      %v2189 = vunpack.c.h.b16 %v2131
      %v2190 = vunpack.c.l.b16 %v2132
      %v2191 = vunpack.c.h.b16 %v2132
      %v2192 = vunpack.c.l.b16 %v2133
      %v2193 = vunpack.c.h.b16 %v2133
      %v2194 = vunpack.c.l.b16 %v2134
      %v2195 = vunpack.c.h.b16 %v2134
      %v2196 = vunpack.c.l.b16 %v2135
      %v2197 = vunpack.c.h.b16 %v2135
      %v2198 = vunpack.c.l.b16 %v2136
      %v2199 = vunpack.c.h.b16 %v2136
      %v2200 = vunpack.c.l.b16 %v2137
      %v2201 = vunpack.c.h.b16 %v2137
      %v2202 = vunpack.c.l.b16 %v2138
      %v2203 = vunpack.c.h.b16 %v2138
      %v2204 = vunpack.c.l.b16 %v2139
      %v2205 = vunpack.c.h.b16 %v2139
      %v2206 = vunpack.c.l.b16 %v2140
      %v2207 = vunpack.c.h.b16 %v2140
      %v2208 = vunpack.c.l.b16 %v2141
      %v2209 = vunpack.c.h.b16 %v2141
      %v2210 = vunpack.c.l.b16 %v2142
      %v2211 = vunpack.c.h.b16 %v2142
      %v2212 = vunpack.c.l.b16 %v2143
      %v2213 = vunpack.c.h.b16 %v2143
      %v2214 = vunpack.c.l.b16 %v2144
      %v2215 = vunpack.c.h.b16 %v2144
      %v2216 = vunpack.c.l.b16 %v2145
      %v2217 = vunpack.c.h.b16 %v2145
      %v2218 = vpack.c.b16 %v2188, %v2186
      %v2219 = vpack.c.b16 %v2189, %v2187
      %v2220 = vpack.c.b16 %v2192, %v2190
      %v2221 = vpack.c.b16 %v2193, %v2191
      %v2222 = vpack.c.b16 %v2196, %v2194
      %v2223 = vpack.c.b16 %v2197, %v2195
      %v2224 = vpack.c.b16 %v2200, %v2198
      %v2225 = vpack.c.b16 %v2201, %v2199
      %v2226 = vpack.c.b16 %v2204, %v2202
      %v2227 = vpack.c.b16 %v2205, %v2203
      %v2228 = vpack.c.b16 %v2208, %v2206
      %v2229 = vpack.c.b16 %v2209, %v2207
      %v2230 = vpack.c.b16 %v2212, %v2210
      %v2231 = vpack.c.b16 %v2213, %v2211
      %v2232 = vpack.c.b16 %v2216, %v2214
      %v2233 = vpack.c.b16 %v2217, %v2215
      %2250 = vmatprep.subr.bf16.mxu0 %v2219
      %2251 = vmatpush1.bf16.msra.mxu0 %v2218
      %2252 = vmatprep.subr.bf16.mxu0 %v2221
      %2253 = vmatpush1.bf16.msra.mxu0 %v2220
      %2254 = vmatprep.subr.bf16.mxu0 %v2223
      %2255 = vmatpush1.bf16.msra.mxu0 %v2222
      %2256 = vmatprep.subr.bf16.mxu0 %v2225
      %2257 = vmatpush1.bf16.msra.mxu0 %v2224
      %2258 = vmatprep.subr.bf16.mxu0 %v2227
      %2259 = vmatpush1.bf16.msra.mxu0 %v2226
      %2260 = vmatprep.subr.bf16.mxu0 %v2229
      %2261 = vmatpush1.bf16.msra.mxu0 %v2228
      %2262 = vmatprep.subr.bf16.mxu0 %v2231
      %2263 = vmatpush1.bf16.msra.mxu0 %v2230
      %2264 = vmatprep.subr.bf16.mxu0 %v2233
      %2265 = vmatpush1.bf16.msra.mxu0 %v2232
      %2266 = vmatprep.subr.bf16.mxu0 0
      %2267 = vmatpush1.bf16.msra.mxu0 0
      %2268 = vmatprep.subr.bf16.mxu0 0
      %2269 = vmatpush1.bf16.msra.mxu0 0
      %2270 = vmatprep.subr.bf16.mxu0 0
      %2271 = vmatpush1.bf16.msra.mxu0 0
      %2272 = vmatprep.subr.bf16.mxu0 0
      %2273 = vmatpush1.bf16.msra.mxu0 0
      %2274 = vmatprep.subr.bf16.mxu0 0
      %2275 = vmatpush1.bf16.msra.mxu0 0
      %2276 = vmatprep.subr.bf16.mxu0 0
      %2277 = vmatpush1.bf16.msra.mxu0 0
      %2278 = vmatprep.subr.bf16.mxu0 0
      %2279 = vmatpush1.bf16.msra.mxu0 0
      %2280 = vmatprep.subr.bf16.mxu0 0
      %2281 = vmatpush1.bf16.msra.mxu0 0
      %2282 = vmatprep.mubr.bf16.mxu0 0
      %2283 = vmatmul.mubr.bf16.gmra.mrb[0].mxu0 %v2162
      %v2284 = vpop.f32.mrb[0].mxu0
      %v2285 = vadd.f32 0.0, %v2284
      %v2286 = vpop.f32.mrb[0].mxu0
      %v2287 = vadd.f32 0.0, %v2286
      %v2288 = vpop.f32.mrb[0].mxu0
      %v2289 = vadd.f32 0.0, %v2288
      %v2290 = vpop.f32.mrb[0].mxu0
      %v2291 = vadd.f32 0.0, %v2290
      %2292 = vmatprep.mubr.bf16.mxu0 0
      %2293 = vmatmul.mubr.bf16.gmra.mrb[0].mxu0 %v2163
      %v2294 = vpop.f32.mrb[0].mxu0
      %v2295 = vadd.f32 0.0, %v2294
      %v2296 = vpop.f32.mrb[0].mxu0
      %v2297 = vadd.f32 0.0, %v2296
      %v2298 = vpop.f32.mrb[0].mxu0
      %v2299 = vadd.f32 0.0, %v2298
      %v2300 = vpop.f32.mrb[0].mxu0
      %v2301 = vadd.f32 0.0, %v2300
      %2302 = vmatprep.mubr.bf16.mxu0 0
      %2303 = vmatmul.mubr.bf16.gmra.mrb[0].mxu0 %v2164
      %v2304 = vpop.f32.mrb[0].mxu0
      %v2305 = vadd.f32 0.0, %v2304
      %v2306 = vpop.f32.mrb[0].mxu0
      %v2307 = vadd.f32 0.0, %v2306
      %v2308 = vpop.f32.mrb[0].mxu0
      %v2309 = vadd.f32 0.0, %v2308
      %v2310 = vpop.f32.mrb[0].mxu0
      %v2311 = vadd.f32 0.0, %v2310
      %2312 = vmatprep.mubr.bf16.mxu0 0
      %2313 = vmatmul.mubr.bf16.gmra.mrb[0].mxu0 %v2165
      %v2314 = vpop.f32.mrb[0].mxu0
      %v2315 = vadd.f32 0.0, %v2314
      %v2316 = vpop.f32.mrb[0].mxu0
      %v2317 = vadd.f32 0.0, %v2316
      %v2318 = vpop.f32.mrb[0].mxu0
      %v2319 = vadd.f32 0.0, %v2318
      %v2320 = vpop.f32.mrb[0].mxu0
      %v2321 = vadd.f32 0.0, %v2320
      %2322 = vdwg.mxu0
      %v2323 = vld [vmem:[#allocation2] sm:$0xff]
      %v2324 = vld [vmem:[#allocation2 + $0x8] sm:$0xff]
      %v2325 = vld [vmem:[#allocation2 + $0x10] sm:$0xff]
      %v2326 = vld [vmem:[#allocation2 + $0x18] sm:$0xff]
      %v2327 = vld [vmem:[#allocation2 + $0x20] sm:$0xff]
      %v2328 = vld [vmem:[#allocation2 + $0x28] sm:$0xff]
      %v2329 = vld [vmem:[#allocation2 + $0x30] sm:$0xff]
      %v2330 = vld [vmem:[#allocation2 + $0x38] sm:$0xff]
      %v2331 = vld [vmem:[#allocation2 + $0x40] sm:$0xff]
      %v2332 = vld [vmem:[#allocation2 + $0x48] sm:$0xff]
      %v2333 = vld [vmem:[#allocation2 + $0x50] sm:$0xff]
      %v2334 = vld [vmem:[#allocation2 + $0x58] sm:$0xff]
      %v2335 = vld [vmem:[#allocation2 + $0x60] sm:$0xff]
      %v2336 = vld [vmem:[#allocation2 + $0x68] sm:$0xff]
      %v2337 = vld [vmem:[#allocation2 + $0x70] sm:$0xff]
      %v2338 = vld [vmem:[#allocation2 + $0x78] sm:$0xff]
      %v2339 = vadd.f32 %v2323, %v2285
      %v2340 = vadd.f32 %v2324, %v2287
      %v2341 = vadd.f32 %v2325, %v2289
      %v2342 = vadd.f32 %v2326, %v2291
      %v2343 = vadd.f32 %v2327, %v2295
      %v2344 = vadd.f32 %v2328, %v2297
      %v2345 = vadd.f32 %v2329, %v2299
      %v2346 = vadd.f32 %v2330, %v2301
      %v2347 = vadd.f32 %v2331, %v2305
      %v2348 = vadd.f32 %v2332, %v2307
      %v2349 = vadd.f32 %v2333, %v2309
      %v2350 = vadd.f32 %v2334, %v2311
      %v2351 = vadd.f32 %v2335, %v2315
      %v2352 = vadd.f32 %v2336, %v2317
      %v2353 = vadd.f32 %v2337, %v2319
      %v2354 = vadd.f32 %v2338, %v2321
      %2355 = vst [vmem:[#allocation2] sm:$0xff] %v2339
      %2356 = vst [vmem:[#allocation2 + $0x8] sm:$0xff] %v2340
      %2357 = vst [vmem:[#allocation2 + $0x10] sm:$0xff] %v2341
      %2358 = vst [vmem:[#allocation2 + $0x18] sm:$0xff] %v2342
      %2359 = vst [vmem:[#allocation2 + $0x20] sm:$0xff] %v2343
      %2360 = vst [vmem:[#allocation2 + $0x28] sm:$0xff] %v2344
      %2361 = vst [vmem:[#allocation2 + $0x30] sm:$0xff] %v2345
      %2362 = vst [vmem:[#allocation2 + $0x38] sm:$0xff] %v2346
      %2363 = vst [vmem:[#allocation2 + $0x40] sm:$0xff] %v2347
      %2364 = vst [vmem:[#allocation2 + $0x48] sm:$0xff] %v2348
      %2365 = vst [vmem:[#allocation2 + $0x50] sm:$0xff] %v2349
      %2366 = vst [vmem:[#allocation2 + $0x58] sm:$0xff] %v2350
      %2367 = vst [vmem:[#allocation2 + $0x60] sm:$0xff] %v2351
      %2368 = vst [vmem:[#allocation2 + $0x68] sm:$0xff] %v2352
      %2369 = vst [vmem:[#allocation2 + $0x70] sm:$0xff] %v2353
      %2370 = vst [vmem:[#allocation2 + $0x78] sm:$0xff] %v2354
      %v2371 = vld [vmem:[%s1869] sm:$0xf]
      %v2372 = vld [vmem:[%s1869 + $0x4] sm:$0x1]
      %v2373 = vld [vmem:[%s1869 + $0x8] sm:$0xf]
      %v2374 = vld [vmem:[%s1869 + $0xc] sm:$0x1]
      %v2375 = vld [vmem:[%s1869 + $0x10] sm:$0xf]
      %v2376 = vld [vmem:[%s1869 + $0x14] sm:$0x1]
      %v2377 = vld [vmem:[%s1869 + $0x18] sm:$0xf]
      %v2378 = vld [vmem:[%s1869 + $0x1c] sm:$0x1]
      %v2379 = vld [vmem:[%s1869 + $0x20] sm:$0xf]
      %v2380 = vld [vmem:[%s1869 + $0x24] sm:$0x1]
      %v2381 = vld [vmem:[%s1869 + $0x28] sm:$0xf]
      %v2382 = vld [vmem:[%s1869 + $0x2c] sm:$0x1]
      %v2383 = vld [vmem:[%s1869 + $0x30] sm:$0xf]
      %v2384 = vld [vmem:[%s1869 + $0x34] sm:$0x1]
      %v2385 = vld [vmem:[%s1869 + $0x38] sm:$0xf]
      %v2386 = vld [vmem:[%s1869 + $0x3c] sm:$0x1]
      %v2388 = vshrl.u32 %v2371, 16
      %v2390 = vrot.slane %v2388, 4
      %v2391 = vshll.u32 %v2371, 16
      %v2393 = vrot.slane %v2391, 5
      %v2394 = vor.u32 %v2390, %v2393
      %v2395 = vrot.slane %v2394, 4
      %v2397 = vshll.u32 %v2372, 16
      %v2399 = vrot.slane %v2397, 5
      %v2400 = vsel %vm658, %v2395, %v2399
      %v2402 = vshrl.u32 %v2373, 16
      %v2404 = vrot.slane %v2402, 4
      %v2405 = vshll.u32 %v2373, 16
      %v2407 = vrot.slane %v2405, 5
      %v2408 = vor.u32 %v2404, %v2407
      %v2409 = vrot.slane %v2408, 4
      %v2411 = vshll.u32 %v2374, 16
      %v2413 = vrot.slane %v2411, 5
      %v2414 = vsel %vm658, %v2409, %v2413
      %v2416 = vshrl.u32 %v2375, 16
      %v2418 = vrot.slane %v2416, 4
      %v2419 = vshll.u32 %v2375, 16
      %v2421 = vrot.slane %v2419, 5
      %v2422 = vor.u32 %v2418, %v2421
      %v2423 = vrot.slane %v2422, 4
      %v2425 = vshll.u32 %v2376, 16
      %v2427 = vrot.slane %v2425, 5
      %v2428 = vsel %vm658, %v2423, %v2427
      %v2430 = vshrl.u32 %v2377, 16
      %v2432 = vrot.slane %v2430, 4
      %v2433 = vshll.u32 %v2377, 16
      %v2435 = vrot.slane %v2433, 5
      %v2436 = vor.u32 %v2432, %v2435
      %v2437 = vrot.slane %v2436, 4
      %v2439 = vshll.u32 %v2378, 16
      %v2441 = vrot.slane %v2439, 5
      %v2442 = vsel %vm658, %v2437, %v2441
      %v2444 = vshrl.u32 %v2379, 16
      %v2446 = vrot.slane %v2444, 4
      %v2447 = vshll.u32 %v2379, 16
      %v2449 = vrot.slane %v2447, 5
      %v2450 = vor.u32 %v2446, %v2449
      %v2451 = vrot.slane %v2450, 4
      %v2453 = vshll.u32 %v2380, 16
      %v2455 = vrot.slane %v2453, 5
      %v2456 = vsel %vm658, %v2451, %v2455
      %v2458 = vshrl.u32 %v2381, 16
      %v2460 = vrot.slane %v2458, 4
      %v2461 = vshll.u32 %v2381, 16
      %v2463 = vrot.slane %v2461, 5
      %v2464 = vor.u32 %v2460, %v2463
      %v2465 = vrot.slane %v2464, 4
      %v2467 = vshll.u32 %v2382, 16
      %v2469 = vrot.slane %v2467, 5
      %v2470 = vsel %vm658, %v2465, %v2469
      %v2472 = vshrl.u32 %v2383, 16
      %v2474 = vrot.slane %v2472, 4
      %v2475 = vshll.u32 %v2383, 16
      %v2477 = vrot.slane %v2475, 5
      %v2478 = vor.u32 %v2474, %v2477
      %v2479 = vrot.slane %v2478, 4
      %v2481 = vshll.u32 %v2384, 16
      %v2483 = vrot.slane %v2481, 5
      %v2484 = vsel %vm658, %v2479, %v2483
      %v2486 = vshrl.u32 %v2385, 16
      %v2488 = vrot.slane %v2486, 4
      %v2489 = vshll.u32 %v2385, 16
      %v2491 = vrot.slane %v2489, 5
      %v2492 = vor.u32 %v2488, %v2491
      %v2493 = vrot.slane %v2492, 4
      %v2495 = vshll.u32 %v2386, 16
      %v2497 = vrot.slane %v2495, 5
      %v2498 = vsel %vm658, %v2493, %v2497
      %s2499 = scalar_lea.vmem %s1, 1024
      %v2500 = vld [vmem:[%s2499] sm:$0xff]
      %v2501 = vld [vmem:[%s2499 + $0x8] sm:$0xff]
      %v2502 = vld [vmem:[%s2499 + $0x10] sm:$0xff]
      %v2503 = vld [vmem:[%s2499 + $0x18] sm:$0xff]
      %v2504 = vld [vmem:[%s2499 + $0x20] sm:$0xff]
      %v2505 = vld [vmem:[%s2499 + $0x28] sm:$0xff]
      %v2506 = vld [vmem:[%s2499 + $0x30] sm:$0xff]
      %v2507 = vld [vmem:[%s2499 + $0x38] sm:$0xff]
      %v2508 = vld [vmem:[%s2499 + $0x40] sm:$0xff]
      %v2509 = vld [vmem:[%s2499 + $0x48] sm:$0xff]
      %v2510 = vld [vmem:[%s2499 + $0x50] sm:$0xff]
      %v2511 = vld [vmem:[%s2499 + $0x58] sm:$0xff]
      %v2512 = vld [vmem:[%s2499 + $0x60] sm:$0xff]
      %v2513 = vld [vmem:[%s2499 + $0x68] sm:$0xff]
      %v2514 = vld [vmem:[%s2499 + $0x70] sm:$0xff]
      %v2515 = vld [vmem:[%s2499 + $0x78] sm:$0xff]
      %v2516 = vunpack.c.l.b16 %v2400
      %v2517 = vunpack.c.l.b16 %v2414
      %v2518 = vunpack.c.l.b16 %v2428
      %v2519 = vunpack.c.l.b16 %v2442
      %v2520 = vunpack.c.l.b16 %v2456
      %v2521 = vunpack.c.l.b16 %v2470
      %v2522 = vunpack.c.l.b16 %v2484
      %v2523 = vunpack.c.l.b16 %v2498
      %v2524 = vpack.c.b16 %v2517, %v2516
      %v2525 = vpack.c.b16 %v2519, %v2518
      %v2526 = vpack.c.b16 %v2521, %v2520
      %v2527 = vpack.c.b16 %v2523, %v2522
      %v2548 = vunpack.c.l.b16 %v2500
      %v2549 = vunpack.c.h.b16 %v2500
      %v2550 = vunpack.c.l.b16 %v2501
      %v2551 = vunpack.c.h.b16 %v2501
      %v2552 = vunpack.c.l.b16 %v2502
      %v2553 = vunpack.c.h.b16 %v2502
      %v2554 = vunpack.c.l.b16 %v2503
      %v2555 = vunpack.c.h.b16 %v2503
      %v2556 = vunpack.c.l.b16 %v2504
      %v2557 = vunpack.c.h.b16 %v2504
      %v2558 = vunpack.c.l.b16 %v2505
      %v2559 = vunpack.c.h.b16 %v2505
      %v2560 = vunpack.c.l.b16 %v2506
      %v2561 = vunpack.c.h.b16 %v2506
      %v2562 = vunpack.c.l.b16 %v2507
      %v2563 = vunpack.c.h.b16 %v2507
      %v2564 = vunpack.c.l.b16 %v2508
      %v2565 = vunpack.c.h.b16 %v2508
      %v2566 = vunpack.c.l.b16 %v2509
      %v2567 = vunpack.c.h.b16 %v2509
      %v2568 = vunpack.c.l.b16 %v2510
      %v2569 = vunpack.c.h.b16 %v2510
      %v2570 = vunpack.c.l.b16 %v2511
      %v2571 = vunpack.c.h.b16 %v2511
      %v2572 = vunpack.c.l.b16 %v2512
      %v2573 = vunpack.c.h.b16 %v2512
      %v2574 = vunpack.c.l.b16 %v2513
      %v2575 = vunpack.c.h.b16 %v2513
      %v2576 = vunpack.c.l.b16 %v2514
      %v2577 = vunpack.c.h.b16 %v2514
      %v2578 = vunpack.c.l.b16 %v2515
      %v2579 = vunpack.c.h.b16 %v2515
      %v2580 = vpack.c.b16 %v2550, %v2548
      %v2581 = vpack.c.b16 %v2551, %v2549
      %v2582 = vpack.c.b16 %v2554, %v2552
      %v2583 = vpack.c.b16 %v2555, %v2553
      %v2584 = vpack.c.b16 %v2558, %v2556
      %v2585 = vpack.c.b16 %v2559, %v2557
      %v2586 = vpack.c.b16 %v2562, %v2560
      %v2587 = vpack.c.b16 %v2563, %v2561
      %v2588 = vpack.c.b16 %v2566, %v2564
      %v2589 = vpack.c.b16 %v2567, %v2565
      %v2590 = vpack.c.b16 %v2570, %v2568
      %v2591 = vpack.c.b16 %v2571, %v2569
      %v2592 = vpack.c.b16 %v2574, %v2572
      %v2593 = vpack.c.b16 %v2575, %v2573
      %v2594 = vpack.c.b16 %v2578, %v2576
      %v2595 = vpack.c.b16 %v2579, %v2577
      %2612 = vmatprep.subr.bf16.mxu0 %v2581
      %2613 = vmatpush1.bf16.msra.mxu0 %v2580
      %2614 = vmatprep.subr.bf16.mxu0 %v2583
      %2615 = vmatpush1.bf16.msra.mxu0 %v2582
      %2616 = vmatprep.subr.bf16.mxu0 %v2585
      %2617 = vmatpush1.bf16.msra.mxu0 %v2584
      %2618 = vmatprep.subr.bf16.mxu0 %v2587
      %2619 = vmatpush1.bf16.msra.mxu0 %v2586
      %2620 = vmatprep.subr.bf16.mxu0 %v2589
      %2621 = vmatpush1.bf16.msra.mxu0 %v2588
      %2622 = vmatprep.subr.bf16.mxu0 %v2591
      %2623 = vmatpush1.bf16.msra.mxu0 %v2590
      %2624 = vmatprep.subr.bf16.mxu0 %v2593
      %2625 = vmatpush1.bf16.msra.mxu0 %v2592
      %2626 = vmatprep.subr.bf16.mxu0 %v2595
      %2627 = vmatpush1.bf16.msra.mxu0 %v2594
      %2628 = vmatprep.subr.bf16.mxu0 0
      %2629 = vmatpush1.bf16.msra.mxu0 0
      %2630 = vmatprep.subr.bf16.mxu0 0
      %2631 = vmatpush1.bf16.msra.mxu0 0
      %2632 = vmatprep.subr.bf16.mxu0 0
      %2633 = vmatpush1.bf16.msra.mxu0 0
      %2634 = vmatprep.subr.bf16.mxu0 0
      %2635 = vmatpush1.bf16.msra.mxu0 0
      %2636 = vmatprep.subr.bf16.mxu0 0
      %2637 = vmatpush1.bf16.msra.mxu0 0
      %2638 = vmatprep.subr.bf16.mxu0 0
      %2639 = vmatpush1.bf16.msra.mxu0 0
      %2640 = vmatprep.subr.bf16.mxu0 0
      %2641 = vmatpush1.bf16.msra.mxu0 0
      %2642 = vmatprep.subr.bf16.mxu0 0
      %2643 = vmatpush1.bf16.msra.mxu0 0
      %2644 = vmatprep.mubr.bf16.mxu0 0
      %2645 = vmatmul.mubr.bf16.gmra.mrb[0].mxu0 %v2524
      %v2646 = vpop.f32.mrb[0].mxu0
      %v2647 = vadd.f32 0.0, %v2646
      %v2648 = vpop.f32.mrb[0].mxu0
      %v2649 = vadd.f32 0.0, %v2648
      %v2650 = vpop.f32.mrb[0].mxu0
      %v2651 = vadd.f32 0.0, %v2650
      %v2652 = vpop.f32.mrb[0].mxu0
      %v2653 = vadd.f32 0.0, %v2652
      %2654 = vmatprep.mubr.bf16.mxu0 0
      %2655 = vmatmul.mubr.bf16.gmra.mrb[0].mxu0 %v2525
      %v2656 = vpop.f32.mrb[0].mxu0
      %v2657 = vadd.f32 0.0, %v2656
      %v2658 = vpop.f32.mrb[0].mxu0
      %v2659 = vadd.f32 0.0, %v2658
      %v2660 = vpop.f32.mrb[0].mxu0
      %v2661 = vadd.f32 0.0, %v2660
      %v2662 = vpop.f32.mrb[0].mxu0
      %v2663 = vadd.f32 0.0, %v2662
      %2664 = vmatprep.mubr.bf16.mxu0 0
      %2665 = vmatmul.mubr.bf16.gmra.mrb[0].mxu0 %v2526
      %v2666 = vpop.f32.mrb[0].mxu0
      %v2667 = vadd.f32 0.0, %v2666
      %v2668 = vpop.f32.mrb[0].mxu0
      %v2669 = vadd.f32 0.0, %v2668
      %v2670 = vpop.f32.mrb[0].mxu0
      %v2671 = vadd.f32 0.0, %v2670
      %v2672 = vpop.f32.mrb[0].mxu0
      %v2673 = vadd.f32 0.0, %v2672
      %2674 = vmatprep.mubr.bf16.mxu0 0
      %2675 = vmatmul.mubr.bf16.gmra.mrb[0].mxu0 %v2527
      %v2676 = vpop.f32.mrb[0].mxu0
      %v2677 = vadd.f32 0.0, %v2676
      %v2678 = vpop.f32.mrb[0].mxu0
      %v2679 = vadd.f32 0.0, %v2678
      %v2680 = vpop.f32.mrb[0].mxu0
      %v2681 = vadd.f32 0.0, %v2680
      %v2682 = vpop.f32.mrb[0].mxu0
      %v2683 = vadd.f32 0.0, %v2682
      %2684 = vdwg.mxu0
      %v2685 = vld [vmem:[#allocation2] sm:$0xff]
      %v2686 = vld [vmem:[#allocation2 + $0x8] sm:$0xff]
      %v2687 = vld [vmem:[#allocation2 + $0x10] sm:$0xff]
      %v2688 = vld [vmem:[#allocation2 + $0x18] sm:$0xff]
      %v2689 = vld [vmem:[#allocation2 + $0x20] sm:$0xff]
      %v2690 = vld [vmem:[#allocation2 + $0x28] sm:$0xff]
      %v2691 = vld [vmem:[#allocation2 + $0x30] sm:$0xff]
      %v2692 = vld [vmem:[#allocation2 + $0x38] sm:$0xff]
      %v2693 = vld [vmem:[#allocation2 + $0x40] sm:$0xff]
      %v2694 = vld [vmem:[#allocation2 + $0x48] sm:$0xff]
      %v2695 = vld [vmem:[#allocation2 + $0x50] sm:$0xff]
      %v2696 = vld [vmem:[#allocation2 + $0x58] sm:$0xff]
      %v2697 = vld [vmem:[#allocation2 + $0x60] sm:$0xff]
      %v2698 = vld [vmem:[#allocation2 + $0x68] sm:$0xff]
      %v2699 = vld [vmem:[#allocation2 + $0x70] sm:$0xff]
      %v2700 = vld [vmem:[#allocation2 + $0x78] sm:$0xff]
      %v2701 = vadd.f32 %v2685, %v2647
      %v2702 = vadd.f32 %v2686, %v2649
      %v2703 = vadd.f32 %v2687, %v2651
      %v2704 = vadd.f32 %v2688, %v2653
      %v2705 = vadd.f32 %v2689, %v2657
      %v2706 = vadd.f32 %v2690, %v2659
      %v2707 = vadd.f32 %v2691, %v2661
      %v2708 = vadd.f32 %v2692, %v2663
      %v2709 = vadd.f32 %v2693, %v2667
      %v2710 = vadd.f32 %v2694, %v2669
      %v2711 = vadd.f32 %v2695, %v2671
      %v2712 = vadd.f32 %v2696, %v2673
      %v2713 = vadd.f32 %v2697, %v2677
      %v2714 = vadd.f32 %v2698, %v2679
      %v2715 = vadd.f32 %v2699, %v2681
      %v2716 = vadd.f32 %v2700, %v2683
      %2717 = vst [vmem:[#allocation2] sm:$0xff] %v2701
      %2718 = vst [vmem:[#allocation2 + $0x8] sm:$0xff] %v2702
      %2719 = vst [vmem:[#allocation2 + $0x10] sm:$0xff] %v2703
      %2720 = vst [vmem:[#allocation2 + $0x18] sm:$0xff] %v2704
      %2721 = vst [vmem:[#allocation2 + $0x20] sm:$0xff] %v2705
      %2722 = vst [vmem:[#allocation2 + $0x28] sm:$0xff] %v2706
      %2723 = vst [vmem:[#allocation2 + $0x30] sm:$0xff] %v2707
      %2724 = vst [vmem:[#allocation2 + $0x38] sm:$0xff] %v2708
      %2725 = vst [vmem:[#allocation2 + $0x40] sm:$0xff] %v2709
      %2726 = vst [vmem:[#allocation2 + $0x48] sm:$0xff] %v2710
      %2727 = vst [vmem:[#allocation2 + $0x50] sm:$0xff] %v2711
      %2728 = vst [vmem:[#allocation2 + $0x58] sm:$0xff] %v2712
      %2729 = vst [vmem:[#allocation2 + $0x60] sm:$0xff] %v2713
      %2730 = vst [vmem:[#allocation2 + $0x68] sm:$0xff] %v2714
      %2731 = vst [vmem:[#allocation2 + $0x70] sm:$0xff] %v2715
      %2732 = vst [vmem:[#allocation2 + $0x78] sm:$0xff] %v2716
      %v2733 = vld [vmem:[#allocation2] sm:$0xff]
      %v2734 = vld [vmem:[#allocation2 + $0x8] sm:$0xff]
      %v2735 = vld [vmem:[#allocation2 + $0x10] sm:$0xff]
      %v2736 = vld [vmem:[#allocation2 + $0x18] sm:$0xff]
      %v2737 = vld [vmem:[#allocation2 + $0x20] sm:$0xff]
      %v2738 = vld [vmem:[#allocation2 + $0x28] sm:$0xff]
      %v2739 = vld [vmem:[#allocation2 + $0x30] sm:$0xff]
      %v2740 = vld [vmem:[#allocation2 + $0x38] sm:$0xff]
      %v2741 = vld [vmem:[#allocation2 + $0x40] sm:$0xff]
      %v2742 = vld [vmem:[#allocation2 + $0x48] sm:$0xff]
      %v2743 = vld [vmem:[#allocation2 + $0x50] sm:$0xff]
      %v2744 = vld [vmem:[#allocation2 + $0x58] sm:$0xff]
      %v2745 = vld [vmem:[#allocation2 + $0x60] sm:$0xff]
      %v2746 = vld [vmem:[#allocation2 + $0x68] sm:$0xff]
      %v2747 = vld [vmem:[#allocation2 + $0x70] sm:$0xff]
      %v2748 = vld [vmem:[#allocation2 + $0x78] sm:$0xff]
      %v2749 = vld [vmem:[%s2] sm:$0x3]
      %v2751 = vlaneseq
      %v2752 = vshrl.u32 %v2751, 7
      %v2753 = vsub.s32 0, %v2752
      %v2754 = vrot.slane %v2749, %v2753
      %v2755 = vlaneseq
      %v2756 = vshrl.u32 %v2755, 7
      %v2757 = vsub.s32 1, %v2756
      %v2758 = vrot.slane %v2749, %v2757
      %v2761 = vadd.f32 %v2733, %v2754
      %v2762 = vadd.f32 %v2734, %v2758
      %v2763 = vadd.f32 %v2735, %v2754
      %v2764 = vadd.f32 %v2736, %v2758
      %v2765 = vadd.f32 %v2737, %v2754
      %v2766 = vadd.f32 %v2738, %v2758
      %v2767 = vadd.f32 %v2739, %v2754
      %v2768 = vadd.f32 %v2740, %v2758
      %v2769 = vadd.f32 %v2741, %v2754
      %v2770 = vadd.f32 %v2742, %v2758
      %v2771 = vadd.f32 %v2743, %v2754
      %v2772 = vadd.f32 %v2744, %v2758
      %v2773 = vadd.f32 %v2745, %v2754
      %v2774 = vadd.f32 %v2746, %v2758
      %v2775 = vadd.f32 %v2747, %v2754
      %v2776 = vadd.f32 %v2748, %v2758
      %v2777 = vmin.f32 %v2761, 20.0
      %v2778 = vmin.f32 %v2762, 20.0
      %v2779 = vmin.f32 %v2763, 20.0
      %v2780 = vmin.f32 %v2764, 20.0
      %v2781 = vmin.f32 %v2765, 20.0
      %v2782 = vmin.f32 %v2766, 20.0
      %v2783 = vmin.f32 %v2767, 20.0
      %v2784 = vmin.f32 %v2768, 20.0
      %v2785 = vmin.f32 %v2769, 20.0
      %v2786 = vmin.f32 %v2770, 20.0
      %v2787 = vmin.f32 %v2771, 20.0
      %v2788 = vmin.f32 %v2772, 20.0
      %v2789 = vmin.f32 %v2773, 20.0
      %v2790 = vmin.f32 %v2774, 20.0
      %v2791 = vmin.f32 %v2775, 20.0
      %v2792 = vmin.f32 %v2776, 20.0
      %v2793 = vmul.f32 %v2777, 1.442695
      %v2794 = vpow.pop %v2793
      %v2795 = vmul.f32 %v2778, 1.442695
      %v2796 = vpow.pop %v2795
      %v2797 = vmul.f32 %v2779, 1.442695
      %v2798 = vpow.pop %v2797
      %v2799 = vmul.f32 %v2780, 1.442695
      %v2800 = vpow.pop %v2799
      %v2801 = vmul.f32 %v2781, 1.442695
      %v2802 = vpow.pop %v2801
      %v2803 = vmul.f32 %v2782, 1.442695
      %v2804 = vpow.pop %v2803
      %v2805 = vmul.f32 %v2783, 1.442695
      %v2806 = vpow.pop %v2805
      %v2807 = vmul.f32 %v2784, 1.442695
      %v2808 = vpow.pop %v2807
      %v2809 = vmul.f32 %v2785, 1.442695
      %v2810 = vpow.pop %v2809
      %v2811 = vmul.f32 %v2786, 1.442695
      %v2812 = vpow.pop %v2811
      %v2813 = vmul.f32 %v2787, 1.442695
      %v2814 = vpow.pop %v2813
      %v2815 = vmul.f32 %v2788, 1.442695
      %v2816 = vpow.pop %v2815
      %v2817 = vmul.f32 %v2789, 1.442695
      %v2818 = vpow.pop %v2817
      %v2819 = vmul.f32 %v2790, 1.442695
      %v2820 = vpow.pop %v2819
      %v2821 = vmul.f32 %v2791, 1.442695
      %v2822 = vpow.pop %v2821
      %v2823 = vmul.f32 %v2792, 1.442695
      %v2824 = vpow.pop %v2823
      %v2825 = vadd.f32 %v2794, 2.0
      %v2826 = vadd.f32 %v2796, 2.0
      %v2827 = vadd.f32 %v2798, 2.0
      %v2828 = vadd.f32 %v2800, 2.0
      %v2829 = vadd.f32 %v2802, 2.0
      %v2830 = vadd.f32 %v2804, 2.0
      %v2831 = vadd.f32 %v2806, 2.0
      %v2832 = vadd.f32 %v2808, 2.0
      %v2833 = vadd.f32 %v2810, 2.0
      %v2834 = vadd.f32 %v2812, 2.0
      %v2835 = vadd.f32 %v2814, 2.0
      %v2836 = vadd.f32 %v2816, 2.0
      %v2837 = vadd.f32 %v2818, 2.0
      %v2838 = vadd.f32 %v2820, 2.0
      %v2839 = vadd.f32 %v2822, 2.0
      %v2840 = vadd.f32 %v2824, 2.0
      %v2841 = vmul.f32 %v2794, %v2825
      %v2842 = vmul.f32 %v2796, %v2826
      %v2843 = vmul.f32 %v2798, %v2827
      %v2844 = vmul.f32 %v2800, %v2828
      %v2845 = vmul.f32 %v2802, %v2829
      %v2846 = vmul.f32 %v2804, %v2830
      %v2847 = vmul.f32 %v2806, %v2831
      %v2848 = vmul.f32 %v2808, %v2832
      %v2849 = vmul.f32 %v2810, %v2833
      %v2850 = vmul.f32 %v2812, %v2834
      %v2851 = vmul.f32 %v2814, %v2835
      %v2852 = vmul.f32 %v2816, %v2836
      %v2853 = vmul.f32 %v2818, %v2837
      %v2854 = vmul.f32 %v2820, %v2838
      %v2855 = vmul.f32 %v2822, %v2839
      %v2856 = vmul.f32 %v2824, %v2840
      %v2857 = vmul.f32 %v2761, %v2841
      %v2858 = vmul.f32 %v2762, %v2842
      %v2859 = vmul.f32 %v2763, %v2843
      %v2860 = vmul.f32 %v2764, %v2844
      %v2861 = vmul.f32 %v2765, %v2845
      %v2862 = vmul.f32 %v2766, %v2846
      %v2863 = vmul.f32 %v2767, %v2847
      %v2864 = vmul.f32 %v2768, %v2848
      %v2865 = vmul.f32 %v2769, %v2849
      %v2866 = vmul.f32 %v2770, %v2850
      %v2867 = vmul.f32 %v2771, %v2851
      %v2868 = vmul.f32 %v2772, %v2852
      %v2869 = vmul.f32 %v2773, %v2853
      %v2870 = vmul.f32 %v2774, %v2854
      %v2871 = vmul.f32 %v2775, %v2855
      %v2872 = vmul.f32 %v2776, %v2856
      %v2873 = vadd.f32 %v2841, 2.0
      %v2874 = vadd.f32 %v2842, 2.0
      %v2875 = vadd.f32 %v2843, 2.0
      %v2876 = vadd.f32 %v2844, 2.0
      %v2877 = vadd.f32 %v2845, 2.0
      %v2878 = vadd.f32 %v2846, 2.0
      %v2879 = vadd.f32 %v2847, 2.0
      %v2880 = vadd.f32 %v2848, 2.0
      %v2881 = vadd.f32 %v2849, 2.0
      %v2882 = vadd.f32 %v2850, 2.0
      %v2883 = vadd.f32 %v2851, 2.0
      %v2884 = vadd.f32 %v2852, 2.0
      %v2885 = vadd.f32 %v2853, 2.0
      %v2886 = vadd.f32 %v2854, 2.0
      %v2887 = vadd.f32 %v2855, 2.0
      %v2888 = vadd.f32 %v2856, 2.0
      %v2889 = vrcp.pop %v2873
      %v2890 = vrcp.pop %v2874
      %v2891 = vrcp.pop %v2875
      %v2892 = vrcp.pop %v2876
      %v2893 = vrcp.pop %v2877
      %v2894 = vrcp.pop %v2878
      %v2895 = vrcp.pop %v2879
      %v2896 = vrcp.pop %v2880
      %v2897 = vrcp.pop %v2881
      %v2898 = vrcp.pop %v2882
      %v2899 = vrcp.pop %v2883
      %v2900 = vrcp.pop %v2884
      %v2901 = vrcp.pop %v2885
      %v2902 = vrcp.pop %v2886
      %v2903 = vrcp.pop %v2887
      %v2904 = vrcp.pop %v2888
      %v2905 = vmul.f32 %v2857, %v2889
      %v2906 = vmul.f32 %v2858, %v2890
      %v2907 = vmul.f32 %v2859, %v2891
      %v2908 = vmul.f32 %v2860, %v2892
      %v2909 = vmul.f32 %v2861, %v2893
      %v2910 = vmul.f32 %v2862, %v2894
      %v2911 = vmul.f32 %v2863, %v2895
      %v2912 = vmul.f32 %v2864, %v2896
      %v2913 = vmul.f32 %v2865, %v2897
      %v2914 = vmul.f32 %v2866, %v2898
      %v2915 = vmul.f32 %v2867, %v2899
      %v2916 = vmul.f32 %v2868, %v2900
      %v2917 = vmul.f32 %v2869, %v2901
      %v2918 = vmul.f32 %v2870, %v2902
      %v2919 = vmul.f32 %v2871, %v2903
      %v2920 = vmul.f32 %v2872, %v2904
      %v2921 = vpack.c.bf16 %v2905, %v2905
      %v2922 = vpack.c.bf16 %v2906, %v2906
      %v2923 = vpack.c.bf16 %v2907, %v2907
      %v2924 = vpack.c.bf16 %v2908, %v2908
      %v2925 = vpack.c.bf16 %v2909, %v2909
      %v2926 = vpack.c.bf16 %v2910, %v2910
      %v2927 = vpack.c.bf16 %v2911, %v2911
      %v2928 = vpack.c.bf16 %v2912, %v2912
      %v2929 = vpack.c.bf16 %v2913, %v2913
      %v2930 = vpack.c.bf16 %v2914, %v2914
      %v2931 = vpack.c.bf16 %v2915, %v2915
      %v2932 = vpack.c.bf16 %v2916, %v2916
      %v2933 = vpack.c.bf16 %v2917, %v2917
      %v2934 = vpack.c.bf16 %v2918, %v2918
      %v2935 = vpack.c.bf16 %v2919, %v2919
      %v2936 = vpack.c.bf16 %v2920, %v2920
      %v2953 = vunpack.c.l.b16 %v2921
      %v2954 = vunpack.c.l.b16 %v2922
      %v2955 = vunpack.c.l.b16 %v2923
      %v2956 = vunpack.c.l.b16 %v2924
      %v2957 = vunpack.c.l.b16 %v2925
      %v2958 = vunpack.c.l.b16 %v2926
      %v2959 = vunpack.c.l.b16 %v2927
      %v2960 = vunpack.c.l.b16 %v2928
      %v2961 = vunpack.c.l.b16 %v2929
      %v2962 = vunpack.c.l.b16 %v2930
      %v2963 = vunpack.c.l.b16 %v2931
      %v2964 = vunpack.c.l.b16 %v2932
      %v2965 = vunpack.c.l.b16 %v2933
      %v2966 = vunpack.c.l.b16 %v2934
      %v2967 = vunpack.c.l.b16 %v2935
      %v2968 = vunpack.c.l.b16 %v2936
      %v2969 = vpack.c.b16 %v2954, %v2953
      %v2970 = vpack.c.b16 %v2956, %v2955
      %v2971 = vpack.c.b16 %v2958, %v2957
      %v2972 = vpack.c.b16 %v2960, %v2959
      %v2973 = vpack.c.b16 %v2962, %v2961
      %v2974 = vpack.c.b16 %v2964, %v2963
      %v2975 = vpack.c.b16 %v2966, %v2965
      %v2976 = vpack.c.b16 %v2968, %v2967
      %2985 = vst [vmem:[%s170] sm:$0xff] %v2969
      %2986 = vst [vmem:[%s170 + $0x8] sm:$0xff] %v2970
      %2987 = vst [vmem:[%s170 + $0x10] sm:$0xff] %v2971
      %2988 = vst [vmem:[%s170 + $0x18] sm:$0xff] %v2972
      %2989 = vst [vmem:[%s170 + $0x20] sm:$0xff] %v2973
      %2990 = vst [vmem:[%s170 + $0x28] sm:$0xff] %v2974
      %2991 = vst [vmem:[%s170 + $0x30] sm:$0xff] %v2975
      %2992 = vst [vmem:[%s170 + $0x38] sm:$0xff] %v2976
      %p2993 = scmp.lt.s32.totalorder %s14, 1
      %s2994 = scalar_select %p2993, %s14, 1
      %s2995 = smul.addr %s2994, 16
      %s2996 = smul.addr %s2995, 4
      %s2997 = scalar_lea.vmem %s3, %s2996
      // Predicated region
      $region33: #{downsample5_forward.7} parent=31 // pred_check
        %p2998 = pneg %p100
      $region34: #{downsample5_forward.7} parent=31 // pred_check_branch
        %3000 = sbr.rel (%p2998) target = $region36
      $region35: #{downsample5_forward.7} parent=31 // pred_region
        _
      $region36: #{downsample5_forward.7} parent=31 // pred_fallthru
        _
    $region32: #{downsample5_forward.7} parent=5 // pred_fallthru
      _
    %p3001 = scmp.le.s32.totalorder 2, %s9
    // Predicated region
    $region37: #{downsample5_forward.7} parent=5 // pred_check
      %p3002 = pneg %p3001
    $region38: #{downsample5_forward.7} parent=5 // pred_check_branch
      %3004 = sbr.rel (%p3002) target = $region40
    $region39: #{downsample5_forward.7} parent=5 // pred_region
      %s3005 = ssub.s32 %s9, 2
      // Predicated region
      $region41: #{downsample5_forward.7} parent=39 // pred_check
        %p3006 = pneg %p106
      $region42: #{downsample5_forward.7} parent=39 // pred_check_branch
        %3008 = sbr.rel (%p3006) target = $region44
      $region43: #{downsample5_forward.7} parent=39 // pred_region
        %p3009 = scmp.lt.s32.totalorder %s15, 1
        %s3010 = scalar_select %p3009, %s15, 1
        %s3011 = smul.addr %s3010, 16
        %s3012 = smul.addr %s3011, 4
        %s3013 = scalar_lea.vmem %s3, %s3012
      $region44: #{downsample5_forward.7} parent=39 // pred_fallthru
        _
    $region40: #{downsample5_forward.7} parent=5 // pred_fallthru
      _
  $region6: #{downsample5_forward.7} parent=0 // loop_footer
    %s13 = sadd.s32 1, %s9
  $region7: #{downsample5_forward.7} parent=0 // loop_footer_branch
    %8 = sbr.rel target = $region3
  $region8: #{downsample5_forward.7} parent=0 // loop_exit
    _

</llo_original>
